<compile_context>
chip_gen: v6e
topology: v6e:2x2x1
jax: 0.10.0
libtpu: 0.0.40
codegen_flags: <defaults>
</compile_context>

<pallas_src>
import functools

import jax
import jax.numpy as jnp
from jax.experimental import pallas as pl
from jax.experimental.pallas import tpu as pltpu


_LANE = 128
_VMEM_LIMIT = 48 * 1024 * 1024  # < physical VMEM on v5e/v6e (128 MiB) and v7x (64 MiB)


def _round_up(x, m):
    return ((x + m - 1) // m) * m


# --------------------- up-conv (ConvTranspose2d) matmul kernel ----------------

def _matmul_bias_kernel(x_ref, w_ref, b_ref, o_ref):
    # x_ref: (tm, K) bf16   w_ref: (K, Np) bf16   b_ref: (1, Np) f32
    acc = jnp.dot(x_ref[...], w_ref[...], preferred_element_type=jnp.float32)
    acc = acc + b_ref[...]
    o_ref[...] = acc.astype(o_ref.dtype)


def matmul_bias(x, w, b, *, out_dtype, tm=512):
    """out = x @ w + b (bf16 inputs, f32 MXU accumulate), tiled over rows.

    Np (lane dim) must be a multiple of 128; a ragged last row-block is handled
    by Pallas (out-of-range rows are never written back)."""
    M, K = x.shape
    Kw, Np = w.shape
    assert K == Kw and Np % _LANE == 0
    tm = min(tm, _round_up(M, 8))
    grid_m = pl.cdiv(M, tm)
    cost = pl.CostEstimate(
        flops=2 * M * K * Np,
        transcendentals=0,
        bytes_accessed=(M * K * 2 + K * Np * 2 + Np * 4
                        + M * Np * jnp.dtype(out_dtype).itemsize),
    )
    return pl.pallas_call(
        _matmul_bias_kernel,
        out_shape=jax.ShapeDtypeStruct((M, Np), out_dtype),
        grid=(grid_m,),
        in_specs=[
            pl.BlockSpec((tm, K), lambda i: (i, 0)),
            pl.BlockSpec((K, Np), lambda i: (0, 0)),
            pl.BlockSpec((1, Np), lambda i: (0, 0)),
        ],
        out_specs=pl.BlockSpec((tm, Np), lambda i: (i, 0)),
        compiler_params=pltpu.CompilerParams(
            dimension_semantics=("parallel",),
            vmem_limit_bytes=_VMEM_LIMIT),
        cost_estimate=cost,
    )(x, w, b)


# ----------- fused 3x3 valid conv (+implicit crop/concat) + bias + ReLU --------

def _conv3x3_relu_kernel(*refs, th, wo, col_offs):
    # refs layout: per group g: (th+2) input-row refs (each (Wg, Cg)) then its
    # weight ref (3, 3, Cg, Coutp); then bias (1, Coutp); then output
    # (th, Wo, Coutp).
    ng = len(col_offs)
    nrow = th + 2
    b_ref = refs[ng * (nrow + 1)]
    o_ref = refs[ng * (nrow + 1) + 1]
    coutp = o_ref.shape[-1]

    # bias folded into the f32 accumulator init
    acc = jnp.zeros((th * wo, coutp), jnp.float32) + b_ref[...]
    for g in range(ng):
        base = g * (nrow + 1)
        rows = [refs[base + t][...].astype(jnp.bfloat16) for t in range(nrow)]
        w_ref = refs[base + nrow]
        co = col_offs[g]
        for dy in range(3):
            for dx in range(3):
                if th == 1:
                    patch = rows[dy][co + dx:co + dx + wo, :]
                else:
                    patch = jnp.concatenate(
                        [rows[t + dy][co + dx:co + dx + wo, :] for t in range(th)],
                        axis=0)                                   # (th*wo, Cg)
                acc += jnp.dot(patch, w_ref[dy, dx],
                               preferred_element_type=jnp.float32)
    for t in range(th):
        o_ref[t] = jnp.maximum(acc[t * wo:(t + 1) * wo, :], 0.0).astype(o_ref.dtype)


def _pick_row_block(ho, th_max=8):
    for t in range(min(th_max, ho), 0, -1):
        if ho % t == 0:
            return t
    return 1


def conv3x3_relu_concat(groups, bias, *, out_h, out_w, out_dtype, th_max=8):
    """3x3 valid conv + ReLU over the channel-concatenation of `groups`.

    groups: list of (x, w, row_off, col_off); x: (N, Hg, Wg, Cg) (any float
    dtype, cast to bf16 in-kernel); w: (3, 3, Cg, Coutp) bf16; bias: (1, Coutp)
    f32.  The PyTorch centre-crop + torch.cat is folded into the per-group
    row/col offsets, so neither the cropped skip nor the concat hits HBM.
    Returns (N, out_h, out_w, Coutp) with Coutp a multiple of 128."""
    N = groups[0][0].shape[0]
    Coutp = groups[0][1].shape[-1]
    assert Coutp % _LANE == 0
    Ho, Wo = out_h, out_w
    th = _pick_row_block(Ho, th_max)

    args, in_specs = [], []
    for (x, w, roff, _coff) in groups:
        Wg, Cg = x.shape[2], x.shape[3]
        for dy in range(th + 2):
            args.append(x)
            # block height 1 along H => block index == element row index, so the
            # static dy/row_off shifts give the halo'd rows with no HBM copy.
            in_specs.append(pl.BlockSpec(
                (None, None, Wg, Cg),
                lambda n, h, dy=dy, roff=roff, th=th: (n, h * th + dy + roff, 0, 0)))
        args.append(w)
        in_specs.append(pl.BlockSpec(w.shape, lambda n, h: (0, 0, 0, 0)))
    args.append(bias)
    in_specs.append(pl.BlockSpec((1, Coutp), lambda n, h: (0, 0)))

    cin_total = sum(g[0].shape[3] for g in groups)
    bytes_in = sum(
        N * (Ho // th) * (th + 2) * g[0].shape[2] * g[0].shape[3]
        * jnp.dtype(g[0].dtype).itemsize + 9 * g[0].shape[3] * Coutp * 2
        for g in groups)
    cost = pl.CostEstimate(
        flops=2 * N * Ho * Wo * 9 * cin_total * Coutp,
        transcendentals=0,
        bytes_accessed=bytes_in + Coutp * 4
        + N * Ho * Wo * Coutp * jnp.dtype(out_dtype).itemsize)

    kernel = functools.partial(_conv3x3_relu_kernel, th=th, wo=Wo,
                               col_offs=tuple(g[3] for g in groups))
    return pl.pallas_call(
        kernel,
        out_shape=jax.ShapeDtypeStruct((N, Ho, Wo, Coutp), out_dtype),
        grid=(N, Ho // th),
        in_specs=in_specs,
        out_specs=pl.BlockSpec((None, th, Wo, Coutp), lambda n, h: (n, h, 0, 0)),
        compiler_params=pltpu.CompilerParams(
            dimension_semantics=("parallel", "parallel"),
            vmem_limit_bytes=_VMEM_LIMIT),
        cost_estimate=cost,
    )(*args)


# ------------------------------ parameter prep --------------------------------

def _prep_upconv_params(w_torch, b):
    # ConvTranspose2d weight (Cin, Cout, 2, 2) -> (Cin, pad(4*Cout, 128)) with
    # flat column order (a, b, cout); bias tiled to match; padded lanes are 0.
    cin, cout = w_torch.shape[0], w_torch.shape[1]
    n_real = 4 * cout
    n_pad = _round_up(n_real, _LANE)
    w2 = jnp.transpose(w_torch, (0, 2, 3, 1)).reshape(cin, n_real)
    w2 = jnp.pad(w2, ((0, 0), (0, n_pad - n_real))).astype(jnp.bfloat16)
    b2 = jnp.pad(jnp.tile(b, 4), (0, n_pad - n_real))
    return w2, b2.astype(jnp.float32).reshape(1, n_pad)


def _prep_conv_weight(w_torch, *, cin_lo, cin_hi, coutp, cin_pad_to=None):
    # Conv2d weight (Cout, Cin, 3, 3): keep input channels [cin_lo, cin_hi),
    # transpose to (3, 3, cin_g, Cout), zero-pad input rows (for padded input
    # channels) and output cols (to coutp) so padded channels never leak.
    cout = w_torch.shape[0]
    cin_g = cin_hi - cin_lo
    cin_pad_to = cin_pad_to if cin_pad_to is not None else cin_g
    w2 = jnp.transpose(w_torch[:, cin_lo:cin_hi], (2, 3, 1, 0))   # (3,3,cin_g,Cout)
    w2 = jnp.pad(w2, ((0, 0), (0, 0),
                      (0, cin_pad_to - cin_g), (0, coutp - cout)))
    return w2.astype(jnp.bfloat16)


def _prep_conv_bias(b, coutp):
    cout = b.shape[0]
    return jnp.pad(b, (0, coutp - cout)).astype(jnp.float32).reshape(1, coutp)


# ------------------------------ forward pass -----------------------------------

def unet_up_conv_block(params, x_nchw, skip_nchw):
    """Forward of UNetUpConvBlock(up_mode='upconv'). I/O in NCHW like PyTorch."""
    cout = params["up_b"].shape[0]
    coutp = _round_up(cout, _LANE)

    x = jnp.transpose(x_nchw, (0, 2, 3, 1)).astype(jnp.bfloat16)   # NHWC bf16
    skip = jnp.transpose(skip_nchw, (0, 2, 3, 1))                  # NHWC (f32)
    N, H, W, Cin = x.shape
    Hc, Wc = 2 * H, 2 * W

    # --- ConvTranspose2d(k=2, s=2): lane-padded matmul + pixel-shuffle glue.
    up_w, up_b = _prep_upconv_params(params["up_w"], params["up_b"])
    y = matmul_bias(x.reshape(N * H * W, Cin), up_w, up_b, out_dtype=jnp.bfloat16)
    y = y[:, :4 * cout].reshape(N, H, W, 2, 2, cout)
    up = jnp.transpose(y, (0, 1, 3, 2, 4, 5)).reshape(N, Hc, Wc, cout)
    # TODO(synk): fuse the 2x2 pixel-shuffle interleave into conv1's input path
    # (read y rows directly with parity-static column slices) to also drop this
    # HBM round trip.

    # --- Conv2d(3x3) + ReLU #1: centre-crop + channel-concat folded into the
    #     kernel via per-group row/col offsets (no crop / concat buffers).
    hd = (skip.shape[1] - Hc) // 2
    wd = (skip.shape[2] - Wc) // 2
    skip_ch = skip.shape[3]
    w1_up = _prep_conv_weight(params["c1_w"], cin_lo=0, cin_hi=cout, coutp=coutp)
    w1_sk = _prep_conv_weight(params["c1_w"], cin_lo=cout, cin_hi=cout + skip_ch,
                              coutp=coutp)
    b1 = _prep_conv_bias(params["c1_b"], coutp)
    h1 = conv3x3_relu_concat(
        [(up, w1_up, 0, 0), (skip, w1_sk, hd, wd)], b1,
        out_h=Hc - 2, out_w=Wc - 2, out_dtype=jnp.bfloat16)

    # --- Conv2d(3x3) + ReLU #2: padded (exactly-zero) channels of h1 flow in
    #     unsliced; the matching weight rows are zero.
    w2 = _prep_conv_weight(params["c2_w"], cin_lo=0, cin_hi=cout,
                           cin_pad_to=coutp, coutp=coutp)
    b2 = _prep_conv_bias(params["c2_b"], coutp)
    out = conv3x3_relu_concat(
        [(h1, w2, 0, 0)], b2,
        out_h=Hc - 4, out_w=Wc - 4, out_dtype=jnp.float32)

    out = out[..., :cout]                                          # drop padded channels
    return jnp.transpose(out, (0, 3, 1, 2))                        # back to NCHW


# ------------------------------ pure-JAX reference ------------------------------

def _ref_forward(params, x, skip):
    up = jnp.einsum('nchw,cdab->ndhawb', x, params['up_w'])
    N, co, H, _, W, _ = up.shape
    up = up.reshape(N, co, 2 * H, 2 * W) + params['up_b'][None, :, None, None]
    hd = (skip.shape[2] - 2 * H) // 2
    wd = (skip.shape[3] - 2 * W) // 2
    crop = skip[:, :, hd:hd + 2 * H, wd:wd + 2 * W]
    z = jnp.concatenate([up, crop], axis=1)

    def conv_relu(t, w, b):
        y = jax.lax.conv_general_dilated(
            t, w, window_strides=(1, 1), padding='VALID',
            dimension_numbers=('NCHW', 'OIHW', 'NCHW'))
        return jax.nn.relu(y + b[None, :, None, None])

    z = conv_relu(z, params['c1_w'], params['c1_b'])
    return conv_relu(z, params['c2_w'], params['c2_b'])


# ----------------------------------- main ---------------------------------------

def init_params(key, in_channels, out_channels):
    ks = jax.random.split(key, 6)
    scale = 0.1
    return {
        # ConvTranspose2d weight: (Cin, Cout, 2, 2)
        "up_w": scale * jax.random.normal(ks[0], (in_channels, out_channels, 2, 2), jnp.float32),
        "up_b": scale * jax.random.normal(ks[1], (out_channels,), jnp.float32),
        # Conv2d weights: (Cout, Cin, 3, 3)
        "c1_w": scale * jax.random.normal(ks[2], (out_channels, in_channels, 3, 3), jnp.float32),
        "c1_b": scale * jax.random.normal(ks[3], (out_channels,), jnp.float32),
        "c2_w": scale * jax.random.normal(ks[4], (out_channels, out_channels, 3, 3), jnp.float32),
        "c2_b": scale * jax.random.normal(ks[5], (out_channels,), jnp.float32),
    }


if __name__ == "__main__":
    in_channels, out_channels = 8, 4
    N, H, W = 2, 8, 8                       # x spatial -> up is 16x16
    skip_ch = in_channels - out_channels    # so concat has in_channels channels
    Hs = Ws = 20                            # skip is larger; centre-cropped to 16x16

    key = jax.random.PRNGKey(0)
    k_p, k_x, k_s = jax.random.split(key, 3)
    params = init_params(k_p, in_channels, out_channels)

    x = jax.random.normal(k_x, (N, in_channels, H, W), jnp.float32)              # NCHW
    input_to_concat = jax.random.normal(k_s, (N, skip_ch, Hs, Ws), jnp.float32)  # NCHW

    out = jax.jit(unet_up_conv_block)(params, x, input_to_concat)
    out = jax.block_until_ready(out)

    expected_shape = (N, out_channels, 2 * H - 4, 2 * W - 4)  # (2, 4, 12, 12)
    assert out.shape == expected_shape, (out.shape, expected_shape)
    assert bool(jnp.all(jnp.isfinite(out)))
    assert bool(jnp.all(out >= 0.0))  # final op is ReLU

    ref = _ref_forward(params, x, input_to_concat)
    err = float(jnp.max(jnp.abs(out - ref)))
    assert err < 8e-2, f"max abs error vs reference: {err}"

    print("KERNEL_OK")
</pallas_src>

<mosaic_0001>
module attributes {stable_mosaic.version = 11 : i64} {
  func.func @_matmul_bias_kernel(%arg0: i32, %arg1: memref<128x8xbf16, #tpu.memory_space<vmem>>, %arg2: memref<8x128xbf16, #tpu.memory_space<vmem>>, %arg3: memref<1x128xf32, #tpu.memory_space<vmem>>, %arg4: memref<128x128xbf16, #tpu.memory_space<vmem>>) attributes {dimension_semantics = [#tpu.dimension_semantics<parallel>], iteration_bounds = array<i64: 1>, scalar_prefetch = 0 : i64, scratch_operands = 0 : i64, tpu.core_type = #tpu.core_type<tc>, window_params = [{transform_indices = @transform_0, window_bounds = array<i64: 128, 8>}, {pipeline_mode = #tpu.pipeline_mode<synchronous>, transform_indices = @transform_1, window_bounds = array<i64: 8, 128>}, {pipeline_mode = #tpu.pipeline_mode<synchronous>, transform_indices = @transform_2, window_bounds = array<i64: 1, 128>}, {transform_indices = @transform_3, window_bounds = array<i64: 128, 128>}]} {
    %c0 = arith.constant 0 : index
    %c0_0 = arith.constant 0 : index
    %0 = vector.load %arg1[%c0, %c0_0] : memref<128x8xbf16, #tpu.memory_space<vmem>>, vector<128x8xbf16>
    %c0_1 = arith.constant 0 : index
    %c0_2 = arith.constant 0 : index
    %1 = vector.load %arg2[%c0_1, %c0_2] : memref<8x128xbf16, #tpu.memory_space<vmem>>, vector<8x128xbf16>
    %cst = arith.constant dense<0.000000e+00> : vector<128x128xf32>
    %2 = tpu.matmul %0, %1, %cst {dimension_numbers = #tpu.dot_dimension_numbers<[1], [0], [0], [1], [0, 0, 1, 1], [], []>} : vector<128x8xbf16>, vector<8x128xbf16>, vector<128x128xf32> -> vector<128x128xf32>
    %c0_3 = arith.constant 0 : index
    %c0_4 = arith.constant 0 : index
    %3 = vector.load %arg3[%c0_3, %c0_4] : memref<1x128xf32, #tpu.memory_space<vmem>>, vector<1x128xf32>
    %4 = vector.broadcast %3 : vector<1x128xf32> to vector<128x128xf32>
    %5 = arith.addf %2, %4 : vector<128x128xf32>
    %6 = arith.truncf %5 : vector<128x128xf32> to vector<128x128xbf16>
    %c0_5 = arith.constant 0 : index
    %c0_6 = arith.constant 0 : index
    %7 = vector.load %arg4[%c0_5, %c0_6] : memref<128x128xbf16, #tpu.memory_space<vmem>>, vector<128x128xbf16>
    tpu.vector_store %arg4[%c0_5, %c0_6], %6 {strides = array<i32>} : memref<128x128xbf16, #tpu.memory_space<vmem>>, vector<128x128xbf16>,
    return
  }
  func.func @transform_0(%arg0: i32) -> (i32, i32) {
    %c0_i32 = arith.constant 0 : i32
    %c0_i32_0 = arith.constant 0 : i32
    return %arg0, %c0_i32 : i32, i32
  }
  func.func @transform_1(%arg0: i32) -> (i32, i32) {
    %c0_i32 = arith.constant 0 : i32
    %c0_i32_0 = arith.constant 0 : i32
    %c0_i32_1 = arith.constant 0 : i32
    return %c0_i32, %c0_i32_0 : i32, i32
  }
  func.func @transform_2(%arg0: i32) -> (i32, i32) {
    %c0_i32 = arith.constant 0 : i32
    %c0_i32_0 = arith.constant 0 : i32
    %c0_i32_1 = arith.constant 0 : i32
    return %c0_i32, %c0_i32_0 : i32, i32
  }
  func.func @transform_3(%arg0: i32) -> (i32, i32) {
    %c0_i32 = arith.constant 0 : i32
    %c0_i32_0 = arith.constant 0 : i32
    return %arg0, %c0_i32 : i32, i32
  }
}

module attributes {stable_mosaic.version = 11 : i64} {
  func.func @_conv3x3_relu_kernel(%arg0: i32, %arg1: i32, %arg2: memref<1x1x16x4xbf16, #tpu.memory_space<vmem>>, %arg3: memref<1x1x16x4xbf16, #tpu.memory_space<vmem>>, %arg4: memref<1x1x16x4xbf16, #tpu.memory_space<vmem>>, %arg5: memref<1x1x16x4xbf16, #tpu.memory_space<vmem>>, %arg6: memref<1x1x16x4xbf16, #tpu.memory_space<vmem>>, %arg7: memref<1x1x16x4xbf16, #tpu.memory_space<vmem>>, %arg8: memref<1x1x16x4xbf16, #tpu.memory_space<vmem>>, %arg9: memref<1x1x16x4xbf16, #tpu.memory_space<vmem>>, %arg10: memref<1x1x16x4xbf16, #tpu.memory_space<vmem>>, %arg11: memref<3x3x4x128xbf16, #tpu.memory_space<vmem>>, %arg12: memref<1x1x20x4xf32, #tpu.memory_space<vmem>>, %arg13: memref<1x1x20x4xf32, #tpu.memory_space<vmem>>, %arg14: memref<1x1x20x4xf32, #tpu.memory_space<vmem>>, %arg15: memref<1x1x20x4xf32, #tpu.memory_space<vmem>>, %arg16: memref<1x1x20x4xf32, #tpu.memory_space<vmem>>, %arg17: memref<1x1x20x4xf32, #tpu.memory_space<vmem>>, %arg18: memref<1x1x20x4xf32, #tpu.memory_space<vmem>>, %arg19: memref<1x1x20x4xf32, #tpu.memory_space<vmem>>, %arg20: memref<1x1x20x4xf32, #tpu.memory_space<vmem>>, %arg21: memref<3x3x4x128xbf16, #tpu.memory_space<vmem>>, %arg22: memref<1x128xf32, #tpu.memory_space<vmem>>, %arg23: memref<1x7x14x128xbf16, #tpu.memory_space<vmem>>) attributes {dimension_semantics = [#tpu.dimension_semantics<parallel>, #tpu.dimension_semantics<parallel>], iteration_bounds = array<i64: 2, 2>, scalar_prefetch = 0 : i64, scratch_operands = 0 : i64, tpu.core_type = #tpu.core_type<tc>, window_params = [{transform_indices = @transform_0, window_bounds = array<i64: 1, 1, 16, 4>}, {transform_indices = @transform_1, window_bounds = array<i64: 1, 1, 16, 4>}, {transform_indices = @transform_2, window_bounds = array<i64: 1, 1, 16, 4>}, {transform_indices = @transform_3, window_bounds = array<i64: 1, 1, 16, 4>}, {transform_indices = @transform_4, window_bounds = array<i64: 1, 1, 16, 4>}, {transform_indices = @transform_5, window_bounds = array<i64: 1, 1, 16, 4>}, {transform_indices = @transform_6, window_bounds = array<i64: 1, 1, 16, 4>}, {transform_indices = @transform_7, window_bounds = array<i64: 1, 1, 16, 4>}, {transform_indices = @transform_8, window_bounds = array<i64: 1, 1, 16, 4>}, {pipeline_mode = #tpu.pipeline_mode<synchronous>, transform_indices = @transform_9, window_bounds = array<i64: 3, 3, 4, 128>}, {transform_indices = @transform_10, window_bounds = array<i64: 1, 1, 20, 4>}, {transform_indices = @transform_11, window_bounds = array<i64: 1, 1, 20, 4>}, {transform_indices = @transform_12, window_bounds = array<i64: 1, 1, 20, 4>}, {transform_indices = @transform_13, window_bounds = array<i64: 1, 1, 20, 4>}, {transform_indices = @transform_14, window_bounds = array<i64: 1, 1, 20, 4>}, {transform_indices = @transform_15, window_bounds = array<i64: 1, 1, 20, 4>}, {transform_indices = @transform_16, window_bounds = array<i64: 1, 1, 20, 4>}, {transform_indices = @transform_17, window_bounds = array<i64: 1, 1, 20, 4>}, {transform_indices = @transform_18, window_bounds = array<i64: 1, 1, 20, 4>}, {pipeline_mode = #tpu.pipeline_mode<synchronous>, transform_indices = @transform_19, window_bounds = array<i64: 3, 3, 4, 128>}, {pipeline_mode = #tpu.pipeline_mode<synchronous>, transform_indices = @transform_20, window_bounds = array<i64: 1, 128>}, {transform_indices = @transform_21, window_bounds = array<i64: 1, 7, 14, 128>}]} {
    %cst = arith.constant 0.000000e+00 : f32
    %0 = vector.broadcast %cst : f32 to vector<98x128xf32>
    %c0 = arith.constant 0 : index
    %c0_0 = arith.constant 0 : index
    %1 = vector.load %arg22[%c0, %c0_0] : memref<1x128xf32, #tpu.memory_space<vmem>>, vector<1x128xf32>
    %2 = vector.broadcast %1 : vector<1x128xf32> to vector<98x128xf32>
    %3 = arith.addf %0, %2 : vector<98x128xf32>
    %c0_1 = arith.constant 0 : index
    %c0_2 = arith.constant 0 : index
    %c0_3 = arith.constant 0 : index
    %c0_4 = arith.constant 0 : index
    %4 = vector.load %arg2[%c0_1, %c0_2, %c0_3, %c0_4] : memref<1x1x16x4xbf16, #tpu.memory_space<vmem>>, vector<1x1x16x4xbf16>
    %5 = vector.shape_cast %4 : vector<1x1x16x4xbf16> to vector<16x4xbf16>
    %c0_5 = arith.constant 0 : index
    %c0_6 = arith.constant 0 : index
    %c0_7 = arith.constant 0 : index
    %c0_8 = arith.constant 0 : index
    %6 = vector.load %arg3[%c0_5, %c0_6, %c0_7, %c0_8] : memref<1x1x16x4xbf16, #tpu.memory_space<vmem>>, vector<1x1x16x4xbf16>
    %7 = vector.shape_cast %6 : vector<1x1x16x4xbf16> to vector<16x4xbf16>
    %c0_9 = arith.constant 0 : index
    %c0_10 = arith.constant 0 : index
    %c0_11 = arith.constant 0 : index
    %c0_12 = arith.constant 0 : index
    %8 = vector.load %arg4[%c0_9, %c0_10, %c0_11, %c0_12] : memref<1x1x16x4xbf16, #tpu.memory_space<vmem>>, vector<1x1x16x4xbf16>
    %9 = vector.shape_cast %8 : vector<1x1x16x4xbf16> to vector<16x4xbf16>
    %c0_13 = arith.constant 0 : index
    %c0_14 = arith.constant 0 : index
    %c0_15 = arith.constant 0 : index
    %c0_16 = arith.constant 0 : index
    %10 = vector.load %arg5[%c0_13, %c0_14, %c0_15, %c0_16] : memref<1x1x16x4xbf16, #tpu.memory_space<vmem>>, vector<1x1x16x4xbf16>
    %11 = vector.shape_cast %10 : vector<1x1x16x4xbf16> to vector<16x4xbf16>
    %c0_17 = arith.constant 0 : index
    %c0_18 = arith.constant 0 : index
    %c0_19 = arith.constant 0 : index
    %c0_20 = arith.constant 0 : index
    %12 = vector.load %arg6[%c0_17, %c0_18, %c0_19, %c0_20] : memref<1x1x16x4xbf16, #tpu.memory_space<vmem>>, vector<1x1x16x4xbf16>
    %13 = vector.shape_cast %12 : vector<1x1x16x4xbf16> to vector<16x4xbf16>
    %c0_21 = arith.constant 0 : index
    %c0_22 = arith.constant 0 : index
    %c0_23 = arith.constant 0 : index
    %c0_24 = arith.constant 0 : index
    %14 = vector.load %arg7[%c0_21, %c0_22, %c0_23, %c0_24] : memref<1x1x16x4xbf16, #tpu.memory_space<vmem>>, vector<1x1x16x4xbf16>
    %15 = vector.shape_cast %14 : vector<1x1x16x4xbf16> to vector<16x4xbf16>
    %c0_25 = arith.constant 0 : index
    %c0_26 = arith.constant 0 : index
    %c0_27 = arith.constant 0 : index
    %c0_28 = arith.constant 0 : index
    %16 = vector.load %arg8[%c0_25, %c0_26, %c0_27, %c0_28] : memref<1x1x16x4xbf16, #tpu.memory_space<vmem>>, vector<1x1x16x4xbf16>
    %17 = vector.shape_cast %16 : vector<1x1x16x4xbf16> to vector<16x4xbf16>
    %c0_29 = arith.constant 0 : index
    %c0_30 = arith.constant 0 : index
    %c0_31 = arith.constant 0 : index
    %c0_32 = arith.constant 0 : index
    %18 = vector.load %arg9[%c0_29, %c0_30, %c0_31, %c0_32] : memref<1x1x16x4xbf16, #tpu.memory_space<vmem>>, vector<1x1x16x4xbf16>
    %19 = vector.shape_cast %18 : vector<1x1x16x4xbf16> to vector<16x4xbf16>
    %c0_33 = arith.constant 0 : index
    %c0_34 = arith.constant 0 : index
    %c0_35 = arith.constant 0 : index
    %c0_36 = arith.constant 0 : index
    %20 = vector.load %arg10[%c0_33, %c0_34, %c0_35, %c0_36] : memref<1x1x16x4xbf16, #tpu.memory_space<vmem>>, vector<1x1x16x4xbf16>
    %21 = vector.shape_cast %20 : vector<1x1x16x4xbf16> to vector<16x4xbf16>
    %22 = vector.extract_strided_slice %5 {offsets = [0, 0], sizes = [14, 4], strides = [1, 1]} : vector<16x4xbf16> to vector<14x4xbf16>
    %23 = vector.extract_strided_slice %7 {offsets = [0, 0], sizes = [14, 4], strides = [1, 1]} : vector<16x4xbf16> to vector<14x4xbf16>
    %24 = vector.extract_strided_slice %9 {offsets = [0, 0], sizes = [14, 4], strides = [1, 1]} : vector<16x4xbf16> to vector<14x4xbf16>
    %25 = vector.extract_strided_slice %11 {offsets = [0, 0], sizes = [14, 4], strides = [1, 1]} : vector<16x4xbf16> to vector<14x4xbf16>
    %26 = vector.extract_strided_slice %13 {offsets = [0, 0], sizes = [14, 4], strides = [1, 1]} : vector<16x4xbf16> to vector<14x4xbf16>
    %27 = vector.extract_strided_slice %15 {offsets = [0, 0], sizes = [14, 4], strides = [1, 1]} : vector<16x4xbf16> to vector<14x4xbf16>
    %28 = vector.extract_strided_slice %17 {offsets = [0, 0], sizes = [14, 4], strides = [1, 1]} : vector<16x4xbf16> to vector<14x4xbf16>
    %29 = tpu.concatenate %22, %23, %24, %25, %26, %27, %28 in 0 : vector<14x4xbf16>, vector<14x4xbf16>, vector<14x4xbf16>, vector<14x4xbf16>, vector<14x4xbf16>, vector<14x4xbf16>, vector<14x4xbf16> -> vector<98x4xbf16>
    %c0_37 = arith.constant 0 : index
    %c0_38 = arith.constant 0 : index
    %c0_39 = arith.constant 0 : index
    %c0_40 = arith.constant 0 : index
    %30 = vector.load %arg11[%c0_37, %c0_38, %c0_39, %c0_40] : memref<3x3x4x128xbf16, #tpu.memory_space<vmem>>, vector<1x1x4x128xbf16>
    %31 = vector.shape_cast %30 : vector<1x1x4x128xbf16> to vector<4x128xbf16>
    %cst_41 = arith.constant dense<0.000000e+00> : vector<98x128xf32>
    %32 = tpu.matmul %29, %31, %cst_41 {dimension_numbers = #tpu.dot_dimension_numbers<[1], [0], [0], [1], [0, 0, 1, 1], [], []>} : vector<98x4xbf16>, vector<4x128xbf16>, vector<98x128xf32> -> vector<98x128xf32>
    %33 = arith.addf %3, %32 : vector<98x128xf32>
    %34 = vector.extract_strided_slice %5 {offsets = [1, 0], sizes = [14, 4], strides = [1, 1]} : vector<16x4xbf16> to vector<14x4xbf16>
    %35 = vector.extract_strided_slice %7 {offsets = [1, 0], sizes = [14, 4], strides = [1, 1]} : vector<16x4xbf16> to vector<14x4xbf16>
    %36 = vector.extract_strided_slice %9 {offsets = [1, 0], sizes = [14, 4], strides = [1, 1]} : vector<16x4xbf16> to vector<14x4xbf16>
    %37 = vector.extract_strided_slice %11 {offsets = [1, 0], sizes = [14, 4], strides = [1, 1]} : vector<16x4xbf16> to vector<14x4xbf16>
    %38 = vector.extract_strided_slice %13 {offsets = [1, 0], sizes = [14, 4], strides = [1, 1]} : vector<16x4xbf16> to vector<14x4xbf16>
    %39 = vector.extract_strided_slice %15 {offsets = [1, 0], sizes = [14, 4], strides = [1, 1]} : vector<16x4xbf16> to vector<14x4xbf16>
    %40 = vector.extract_strided_slice %17 {offsets = [1, 0], sizes = [14, 4], strides = [1, 1]} : vector<16x4xbf16> to vector<14x4xbf16>
    %41 = tpu.concatenate %34, %35, %36, %37, %38, %39, %40 in 0 : vector<14x4xbf16>, vector<14x4xbf16>, vector<14x4xbf16>, vector<14x4xbf16>, vector<14x4xbf16>, vector<14x4xbf16>, vector<14x4xbf16> -> vector<98x4xbf16>
    %c0_42 = arith.constant 0 : index
    %c1 = arith.constant 1 : index
    %c0_43 = arith.constant 0 : index
    %c0_44 = arith.constant 0 : index
    %42 = vector.load %arg11[%c0_42, %c1, %c0_43, %c0_44] : memref<3x3x4x128xbf16, #tpu.memory_space<vmem>>, vector<1x1x4x128xbf16>
    %43 = vector.shape_cast %42 : vector<1x1x4x128xbf16> to vector<4x128xbf16>
    %cst_45 = arith.constant dense<0.000000e+00> : vector<98x128xf32>
    %44 = tpu.matmul %41, %43, %cst_45 {dimension_numbers = #tpu.dot_dimension_numbers<[1], [0], [0], [1], [0, 0, 1, 1], [], []>} : vector<98x4xbf16>, vector<4x128xbf16>, vector<98x128xf32> -> vector<98x128xf32>
    %45 = arith.addf %33, %44 : vector<98x128xf32>
    %46 = vector.extract_strided_slice %5 {offsets = [2, 0], sizes = [14, 4], strides = [1, 1]} : vector<16x4xbf16> to vector<14x4xbf16>
    %47 = vector.extract_strided_slice %7 {offsets = [2, 0], sizes = [14, 4], strides = [1, 1]} : vector<16x4xbf16> to vector<14x4xbf16>
    %48 = vector.extract_strided_slice %9 {offsets = [2, 0], sizes = [14, 4], strides = [1, 1]} : vector<16x4xbf16> to vector<14x4xbf16>
    %49 = vector.extract_strided_slice %11 {offsets = [2, 0], sizes = [14, 4], strides = [1, 1]} : vector<16x4xbf16> to vector<14x4xbf16>
    %50 = vector.extract_strided_slice %13 {offsets = [2, 0], sizes = [14, 4], strides = [1, 1]} : vector<16x4xbf16> to vector<14x4xbf16>
    %51 = vector.extract_strided_slice %15 {offsets = [2, 0], sizes = [14, 4], strides = [1, 1]} : vector<16x4xbf16> to vector<14x4xbf16>
    %52 = vector.extract_strided_slice %17 {offsets = [2, 0], sizes = [14, 4], strides = [1, 1]} : vector<16x4xbf16> to vector<14x4xbf16>
    %53 = tpu.concatenate %46, %47, %48, %49, %50, %51, %52 in 0 : vector<14x4xbf16>, vector<14x4xbf16>, vector<14x4xbf16>, vector<14x4xbf16>, vector<14x4xbf16>, vector<14x4xbf16>, vector<14x4xbf16> -> vector<98x4xbf16>
    %c0_46 = arith.constant 0 : index
    %c2 = arith.constant 2 : index
    %c0_47 = arith.constant 0 : index
    %c0_48 = arith.constant 0 : index
    %54 = vector.load %arg11[%c0_46, %c2, %c0_47, %c0_48] : memref<3x3x4x128xbf16, #tpu.memory_space<vmem>>, vector<1x1x4x128xbf16>
    %55 = vector.shape_cast %54 : vector<1x1x4x128xbf16> to vector<4x128xbf16>
    %cst_49 = arith.constant dense<0.000000e+00> : vector<98x128xf32>
    %56 = tpu.matmul %53, %55, %cst_49 {dimension_numbers = #tpu.dot_dimension_numbers<[1], [0], [0], [1], [0, 0, 1, 1], [], []>} : vector<98x4xbf16>, vector<4x128xbf16>, vector<98x128xf32> -> vector<98x128xf32>
    %57 = arith.addf %45, %56 : vector<98x128xf32>
    %58 = vector.extract_strided_slice %7 {offsets = [0, 0], sizes = [14, 4], strides = [1, 1]} : vector<16x4xbf16> to vector<14x4xbf16>
    %59 = vector.extract_strided_slice %9 {offsets = [0, 0], sizes = [14, 4], strides = [1, 1]} : vector<16x4xbf16> to vector<14x4xbf16>
    %60 = vector.extract_strided_slice %11 {offsets = [0, 0], sizes = [14, 4], strides = [1, 1]} : vector<16x4xbf16> to vector<14x4xbf16>
    %61 = vector.extract_strided_slice %13 {offsets = [0, 0], sizes = [14, 4], strides = [1, 1]} : vector<16x4xbf16> to vector<14x4xbf16>
    %62 = vector.extract_strided_slice %15 {offsets = [0, 0], sizes = [14, 4], strides = [1, 1]} : vector<16x4xbf16> to vector<14x4xbf16>
    %63 = vector.extract_strided_slice %17 {offsets = [0, 0], sizes = [14, 4], strides = [1, 1]} : vector<16x4xbf16> to vector<14x4xbf16>
    %64 = vector.extract_strided_slice %19 {offsets = [0, 0], sizes = [14, 4], strides = [1, 1]} : vector<16x4xbf16> to vector<14x4xbf16>
    %65 = tpu.concatenate %58, %59, %60, %61, %62, %63, %64 in 0 : vector<14x4xbf16>, vector<14x4xbf16>, vector<14x4xbf16>, vector<14x4xbf16>, vector<14x4xbf16>, vector<14x4xbf16>, vector<14x4xbf16> -> vector<98x4xbf16>
    %c1_50 = arith.constant 1 : index
    %c0_51 = arith.constant 0 : index
    %c0_52 = arith.constant 0 : index
    %c0_53 = arith.constant 0 : index
    %66 = vector.load %arg11[%c1_50, %c0_51, %c0_52, %c0_53] : memref<3x3x4x128xbf16, #tpu.memory_space<vmem>>, vector<1x1x4x128xbf16>
    %67 = vector.shape_cast %66 : vector<1x1x4x128xbf16> to vector<4x128xbf16>
    %cst_54 = arith.constant dense<0.000000e+00> : vector<98x128xf32>
    %68 = tpu.matmul %65, %67, %cst_54 {dimension_numbers = #tpu.dot_dimension_numbers<[1], [0], [0], [1], [0, 0, 1, 1], [], []>} : vector<98x4xbf16>, vector<4x128xbf16>, vector<98x128xf32> -> vector<98x128xf32>
    %69 = arith.addf %57, %68 : vector<98x128xf32>
    %70 = vector.extract_strided_slice %7 {offsets = [1, 0], sizes = [14, 4], strides = [1, 1]} : vector<16x4xbf16> to vector<14x4xbf16>
    %71 = vector.extract_strided_slice %9 {offsets = [1, 0], sizes = [14, 4], strides = [1, 1]} : vector<16x4xbf16> to vector<14x4xbf16>
    %72 = vector.extract_strided_slice %11 {offsets = [1, 0], sizes = [14, 4], strides = [1, 1]} : vector<16x4xbf16> to vector<14x4xbf16>
    %73 = vector.extract_strided_slice %13 {offsets = [1, 0], sizes = [14, 4], strides = [1, 1]} : vector<16x4xbf16> to vector<14x4xbf16>
    %74 = vector.extract_strided_slice %15 {offsets = [1, 0], sizes = [14, 4], strides = [1, 1]} : vector<16x4xbf16> to vector<14x4xbf16>
    %75 = vector.extract_strided_slice %17 {offsets = [1, 0], sizes = [14, 4], strides = [1, 1]} : vector<16x4xbf16> to vector<14x4xbf16>
    %76 = vector.extract_strided_slice %19 {offsets = [1, 0], sizes = [14, 4], strides = [1, 1]} : vector<16x4xbf16> to vector<14x4xbf16>
    %77 = tpu.concatenate %70, %71, %72, %73, %74, %75, %76 in 0 : vector<14x4xbf16>, vector<14x4xbf16>, vector<14x4xbf16>, vector<14x4xbf16>, vector<14x4xbf16>, vector<14x4xbf16>, vector<14x4xbf16> -> vector<98x4xbf16>
    %c1_55 = arith.constant 1 : index
    %c1_56 = arith.constant 1 : index
    %c0_57 = arith.constant 0 : index
    %c0_58 = arith.constant 0 : index
    %78 = vector.load %arg11[%c1_55, %c1_56, %c0_57, %c0_58] : memref<3x3x4x128xbf16, #tpu.memory_space<vmem>>, vector<1x1x4x128xbf16>
    %79 = vector.shape_cast %78 : vector<1x1x4x128xbf16> to vector<4x128xbf16>
    %cst_59 = arith.constant dense<0.000000e+00> : vector<98x128xf32>
    %80 = tpu.matmul %77, %79, %cst_59 {dimension_numbers = #tpu.dot_dimension_numbers<[1], [0], [0], [1], [0, 0, 1, 1], [], []>} : vector<98x4xbf16>, vector<4x128xbf16>, vector<98x128xf32> -> vector<98x128xf32>
    %81 = arith.addf %69, %80 : vector<98x128xf32>
    %82 = vector.extract_strided_slice %7 {offsets = [2, 0], sizes = [14, 4], strides = [1, 1]} : vector<16x4xbf16> to vector<14x4xbf16>
    %83 = vector.extract_strided_slice %9 {offsets = [2, 0], sizes = [14, 4], strides = [1, 1]} : vector<16x4xbf16> to vector<14x4xbf16>
    %84 = vector.extract_strided_slice %11 {offsets = [2, 0], sizes = [14, 4], strides = [1, 1]} : vector<16x4xbf16> to vector<14x4xbf16>
    %85 = vector.extract_strided_slice %13 {offsets = [2, 0], sizes = [14, 4], strides = [1, 1]} : vector<16x4xbf16> to vector<14x4xbf16>
    %86 = vector.extract_strided_slice %15 {offsets = [2, 0], sizes = [14, 4], strides = [1, 1]} : vector<16x4xbf16> to vector<14x4xbf16>
    %87 = vector.extract_strided_slice %17 {offsets = [2, 0], sizes = [14, 4], strides = [1, 1]} : vector<16x4xbf16> to vector<14x4xbf16>
    %88 = vector.extract_strided_slice %19 {offsets = [2, 0], sizes = [14, 4], strides = [1, 1]} : vector<16x4xbf16> to vector<14x4xbf16>
    %89 = tpu.concatenate %82, %83, %84, %85, %86, %87, %88 in 0 : vector<14x4xbf16>, vector<14x4xbf16>, vector<14x4xbf16>, vector<14x4xbf16>, vector<14x4xbf16>, vector<14x4xbf16>, vector<14x4xbf16> -> vector<98x4xbf16>
    %c1_60 = arith.constant 1 : index
    %c2_61 = arith.constant 2 : index
    %c0_62 = arith.constant 0 : index
    %c0_63 = arith.constant 0 : index
    %90 = vector.load %arg11[%c1_60, %c2_61, %c0_62, %c0_63] : memref<3x3x4x128xbf16, #tpu.memory_space<vmem>>, vector<1x1x4x128xbf16>
    %91 = vector.shape_cast %90 : vector<1x1x4x128xbf16> to vector<4x128xbf16>
    %cst_64 = arith.constant dense<0.000000e+00> : vector<98x128xf32>
    %92 = tpu.matmul %89, %91, %cst_64 {dimension_numbers = #tpu.dot_dimension_numbers<[1], [0], [0], [1], [0, 0, 1, 1], [], []>} : vector<98x4xbf16>, vector<4x128xbf16>, vector<98x128xf32> -> vector<98x128xf32>
    %93 = arith.addf %81, %92 : vector<98x128xf32>
    %94 = vector.extract_strided_slice %9 {offsets = [0, 0], sizes = [14, 4], strides = [1, 1]} : vector<16x4xbf16> to vector<14x4xbf16>
    %95 = vector.extract_strided_slice %11 {offsets = [0, 0], sizes = [14, 4], strides = [1, 1]} : vector<16x4xbf16> to vector<14x4xbf16>
    %96 = vector.extract_strided_slice %13 {offsets = [0, 0], sizes = [14, 4], strides = [1, 1]} : vector<16x4xbf16> to vector<14x4xbf16>
    %97 = vector.extract_strided_slice %15 {offsets = [0, 0], sizes = [14, 4], strides = [1, 1]} : vector<16x4xbf16> to vector<14x4xbf16>
    %98 = vector.extract_strided_slice %17 {offsets = [0, 0], sizes = [14, 4], strides = [1, 1]} : vector<16x4xbf16> to vector<14x4xbf16>
    %99 = vector.extract_strided_slice %19 {offsets = [0, 0], sizes = [14, 4], strides = [1, 1]} : vector<16x4xbf16> to vector<14x4xbf16>
    %100 = vector.extract_strided_slice %21 {offsets = [0, 0], sizes = [14, 4], strides = [1, 1]} : vector<16x4xbf16> to vector<14x4xbf16>
    %101 = tpu.concatenate %94, %95, %96, %97, %98, %99, %100 in 0 : vector<14x4xbf16>, vector<14x4xbf16>, vector<14x4xbf16>, vector<14x4xbf16>, vector<14x4xbf16>, vector<14x4xbf16>, vector<14x4xbf16> -> vector<98x4xbf16>
    %c2_65 = arith.constant 2 : index
    %c0_66 = arith.constant 0 : index
    %c0_67 = arith.constant 0 : index
    %c0_68 = arith.constant 0 : index
    %102 = vector.load %arg11[%c2_65, %c0_66, %c0_67, %c0_68] : memref<3x3x4x128xbf16, #tpu.memory_space<vmem>>, vector<1x1x4x128xbf16>
    %103 = vector.shape_cast %102 : vector<1x1x4x128xbf16> to vector<4x128xbf16>
    %cst_69 = arith.constant dense<0.000000e+00> : vector<98x128xf32>
    %104 = tpu.matmul %101, %103, %cst_69 {dimension_numbers = #tpu.dot_dimension_numbers<[1], [0], [0], [1], [0, 0, 1, 1], [], []>} : vector<98x4xbf16>, vector<4x128xbf16>, vector<98x128xf32> -> vector<98x128xf32>
    %105 = arith.addf %93, %104 : vector<98x128xf32>
    %106 = vector.extract_strided_slice %9 {offsets = [1, 0], sizes = [14, 4], strides = [1, 1]} : vector<16x4xbf16> to vector<14x4xbf16>
    %107 = vector.extract_strided_slice %11 {offsets = [1, 0], sizes = [14, 4], strides = [1, 1]} : vector<16x4xbf16> to vector<14x4xbf16>
    %108 = vector.extract_strided_slice %13 {offsets = [1, 0], sizes = [14, 4], strides = [1, 1]} : vector<16x4xbf16> to vector<14x4xbf16>
    %109 = vector.extract_strided_slice %15 {offsets = [1, 0], sizes = [14, 4], strides = [1, 1]} : vector<16x4xbf16> to vector<14x4xbf16>
    %110 = vector.extract_strided_slice %17 {offsets = [1, 0], sizes = [14, 4], strides = [1, 1]} : vector<16x4xbf16> to vector<14x4xbf16>
    %111 = vector.extract_strided_slice %19 {offsets = [1, 0], sizes = [14, 4], strides = [1, 1]} : vector<16x4xbf16> to vector<14x4xbf16>
    %112 = vector.extract_strided_slice %21 {offsets = [1, 0], sizes = [14, 4], strides = [1, 1]} : vector<16x4xbf16> to vector<14x4xbf16>
    %113 = tpu.concatenate %106, %107, %108, %109, %110, %111, %112 in 0 : vector<14x4xbf16>, vector<14x4xbf16>, vector<14x4xbf16>, vector<14x4xbf16>, vector<14x4xbf16>, vector<14x4xbf16>, vector<14x4xbf16> -> vector<98x4xbf16>
    %c2_70 = arith.constant 2 : index
    %c1_71 = arith.constant 1 : index
    %c0_72 = arith.constant 0 : index
    %c0_73 = arith.constant 0 : index
    %114 = vector.load %arg11[%c2_70, %c1_71, %c0_72, %c0_73] : memref<3x3x4x128xbf16, #tpu.memory_space<vmem>>, vector<1x1x4x128xbf16>
    %115 = vector.shape_cast %114 : vector<1x1x4x128xbf16> to vector<4x128xbf16>
    %cst_74 = arith.constant dense<0.000000e+00> : vector<98x128xf32>
    %116 = tpu.matmul %113, %115, %cst_74 {dimension_numbers = #tpu.dot_dimension_numbers<[1], [0], [0], [1], [0, 0, 1, 1], [], []>} : vector<98x4xbf16>, vector<4x128xbf16>, vector<98x128xf32> -> vector<98x128xf32>
    %117 = arith.addf %105, %116 : vector<98x128xf32>
    %118 = vector.extract_strided_slice %9 {offsets = [2, 0], sizes = [14, 4], strides = [1, 1]} : vector<16x4xbf16> to vector<14x4xbf16>
    %119 = vector.extract_strided_slice %11 {offsets = [2, 0], sizes = [14, 4], strides = [1, 1]} : vector<16x4xbf16> to vector<14x4xbf16>
    %120 = vector.extract_strided_slice %13 {offsets = [2, 0], sizes = [14, 4], strides = [1, 1]} : vector<16x4xbf16> to vector<14x4xbf16>
    %121 = vector.extract_strided_slice %15 {offsets = [2, 0], sizes = [14, 4], strides = [1, 1]} : vector<16x4xbf16> to vector<14x4xbf16>
    %122 = vector.extract_strided_slice %17 {offsets = [2, 0], sizes = [14, 4], strides = [1, 1]} : vector<16x4xbf16> to vector<14x4xbf16>
    %123 = vector.extract_strided_slice %19 {offsets = [2, 0], sizes = [14, 4], strides = [1, 1]} : vector<16x4xbf16> to vector<14x4xbf16>
    %124 = vector.extract_strided_slice %21 {offsets = [2, 0], sizes = [14, 4], strides = [1, 1]} : vector<16x4xbf16> to vector<14x4xbf16>
    %125 = tpu.concatenate %118, %119, %120, %121, %122, %123, %124 in 0 : vector<14x4xbf16>, vector<14x4xbf16>, vector<14x4xbf16>, vector<14x4xbf16>, vector<14x4xbf16>, vector<14x4xbf16>, vector<14x4xbf16> -> vector<98x4xbf16>
    %c2_75 = arith.constant 2 : index
    %c2_76 = arith.constant 2 : index
    %c0_77 = arith.constant 0 : index
    %c0_78 = arith.constant 0 : index
    %126 = vector.load %arg11[%c2_75, %c2_76, %c0_77, %c0_78] : memref<3x3x4x128xbf16, #tpu.memory_space<vmem>>, vector<1x1x4x128xbf16>
    %127 = vector.shape_cast %126 : vector<1x1x4x128xbf16> to vector<4x128xbf16>
    %cst_79 = arith.constant dense<0.000000e+00> : vector<98x128xf32>
    %128 = tpu.matmul %125, %127, %cst_79 {dimension_numbers = #tpu.dot_dimension_numbers<[1], [0], [0], [1], [0, 0, 1, 1], [], []>} : vector<98x4xbf16>, vector<4x128xbf16>, vector<98x128xf32> -> vector<98x128xf32>
    %129 = arith.addf %117, %128 : vector<98x128xf32>
    %c0_80 = arith.constant 0 : index
    %c0_81 = arith.constant 0 : index
    %c0_82 = arith.constant 0 : index
    %c0_83 = arith.constant 0 : index
    %130 = vector.load %arg12[%c0_80, %c0_81, %c0_82, %c0_83] : memref<1x1x20x4xf32, #tpu.memory_space<vmem>>, vector<1x1x20x4xf32>
    %131 = vector.shape_cast %130 : vector<1x1x20x4xf32> to vector<20x4xf32>
    %132 = arith.truncf %131 : vector<20x4xf32> to vector<20x4xbf16>
    %c0_84 = arith.constant 0 : index
    %c0_85 = arith.constant 0 : index
    %c0_86 = arith.constant 0 : index
    %c0_87 = arith.constant 0 : index
    %133 = vector.load %arg13[%c0_84, %c0_85, %c0_86, %c0_87] : memref<1x1x20x4xf32, #tpu.memory_space<vmem>>, vector<1x1x20x4xf32>
    %134 = vector.shape_cast %133 : vector<1x1x20x4xf32> to vector<20x4xf32>
    %135 = arith.truncf %134 : vector<20x4xf32> to vector<20x4xbf16>
    %c0_88 = arith.constant 0 : index
    %c0_89 = arith.constant 0 : index
    %c0_90 = arith.constant 0 : index
    %c0_91 = arith.constant 0 : index
    %136 = vector.load %arg14[%c0_88, %c0_89, %c0_90, %c0_91] : memref<1x1x20x4xf32, #tpu.memory_space<vmem>>, vector<1x1x20x4xf32>
    %137 = vector.shape_cast %136 : vector<1x1x20x4xf32> to vector<20x4xf32>
    %138 = arith.truncf %137 : vector<20x4xf32> to vector<20x4xbf16>
    %c0_92 = arith.constant 0 : index
    %c0_93 = arith.constant 0 : index
    %c0_94 = arith.constant 0 : index
    %c0_95 = arith.constant 0 : index
    %139 = vector.load %arg15[%c0_92, %c0_93, %c0_94, %c0_95] : memref<1x1x20x4xf32, #tpu.memory_space<vmem>>, vector<1x1x20x4xf32>
    %140 = vector.shape_cast %139 : vector<1x1x20x4xf32> to vector<20x4xf32>
    %141 = arith.truncf %140 : vector<20x4xf32> to vector<20x4xbf16>
    %c0_96 = arith.constant 0 : index
    %c0_97 = arith.constant 0 : index
    %c0_98 = arith.constant 0 : index
    %c0_99 = arith.constant 0 : index
    %142 = vector.load %arg16[%c0_96, %c0_97, %c0_98, %c0_99] : memref<1x1x20x4xf32, #tpu.memory_space<vmem>>, vector<1x1x20x4xf32>
    %143 = vector.shape_cast %142 : vector<1x1x20x4xf32> to vector<20x4xf32>
    %144 = arith.truncf %143 : vector<20x4xf32> to vector<20x4xbf16>
    %c0_100 = arith.constant 0 : index
    %c0_101 = arith.constant 0 : index
    %c0_102 = arith.constant 0 : index
    %c0_103 = arith.constant 0 : index
    %145 = vector.load %arg17[%c0_100, %c0_101, %c0_102, %c0_103] : memref<1x1x20x4xf32, #tpu.memory_space<vmem>>, vector<1x1x20x4xf32>
    %146 = vector.shape_cast %145 : vector<1x1x20x4xf32> to vector<20x4xf32>
    %147 = arith.truncf %146 : vector<20x4xf32> to vector<20x4xbf16>
    %c0_104 = arith.constant 0 : index
    %c0_105 = arith.constant 0 : index
    %c0_106 = arith.constant 0 : index
    %c0_107 = arith.constant 0 : index
    %148 = vector.load %arg18[%c0_104, %c0_105, %c0_106, %c0_107] : memref<1x1x20x4xf32, #tpu.memory_space<vmem>>, vector<1x1x20x4xf32>
    %149 = vector.shape_cast %148 : vector<1x1x20x4xf32> to vector<20x4xf32>
    %150 = arith.truncf %149 : vector<20x4xf32> to vector<20x4xbf16>
    %c0_108 = arith.constant 0 : index
    %c0_109 = arith.constant 0 : index
    %c0_110 = arith.constant 0 : index
    %c0_111 = arith.constant 0 : index
    %151 = vector.load %arg19[%c0_108, %c0_109, %c0_110, %c0_111] : memref<1x1x20x4xf32, #tpu.memory_space<vmem>>, vector<1x1x20x4xf32>
    %152 = vector.shape_cast %151 : vector<1x1x20x4xf32> to vector<20x4xf32>
    %153 = arith.truncf %152 : vector<20x4xf32> to vector<20x4xbf16>
    %c0_112 = arith.constant 0 : index
    %c0_113 = arith.constant 0 : index
    %c0_114 = arith.constant 0 : index
    %c0_115 = arith.constant 0 : index
    %154 = vector.load %arg20[%c0_112, %c0_113, %c0_114, %c0_115] : memref<1x1x20x4xf32, #tpu.memory_space<vmem>>, vector<1x1x20x4xf32>
    %155 = vector.shape_cast %154 : vector<1x1x20x4xf32> to vector<20x4xf32>
    %156 = arith.truncf %155 : vector<20x4xf32> to vector<20x4xbf16>
    %157 = vector.extract_strided_slice %132 {offsets = [2, 0], sizes = [14, 4], strides = [1, 1]} : vector<20x4xbf16> to vector<14x4xbf16>
    %158 = vector.extract_strided_slice %135 {offsets = [2, 0], sizes = [14, 4], strides = [1, 1]} : vector<20x4xbf16> to vector<14x4xbf16>
    %159 = vector.extract_strided_slice %138 {offsets = [2, 0], sizes = [14, 4], strides = [1, 1]} : vector<20x4xbf16> to vector<14x4xbf16>
    %160 = vector.extract_strided_slice %141 {offsets = [2, 0], sizes = [14, 4], strides = [1, 1]} : vector<20x4xbf16> to vector<14x4xbf16>
    %161 = vector.extract_strided_slice %144 {offsets = [2, 0], sizes = [14, 4], strides = [1, 1]} : vector<20x4xbf16> to vector<14x4xbf16>
    %162 = vector.extract_strided_slice %147 {offsets = [2, 0], sizes = [14, 4], strides = [1, 1]} : vector<20x4xbf16> to vector<14x4xbf16>
    %163 = vector.extract_strided_slice %150 {offsets = [2, 0], sizes = [14, 4], strides = [1, 1]} : vector<20x4xbf16> to vector<14x4xbf16>
    %164 = tpu.concatenate %157, %158, %159, %160, %161, %162, %163 in 0 : vector<14x4xbf16>, vector<14x4xbf16>, vector<14x4xbf16>, vector<14x4xbf16>, vector<14x4xbf16>, vector<14x4xbf16>, vector<14x4xbf16> -> vector<98x4xbf16>
    %c0_116 = arith.constant 0 : index
    %c0_117 = arith.constant 0 : index
    %c0_118 = arith.constant 0 : index
    %c0_119 = arith.constant 0 : index
    %165 = vector.load %arg21[%c0_116, %c0_117, %c0_118, %c0_119] : memref<3x3x4x128xbf16, #tpu.memory_space<vmem>>, vector<1x1x4x128xbf16>
    %166 = vector.shape_cast %165 : vector<1x1x4x128xbf16> to vector<4x128xbf16>
    %cst_120 = arith.constant dense<0.000000e+00> : vector<98x128xf32>
    %167 = tpu.matmul %164, %166, %cst_120 {dimension_numbers = #tpu.dot_dimension_numbers<[1], [0], [0], [1], [0, 0, 1, 1], [], []>} : vector<98x4xbf16>, vector<4x128xbf16>, vector<98x128xf32> -> vector<98x128xf32>
    %168 = arith.addf %129, %167 : vector<98x128xf32>
    %169 = vector.extract_strided_slice %132 {offsets = [3, 0], sizes = [14, 4], strides = [1, 1]} : vector<20x4xbf16> to vector<14x4xbf16>
    %170 = vector.extract_strided_slice %135 {offsets = [3, 0], sizes = [14, 4], strides = [1, 1]} : vector<20x4xbf16> to vector<14x4xbf16>
    %171 = vector.extract_strided_slice %138 {offsets = [3, 0], sizes = [14, 4], strides = [1, 1]} : vector<20x4xbf16> to vector<14x4xbf16>
    %172 = vector.extract_strided_slice %141 {offsets = [3, 0], sizes = [14, 4], strides = [1, 1]} : vector<20x4xbf16> to vector<14x4xbf16>
    %173 = vector.extract_strided_slice %144 {offsets = [3, 0], sizes = [14, 4], strides = [1, 1]} : vector<20x4xbf16> to vector<14x4xbf16>
    %174 = vector.extract_strided_slice %147 {offsets = [3, 0], sizes = [14, 4], strides = [1, 1]} : vector<20x4xbf16> to vector<14x4xbf16>
    %175 = vector.extract_strided_slice %150 {offsets = [3, 0], sizes = [14, 4], strides = [1, 1]} : vector<20x4xbf16> to vector<14x4xbf16>
    %176 = tpu.concatenate %169, %170, %171, %172, %173, %174, %175 in 0 : vector<14x4xbf16>, vector<14x4xbf16>, vector<14x4xbf16>, vector<14x4xbf16>, vector<14x4xbf16>, vector<14x4xbf16>, vector<14x4xbf16> -> vector<98x4xbf16>
    %c0_121 = arith.constant 0 : index
    %c1_122 = arith.constant 1 : index
    %c0_123 = arith.constant 0 : index
    %c0_124 = arith.constant 0 : index
    %177 = vector.load %arg21[%c0_121, %c1_122, %c0_123, %c0_124] : memref<3x3x4x128xbf16, #tpu.memory_space<vmem>>, vector<1x1x4x128xbf16>
    %178 = vector.shape_cast %177 : vector<1x1x4x128xbf16> to vector<4x128xbf16>
    %cst_125 = arith.constant dense<0.000000e+00> : vector<98x128xf32>
    %179 = tpu.matmul %176, %178, %cst_125 {dimension_numbers = #tpu.dot_dimension_numbers<[1], [0], [0], [1], [0, 0, 1, 1], [], []>} : vector<98x4xbf16>, vector<4x128xbf16>, vector<98x128xf32> -> vector<98x128xf32>
    %180 = arith.addf %168, %179 : vector<98x128xf32>
    %181 = vector.extract_strided_slice %132 {offsets = [4, 0], sizes = [14, 4], strides = [1, 1]} : vector<20x4xbf16> to vector<14x4xbf16>
    %182 = vector.extract_strided_slice %135 {offsets = [4, 0], sizes = [14, 4], strides = [1, 1]} : vector<20x4xbf16> to vector<14x4xbf16>
    %183 = vector.extract_strided_slice %138 {offsets = [4, 0], sizes = [14, 4], strides = [1, 1]} : vector<20x4xbf16> to vector<14x4xbf16>
    %184 = vector.extract_strided_slice %141 {offsets = [4, 0], sizes = [14, 4], strides = [1, 1]} : vector<20x4xbf16> to vector<14x4xbf16>
    %185 = vector.extract_strided_slice %144 {offsets = [4, 0], sizes = [14, 4], strides = [1, 1]} : vector<20x4xbf16> to vector<14x4xbf16>
    %186 = vector.extract_strided_slice %147 {offsets = [4, 0], sizes = [14, 4], strides = [1, 1]} : vector<20x4xbf16> to vector<14x4xbf16>
    %187 = vector.extract_strided_slice %150 {offsets = [4, 0], sizes = [14, 4], strides = [1, 1]} : vector<20x4xbf16> to vector<14x4xbf16>
    %188 = tpu.concatenate %181, %182, %183, %184, %185, %186, %187 in 0 : vector<14x4xbf16>, vector<14x4xbf16>, vector<14x4xbf16>, vector<14x4xbf16>, vector<14x4xbf16>, vector<14x4xbf16>, vector<14x4xbf16> -> vector<98x4xbf16>
    %c0_126 = arith.constant 0 : index
    %c2_127 = arith.constant 2 : index
    %c0_128 = arith.constant 0 : index
    %c0_129 = arith.constant 0 : index
    %189 = vector.load %arg21[%c0_126, %c2_127, %c0_128, %c0_129] : memref<3x3x4x128xbf16, #tpu.memory_space<vmem>>, vector<1x1x4x128xbf16>
    %190 = vector.shape_cast %189 : vector<1x1x4x128xbf16> to vector<4x128xbf16>
    %cst_130 = arith.constant dense<0.000000e+00> : vector<98x128xf32>
    %191 = tpu.matmul %188, %190, %cst_130 {dimension_numbers = #tpu.dot_dimension_numbers<[1], [0], [0], [1], [0, 0, 1, 1], [], []>} : vector<98x4xbf16>, vector<4x128xbf16>, vector<98x128xf32> -> vector<98x128xf32>
    %192 = arith.addf %180, %191 : vector<98x128xf32>
    %193 = vector.extract_strided_slice %135 {offsets = [2, 0], sizes = [14, 4], strides = [1, 1]} : vector<20x4xbf16> to vector<14x4xbf16>
    %194 = vector.extract_strided_slice %138 {offsets = [2, 0], sizes = [14, 4], strides = [1, 1]} : vector<20x4xbf16> to vector<14x4xbf16>
    %195 = vector.extract_strided_slice %141 {offsets = [2, 0], sizes = [14, 4], strides = [1, 1]} : vector<20x4xbf16> to vector<14x4xbf16>
    %196 = vector.extract_strided_slice %144 {offsets = [2, 0], sizes = [14, 4], strides = [1, 1]} : vector<20x4xbf16> to vector<14x4xbf16>
    %197 = vector.extract_strided_slice %147 {offsets = [2, 0], sizes = [14, 4], strides = [1, 1]} : vector<20x4xbf16> to vector<14x4xbf16>
    %198 = vector.extract_strided_slice %150 {offsets = [2, 0], sizes = [14, 4], strides = [1, 1]} : vector<20x4xbf16> to vector<14x4xbf16>
    %199 = vector.extract_strided_slice %153 {offsets = [2, 0], sizes = [14, 4], strides = [1, 1]} : vector<20x4xbf16> to vector<14x4xbf16>
    %200 = tpu.concatenate %193, %194, %195, %196, %197, %198, %199 in 0 : vector<14x4xbf16>, vector<14x4xbf16>, vector<14x4xbf16>, vector<14x4xbf16>, vector<14x4xbf16>, vector<14x4xbf16>, vector<14x4xbf16> -> vector<98x4xbf16>
    %c1_131 = arith.constant 1 : index
    %c0_132 = arith.constant 0 : index
    %c0_133 = arith.constant 0 : index
    %c0_134 = arith.constant 0 : index
    %201 = vector.load %arg21[%c1_131, %c0_132, %c0_133, %c0_134] : memref<3x3x4x128xbf16, #tpu.memory_space<vmem>>, vector<1x1x4x128xbf16>
    %202 = vector.shape_cast %201 : vector<1x1x4x128xbf16> to vector<4x128xbf16>
    %cst_135 = arith.constant dense<0.000000e+00> : vector<98x128xf32>
    %203 = tpu.matmul %200, %202, %cst_135 {dimension_numbers = #tpu.dot_dimension_numbers<[1], [0], [0], [1], [0, 0, 1, 1], [], []>} : vector<98x4xbf16>, vector<4x128xbf16>, vector<98x128xf32> -> vector<98x128xf32>
    %204 = arith.addf %192, %203 : vector<98x128xf32>
    %205 = vector.extract_strided_slice %135 {offsets = [3, 0], sizes = [14, 4], strides = [1, 1]} : vector<20x4xbf16> to vector<14x4xbf16>
    %206 = vector.extract_strided_slice %138 {offsets = [3, 0], sizes = [14, 4], strides = [1, 1]} : vector<20x4xbf16> to vector<14x4xbf16>
    %207 = vector.extract_strided_slice %141 {offsets = [3, 0], sizes = [14, 4], strides = [1, 1]} : vector<20x4xbf16> to vector<14x4xbf16>
    %208 = vector.extract_strided_slice %144 {offsets = [3, 0], sizes = [14, 4], strides = [1, 1]} : vector<20x4xbf16> to vector<14x4xbf16>
    %209 = vector.extract_strided_slice %147 {offsets = [3, 0], sizes = [14, 4], strides = [1, 1]} : vector<20x4xbf16> to vector<14x4xbf16>
    %210 = vector.extract_strided_slice %150 {offsets = [3, 0], sizes = [14, 4], strides = [1, 1]} : vector<20x4xbf16> to vector<14x4xbf16>
    %211 = vector.extract_strided_slice %153 {offsets = [3, 0], sizes = [14, 4], strides = [1, 1]} : vector<20x4xbf16> to vector<14x4xbf16>
    %212 = tpu.concatenate %205, %206, %207, %208, %209, %210, %211 in 0 : vector<14x4xbf16>, vector<14x4xbf16>, vector<14x4xbf16>, vector<14x4xbf16>, vector<14x4xbf16>, vector<14x4xbf16>, vector<14x4xbf16> -> vector<98x4xbf16>
    %c1_136 = arith.constant 1 : index
    %c1_137 = arith.constant 1 : index
    %c0_138 = arith.constant 0 : index
    %c0_139 = arith.constant 0 : index
    %213 = vector.load %arg21[%c1_136, %c1_137, %c0_138, %c0_139] : memref<3x3x4x128xbf16, #tpu.memory_space<vmem>>, vector<1x1x4x128xbf16>
    %214 = vector.shape_cast %213 : vector<1x1x4x128xbf16> to vector<4x128xbf16>
    %cst_140 = arith.constant dense<0.000000e+00> : vector<98x128xf32>
    %215 = tpu.matmul %212, %214, %cst_140 {dimension_numbers = #tpu.dot_dimension_numbers<[1], [0], [0], [1], [0, 0, 1, 1], [], []>} : vector<98x4xbf16>, vector<4x128xbf16>, vector<98x128xf32> -> vector<98x128xf32>
    %216 = arith.addf %204, %215 : vector<98x128xf32>
    %217 = vector.extract_strided_slice %135 {offsets = [4, 0], sizes = [14, 4], strides = [1, 1]} : vector<20x4xbf16> to vector<14x4xbf16>
    %218 = vector.extract_strided_slice %138 {offsets = [4, 0], sizes = [14, 4], strides = [1, 1]} : vector<20x4xbf16> to vector<14x4xbf16>
    %219 = vector.extract_strided_slice %141 {offsets = [4, 0], sizes = [14, 4], strides = [1, 1]} : vector<20x4xbf16> to vector<14x4xbf16>
    %220 = vector.extract_strided_slice %144 {offsets = [4, 0], sizes = [14, 4], strides = [1, 1]} : vector<20x4xbf16> to vector<14x4xbf16>
    %221 = vector.extract_strided_slice %147 {offsets = [4, 0], sizes = [14, 4], strides = [1, 1]} : vector<20x4xbf16> to vector<14x4xbf16>
    %222 = vector.extract_strided_slice %150 {offsets = [4, 0], sizes = [14, 4], strides = [1, 1]} : vector<20x4xbf16> to vector<14x4xbf16>
    %223 = vector.extract_strided_slice %153 {offsets = [4, 0], sizes = [14, 4], strides = [1, 1]} : vector<20x4xbf16> to vector<14x4xbf16>
    %224 = tpu.concatenate %217, %218, %219, %220, %221, %222, %223 in 0 : vector<14x4xbf16>, vector<14x4xbf16>, vector<14x4xbf16>, vector<14x4xbf16>, vector<14x4xbf16>, vector<14x4xbf16>, vector<14x4xbf16> -> vector<98x4xbf16>
    %c1_141 = arith.constant 1 : index
    %c2_142 = arith.constant 2 : index
    %c0_143 = arith.constant 0 : index
    %c0_144 = arith.constant 0 : index
    %225 = vector.load %arg21[%c1_141, %c2_142, %c0_143, %c0_144] : memref<3x3x4x128xbf16, #tpu.memory_space<vmem>>, vector<1x1x4x128xbf16>
    %226 = vector.shape_cast %225 : vector<1x1x4x128xbf16> to vector<4x128xbf16>
    %cst_145 = arith.constant dense<0.000000e+00> : vector<98x128xf32>
    %227 = tpu.matmul %224, %226, %cst_145 {dimension_numbers = #tpu.dot_dimension_numbers<[1], [0], [0], [1], [0, 0, 1, 1], [], []>} : vector<98x4xbf16>, vector<4x128xbf16>, vector<98x128xf32> -> vector<98x128xf32>
    %228 = arith.addf %216, %227 : vector<98x128xf32>
    %229 = vector.extract_strided_slice %138 {offsets = [2, 0], sizes = [14, 4], strides = [1, 1]} : vector<20x4xbf16> to vector<14x4xbf16>
    %230 = vector.extract_strided_slice %141 {offsets = [2, 0], sizes = [14, 4], strides = [1, 1]} : vector<20x4xbf16> to vector<14x4xbf16>
    %231 = vector.extract_strided_slice %144 {offsets = [2, 0], sizes = [14, 4], strides = [1, 1]} : vector<20x4xbf16> to vector<14x4xbf16>
    %232 = vector.extract_strided_slice %147 {offsets = [2, 0], sizes = [14, 4], strides = [1, 1]} : vector<20x4xbf16> to vector<14x4xbf16>
    %233 = vector.extract_strided_slice %150 {offsets = [2, 0], sizes = [14, 4], strides = [1, 1]} : vector<20x4xbf16> to vector<14x4xbf16>
    %234 = vector.extract_strided_slice %153 {offsets = [2, 0], sizes = [14, 4], strides = [1, 1]} : vector<20x4xbf16> to vector<14x4xbf16>
    %235 = vector.extract_strided_slice %156 {offsets = [2, 0], sizes = [14, 4], strides = [1, 1]} : vector<20x4xbf16> to vector<14x4xbf16>
    %236 = tpu.concatenate %229, %230, %231, %232, %233, %234, %235 in 0 : vector<14x4xbf16>, vector<14x4xbf16>, vector<14x4xbf16>, vector<14x4xbf16>, vector<14x4xbf16>, vector<14x4xbf16>, vector<14x4xbf16> -> vector<98x4xbf16>
    %c2_146 = arith.constant 2 : index
    %c0_147 = arith.constant 0 : index
    %c0_148 = arith.constant 0 : index
    %c0_149 = arith.constant 0 : index
    %237 = vector.load %arg21[%c2_146, %c0_147, %c0_148, %c0_149] : memref<3x3x4x128xbf16, #tpu.memory_space<vmem>>, vector<1x1x4x128xbf16>
    %238 = vector.shape_cast %237 : vector<1x1x4x128xbf16> to vector<4x128xbf16>
    %cst_150 = arith.constant dense<0.000000e+00> : vector<98x128xf32>
    %239 = tpu.matmul %236, %238, %cst_150 {dimension_numbers = #tpu.dot_dimension_numbers<[1], [0], [0], [1], [0, 0, 1, 1], [], []>} : vector<98x4xbf16>, vector<4x128xbf16>, vector<98x128xf32> -> vector<98x128xf32>
    %240 = arith.addf %228, %239 : vector<98x128xf32>
    %241 = vector.extract_strided_slice %138 {offsets = [3, 0], sizes = [14, 4], strides = [1, 1]} : vector<20x4xbf16> to vector<14x4xbf16>
    %242 = vector.extract_strided_slice %141 {offsets = [3, 0], sizes = [14, 4], strides = [1, 1]} : vector<20x4xbf16> to vector<14x4xbf16>
    %243 = vector.extract_strided_slice %144 {offsets = [3, 0], sizes = [14, 4], strides = [1, 1]} : vector<20x4xbf16> to vector<14x4xbf16>
    %244 = vector.extract_strided_slice %147 {offsets = [3, 0], sizes = [14, 4], strides = [1, 1]} : vector<20x4xbf16> to vector<14x4xbf16>
    %245 = vector.extract_strided_slice %150 {offsets = [3, 0], sizes = [14, 4], strides = [1, 1]} : vector<20x4xbf16> to vector<14x4xbf16>
    %246 = vector.extract_strided_slice %153 {offsets = [3, 0], sizes = [14, 4], strides = [1, 1]} : vector<20x4xbf16> to vector<14x4xbf16>
    %247 = vector.extract_strided_slice %156 {offsets = [3, 0], sizes = [14, 4], strides = [1, 1]} : vector<20x4xbf16> to vector<14x4xbf16>
    %248 = tpu.concatenate %241, %242, %243, %244, %245, %246, %247 in 0 : vector<14x4xbf16>, vector<14x4xbf16>, vector<14x4xbf16>, vector<14x4xbf16>, vector<14x4xbf16>, vector<14x4xbf16>, vector<14x4xbf16> -> vector<98x4xbf16>
    %c2_151 = arith.constant 2 : index
    %c1_152 = arith.constant 1 : index
    %c0_153 = arith.constant 0 : index
    %c0_154 = arith.constant 0 : index
    %249 = vector.load %arg21[%c2_151, %c1_152, %c0_153, %c0_154] : memref<3x3x4x128xbf16, #tpu.memory_space<vmem>>, vector<1x1x4x128xbf16>
    %250 = vector.shape_cast %249 : vector<1x1x4x128xbf16> to vector<4x128xbf16>
    %cst_155 = arith.constant dense<0.000000e+00> : vector<98x128xf32>
    %251 = tpu.matmul %248, %250, %cst_155 {dimension_numbers = #tpu.dot_dimension_numbers<[1], [0], [0], [1], [0, 0, 1, 1], [], []>} : vector<98x4xbf16>, vector<4x128xbf16>, vector<98x128xf32> -> vector<98x128xf32>
    %252 = arith.addf %240, %251 : vector<98x128xf32>
    %253 = vector.extract_strided_slice %138 {offsets = [4, 0], sizes = [14, 4], strides = [1, 1]} : vector<20x4xbf16> to vector<14x4xbf16>
    %254 = vector.extract_strided_slice %141 {offsets = [4, 0], sizes = [14, 4], strides = [1, 1]} : vector<20x4xbf16> to vector<14x4xbf16>
    %255 = vector.extract_strided_slice %144 {offsets = [4, 0], sizes = [14, 4], strides = [1, 1]} : vector<20x4xbf16> to vector<14x4xbf16>
    %256 = vector.extract_strided_slice %147 {offsets = [4, 0], sizes = [14, 4], strides = [1, 1]} : vector<20x4xbf16> to vector<14x4xbf16>
    %257 = vector.extract_strided_slice %150 {offsets = [4, 0], sizes = [14, 4], strides = [1, 1]} : vector<20x4xbf16> to vector<14x4xbf16>
    %258 = vector.extract_strided_slice %153 {offsets = [4, 0], sizes = [14, 4], strides = [1, 1]} : vector<20x4xbf16> to vector<14x4xbf16>
    %259 = vector.extract_strided_slice %156 {offsets = [4, 0], sizes = [14, 4], strides = [1, 1]} : vector<20x4xbf16> to vector<14x4xbf16>
    %260 = tpu.concatenate %253, %254, %255, %256, %257, %258, %259 in 0 : vector<14x4xbf16>, vector<14x4xbf16>, vector<14x4xbf16>, vector<14x4xbf16>, vector<14x4xbf16>, vector<14x4xbf16>, vector<14x4xbf16> -> vector<98x4xbf16>
    %c2_156 = arith.constant 2 : index
    %c2_157 = arith.constant 2 : index
    %c0_158 = arith.constant 0 : index
    %c0_159 = arith.constant 0 : index
    %261 = vector.load %arg21[%c2_156, %c2_157, %c0_158, %c0_159] : memref<3x3x4x128xbf16, #tpu.memory_space<vmem>>, vector<1x1x4x128xbf16>
    %262 = vector.shape_cast %261 : vector<1x1x4x128xbf16> to vector<4x128xbf16>
    %cst_160 = arith.constant dense<0.000000e+00> : vector<98x128xf32>
    %263 = tpu.matmul %260, %262, %cst_160 {dimension_numbers = #tpu.dot_dimension_numbers<[1], [0], [0], [1], [0, 0, 1, 1], [], []>} : vector<98x4xbf16>, vector<4x128xbf16>, vector<98x128xf32> -> vector<98x128xf32>
    %264 = arith.addf %252, %263 : vector<98x128xf32>
    %265 = vector.extract_strided_slice %264 {offsets = [0, 0], sizes = [14, 128], strides = [1, 1]} : vector<98x128xf32> to vector<14x128xf32>
    %cst_161 = arith.constant 0.000000e+00 : f32
    %266 = vector.broadcast %cst_161 : f32 to vector<14x128xf32>
    %267 = arith.maximumf %265, %266 : vector<14x128xf32>
    %268 = arith.truncf %267 : vector<14x128xf32> to vector<14x128xbf16>
    %c0_162 = arith.constant 0 : index
    %c0_163 = arith.constant 0 : index
    %c0_164 = arith.constant 0 : index
    %c0_165 = arith.constant 0 : index
    %269 = vector.load %arg23[%c0_162, %c0_163, %c0_164, %c0_165] : memref<1x7x14x128xbf16, #tpu.memory_space<vmem>>, vector<1x1x14x128xbf16>
    %270 = vector.shape_cast %269 : vector<1x1x14x128xbf16> to vector<14x128xbf16>
    %271 = vector.shape_cast %268 : vector<14x128xbf16> to vector<1x1x14x128xbf16>
    tpu.vector_store %arg23[%c0_162, %c0_163, %c0_164, %c0_165], %271 {strides = array<i32>} : memref<1x7x14x128xbf16, #tpu.memory_space<vmem>>, vector<1x1x14x128xbf16>,
    %272 = vector.extract_strided_slice %264 {offsets = [14, 0], sizes = [14, 128], strides = [1, 1]} : vector<98x128xf32> to vector<14x128xf32>
    %cst_166 = arith.constant 0.000000e+00 : f32
    %273 = vector.broadcast %cst_166 : f32 to vector<14x128xf32>
    %274 = arith.maximumf %272, %273 : vector<14x128xf32>
    %275 = arith.truncf %274 : vector<14x128xf32> to vector<14x128xbf16>
    %c0_167 = arith.constant 0 : index
    %c1_168 = arith.constant 1 : index
    %c0_169 = arith.constant 0 : index
    %c0_170 = arith.constant 0 : index
    %276 = vector.load %arg23[%c0_167, %c1_168, %c0_169, %c0_170] : memref<1x7x14x128xbf16, #tpu.memory_space<vmem>>, vector<1x1x14x128xbf16>
    %277 = vector.shape_cast %276 : vector<1x1x14x128xbf16> to vector<14x128xbf16>
    %278 = vector.shape_cast %275 : vector<14x128xbf16> to vector<1x1x14x128xbf16>
    tpu.vector_store %arg23[%c0_167, %c1_168, %c0_169, %c0_170], %278 {strides = array<i32>} : memref<1x7x14x128xbf16, #tpu.memory_space<vmem>>, vector<1x1x14x128xbf16>,
    %279 = vector.extract_strided_slice %264 {offsets = [28, 0], sizes = [14, 128], strides = [1, 1]} : vector<98x128xf32> to vector<14x128xf32>
    %cst_171 = arith.constant 0.000000e+00 : f32
    %280 = vector.broadcast %cst_171 : f32 to vector<14x128xf32>
    %281 = arith.maximumf %279, %280 : vector<14x128xf32>
    %282 = arith.truncf %281 : vector<14x128xf32> to vector<14x128xbf16>
    %c0_172 = arith.constant 0 : index
    %c2_173 = arith.constant 2 : index
    %c0_174 = arith.constant 0 : index
    %c0_175 = arith.constant 0 : index
    %283 = vector.load %arg23[%c0_172, %c2_173, %c0_174, %c0_175] : memref<1x7x14x128xbf16, #tpu.memory_space<vmem>>, vector<1x1x14x128xbf16>
    %284 = vector.shape_cast %283 : vector<1x1x14x128xbf16> to vector<14x128xbf16>
    %285 = vector.shape_cast %282 : vector<14x128xbf16> to vector<1x1x14x128xbf16>
    tpu.vector_store %arg23[%c0_172, %c2_173, %c0_174, %c0_175], %285 {strides = array<i32>} : memref<1x7x14x128xbf16, #tpu.memory_space<vmem>>, vector<1x1x14x128xbf16>,
    %286 = vector.extract_strided_slice %264 {offsets = [42, 0], sizes = [14, 128], strides = [1, 1]} : vector<98x128xf32> to vector<14x128xf32>
    %cst_176 = arith.constant 0.000000e+00 : f32
    %287 = vector.broadcast %cst_176 : f32 to vector<14x128xf32>
    %288 = arith.maximumf %286, %287 : vector<14x128xf32>
    %289 = arith.truncf %288 : vector<14x128xf32> to vector<14x128xbf16>
    %c0_177 = arith.constant 0 : index
    %c3 = arith.constant 3 : index
    %c0_178 = arith.constant 0 : index
    %c0_179 = arith.constant 0 : index
    %290 = vector.load %arg23[%c0_177, %c3, %c0_178, %c0_179] : memref<1x7x14x128xbf16, #tpu.memory_space<vmem>>, vector<1x1x14x128xbf16>
    %291 = vector.shape_cast %290 : vector<1x1x14x128xbf16> to vector<14x128xbf16>
    %292 = vector.shape_cast %289 : vector<14x128xbf16> to vector<1x1x14x128xbf16>
    tpu.vector_store %arg23[%c0_177, %c3, %c0_178, %c0_179], %292 {strides = array<i32>} : memref<1x7x14x128xbf16, #tpu.memory_space<vmem>>, vector<1x1x14x128xbf16>,
    %293 = vector.extract_strided_slice %264 {offsets = [56, 0], sizes = [14, 128], strides = [1, 1]} : vector<98x128xf32> to vector<14x128xf32>
    %cst_180 = arith.constant 0.000000e+00 : f32
    %294 = vector.broadcast %cst_180 : f32 to vector<14x128xf32>
    %295 = arith.maximumf %293, %294 : vector<14x128xf32>
    %296 = arith.truncf %295 : vector<14x128xf32> to vector<14x128xbf16>
    %c0_181 = arith.constant 0 : index
    %c4 = arith.constant 4 : index
    %c0_182 = arith.constant 0 : index
    %c0_183 = arith.constant 0 : index
    %297 = vector.load %arg23[%c0_181, %c4, %c0_182, %c0_183] : memref<1x7x14x128xbf16, #tpu.memory_space<vmem>>, vector<1x1x14x128xbf16>
    %298 = vector.shape_cast %297 : vector<1x1x14x128xbf16> to vector<14x128xbf16>
    %299 = vector.shape_cast %296 : vector<14x128xbf16> to vector<1x1x14x128xbf16>
    tpu.vector_store %arg23[%c0_181, %c4, %c0_182, %c0_183], %299 {strides = array<i32>} : memref<1x7x14x128xbf16, #tpu.memory_space<vmem>>, vector<1x1x14x128xbf16>,
    %300 = vector.extract_strided_slice %264 {offsets = [70, 0], sizes = [14, 128], strides = [1, 1]} : vector<98x128xf32> to vector<14x128xf32>
    %cst_184 = arith.constant 0.000000e+00 : f32
    %301 = vector.broadcast %cst_184 : f32 to vector<14x128xf32>
    %302 = arith.maximumf %300, %301 : vector<14x128xf32>
    %303 = arith.truncf %302 : vector<14x128xf32> to vector<14x128xbf16>
    %c0_185 = arith.constant 0 : index
    %c5 = arith.constant 5 : index
    %c0_186 = arith.constant 0 : index
    %c0_187 = arith.constant 0 : index
    %304 = vector.load %arg23[%c0_185, %c5, %c0_186, %c0_187] : memref<1x7x14x128xbf16, #tpu.memory_space<vmem>>, vector<1x1x14x128xbf16>
    %305 = vector.shape_cast %304 : vector<1x1x14x128xbf16> to vector<14x128xbf16>
    %306 = vector.shape_cast %303 : vector<14x128xbf16> to vector<1x1x14x128xbf16>
    tpu.vector_store %arg23[%c0_185, %c5, %c0_186, %c0_187], %306 {strides = array<i32>} : memref<1x7x14x128xbf16, #tpu.memory_space<vmem>>, vector<1x1x14x128xbf16>,
    %307 = vector.extract_strided_slice %264 {offsets = [84, 0], sizes = [14, 128], strides = [1, 1]} : vector<98x128xf32> to vector<14x128xf32>
    %cst_188 = arith.constant 0.000000e+00 : f32
    %308 = vector.broadcast %cst_188 : f32 to vector<14x128xf32>
    %309 = arith.maximumf %307, %308 : vector<14x128xf32>
    %310 = arith.truncf %309 : vector<14x128xf32> to vector<14x128xbf16>
    %c0_189 = arith.constant 0 : index
    %c6 = arith.constant 6 : index
    %c0_190 = arith.constant 0 : index
    %c0_191 = arith.constant 0 : index
    %311 = vector.load %arg23[%c0_189, %c6, %c0_190, %c0_191] : memref<1x7x14x128xbf16, #tpu.memory_space<vmem>>, vector<1x1x14x128xbf16>
    %312 = vector.shape_cast %311 : vector<1x1x14x128xbf16> to vector<14x128xbf16>
    %313 = vector.shape_cast %310 : vector<14x128xbf16> to vector<1x1x14x128xbf16>
    tpu.vector_store %arg23[%c0_189, %c6, %c0_190, %c0_191], %313 {strides = array<i32>} : memref<1x7x14x128xbf16, #tpu.memory_space<vmem>>, vector<1x1x14x128xbf16>,
    return
  }
  func.func @transform_0(%arg0: i32, %arg1: i32) -> (i32, i32, i32, i32) {
    %c7_i32 = arith.constant 7 : i32
    %0 = arith.muli %arg1, %c7_i32 : i32
    %c0_i32 = arith.constant 0 : i32
    %1 = arith.addi %0, %c0_i32 : i32
    %c0_i32_0 = arith.constant 0 : i32
    %2 = arith.addi %1, %c0_i32_0 : i32
    %c0_i32_1 = arith.constant 0 : i32
    %c0_i32_2 = arith.constant 0 : i32
    %c0_i32_3 = arith.constant 0 : i32
    return %arg0, %2, %c0_i32_1, %c0_i32_2 : i32, i32, i32, i32
  }
  func.func @transform_1(%arg0: i32, %arg1: i32) -> (i32, i32, i32, i32) {
    %c7_i32 = arith.constant 7 : i32
    %0 = arith.muli %arg1, %c7_i32 : i32
    %c1_i32 = arith.constant 1 : i32
    %1 = arith.addi %0, %c1_i32 : i32
    %c0_i32 = arith.constant 0 : i32
    %2 = arith.addi %1, %c0_i32 : i32
    %c0_i32_0 = arith.constant 0 : i32
    %c0_i32_1 = arith.constant 0 : i32
    %c0_i32_2 = arith.constant 0 : i32
    return %arg0, %2, %c0_i32_0, %c0_i32_1 : i32, i32, i32, i32
  }
  func.func @transform_2(%arg0: i32, %arg1: i32) -> (i32, i32, i32, i32) {
    %c7_i32 = arith.constant 7 : i32
    %0 = arith.muli %arg1, %c7_i32 : i32
    %c2_i32 = arith.constant 2 : i32
    %1 = arith.addi %0, %c2_i32 : i32
    %c0_i32 = arith.constant 0 : i32
    %2 = arith.addi %1, %c0_i32 : i32
    %c0_i32_0 = arith.constant 0 : i32
    %c0_i32_1 = arith.constant 0 : i32
    %c0_i32_2 = arith.constant 0 : i32
    return %arg0, %2, %c0_i32_0, %c0_i32_1 : i32, i32, i32, i32
  }
  func.func @transform_3(%arg0: i32, %arg1: i32) -> (i32, i32, i32, i32) {
    %c7_i32 = arith.constant 7 : i32
    %0 = arith.muli %arg1, %c7_i32 : i32
    %c3_i32 = arith.constant 3 : i32
    %1 = arith.addi %0, %c3_i32 : i32
    %c0_i32 = arith.constant 0 : i32
    %2 = arith.addi %1, %c0_i32 : i32
    %c0_i32_0 = arith.constant 0 : i32
    %c0_i32_1 = arith.constant 0 : i32
    %c0_i32_2 = arith.constant 0 : i32
    return %arg0, %2, %c0_i32_0, %c0_i32_1 : i32, i32, i32, i32
  }
  func.func @transform_4(%arg0: i32, %arg1: i32) -> (i32, i32, i32, i32) {
    %c7_i32 = arith.constant 7 : i32
    %0 = arith.muli %arg1, %c7_i32 : i32
    %c4_i32 = arith.constant 4 : i32
    %1 = arith.addi %0, %c4_i32 : i32
    %c0_i32 = arith.constant 0 : i32
    %2 = arith.addi %1, %c0_i32 : i32
    %c0_i32_0 = arith.constant 0 : i32
    %c0_i32_1 = arith.constant 0 : i32
    %c0_i32_2 = arith.constant 0 : i32
    return %arg0, %2, %c0_i32_0, %c0_i32_1 : i32, i32, i32, i32
  }
  func.func @transform_5(%arg0: i32, %arg1: i32) -> (i32, i32, i32, i32) {
    %c7_i32 = arith.constant 7 : i32
    %0 = arith.muli %arg1, %c7_i32 : i32
    %c5_i32 = arith.constant 5 : i32
    %1 = arith.addi %0, %c5_i32 : i32
    %c0_i32 = arith.constant 0 : i32
    %2 = arith.addi %1, %c0_i32 : i32
    %c0_i32_0 = arith.constant 0 : i32
    %c0_i32_1 = arith.constant 0 : i32
    %c0_i32_2 = arith.constant 0 : i32
    return %arg0, %2, %c0_i32_0, %c0_i32_1 : i32, i32, i32, i32
  }
  func.func @transform_6(%arg0: i32, %arg1: i32) -> (i32, i32, i32, i32) {
    %c7_i32 = arith.constant 7 : i32
    %0 = arith.muli %arg1, %c7_i32 : i32
    %c6_i32 = arith.constant 6 : i32
    %1 = arith.addi %0, %c6_i32 : i32
    %c0_i32 = arith.constant 0 : i32
    %2 = arith.addi %1, %c0_i32 : i32
    %c0_i32_0 = arith.constant 0 : i32
    %c0_i32_1 = arith.constant 0 : i32
    %c0_i32_2 = arith.constant 0 : i32
    return %arg0, %2, %c0_i32_0, %c0_i32_1 : i32, i32, i32, i32
  }
  func.func @transform_7(%arg0: i32, %arg1: i32) -> (i32, i32, i32, i32) {
    %c7_i32 = arith.constant 7 : i32
    %0 = arith.muli %arg1, %c7_i32 : i32
    %c7_i32_0 = arith.constant 7 : i32
    %1 = arith.addi %0, %c7_i32_0 : i32
    %c0_i32 = arith.constant 0 : i32
    %2 = arith.addi %1, %c0_i32 : i32
    %c0_i32_1 = arith.constant 0 : i32
    %c0_i32_2 = arith.constant 0 : i32
    %c0_i32_3 = arith.constant 0 : i32
    return %arg0, %2, %c0_i32_1, %c0_i32_2 : i32, i32, i32, i32
  }
  func.func @transform_8(%arg0: i32, %arg1: i32) -> (i32, i32, i32, i32) {
    %c7_i32 = arith.constant 7 : i32
    %0 = arith.muli %arg1, %c7_i32 : i32
    %c8_i32 = arith.constant 8 : i32
    %1 = arith.addi %0, %c8_i32 : i32
    %c0_i32 = arith.constant 0 : i32
    %2 = arith.addi %1, %c0_i32 : i32
    %c0_i32_0 = arith.constant 0 : i32
    %c0_i32_1 = arith.constant 0 : i32
    %c0_i32_2 = arith.constant 0 : i32
    return %arg0, %2, %c0_i32_0, %c0_i32_1 : i32, i32, i32, i32
  }
  func.func @transform_9(%arg0: i32, %arg1: i32) -> (i32, i32, i32, i32) {
    %c0_i32 = arith.constant 0 : i32
    %c0_i32_0 = arith.constant 0 : i32
    %c0_i32_1 = arith.constant 0 : i32
    %c0_i32_2 = arith.constant 0 : i32
    %c0_i32_3 = arith.constant 0 : i32
    return %c0_i32, %c0_i32_0, %c0_i32_1, %c0_i32_2 : i32, i32, i32, i32
  }
  func.func @transform_10(%arg0: i32, %arg1: i32) -> (i32, i32, i32, i32) {
    %c7_i32 = arith.constant 7 : i32
    %0 = arith.muli %arg1, %c7_i32 : i32
    %c0_i32 = arith.constant 0 : i32
    %1 = arith.addi %0, %c0_i32 : i32
    %c2_i32 = arith.constant 2 : i32
    %2 = arith.addi %1, %c2_i32 : i32
    %c0_i32_0 = arith.constant 0 : i32
    %c0_i32_1 = arith.constant 0 : i32
    %c0_i32_2 = arith.constant 0 : i32
    return %arg0, %2, %c0_i32_0, %c0_i32_1 : i32, i32, i32, i32
  }
  func.func @transform_11(%arg0: i32, %arg1: i32) -> (i32, i32, i32, i32) {
    %c7_i32 = arith.constant 7 : i32
    %0 = arith.muli %arg1, %c7_i32 : i32
    %c1_i32 = arith.constant 1 : i32
    %1 = arith.addi %0, %c1_i32 : i32
    %c2_i32 = arith.constant 2 : i32
    %2 = arith.addi %1, %c2_i32 : i32
    %c0_i32 = arith.constant 0 : i32
    %c0_i32_0 = arith.constant 0 : i32
    %c0_i32_1 = arith.constant 0 : i32
    return %arg0, %2, %c0_i32, %c0_i32_0 : i32, i32, i32, i32
  }
  func.func @transform_12(%arg0: i32, %arg1: i32) -> (i32, i32, i32, i32) {
    %c7_i32 = arith.constant 7 : i32
    %0 = arith.muli %arg1, %c7_i32 : i32
    %c2_i32 = arith.constant 2 : i32
    %1 = arith.addi %0, %c2_i32 : i32
    %c2_i32_0 = arith.constant 2 : i32
    %2 = arith.addi %1, %c2_i32_0 : i32
    %c0_i32 = arith.constant 0 : i32
    %c0_i32_1 = arith.constant 0 : i32
    %c0_i32_2 = arith.constant 0 : i32
    return %arg0, %2, %c0_i32, %c0_i32_1 : i32, i32, i32, i32
  }
  func.func @transform_13(%arg0: i32, %arg1: i32) -> (i32, i32, i32, i32) {
    %c7_i32 = arith.constant 7 : i32
    %0 = arith.muli %arg1, %c7_i32 : i32
    %c3_i32 = arith.constant 3 : i32
    %1 = arith.addi %0, %c3_i32 : i32
    %c2_i32 = arith.constant 2 : i32
    %2 = arith.addi %1, %c2_i32 : i32
    %c0_i32 = arith.constant 0 : i32
    %c0_i32_0 = arith.constant 0 : i32
    %c0_i32_1 = arith.constant 0 : i32
    return %arg0, %2, %c0_i32, %c0_i32_0 : i32, i32, i32, i32
  }
  func.func @transform_14(%arg0: i32, %arg1: i32) -> (i32, i32, i32, i32) {
    %c7_i32 = arith.constant 7 : i32
    %0 = arith.muli %arg1, %c7_i32 : i32
    %c4_i32 = arith.constant 4 : i32
    %1 = arith.addi %0, %c4_i32 : i32
    %c2_i32 = arith.constant 2 : i32
    %2 = arith.addi %1, %c2_i32 : i32
    %c0_i32 = arith.constant 0 : i32
    %c0_i32_0 = arith.constant 0 : i32
    %c0_i32_1 = arith.constant 0 : i32
    return %arg0, %2, %c0_i32, %c0_i32_0 : i32, i32, i32, i32
  }
  func.func @transform_15(%arg0: i32, %arg1: i32) -> (i32, i32, i32, i32) {
    %c7_i32 = arith.constant 7 : i32
    %0 = arith.muli %arg1, %c7_i32 : i32
    %c5_i32 = arith.constant 5 : i32
    %1 = arith.addi %0, %c5_i32 : i32
    %c2_i32 = arith.constant 2 : i32
    %2 = arith.addi %1, %c2_i32 : i32
    %c0_i32 = arith.constant 0 : i32
    %c0_i32_0 = arith.constant 0 : i32
    %c0_i32_1 = arith.constant 0 : i32
    return %arg0, %2, %c0_i32, %c0_i32_0 : i32, i32, i32, i32
  }
  func.func @transform_16(%arg0: i32, %arg1: i32) -> (i32, i32, i32, i32) {
    %c7_i32 = arith.constant 7 : i32
    %0 = arith.muli %arg1, %c7_i32 : i32
    %c6_i32 = arith.constant 6 : i32
    %1 = arith.addi %0, %c6_i32 : i32
    %c2_i32 = arith.constant 2 : i32
    %2 = arith.addi %1, %c2_i32 : i32
    %c0_i32 = arith.constant 0 : i32
    %c0_i32_0 = arith.constant 0 : i32
    %c0_i32_1 = arith.constant 0 : i32
    return %arg0, %2, %c0_i32, %c0_i32_0 : i32, i32, i32, i32
  }
  func.func @transform_17(%arg0: i32, %arg1: i32) -> (i32, i32, i32, i32) {
    %c7_i32 = arith.constant 7 : i32
    %0 = arith.muli %arg1, %c7_i32 : i32
    %c7_i32_0 = arith.constant 7 : i32
    %1 = arith.addi %0, %c7_i32_0 : i32
    %c2_i32 = arith.constant 2 : i32
    %2 = arith.addi %1, %c2_i32 : i32
    %c0_i32 = arith.constant 0 : i32
    %c0_i32_1 = arith.constant 0 : i32
    %c0_i32_2 = arith.constant 0 : i32
    return %arg0, %2, %c0_i32, %c0_i32_1 : i32, i32, i32, i32
  }
  func.func @transform_18(%arg0: i32, %arg1: i32) -> (i32, i32, i32, i32) {
    %c7_i32 = arith.constant 7 : i32
    %0 = arith.muli %arg1, %c7_i32 : i32
    %c8_i32 = arith.constant 8 : i32
    %1 = arith.addi %0, %c8_i32 : i32
    %c2_i32 = arith.constant 2 : i32
    %2 = arith.addi %1, %c2_i32 : i32
    %c0_i32 = arith.constant 0 : i32
    %c0_i32_0 = arith.constant 0 : i32
    %c0_i32_1 = arith.constant 0 : i32
    return %arg0, %2, %c0_i32, %c0_i32_0 : i32, i32, i32, i32
  }
  func.func @transform_19(%arg0: i32, %arg1: i32) -> (i32, i32, i32, i32) {
    %c0_i32 = arith.constant 0 : i32
    %c0_i32_0 = arith.constant 0 : i32
    %c0_i32_1 = arith.constant 0 : i32
    %c0_i32_2 = arith.constant 0 : i32
    %c0_i32_3 = arith.constant 0 : i32
    return %c0_i32, %c0_i32_0, %c0_i32_1, %c0_i32_2 : i32, i32, i32, i32
  }
  func.func @transform_20(%arg0: i32, %arg1: i32) -> (i32, i32) {
    %c0_i32 = arith.constant 0 : i32
    %c0_i32_0 = arith.constant 0 : i32
    %c0_i32_1 = arith.constant 0 : i32
    return %c0_i32, %c0_i32_0 : i32, i32
  }
  func.func @transform_21(%arg0: i32, %arg1: i32) -> (i32, i32, i32, i32) {
    %c0_i32 = arith.constant 0 : i32
    %c0_i32_0 = arith.constant 0 : i32
    %c0_i32_1 = arith.constant 0 : i32
    return %arg0, %arg1, %c0_i32, %c0_i32_0 : i32, i32, i32, i32
  }
}

module attributes {stable_mosaic.version = 11 : i64} {
  func.func @_conv3x3_relu_kernel(%arg0: i32, %arg1: i32, %arg2: memref<1x1x14x128xbf16, #tpu.memory_space<vmem>>, %arg3: memref<1x1x14x128xbf16, #tpu.memory_space<vmem>>, %arg4: memref<1x1x14x128xbf16, #tpu.memory_space<vmem>>, %arg5: memref<1x1x14x128xbf16, #tpu.memory_space<vmem>>, %arg6: memref<1x1x14x128xbf16, #tpu.memory_space<vmem>>, %arg7: memref<1x1x14x128xbf16, #tpu.memory_space<vmem>>, %arg8: memref<1x1x14x128xbf16, #tpu.memory_space<vmem>>, %arg9: memref<1x1x14x128xbf16, #tpu.memory_space<vmem>>, %arg10: memref<3x3x128x128xbf16, #tpu.memory_space<vmem>>, %arg11: memref<1x128xf32, #tpu.memory_space<vmem>>, %arg12: memref<1x6x12x128xf32, #tpu.memory_space<vmem>>) attributes {dimension_semantics = [#tpu.dimension_semantics<parallel>, #tpu.dimension_semantics<parallel>], iteration_bounds = array<i64: 2, 2>, scalar_prefetch = 0 : i64, scratch_operands = 0 : i64, tpu.core_type = #tpu.core_type<tc>, window_params = [{transform_indices = @transform_0, window_bounds = array<i64: 1, 1, 14, 128>}, {transform_indices = @transform_1, window_bounds = array<i64: 1, 1, 14, 128>}, {transform_indices = @transform_2, window_bounds = array<i64: 1, 1, 14, 128>}, {transform_indices = @transform_3, window_bounds = array<i64: 1, 1, 14, 128>}, {transform_indices = @transform_4, window_bounds = array<i64: 1, 1, 14, 128>}, {transform_indices = @transform_5, window_bounds = array<i64: 1, 1, 14, 128>}, {transform_indices = @transform_6, window_bounds = array<i64: 1, 1, 14, 128>}, {transform_indices = @transform_7, window_bounds = array<i64: 1, 1, 14, 128>}, {pipeline_mode = #tpu.pipeline_mode<synchronous>, transform_indices = @transform_8, window_bounds = array<i64: 3, 3, 128, 128>}, {pipeline_mode = #tpu.pipeline_mode<synchronous>, transform_indices = @transform_9, window_bounds = array<i64: 1, 128>}, {transform_indices = @transform_10, window_bounds = array<i64: 1, 6, 12, 128>}]} {
    %cst = arith.constant 0.000000e+00 : f32
    %0 = vector.broadcast %cst : f32 to vector<72x128xf32>
    %c0 = arith.constant 0 : index
    %c0_0 = arith.constant 0 : index
    %1 = vector.load %arg11[%c0, %c0_0] : memref<1x128xf32, #tpu.memory_space<vmem>>, vector<1x128xf32>
    %2 = vector.broadcast %1 : vector<1x128xf32> to vector<72x128xf32>
    %3 = arith.addf %0, %2 : vector<72x128xf32>
    %c0_1 = arith.constant 0 : index
    %c0_2 = arith.constant 0 : index
    %c0_3 = arith.constant 0 : index
    %c0_4 = arith.constant 0 : index
    %4 = vector.load %arg2[%c0_1, %c0_2, %c0_3, %c0_4] : memref<1x1x14x128xbf16, #tpu.memory_space<vmem>>, vector<1x1x14x128xbf16>
    %5 = vector.shape_cast %4 : vector<1x1x14x128xbf16> to vector<14x128xbf16>
    %c0_5 = arith.constant 0 : index
    %c0_6 = arith.constant 0 : index
    %c0_7 = arith.constant 0 : index
    %c0_8 = arith.constant 0 : index
    %6 = vector.load %arg3[%c0_5, %c0_6, %c0_7, %c0_8] : memref<1x1x14x128xbf16, #tpu.memory_space<vmem>>, vector<1x1x14x128xbf16>
    %7 = vector.shape_cast %6 : vector<1x1x14x128xbf16> to vector<14x128xbf16>
    %c0_9 = arith.constant 0 : index
    %c0_10 = arith.constant 0 : index
    %c0_11 = arith.constant 0 : index
    %c0_12 = arith.constant 0 : index
    %8 = vector.load %arg4[%c0_9, %c0_10, %c0_11, %c0_12] : memref<1x1x14x128xbf16, #tpu.memory_space<vmem>>, vector<1x1x14x128xbf16>
    %9 = vector.shape_cast %8 : vector<1x1x14x128xbf16> to vector<14x128xbf16>
    %c0_13 = arith.constant 0 : index
    %c0_14 = arith.constant 0 : index
    %c0_15 = arith.constant 0 : index
    %c0_16 = arith.constant 0 : index
    %10 = vector.load %arg5[%c0_13, %c0_14, %c0_15, %c0_16] : memref<1x1x14x128xbf16, #tpu.memory_space<vmem>>, vector<1x1x14x128xbf16>
    %11 = vector.shape_cast %10 : vector<1x1x14x128xbf16> to vector<14x128xbf16>
    %c0_17 = arith.constant 0 : index
    %c0_18 = arith.constant 0 : index
    %c0_19 = arith.constant 0 : index
    %c0_20 = arith.constant 0 : index
    %12 = vector.load %arg6[%c0_17, %c0_18, %c0_19, %c0_20] : memref<1x1x14x128xbf16, #tpu.memory_space<vmem>>, vector<1x1x14x128xbf16>
    %13 = vector.shape_cast %12 : vector<1x1x14x128xbf16> to vector<14x128xbf16>
    %c0_21 = arith.constant 0 : index
    %c0_22 = arith.constant 0 : index
    %c0_23 = arith.constant 0 : index
    %c0_24 = arith.constant 0 : index
    %14 = vector.load %arg7[%c0_21, %c0_22, %c0_23, %c0_24] : memref<1x1x14x128xbf16, #tpu.memory_space<vmem>>, vector<1x1x14x128xbf16>
    %15 = vector.shape_cast %14 : vector<1x1x14x128xbf16> to vector<14x128xbf16>
    %c0_25 = arith.constant 0 : index
    %c0_26 = arith.constant 0 : index
    %c0_27 = arith.constant 0 : index
    %c0_28 = arith.constant 0 : index
    %16 = vector.load %arg8[%c0_25, %c0_26, %c0_27, %c0_28] : memref<1x1x14x128xbf16, #tpu.memory_space<vmem>>, vector<1x1x14x128xbf16>
    %17 = vector.shape_cast %16 : vector<1x1x14x128xbf16> to vector<14x128xbf16>
    %c0_29 = arith.constant 0 : index
    %c0_30 = arith.constant 0 : index
    %c0_31 = arith.constant 0 : index
    %c0_32 = arith.constant 0 : index
    %18 = vector.load %arg9[%c0_29, %c0_30, %c0_31, %c0_32] : memref<1x1x14x128xbf16, #tpu.memory_space<vmem>>, vector<1x1x14x128xbf16>
    %19 = vector.shape_cast %18 : vector<1x1x14x128xbf16> to vector<14x128xbf16>
    %20 = vector.extract_strided_slice %5 {offsets = [0, 0], sizes = [12, 128], strides = [1, 1]} : vector<14x128xbf16> to vector<12x128xbf16>
    %21 = vector.extract_strided_slice %7 {offsets = [0, 0], sizes = [12, 128], strides = [1, 1]} : vector<14x128xbf16> to vector<12x128xbf16>
    %22 = vector.extract_strided_slice %9 {offsets = [0, 0], sizes = [12, 128], strides = [1, 1]} : vector<14x128xbf16> to vector<12x128xbf16>
    %23 = vector.extract_strided_slice %11 {offsets = [0, 0], sizes = [12, 128], strides = [1, 1]} : vector<14x128xbf16> to vector<12x128xbf16>
    %24 = vector.extract_strided_slice %13 {offsets = [0, 0], sizes = [12, 128], strides = [1, 1]} : vector<14x128xbf16> to vector<12x128xbf16>
    %25 = vector.extract_strided_slice %15 {offsets = [0, 0], sizes = [12, 128], strides = [1, 1]} : vector<14x128xbf16> to vector<12x128xbf16>
    %26 = tpu.concatenate %20, %21, %22, %23, %24, %25 in 0 : vector<12x128xbf16>, vector<12x128xbf16>, vector<12x128xbf16>, vector<12x128xbf16>, vector<12x128xbf16>, vector<12x128xbf16> -> vector<72x128xbf16>
    %c0_33 = arith.constant 0 : index
    %c0_34 = arith.constant 0 : index
    %c0_35 = arith.constant 0 : index
    %c0_36 = arith.constant 0 : index
    %27 = vector.load %arg10[%c0_33, %c0_34, %c0_35, %c0_36] : memref<3x3x128x128xbf16, #tpu.memory_space<vmem>>, vector<1x1x128x128xbf16>
    %28 = vector.shape_cast %27 : vector<1x1x128x128xbf16> to vector<128x128xbf16>
    %cst_37 = arith.constant dense<0.000000e+00> : vector<72x128xf32>
    %29 = tpu.matmul %26, %28, %cst_37 {dimension_numbers = #tpu.dot_dimension_numbers<[1], [0], [0], [1], [0, 0, 1, 1], [], []>} : vector<72x128xbf16>, vector<128x128xbf16>, vector<72x128xf32> -> vector<72x128xf32>
    %30 = arith.addf %3, %29 : vector<72x128xf32>
    %31 = vector.extract_strided_slice %5 {offsets = [1, 0], sizes = [12, 128], strides = [1, 1]} : vector<14x128xbf16> to vector<12x128xbf16>
    %32 = vector.extract_strided_slice %7 {offsets = [1, 0], sizes = [12, 128], strides = [1, 1]} : vector<14x128xbf16> to vector<12x128xbf16>
    %33 = vector.extract_strided_slice %9 {offsets = [1, 0], sizes = [12, 128], strides = [1, 1]} : vector<14x128xbf16> to vector<12x128xbf16>
    %34 = vector.extract_strided_slice %11 {offsets = [1, 0], sizes = [12, 128], strides = [1, 1]} : vector<14x128xbf16> to vector<12x128xbf16>
    %35 = vector.extract_strided_slice %13 {offsets = [1, 0], sizes = [12, 128], strides = [1, 1]} : vector<14x128xbf16> to vector<12x128xbf16>
    %36 = vector.extract_strided_slice %15 {offsets = [1, 0], sizes = [12, 128], strides = [1, 1]} : vector<14x128xbf16> to vector<12x128xbf16>
    %37 = tpu.concatenate %31, %32, %33, %34, %35, %36 in 0 : vector<12x128xbf16>, vector<12x128xbf16>, vector<12x128xbf16>, vector<12x128xbf16>, vector<12x128xbf16>, vector<12x128xbf16> -> vector<72x128xbf16>
    %c0_38 = arith.constant 0 : index
    %c1 = arith.constant 1 : index
    %c0_39 = arith.constant 0 : index
    %c0_40 = arith.constant 0 : index
    %38 = vector.load %arg10[%c0_38, %c1, %c0_39, %c0_40] : memref<3x3x128x128xbf16, #tpu.memory_space<vmem>>, vector<1x1x128x128xbf16>
    %39 = vector.shape_cast %38 : vector<1x1x128x128xbf16> to vector<128x128xbf16>
    %cst_41 = arith.constant dense<0.000000e+00> : vector<72x128xf32>
    %40 = tpu.matmul %37, %39, %cst_41 {dimension_numbers = #tpu.dot_dimension_numbers<[1], [0], [0], [1], [0, 0, 1, 1], [], []>} : vector<72x128xbf16>, vector<128x128xbf16>, vector<72x128xf32> -> vector<72x128xf32>
    %41 = arith.addf %30, %40 : vector<72x128xf32>
    %42 = vector.extract_strided_slice %5 {offsets = [2, 0], sizes = [12, 128], strides = [1, 1]} : vector<14x128xbf16> to vector<12x128xbf16>
    %43 = vector.extract_strided_slice %7 {offsets = [2, 0], sizes = [12, 128], strides = [1, 1]} : vector<14x128xbf16> to vector<12x128xbf16>
    %44 = vector.extract_strided_slice %9 {offsets = [2, 0], sizes = [12, 128], strides = [1, 1]} : vector<14x128xbf16> to vector<12x128xbf16>
    %45 = vector.extract_strided_slice %11 {offsets = [2, 0], sizes = [12, 128], strides = [1, 1]} : vector<14x128xbf16> to vector<12x128xbf16>
    %46 = vector.extract_strided_slice %13 {offsets = [2, 0], sizes = [12, 128], strides = [1, 1]} : vector<14x128xbf16> to vector<12x128xbf16>
    %47 = vector.extract_strided_slice %15 {offsets = [2, 0], sizes = [12, 128], strides = [1, 1]} : vector<14x128xbf16> to vector<12x128xbf16>
    %48 = tpu.concatenate %42, %43, %44, %45, %46, %47 in 0 : vector<12x128xbf16>, vector<12x128xbf16>, vector<12x128xbf16>, vector<12x128xbf16>, vector<12x128xbf16>, vector<12x128xbf16> -> vector<72x128xbf16>
    %c0_42 = arith.constant 0 : index
    %c2 = arith.constant 2 : index
    %c0_43 = arith.constant 0 : index
    %c0_44 = arith.constant 0 : index
    %49 = vector.load %arg10[%c0_42, %c2, %c0_43, %c0_44] : memref<3x3x128x128xbf16, #tpu.memory_space<vmem>>, vector<1x1x128x128xbf16>
    %50 = vector.shape_cast %49 : vector<1x1x128x128xbf16> to vector<128x128xbf16>
    %cst_45 = arith.constant dense<0.000000e+00> : vector<72x128xf32>
    %51 = tpu.matmul %48, %50, %cst_45 {dimension_numbers = #tpu.dot_dimension_numbers<[1], [0], [0], [1], [0, 0, 1, 1], [], []>} : vector<72x128xbf16>, vector<128x128xbf16>, vector<72x128xf32> -> vector<72x128xf32>
    %52 = arith.addf %41, %51 : vector<72x128xf32>
    %53 = vector.extract_strided_slice %7 {offsets = [0, 0], sizes = [12, 128], strides = [1, 1]} : vector<14x128xbf16> to vector<12x128xbf16>
    %54 = vector.extract_strided_slice %9 {offsets = [0, 0], sizes = [12, 128], strides = [1, 1]} : vector<14x128xbf16> to vector<12x128xbf16>
    %55 = vector.extract_strided_slice %11 {offsets = [0, 0], sizes = [12, 128], strides = [1, 1]} : vector<14x128xbf16> to vector<12x128xbf16>
    %56 = vector.extract_strided_slice %13 {offsets = [0, 0], sizes = [12, 128], strides = [1, 1]} : vector<14x128xbf16> to vector<12x128xbf16>
    %57 = vector.extract_strided_slice %15 {offsets = [0, 0], sizes = [12, 128], strides = [1, 1]} : vector<14x128xbf16> to vector<12x128xbf16>
    %58 = vector.extract_strided_slice %17 {offsets = [0, 0], sizes = [12, 128], strides = [1, 1]} : vector<14x128xbf16> to vector<12x128xbf16>
    %59 = tpu.concatenate %53, %54, %55, %56, %57, %58 in 0 : vector<12x128xbf16>, vector<12x128xbf16>, vector<12x128xbf16>, vector<12x128xbf16>, vector<12x128xbf16>, vector<12x128xbf16> -> vector<72x128xbf16>
    %c1_46 = arith.constant 1 : index
    %c0_47 = arith.constant 0 : index
    %c0_48 = arith.constant 0 : index
    %c0_49 = arith.constant 0 : index
    %60 = vector.load %arg10[%c1_46, %c0_47, %c0_48, %c0_49] : memref<3x3x128x128xbf16, #tpu.memory_space<vmem>>, vector<1x1x128x128xbf16>
    %61 = vector.shape_cast %60 : vector<1x1x128x128xbf16> to vector<128x128xbf16>
    %cst_50 = arith.constant dense<0.000000e+00> : vector<72x128xf32>
    %62 = tpu.matmul %59, %61, %cst_50 {dimension_numbers = #tpu.dot_dimension_numbers<[1], [0], [0], [1], [0, 0, 1, 1], [], []>} : vector<72x128xbf16>, vector<128x128xbf16>, vector<72x128xf32> -> vector<72x128xf32>
    %63 = arith.addf %52, %62 : vector<72x128xf32>
    %64 = vector.extract_strided_slice %7 {offsets = [1, 0], sizes = [12, 128], strides = [1, 1]} : vector<14x128xbf16> to vector<12x128xbf16>
    %65 = vector.extract_strided_slice %9 {offsets = [1, 0], sizes = [12, 128], strides = [1, 1]} : vector<14x128xbf16> to vector<12x128xbf16>
    %66 = vector.extract_strided_slice %11 {offsets = [1, 0], sizes = [12, 128], strides = [1, 1]} : vector<14x128xbf16> to vector<12x128xbf16>
    %67 = vector.extract_strided_slice %13 {offsets = [1, 0], sizes = [12, 128], strides = [1, 1]} : vector<14x128xbf16> to vector<12x128xbf16>
    %68 = vector.extract_strided_slice %15 {offsets = [1, 0], sizes = [12, 128], strides = [1, 1]} : vector<14x128xbf16> to vector<12x128xbf16>
    %69 = vector.extract_strided_slice %17 {offsets = [1, 0], sizes = [12, 128], strides = [1, 1]} : vector<14x128xbf16> to vector<12x128xbf16>
    %70 = tpu.concatenate %64, %65, %66, %67, %68, %69 in 0 : vector<12x128xbf16>, vector<12x128xbf16>, vector<12x128xbf16>, vector<12x128xbf16>, vector<12x128xbf16>, vector<12x128xbf16> -> vector<72x128xbf16>
    %c1_51 = arith.constant 1 : index
    %c1_52 = arith.constant 1 : index
    %c0_53 = arith.constant 0 : index
    %c0_54 = arith.constant 0 : index
    %71 = vector.load %arg10[%c1_51, %c1_52, %c0_53, %c0_54] : memref<3x3x128x128xbf16, #tpu.memory_space<vmem>>, vector<1x1x128x128xbf16>
    %72 = vector.shape_cast %71 : vector<1x1x128x128xbf16> to vector<128x128xbf16>
    %cst_55 = arith.constant dense<0.000000e+00> : vector<72x128xf32>
    %73 = tpu.matmul %70, %72, %cst_55 {dimension_numbers = #tpu.dot_dimension_numbers<[1], [0], [0], [1], [0, 0, 1, 1], [], []>} : vector<72x128xbf16>, vector<128x128xbf16>, vector<72x128xf32> -> vector<72x128xf32>
    %74 = arith.addf %63, %73 : vector<72x128xf32>
    %75 = vector.extract_strided_slice %7 {offsets = [2, 0], sizes = [12, 128], strides = [1, 1]} : vector<14x128xbf16> to vector<12x128xbf16>
    %76 = vector.extract_strided_slice %9 {offsets = [2, 0], sizes = [12, 128], strides = [1, 1]} : vector<14x128xbf16> to vector<12x128xbf16>
    %77 = vector.extract_strided_slice %11 {offsets = [2, 0], sizes = [12, 128], strides = [1, 1]} : vector<14x128xbf16> to vector<12x128xbf16>
    %78 = vector.extract_strided_slice %13 {offsets = [2, 0], sizes = [12, 128], strides = [1, 1]} : vector<14x128xbf16> to vector<12x128xbf16>
    %79 = vector.extract_strided_slice %15 {offsets = [2, 0], sizes = [12, 128], strides = [1, 1]} : vector<14x128xbf16> to vector<12x128xbf16>
    %80 = vector.extract_strided_slice %17 {offsets = [2, 0], sizes = [12, 128], strides = [1, 1]} : vector<14x128xbf16> to vector<12x128xbf16>
    %81 = tpu.concatenate %75, %76, %77, %78, %79, %80 in 0 : vector<12x128xbf16>, vector<12x128xbf16>, vector<12x128xbf16>, vector<12x128xbf16>, vector<12x128xbf16>, vector<12x128xbf16> -> vector<72x128xbf16>
    %c1_56 = arith.constant 1 : index
    %c2_57 = arith.constant 2 : index
    %c0_58 = arith.constant 0 : index
    %c0_59 = arith.constant 0 : index
    %82 = vector.load %arg10[%c1_56, %c2_57, %c0_58, %c0_59] : memref<3x3x128x128xbf16, #tpu.memory_space<vmem>>, vector<1x1x128x128xbf16>
    %83 = vector.shape_cast %82 : vector<1x1x128x128xbf16> to vector<128x128xbf16>
    %cst_60 = arith.constant dense<0.000000e+00> : vector<72x128xf32>
    %84 = tpu.matmul %81, %83, %cst_60 {dimension_numbers = #tpu.dot_dimension_numbers<[1], [0], [0], [1], [0, 0, 1, 1], [], []>} : vector<72x128xbf16>, vector<128x128xbf16>, vector<72x128xf32> -> vector<72x128xf32>
    %85 = arith.addf %74, %84 : vector<72x128xf32>
    %86 = vector.extract_strided_slice %9 {offsets = [0, 0], sizes = [12, 128], strides = [1, 1]} : vector<14x128xbf16> to vector<12x128xbf16>
    %87 = vector.extract_strided_slice %11 {offsets = [0, 0], sizes = [12, 128], strides = [1, 1]} : vector<14x128xbf16> to vector<12x128xbf16>
    %88 = vector.extract_strided_slice %13 {offsets = [0, 0], sizes = [12, 128], strides = [1, 1]} : vector<14x128xbf16> to vector<12x128xbf16>
    %89 = vector.extract_strided_slice %15 {offsets = [0, 0], sizes = [12, 128], strides = [1, 1]} : vector<14x128xbf16> to vector<12x128xbf16>
    %90 = vector.extract_strided_slice %17 {offsets = [0, 0], sizes = [12, 128], strides = [1, 1]} : vector<14x128xbf16> to vector<12x128xbf16>
    %91 = vector.extract_strided_slice %19 {offsets = [0, 0], sizes = [12, 128], strides = [1, 1]} : vector<14x128xbf16> to vector<12x128xbf16>
    %92 = tpu.concatenate %86, %87, %88, %89, %90, %91 in 0 : vector<12x128xbf16>, vector<12x128xbf16>, vector<12x128xbf16>, vector<12x128xbf16>, vector<12x128xbf16>, vector<12x128xbf16> -> vector<72x128xbf16>
    %c2_61 = arith.constant 2 : index
    %c0_62 = arith.constant 0 : index
    %c0_63 = arith.constant 0 : index
    %c0_64 = arith.constant 0 : index
    %93 = vector.load %arg10[%c2_61, %c0_62, %c0_63, %c0_64] : memref<3x3x128x128xbf16, #tpu.memory_space<vmem>>, vector<1x1x128x128xbf16>
    %94 = vector.shape_cast %93 : vector<1x1x128x128xbf16> to vector<128x128xbf16>
    %cst_65 = arith.constant dense<0.000000e+00> : vector<72x128xf32>
    %95 = tpu.matmul %92, %94, %cst_65 {dimension_numbers = #tpu.dot_dimension_numbers<[1], [0], [0], [1], [0, 0, 1, 1], [], []>} : vector<72x128xbf16>, vector<128x128xbf16>, vector<72x128xf32> -> vector<72x128xf32>
    %96 = arith.addf %85, %95 : vector<72x128xf32>
    %97 = vector.extract_strided_slice %9 {offsets = [1, 0], sizes = [12, 128], strides = [1, 1]} : vector<14x128xbf16> to vector<12x128xbf16>
    %98 = vector.extract_strided_slice %11 {offsets = [1, 0], sizes = [12, 128], strides = [1, 1]} : vector<14x128xbf16> to vector<12x128xbf16>
    %99 = vector.extract_strided_slice %13 {offsets = [1, 0], sizes = [12, 128], strides = [1, 1]} : vector<14x128xbf16> to vector<12x128xbf16>
    %100 = vector.extract_strided_slice %15 {offsets = [1, 0], sizes = [12, 128], strides = [1, 1]} : vector<14x128xbf16> to vector<12x128xbf16>
    %101 = vector.extract_strided_slice %17 {offsets = [1, 0], sizes = [12, 128], strides = [1, 1]} : vector<14x128xbf16> to vector<12x128xbf16>
    %102 = vector.extract_strided_slice %19 {offsets = [1, 0], sizes = [12, 128], strides = [1, 1]} : vector<14x128xbf16> to vector<12x128xbf16>
    %103 = tpu.concatenate %97, %98, %99, %100, %101, %102 in 0 : vector<12x128xbf16>, vector<12x128xbf16>, vector<12x128xbf16>, vector<12x128xbf16>, vector<12x128xbf16>, vector<12x128xbf16> -> vector<72x128xbf16>
    %c2_66 = arith.constant 2 : index
    %c1_67 = arith.constant 1 : index
    %c0_68 = arith.constant 0 : index
    %c0_69 = arith.constant 0 : index
    %104 = vector.load %arg10[%c2_66, %c1_67, %c0_68, %c0_69] : memref<3x3x128x128xbf16, #tpu.memory_space<vmem>>, vector<1x1x128x128xbf16>
    %105 = vector.shape_cast %104 : vector<1x1x128x128xbf16> to vector<128x128xbf16>
    %cst_70 = arith.constant dense<0.000000e+00> : vector<72x128xf32>
    %106 = tpu.matmul %103, %105, %cst_70 {dimension_numbers = #tpu.dot_dimension_numbers<[1], [0], [0], [1], [0, 0, 1, 1], [], []>} : vector<72x128xbf16>, vector<128x128xbf16>, vector<72x128xf32> -> vector<72x128xf32>
    %107 = arith.addf %96, %106 : vector<72x128xf32>
    %108 = vector.extract_strided_slice %9 {offsets = [2, 0], sizes = [12, 128], strides = [1, 1]} : vector<14x128xbf16> to vector<12x128xbf16>
    %109 = vector.extract_strided_slice %11 {offsets = [2, 0], sizes = [12, 128], strides = [1, 1]} : vector<14x128xbf16> to vector<12x128xbf16>
    %110 = vector.extract_strided_slice %13 {offsets = [2, 0], sizes = [12, 128], strides = [1, 1]} : vector<14x128xbf16> to vector<12x128xbf16>
    %111 = vector.extract_strided_slice %15 {offsets = [2, 0], sizes = [12, 128], strides = [1, 1]} : vector<14x128xbf16> to vector<12x128xbf16>
    %112 = vector.extract_strided_slice %17 {offsets = [2, 0], sizes = [12, 128], strides = [1, 1]} : vector<14x128xbf16> to vector<12x128xbf16>
    %113 = vector.extract_strided_slice %19 {offsets = [2, 0], sizes = [12, 128], strides = [1, 1]} : vector<14x128xbf16> to vector<12x128xbf16>
    %114 = tpu.concatenate %108, %109, %110, %111, %112, %113 in 0 : vector<12x128xbf16>, vector<12x128xbf16>, vector<12x128xbf16>, vector<12x128xbf16>, vector<12x128xbf16>, vector<12x128xbf16> -> vector<72x128xbf16>
    %c2_71 = arith.constant 2 : index
    %c2_72 = arith.constant 2 : index
    %c0_73 = arith.constant 0 : index
    %c0_74 = arith.constant 0 : index
    %115 = vector.load %arg10[%c2_71, %c2_72, %c0_73, %c0_74] : memref<3x3x128x128xbf16, #tpu.memory_space<vmem>>, vector<1x1x128x128xbf16>
    %116 = vector.shape_cast %115 : vector<1x1x128x128xbf16> to vector<128x128xbf16>
    %cst_75 = arith.constant dense<0.000000e+00> : vector<72x128xf32>
    %117 = tpu.matmul %114, %116, %cst_75 {dimension_numbers = #tpu.dot_dimension_numbers<[1], [0], [0], [1], [0, 0, 1, 1], [], []>} : vector<72x128xbf16>, vector<128x128xbf16>, vector<72x128xf32> -> vector<72x128xf32>
    %118 = arith.addf %107, %117 : vector<72x128xf32>
    %119 = vector.extract_strided_slice %118 {offsets = [0, 0], sizes = [12, 128], strides = [1, 1]} : vector<72x128xf32> to vector<12x128xf32>
    %cst_76 = arith.constant 0.000000e+00 : f32
    %120 = vector.broadcast %cst_76 : f32 to vector<12x128xf32>
    %121 = arith.maximumf %119, %120 : vector<12x128xf32>
    %c0_77 = arith.constant 0 : index
    %c0_78 = arith.constant 0 : index
    %c0_79 = arith.constant 0 : index
    %c0_80 = arith.constant 0 : index
    %122 = vector.load %arg12[%c0_77, %c0_78, %c0_79, %c0_80] : memref<1x6x12x128xf32, #tpu.memory_space<vmem>>, vector<1x1x12x128xf32>
    %123 = vector.shape_cast %122 : vector<1x1x12x128xf32> to vector<12x128xf32>
    %124 = vector.shape_cast %121 : vector<12x128xf32> to vector<1x1x12x128xf32>
    tpu.vector_store %arg12[%c0_77, %c0_78, %c0_79, %c0_80], %124 {strides = array<i32>} : memref<1x6x12x128xf32, #tpu.memory_space<vmem>>, vector<1x1x12x128xf32>,
    %125 = vector.extract_strided_slice %118 {offsets = [12, 0], sizes = [12, 128], strides = [1, 1]} : vector<72x128xf32> to vector<12x128xf32>
    %cst_81 = arith.constant 0.000000e+00 : f32
    %126 = vector.broadcast %cst_81 : f32 to vector<12x128xf32>
    %127 = arith.maximumf %125, %126 : vector<12x128xf32>
    %c0_82 = arith.constant 0 : index
    %c1_83 = arith.constant 1 : index
    %c0_84 = arith.constant 0 : index
    %c0_85 = arith.constant 0 : index
    %128 = vector.load %arg12[%c0_82, %c1_83, %c0_84, %c0_85] : memref<1x6x12x128xf32, #tpu.memory_space<vmem>>, vector<1x1x12x128xf32>
    %129 = vector.shape_cast %128 : vector<1x1x12x128xf32> to vector<12x128xf32>
    %130 = vector.shape_cast %127 : vector<12x128xf32> to vector<1x1x12x128xf32>
    tpu.vector_store %arg12[%c0_82, %c1_83, %c0_84, %c0_85], %130 {strides = array<i32>} : memref<1x6x12x128xf32, #tpu.memory_space<vmem>>, vector<1x1x12x128xf32>,
    %131 = vector.extract_strided_slice %118 {offsets = [24, 0], sizes = [12, 128], strides = [1, 1]} : vector<72x128xf32> to vector<12x128xf32>
    %cst_86 = arith.constant 0.000000e+00 : f32
    %132 = vector.broadcast %cst_86 : f32 to vector<12x128xf32>
    %133 = arith.maximumf %131, %132 : vector<12x128xf32>
    %c0_87 = arith.constant 0 : index
    %c2_88 = arith.constant 2 : index
    %c0_89 = arith.constant 0 : index
    %c0_90 = arith.constant 0 : index
    %134 = vector.load %arg12[%c0_87, %c2_88, %c0_89, %c0_90] : memref<1x6x12x128xf32, #tpu.memory_space<vmem>>, vector<1x1x12x128xf32>
    %135 = vector.shape_cast %134 : vector<1x1x12x128xf32> to vector<12x128xf32>
    %136 = vector.shape_cast %133 : vector<12x128xf32> to vector<1x1x12x128xf32>
    tpu.vector_store %arg12[%c0_87, %c2_88, %c0_89, %c0_90], %136 {strides = array<i32>} : memref<1x6x12x128xf32, #tpu.memory_space<vmem>>, vector<1x1x12x128xf32>,
    %137 = vector.extract_strided_slice %118 {offsets = [36, 0], sizes = [12, 128], strides = [1, 1]} : vector<72x128xf32> to vector<12x128xf32>
    %cst_91 = arith.constant 0.000000e+00 : f32
    %138 = vector.broadcast %cst_91 : f32 to vector<12x128xf32>
    %139 = arith.maximumf %137, %138 : vector<12x128xf32>
    %c0_92 = arith.constant 0 : index
    %c3 = arith.constant 3 : index
    %c0_93 = arith.constant 0 : index
    %c0_94 = arith.constant 0 : index
    %140 = vector.load %arg12[%c0_92, %c3, %c0_93, %c0_94] : memref<1x6x12x128xf32, #tpu.memory_space<vmem>>, vector<1x1x12x128xf32>
    %141 = vector.shape_cast %140 : vector<1x1x12x128xf32> to vector<12x128xf32>
    %142 = vector.shape_cast %139 : vector<12x128xf32> to vector<1x1x12x128xf32>
    tpu.vector_store %arg12[%c0_92, %c3, %c0_93, %c0_94], %142 {strides = array<i32>} : memref<1x6x12x128xf32, #tpu.memory_space<vmem>>, vector<1x1x12x128xf32>,
    %143 = vector.extract_strided_slice %118 {offsets = [48, 0], sizes = [12, 128], strides = [1, 1]} : vector<72x128xf32> to vector<12x128xf32>
    %cst_95 = arith.constant 0.000000e+00 : f32
    %144 = vector.broadcast %cst_95 : f32 to vector<12x128xf32>
    %145 = arith.maximumf %143, %144 : vector<12x128xf32>
    %c0_96 = arith.constant 0 : index
    %c4 = arith.constant 4 : index
    %c0_97 = arith.constant 0 : index
    %c0_98 = arith.constant 0 : index
    %146 = vector.load %arg12[%c0_96, %c4, %c0_97, %c0_98] : memref<1x6x12x128xf32, #tpu.memory_space<vmem>>, vector<1x1x12x128xf32>
    %147 = vector.shape_cast %146 : vector<1x1x12x128xf32> to vector<12x128xf32>
    %148 = vector.shape_cast %145 : vector<12x128xf32> to vector<1x1x12x128xf32>
    tpu.vector_store %arg12[%c0_96, %c4, %c0_97, %c0_98], %148 {strides = array<i32>} : memref<1x6x12x128xf32, #tpu.memory_space<vmem>>, vector<1x1x12x128xf32>,
    %149 = vector.extract_strided_slice %118 {offsets = [60, 0], sizes = [12, 128], strides = [1, 1]} : vector<72x128xf32> to vector<12x128xf32>
    %cst_99 = arith.constant 0.000000e+00 : f32
    %150 = vector.broadcast %cst_99 : f32 to vector<12x128xf32>
    %151 = arith.maximumf %149, %150 : vector<12x128xf32>
    %c0_100 = arith.constant 0 : index
    %c5 = arith.constant 5 : index
    %c0_101 = arith.constant 0 : index
    %c0_102 = arith.constant 0 : index
    %152 = vector.load %arg12[%c0_100, %c5, %c0_101, %c0_102] : memref<1x6x12x128xf32, #tpu.memory_space<vmem>>, vector<1x1x12x128xf32>
    %153 = vector.shape_cast %152 : vector<1x1x12x128xf32> to vector<12x128xf32>
    %154 = vector.shape_cast %151 : vector<12x128xf32> to vector<1x1x12x128xf32>
    tpu.vector_store %arg12[%c0_100, %c5, %c0_101, %c0_102], %154 {strides = array<i32>} : memref<1x6x12x128xf32, #tpu.memory_space<vmem>>, vector<1x1x12x128xf32>,
    return
  }
  func.func @transform_0(%arg0: i32, %arg1: i32) -> (i32, i32, i32, i32) {
    %c6_i32 = arith.constant 6 : i32
    %0 = arith.muli %arg1, %c6_i32 : i32
    %c0_i32 = arith.constant 0 : i32
    %1 = arith.addi %0, %c0_i32 : i32
    %c0_i32_0 = arith.constant 0 : i32
    %2 = arith.addi %1, %c0_i32_0 : i32
    %c0_i32_1 = arith.constant 0 : i32
    %c0_i32_2 = arith.constant 0 : i32
    %c0_i32_3 = arith.constant 0 : i32
    return %arg0, %2, %c0_i32_1, %c0_i32_2 : i32, i32, i32, i32
  }
  func.func @transform_1(%arg0: i32, %arg1: i32) -> (i32, i32, i32, i32) {
    %c6_i32 = arith.constant 6 : i32
    %0 = arith.muli %arg1, %c6_i32 : i32
    %c1_i32 = arith.constant 1 : i32
    %1 = arith.addi %0, %c1_i32 : i32
    %c0_i32 = arith.constant 0 : i32
    %2 = arith.addi %1, %c0_i32 : i32
    %c0_i32_0 = arith.constant 0 : i32
    %c0_i32_1 = arith.constant 0 : i32
    %c0_i32_2 = arith.constant 0 : i32
    return %arg0, %2, %c0_i32_0, %c0_i32_1 : i32, i32, i32, i32
  }
  func.func @transform_2(%arg0: i32, %arg1: i32) -> (i32, i32, i32, i32) {
    %c6_i32 = arith.constant 6 : i32
    %0 = arith.muli %arg1, %c6_i32 : i32
    %c2_i32 = arith.constant 2 : i32
    %1 = arith.addi %0, %c2_i32 : i32
    %c0_i32 = arith.constant 0 : i32
    %2 = arith.addi %1, %c0_i32 : i32
    %c0_i32_0 = arith.constant 0 : i32
    %c0_i32_1 = arith.constant 0 : i32
    %c0_i32_2 = arith.constant 0 : i32
    return %arg0, %2, %c0_i32_0, %c0_i32_1 : i32, i32, i32, i32
  }
  func.func @transform_3(%arg0: i32, %arg1: i32) -> (i32, i32, i32, i32) {
    %c6_i32 = arith.constant 6 : i32
    %0 = arith.muli %arg1, %c6_i32 : i32
    %c3_i32 = arith.constant 3 : i32
    %1 = arith.addi %0, %c3_i32 : i32
    %c0_i32 = arith.constant 0 : i32
    %2 = arith.addi %1, %c0_i32 : i32
    %c0_i32_0 = arith.constant 0 : i32
    %c0_i32_1 = arith.constant 0 : i32
    %c0_i32_2 = arith.constant 0 : i32
    return %arg0, %2, %c0_i32_0, %c0_i32_1 : i32, i32, i32, i32
  }
  func.func @transform_4(%arg0: i32, %arg1: i32) -> (i32, i32, i32, i32) {
    %c6_i32 = arith.constant 6 : i32
    %0 = arith.muli %arg1, %c6_i32 : i32
    %c4_i32 = arith.constant 4 : i32
    %1 = arith.addi %0, %c4_i32 : i32
    %c0_i32 = arith.constant 0 : i32
    %2 = arith.addi %1, %c0_i32 : i32
    %c0_i32_0 = arith.constant 0 : i32
    %c0_i32_1 = arith.constant 0 : i32
    %c0_i32_2 = arith.constant 0 : i32
    return %arg0, %2, %c0_i32_0, %c0_i32_1 : i32, i32, i32, i32
  }
  func.func @transform_5(%arg0: i32, %arg1: i32) -> (i32, i32, i32, i32) {
    %c6_i32 = arith.constant 6 : i32
    %0 = arith.muli %arg1, %c6_i32 : i32
    %c5_i32 = arith.constant 5 : i32
    %1 = arith.addi %0, %c5_i32 : i32
    %c0_i32 = arith.constant 0 : i32
    %2 = arith.addi %1, %c0_i32 : i32
    %c0_i32_0 = arith.constant 0 : i32
    %c0_i32_1 = arith.constant 0 : i32
    %c0_i32_2 = arith.constant 0 : i32
    return %arg0, %2, %c0_i32_0, %c0_i32_1 : i32, i32, i32, i32
  }
  func.func @transform_6(%arg0: i32, %arg1: i32) -> (i32, i32, i32, i32) {
    %c6_i32 = arith.constant 6 : i32
    %0 = arith.muli %arg1, %c6_i32 : i32
    %c6_i32_0 = arith.constant 6 : i32
    %1 = arith.addi %0, %c6_i32_0 : i32
    %c0_i32 = arith.constant 0 : i32
    %2 = arith.addi %1, %c0_i32 : i32
    %c0_i32_1 = arith.constant 0 : i32
    %c0_i32_2 = arith.constant 0 : i32
    %c0_i32_3 = arith.constant 0 : i32
    return %arg0, %2, %c0_i32_1, %c0_i32_2 : i32, i32, i32, i32
  }
  func.func @transform_7(%arg0: i32, %arg1: i32) -> (i32, i32, i32, i32) {
    %c6_i32 = arith.constant 6 : i32
    %0 = arith.muli %arg1, %c6_i32 : i32
    %c7_i32 = arith.constant 7 : i32
    %1 = arith.addi %0, %c7_i32 : i32
    %c0_i32 = arith.constant 0 : i32
    %2 = arith.addi %1, %c0_i32 : i32
    %c0_i32_0 = arith.constant 0 : i32
    %c0_i32_1 = arith.constant 0 : i32
    %c0_i32_2 = arith.constant 0 : i32
    return %arg0, %2, %c0_i32_0, %c0_i32_1 : i32, i32, i32, i32
  }
  func.func @transform_8(%arg0: i32, %arg1: i32) -> (i32, i32, i32, i32) {
    %c0_i32 = arith.constant 0 : i32
    %c0_i32_0 = arith.constant 0 : i32
    %c0_i32_1 = arith.constant 0 : i32
    %c0_i32_2 = arith.constant 0 : i32
    %c0_i32_3 = arith.constant 0 : i32
    return %c0_i32, %c0_i32_0, %c0_i32_1, %c0_i32_2 : i32, i32, i32, i32
  }
  func.func @transform_9(%arg0: i32, %arg1: i32) -> (i32, i32) {
    %c0_i32 = arith.constant 0 : i32
    %c0_i32_0 = arith.constant 0 : i32
    %c0_i32_1 = arith.constant 0 : i32
    return %c0_i32, %c0_i32_0 : i32, i32
  }
  func.func @transform_10(%arg0: i32, %arg1: i32) -> (i32, i32, i32, i32) {
    %c0_i32 = arith.constant 0 : i32
    %c0_i32_0 = arith.constant 0 : i32
    %c0_i32_1 = arith.constant 0 : i32
    return %arg0, %arg1, %c0_i32, %c0_i32_0 : i32, i32, i32, i32
  }
}

</mosaic_0001>

<llo_original>
// kernel: tile.8
$region0: #{tile.8}
  #allocation0 [shape = 's32[1]{0}', space=sflag, size = 0x4, scoped, tag = 'scoped memory for tile.8']
  %s0 = inlined_call_operand.vmem [shape: f32[4], index: 0, kind: input, shape index: {}]
  %s1 = inlined_call_operand.vmem [shape: f32[4,4], index: 1, kind: output, shape index: {}]
  // Predicated region
  $region2: #{tile.8} parent=0 // pred_check
    _
  $region3: #{tile.8} parent=0 // pred_check_branch
    %3 = sbr.rel (0) target = $region5
  $region4: #{tile.8} parent=0 // pred_region
    _
  $region5: #{tile.8} parent=0 // pred_fallthru
    _
  %v4 = vld [vmem:[%s0] ss:$0 sm:$0xff]
  %5 = vst [vmem:[%s1] sm:$0xf] %v4

// kernel: tile.9
$region0: #{tile.9}
  %s0 = inlined_call_operand.vmem [shape: f32[4,4], index: 0, kind: input, shape index: {}]
  %s1 = inlined_call_operand.vmem [shape: f32[16], index: 1, kind: output, shape index: {}]
  $region1: #{tile.9} parent=0
    #allocation0 [shape = 'u8[4096]{0}', space=vmem, size = 0x1000, scoped, tag = 'scoped mem for output reshape']
    #allocation1 [shape = 'u8[4096]{0}', space=vmem, size = 0x1000, scoped, tag = 'scoped mem for input reshape']
    %s3 = sshll.u32 1, 4
    %s4 = ssub.s32 %s3, 1
    %v5 = vld [vmem:[%s0] sm:%s4]
    %6 = vst [vmem:[#allocation1] sm:%s4] %v5
    %v7 = vld [vmem:[#allocation1] sm:$0x1]
    %vm8 = vcmask 31744
    %9 = vst.msk [vmem:[#allocation0] sm:$0x1] %vm8, %v7
    %s10 = scalar_lea.vmem [#allocation1], 3
    %v11 = vld [vmem:[%s10] sm:$0x1]
    %12 = vrot.lane.b32.xlu0 %v11, 12
    %v13 = vpop.permute.xlu0 %12
    %vm14 = vcmask 130144
    %15 = vst.msk [vmem:[#allocation0] sm:$0x1] %vm14, %v13
    %s16 = scalar_lea.vmem [#allocation1], 2
    %v17 = vld [vmem:[%s16] sm:$0x1]
    %18 = vrot.lane.b32.xlu0 %v17, 8
    %v19 = vpop.permute.xlu0 %18
    %vm20 = vcmask 97344
    %21 = vst.msk [vmem:[#allocation0] sm:$0x1] %vm20, %v19
    %s22 = scalar_lea.vmem [#allocation1], 1
    %v23 = vld [vmem:[%s22] sm:$0x1]
    %24 = vrot.lane.b32.xlu0 %v23, 4
    %v25 = vpop.permute.xlu0 %24
    %vm26 = vcmask 64544
    %27 = vst.msk [vmem:[#allocation0] sm:$0x1] %vm26, %v25
    %s29 = sshll.u32 1, 1
    %s30 = ssub.s32 %s29, 1
    %v32 = vld [vmem:[#allocation0] sm:%s30]
    %s33 = sshll.u32 1, 1
    %s34 = ssub.s32 %s33, 1
    %35 = vst [vmem:[%s1] sm:%s34] %v32

// kernel: unet_up_conv_block.3
$region0: #{unet_up_conv_block.3}
  #allocation0 [shape = 'u32[]', space=smem, size = 0x4, offset = 0x4, fixed_abs, tag = 'smem constant byte address 0x4 - core index']
  #allocation1 [shape = 'u32[144,128]{1,0:T(1,128)}', space=vmem, size = 0x12000, scoped, tag = 'internal scratch']
  %s0 = inlined_call_operand.vmem [shape: bf16[128,8], index: 0, kind: input, shape index: {}]
  %s1 = inlined_call_operand.vmem [shape: bf16[8,128], index: 1, kind: input, shape index: {}]
  %s2 = inlined_call_operand.vmem [shape: f32[1,128], index: 2, kind: input, shape index: {}]
  %s3 = inlined_call_operand.vmem [shape: bf16[128,128], index: 3, kind: output, shape index: {}]
  %s4 = sld [smem:[#allocation0]]
  $region22: #{unet_up_conv_block.3} parent=0
    _
  %s6 = ssub.s32 1, %s4
  %s7 = scalar_select 0, %s6, %s4
  // Predicated region
  $region2: #{unet_up_conv_block.3} parent=0 // pred_check
    _
  $region3: #{unet_up_conv_block.3} parent=0 // pred_check_branch
    %9 = sbr.rel (0) target = $region5
  $region4: #{unet_up_conv_block.3} parent=0 // pred_region
    _
  $region5: #{unet_up_conv_block.3} parent=0 // pred_fallthru
    _
  // Predicated region
  $region6: #{unet_up_conv_block.3} parent=0 // pred_check
    _
  $region7: #{unet_up_conv_block.3} parent=0 // pred_check_branch
    %11 = sbr.rel (0) target = $region9
  $region8: #{unet_up_conv_block.3} parent=0 // pred_region
    _
  $region9: #{unet_up_conv_block.3} parent=0 // pred_fallthru
    _
  // Predicated region
  $region10: #{unet_up_conv_block.3} parent=0 // pred_check
    _
  $region11: #{unet_up_conv_block.3} parent=0 // pred_check_branch
    %13 = sbr.rel (0) target = $region13
  $region12: #{unet_up_conv_block.3} parent=0 // pred_region
    _
  $region13: #{unet_up_conv_block.3} parent=0 // pred_fallthru
    _
  %v15 = vld [vmem:[%s0] sm:$0xf]
  %v16 = vld [vmem:[%s0 + $0x4] sm:$0xf]
  %v17 = vld [vmem:[%s0 + $0x8] sm:$0xf]
  %v18 = vld [vmem:[%s0 + $0xc] sm:$0xf]
  %v19 = vld [vmem:[%s0 + $0x10] sm:$0xf]
  %v20 = vld [vmem:[%s0 + $0x14] sm:$0xf]
  %v21 = vld [vmem:[%s0 + $0x18] sm:$0xf]
  %v22 = vld [vmem:[%s0 + $0x1c] sm:$0xf]
  %v23 = vld [vmem:[%s0 + $0x20] sm:$0xf]
  %v24 = vld [vmem:[%s0 + $0x24] sm:$0xf]
  %v25 = vld [vmem:[%s0 + $0x28] sm:$0xf]
  %v26 = vld [vmem:[%s0 + $0x2c] sm:$0xf]
  %v27 = vld [vmem:[%s0 + $0x30] sm:$0xf]
  %v28 = vld [vmem:[%s0 + $0x34] sm:$0xf]
  %v29 = vld [vmem:[%s0 + $0x38] sm:$0xf]
  %v30 = vld [vmem:[%s0 + $0x3c] sm:$0xf]
  %v31 = vld [vmem:[%s1] sm:$0xf]
  %v32 = vld [vmem:[%s2] sm:$0x1]
  %v34 = vlaneseq
  %v35 = vshrl.u32 %v34, 7
  %v36 = vsub.s32 0, %v35
  %v37 = vrot.slane %v32, %v36
  %v55 = vunpack.c.l.b16 %v15
  %v56 = vunpack.c.l.b16 %v16
  %v57 = vunpack.c.l.b16 %v17
  %v58 = vunpack.c.l.b16 %v18
  %v59 = vunpack.c.l.b16 %v19
  %v60 = vunpack.c.l.b16 %v20
  %v61 = vunpack.c.l.b16 %v21
  %v62 = vunpack.c.l.b16 %v22
  %v63 = vunpack.c.l.b16 %v23
  %v64 = vunpack.c.l.b16 %v24
  %v65 = vunpack.c.l.b16 %v25
  %v66 = vunpack.c.l.b16 %v26
  %v67 = vunpack.c.l.b16 %v27
  %v68 = vunpack.c.l.b16 %v28
  %v69 = vunpack.c.l.b16 %v29
  %v70 = vunpack.c.l.b16 %v30
  %v71 = vpack.c.b16 %v56, %v55
  %v72 = vpack.c.b16 %v58, %v57
  %v73 = vpack.c.b16 %v60, %v59
  %v74 = vpack.c.b16 %v62, %v61
  %v75 = vpack.c.b16 %v64, %v63
  %v76 = vpack.c.b16 %v66, %v65
  %v77 = vpack.c.b16 %v68, %v67
  %v78 = vpack.c.b16 %v70, %v69
  %vm79 = vcmask 64512
  %v81 = vsel %vm79, %v71, 0
  %v84 = vsel %vm79, %v72, 0
  %v87 = vsel %vm79, %v73, 0
  %v90 = vsel %vm79, %v74, 0
  %v93 = vsel %vm79, %v75, 0
  %v96 = vsel %vm79, %v76, 0
  %v99 = vsel %vm79, %v77, 0
  %v102 = vsel %vm79, %v78, 0
  %vm104 = vcmask 1043456
  %v106 = vsel %vm104, %v31, 0
  %108 = vmatprep.subr.bf16.mxu0 0
  %109 = vmatpush1.bf16.msra.mxu0 0
  %110 = vmatprep.subr.bf16.mxu0 0
  %111 = vmatpush1.bf16.msra.mxu0 0
  %112 = vmatprep.subr.bf16.mxu0 0
  %113 = vmatpush1.bf16.msra.mxu0 0
  %114 = vmatprep.subr.bf16.mxu0 0
  %115 = vmatpush1.bf16.msra.mxu0 0
  %116 = vmatprep.subr.bf16.mxu0 0
  %117 = vmatpush1.bf16.msra.mxu0 0
  %118 = vmatprep.subr.bf16.mxu0 0
  %119 = vmatpush1.bf16.msra.mxu0 0
  %120 = vmatprep.subr.bf16.mxu0 0
  %121 = vmatpush1.bf16.msra.mxu0 0
  %122 = vmatprep.subr.bf16.mxu0 0
  %123 = vmatpush1.bf16.msra.mxu0 %v106
  %124 = vmatprep.subr.bf16.mxu0 0
  %125 = vmatpush2.bf16.msra.mxu0 0
  %126 = vmatprep.subr.bf16.mxu0 0
  %127 = vmatpush2.bf16.msra.mxu0 0
  %128 = vmatprep.subr.bf16.mxu0 0
  %129 = vmatpush2.bf16.msra.mxu0 0
  %130 = vmatprep.subr.bf16.mxu0 0
  %131 = vmatpush2.bf16.msra.mxu0 0
  %132 = vmatprep.subr.bf16.mxu0 0
  %133 = vmatpush2.bf16.msra.mxu0 0
  %134 = vmatprep.subr.bf16.mxu0 0
  %135 = vmatpush2.bf16.msra.mxu0 0
  %136 = vmatprep.subr.bf16.mxu0 0
  %137 = vmatpush2.bf16.msra.mxu0 0
  %138 = vmatprep.subr.bf16.mxu0 0
  %139 = vmatpush2.bf16.msra.mxu0 0
  %140 = vmatprep.mubr.bf16.mxu0 0
  %141 = vmatmul.mubr.bf16.gmra.mxu0 %v81
  %v142 = vpop.f32.mrf.mxu0
  %v143 = vadd.f32 %v37, %v142
  %v144 = vpop.f32.mrf.mxu0
  %v145 = vpop.f32.mrf.mxu0
  %v146 = vadd.f32 %v37, %v145
  %v147 = vpop.f32.mrf.mxu0
  %148 = vmatprep.mubr.bf16.mxu0 0
  %149 = vmatmul.mubr.bf16.gmra.mxu0 %v84
  %v150 = vpop.f32.mrf.mxu0
  %v151 = vadd.f32 %v37, %v150
  %v152 = vpop.f32.mrf.mxu0
  %v153 = vpop.f32.mrf.mxu0
  %v154 = vadd.f32 %v37, %v153
  %v155 = vpop.f32.mrf.mxu0
  %156 = vmatprep.mubr.bf16.mxu0 0
  %157 = vmatmul.mubr.bf16.gmra.mxu0 %v87
  %v158 = vpop.f32.mrf.mxu0
  %v159 = vadd.f32 %v37, %v158
  %v160 = vpop.f32.mrf.mxu0
  %v161 = vpop.f32.mrf.mxu0
  %v162 = vadd.f32 %v37, %v161
  %v163 = vpop.f32.mrf.mxu0
  %164 = vmatprep.mubr.bf16.mxu0 0
  %165 = vmatmul.mubr.bf16.gmra.mxu0 %v90
  %v166 = vpop.f32.mrf.mxu0
  %v167 = vadd.f32 %v37, %v166
  %v168 = vpop.f32.mrf.mxu0
  %v169 = vpop.f32.mrf.mxu0
  %v170 = vadd.f32 %v37, %v169
  %v171 = vpop.f32.mrf.mxu0
  %172 = vmatprep.mubr.bf16.mxu0 0
  %173 = vmatmul.mubr.bf16.gmra.mxu0 %v93
  %v174 = vpop.f32.mrf.mxu0
  %v175 = vadd.f32 %v37, %v174
  %v176 = vpop.f32.mrf.mxu0
  %v177 = vpop.f32.mrf.mxu0
  %v178 = vadd.f32 %v37, %v177
  %v179 = vpop.f32.mrf.mxu0
  %180 = vmatprep.mubr.bf16.mxu0 0
  %181 = vmatmul.mubr.bf16.gmra.mxu0 %v96
  %v182 = vpop.f32.mrf.mxu0
  %v183 = vadd.f32 %v37, %v182
  %v184 = vpop.f32.mrf.mxu0
  %v185 = vpop.f32.mrf.mxu0
  %v186 = vadd.f32 %v37, %v185
  %v187 = vpop.f32.mrf.mxu0
  %188 = vmatprep.mubr.bf16.mxu0 0
  %189 = vmatmul.mubr.bf16.gmra.mxu0 %v99
  %v190 = vpop.f32.mrf.mxu0
  %v191 = vadd.f32 %v37, %v190
  %v192 = vpop.f32.mrf.mxu0
  %v193 = vpop.f32.mrf.mxu0
  %v194 = vadd.f32 %v37, %v193
  %v195 = vpop.f32.mrf.mxu0
  %196 = vmatprep.mubr.bf16.mxu0 0
  %197 = vmatmul.mubr.bf16.gmra.mxu0 %v102
  %v198 = vpop.f32.mrf.mxu0
  %v199 = vadd.f32 %v37, %v198
  %v200 = vpop.f32.mrf.mxu0
  %v201 = vpop.f32.mrf.mxu0
  %v202 = vadd.f32 %v37, %v201
  %v203 = vpop.f32.mrf.mxu0
  %204 = vdwg.mxu0
  %v205 = vpack.c.bf16 %v146, %v143
  %v206 = vpack.c.bf16 %v154, %v151
  %v207 = vpack.c.bf16 %v162, %v159
  %v208 = vpack.c.bf16 %v170, %v167
  %v209 = vpack.c.bf16 %v178, %v175
  %v210 = vpack.c.bf16 %v186, %v183
  %v211 = vpack.c.bf16 %v194, %v191
  %v212 = vpack.c.bf16 %v202, %v199
  %v221 = vunpack.c.l.b16 %v205
  %v222 = vunpack.c.h.b16 %v205
  %v223 = vunpack.c.l.b16 %v206
  %v224 = vunpack.c.h.b16 %v206
  %v225 = vunpack.c.l.b16 %v207
  %v226 = vunpack.c.h.b16 %v207
  %v227 = vunpack.c.l.b16 %v208
  %v228 = vunpack.c.h.b16 %v208
  %v229 = vunpack.c.l.b16 %v209
  %v230 = vunpack.c.h.b16 %v209
  %v231 = vunpack.c.l.b16 %v210
  %v232 = vunpack.c.h.b16 %v210
  %v233 = vunpack.c.l.b16 %v211
  %v234 = vunpack.c.h.b16 %v211
  %v235 = vunpack.c.l.b16 %v212
  %v236 = vunpack.c.h.b16 %v212
  %v237 = vpack.c.b16 %v221, %v221
  %v238 = vpack.c.b16 %v222, %v222
  %v239 = vpack.c.b16 %v223, %v223
  %v240 = vpack.c.b16 %v224, %v224
  %v241 = vpack.c.b16 %v225, %v225
  %v242 = vpack.c.b16 %v226, %v226
  %v243 = vpack.c.b16 %v227, %v227
  %v244 = vpack.c.b16 %v228, %v228
  %v245 = vpack.c.b16 %v229, %v229
  %v246 = vpack.c.b16 %v230, %v230
  %v247 = vpack.c.b16 %v231, %v231
  %v248 = vpack.c.b16 %v232, %v232
  %v249 = vpack.c.b16 %v233, %v233
  %v250 = vpack.c.b16 %v234, %v234
  %v251 = vpack.c.b16 %v235, %v235
  %v252 = vpack.c.b16 %v236, %v236
  %269 = vst [vmem:[%s3] sm:$0xf] %v237
  %270 = vst [vmem:[%s3 + $0x4] sm:$0xf] %v238
  %271 = vst [vmem:[%s3 + $0x8] sm:$0xf] %v239
  %272 = vst [vmem:[%s3 + $0xc] sm:$0xf] %v240
  %273 = vst [vmem:[%s3 + $0x10] sm:$0xf] %v241
  %274 = vst [vmem:[%s3 + $0x14] sm:$0xf] %v242
  %275 = vst [vmem:[%s3 + $0x18] sm:$0xf] %v243
  %276 = vst [vmem:[%s3 + $0x1c] sm:$0xf] %v244
  %277 = vst [vmem:[%s3 + $0x20] sm:$0xf] %v245
  %278 = vst [vmem:[%s3 + $0x24] sm:$0xf] %v246
  %279 = vst [vmem:[%s3 + $0x28] sm:$0xf] %v247
  %280 = vst [vmem:[%s3 + $0x2c] sm:$0xf] %v248
  %281 = vst [vmem:[%s3 + $0x30] sm:$0xf] %v249
  %282 = vst [vmem:[%s3 + $0x34] sm:$0xf] %v250
  %283 = vst [vmem:[%s3 + $0x38] sm:$0xf] %v251
  %284 = vst [vmem:[%s3 + $0x3c] sm:$0xf] %v252
  // Predicated region
  $region14: #{unet_up_conv_block.3} parent=0 // pred_check
    _
  $region15: #{unet_up_conv_block.3} parent=0 // pred_check_branch
    %286 = sbr.rel (0) target = $region17
  $region16: #{unet_up_conv_block.3} parent=0 // pred_region
    _
  $region17: #{unet_up_conv_block.3} parent=0 // pred_fallthru
    _
  // Predicated region
  $region18: #{unet_up_conv_block.3} parent=0 // pred_check
    _
  $region19: #{unet_up_conv_block.3} parent=0 // pred_check_branch
    %288 = sbr.rel (0) target = $region21
  $region20: #{unet_up_conv_block.3} parent=0 // pred_region
    _
  $region21: #{unet_up_conv_block.3} parent=0 // pred_fallthru
    _

// kernel: unet_up_conv_block.5
$region0: #{unet_up_conv_block.5}
  #allocation0 [shape = 'u32[]', space=smem, size = 0x4, offset = 0x4, fixed_abs, tag = 'smem constant byte address 0x4 - core index']
  #allocation1 [shape = 'u32[144,128]{1,0:T(1,128)}', space=vmem, size = 0x12000, scoped, tag = 'internal scratch']
  %s0 = inlined_call_operand.vmem [shape: bf16[2,14,14,128], index: 0, kind: input, shape index: {}, may-alias: {0,1,2,3,4,5,6,7}]
  %s1 = inlined_call_operand.vmem [shape: bf16[2,14,14,128], index: 1, kind: input, shape index: {}, may-alias: {0,1,2,3,4,5,6,7}]
  %s2 = inlined_call_operand.vmem [shape: bf16[2,14,14,128], index: 2, kind: input, shape index: {}, may-alias: {0,1,2,3,4,5,6,7}]
  %s3 = inlined_call_operand.vmem [shape: bf16[2,14,14,128], index: 3, kind: input, shape index: {}, may-alias: {0,1,2,3,4,5,6,7}]
  %s4 = inlined_call_operand.vmem [shape: bf16[2,14,14,128], index: 4, kind: input, shape index: {}, may-alias: {0,1,2,3,4,5,6,7}]
  %s5 = inlined_call_operand.vmem [shape: bf16[2,14,14,128], index: 5, kind: input, shape index: {}, may-alias: {0,1,2,3,4,5,6,7}]
  %s6 = inlined_call_operand.vmem [shape: bf16[2,14,14,128], index: 6, kind: input, shape index: {}, may-alias: {0,1,2,3,4,5,6,7}]
  %s7 = inlined_call_operand.vmem [shape: bf16[2,14,14,128], index: 7, kind: input, shape index: {}, may-alias: {0,1,2,3,4,5,6,7}]
  %s8 = inlined_call_operand.vmem [shape: bf16[3,3,128,128], index: 8, kind: input, shape index: {}]
  %s9 = inlined_call_operand.vmem [shape: f32[1,128], index: 9, kind: input, shape index: {}]
  %s10 = inlined_call_operand.vmem [shape: f32[2,12,12,128], index: 10, kind: output, shape index: {}]
  %s11 = sld [smem:[#allocation0]]
  $region73: #{unet_up_conv_block.5} parent=0
    _
  %s13 = ssub.s32 1, %s11
  %s14 = scalar_select 0, %s13, %s11
  loop: start=0, step=1, limit=6
  $region2: #{unet_up_conv_block.5} parent=0 // loop_pre_header
    _
  $region3: #{unet_up_conv_block.5} parent=0 // loop_header
    %s16 = sphi 0, %s20
    %p17 = scmp.ge.s32.totalorder %s16, 6
    %s23 = sphi 0, %s35
    %s24 = sphi 0, %s31
    %s25 = sphi 0, %s23
    %s26 = sphi 0, %s24
    %s27 = sphi 0, %s25
    %s28 = sphi 0, %s26
    %s42 = sphi 0, %s44
    %s45 = sphi 0, %s42
    %s46 = sphi 0, %s45
    %s62 = sphi 0, %s46
    %s74 = sphi 0, %s76
    %s77 = sphi 0, %s74
    %s78 = sphi 0, %s77
    %s94 = sphi 0, %s78
    %s106 = sphi 0, %s108
    %s109 = sphi 0, %s106
    %s110 = sphi 0, %s109
    %s126 = sphi 0, %s110
    %s138 = sphi 0, %s140
    %s141 = sphi 0, %s138
    %s142 = sphi 0, %s141
    %s158 = sphi 0, %s142
    %s170 = sphi 0, %s172
    %s173 = sphi 0, %s170
    %s174 = sphi 0, %s173
    %s190 = sphi 0, %s174
    %s202 = sphi 0, %s204
    %s205 = sphi 0, %s202
    %s206 = sphi 0, %s205
    %s222 = sphi 0, %s206
    %s234 = sphi 0, %s236
    %s237 = sphi 0, %s234
    %s238 = sphi 0, %s237
    %s254 = sphi 0, %s238
    %s266 = sphi 0, %s268
    %s269 = sphi 0, %s266
    %s270 = sphi 0, %s269
    %s286 = sphi 0, %s270
    %s290 = sphi 0, %s290
    %s292 = sphi 0, %s290
    %s293 = sphi 0, %s292
    %s307 = sphi 0, %s293
    %s311 = sphi 0, %s311
    %s313 = sphi 0, %s311
    %s314 = sphi 0, %s313
    %s328 = sphi 0, %s314
    %s336 = sphi 0, %s338
    %s339 = sphi 0, %s336
    %s340 = sphi 0, %s339
    %s356 = sphi 0, %s340
  $region4: #{unet_up_conv_block.5} parent=0 // loop_header_branch
    %19 = sbr.rel (%p17) target = $region8
  $region5: #{unet_up_conv_block.5} parent=0 // loop_body
    %s21 = ssub.s32 %s16, 1
    %s22 = ssub.s32 %s16, 2
    %s29 = sadd.s32 1, %s24
    %p30 = scmp.ge.s32.totalorder %s29, 2
    %s31 = scalar_select %p30, 0, %s29
    %s32 = sadd.s32 1, %s23
    %s33 = scalar_select %p30, %s32, %s23
    %p34 = scmp.ge.s32.totalorder %s33, 2
    %s35 = scalar_select %p34, 0, %s33
    %s36 = smul.u32 %s24, 6
    %s37 = smul.u32 %s31, 6
    %s38 = ssub.s32 %s23, %s35
    %s39 = ssub.s32 %s36, %s37
    %s40 = sor.u32 %s38, %s39
    %p41 = scmp.eq.s32.totalorder %s40, 0
    %s43 = sadd.s32 %s42, 1
    %s44 = scalar_select %p41, %s42, %s43
    %p47 = pneg %p41
    %p48 = scmp.eq.s32.totalorder %s16, 3
    %p49 = por %p47, %p48
    %p50 = scmp.ne.s32.totalorder %s42, %s45
    %p51 = scmp.eq.s32.totalorder %s16, 0
    %p52 = por %p50, %p51
    %p53 = scmp.ne.s32.totalorder %s42, %s45
    %p54 = scmp.eq.s32.totalorder %s21, 3
    %p55 = por %p53, %p54
    %p56 = scmp.ne.s32.totalorder %s45, %s46
    %p57 = scmp.eq.s32.totalorder %s21, 0
    %p58 = por %p56, %p57
    %p59 = scmp.ne.s32.totalorder %s45, %s46
    %p60 = scmp.eq.s32.totalorder %s22, 3
    %p61 = por %p59, %p60
    %p63 = scmp.ne.s32.totalorder %s46, %s62
    %p64 = scmp.eq.s32.totalorder %s22, 0
    %p65 = por %p63, %p64
    %s66 = smul.u32 %s24, 6
    %s67 = sadd.s32 %s66, 1
    %s68 = smul.u32 %s31, 6
    %s69 = sadd.s32 %s68, 1
    %s70 = ssub.s32 %s23, %s35
    %s71 = ssub.s32 %s67, %s69
    %s72 = sor.u32 %s70, %s71
    %p73 = scmp.eq.s32.totalorder %s72, 0
    %s75 = sadd.s32 %s74, 1
    %s76 = scalar_select %p73, %s74, %s75
    %p79 = pneg %p73
    %p80 = scmp.eq.s32.totalorder %s16, 3
    %p81 = por %p79, %p80
    %p82 = scmp.ne.s32.totalorder %s74, %s77
    %p83 = scmp.eq.s32.totalorder %s16, 0
    %p84 = por %p82, %p83
    %p85 = scmp.ne.s32.totalorder %s74, %s77
    %p86 = scmp.eq.s32.totalorder %s21, 3
    %p87 = por %p85, %p86
    %p88 = scmp.ne.s32.totalorder %s77, %s78
    %p89 = scmp.eq.s32.totalorder %s21, 0
    %p90 = por %p88, %p89
    %p91 = scmp.ne.s32.totalorder %s77, %s78
    %p92 = scmp.eq.s32.totalorder %s22, 3
    %p93 = por %p91, %p92
    %p95 = scmp.ne.s32.totalorder %s78, %s94
    %p96 = scmp.eq.s32.totalorder %s22, 0
    %p97 = por %p95, %p96
    %s98 = smul.u32 %s24, 6
    %s99 = sadd.s32 %s98, 2
    %s100 = smul.u32 %s31, 6
    %s101 = sadd.s32 %s100, 2
    %s102 = ssub.s32 %s23, %s35
    %s103 = ssub.s32 %s99, %s101
    %s104 = sor.u32 %s102, %s103
    %p105 = scmp.eq.s32.totalorder %s104, 0
    %s107 = sadd.s32 %s106, 1
    %s108 = scalar_select %p105, %s106, %s107
    %p111 = pneg %p105
    %p112 = scmp.eq.s32.totalorder %s16, 3
    %p113 = por %p111, %p112
    %p114 = scmp.ne.s32.totalorder %s106, %s109
    %p115 = scmp.eq.s32.totalorder %s16, 0
    %p116 = por %p114, %p115
    %p117 = scmp.ne.s32.totalorder %s106, %s109
    %p118 = scmp.eq.s32.totalorder %s21, 3
    %p119 = por %p117, %p118
    %p120 = scmp.ne.s32.totalorder %s109, %s110
    %p121 = scmp.eq.s32.totalorder %s21, 0
    %p122 = por %p120, %p121
    %p123 = scmp.ne.s32.totalorder %s109, %s110
    %p124 = scmp.eq.s32.totalorder %s22, 3
    %p125 = por %p123, %p124
    %p127 = scmp.ne.s32.totalorder %s110, %s126
    %p128 = scmp.eq.s32.totalorder %s22, 0
    %p129 = por %p127, %p128
    %s130 = smul.u32 %s24, 6
    %s131 = sadd.s32 %s130, 3
    %s132 = smul.u32 %s31, 6
    %s133 = sadd.s32 %s132, 3
    %s134 = ssub.s32 %s23, %s35
    %s135 = ssub.s32 %s131, %s133
    %s136 = sor.u32 %s134, %s135
    %p137 = scmp.eq.s32.totalorder %s136, 0
    %s139 = sadd.s32 %s138, 1
    %s140 = scalar_select %p137, %s138, %s139
    %p143 = pneg %p137
    %p144 = scmp.eq.s32.totalorder %s16, 3
    %p145 = por %p143, %p144
    %p146 = scmp.ne.s32.totalorder %s138, %s141
    %p147 = scmp.eq.s32.totalorder %s16, 0
    %p148 = por %p146, %p147
    %p149 = scmp.ne.s32.totalorder %s138, %s141
    %p150 = scmp.eq.s32.totalorder %s21, 3
    %p151 = por %p149, %p150
    %p152 = scmp.ne.s32.totalorder %s141, %s142
    %p153 = scmp.eq.s32.totalorder %s21, 0
    %p154 = por %p152, %p153
    %p155 = scmp.ne.s32.totalorder %s141, %s142
    %p156 = scmp.eq.s32.totalorder %s22, 3
    %p157 = por %p155, %p156
    %p159 = scmp.ne.s32.totalorder %s142, %s158
    %p160 = scmp.eq.s32.totalorder %s22, 0
    %p161 = por %p159, %p160
    %s162 = smul.u32 %s24, 6
    %s163 = sadd.s32 %s162, 4
    %s164 = smul.u32 %s31, 6
    %s165 = sadd.s32 %s164, 4
    %s166 = ssub.s32 %s23, %s35
    %s167 = ssub.s32 %s163, %s165
    %s168 = sor.u32 %s166, %s167
    %p169 = scmp.eq.s32.totalorder %s168, 0
    %s171 = sadd.s32 %s170, 1
    %s172 = scalar_select %p169, %s170, %s171
    %p175 = pneg %p169
    %p176 = scmp.eq.s32.totalorder %s16, 3
    %p177 = por %p175, %p176
    %p178 = scmp.ne.s32.totalorder %s170, %s173
    %p179 = scmp.eq.s32.totalorder %s16, 0
    %p180 = por %p178, %p179
    %p181 = scmp.ne.s32.totalorder %s170, %s173
    %p182 = scmp.eq.s32.totalorder %s21, 3
    %p183 = por %p181, %p182
    %p184 = scmp.ne.s32.totalorder %s173, %s174
    %p185 = scmp.eq.s32.totalorder %s21, 0
    %p186 = por %p184, %p185
    %p187 = scmp.ne.s32.totalorder %s173, %s174
    %p188 = scmp.eq.s32.totalorder %s22, 3
    %p189 = por %p187, %p188
    %p191 = scmp.ne.s32.totalorder %s174, %s190
    %p192 = scmp.eq.s32.totalorder %s22, 0
    %p193 = por %p191, %p192
    %s194 = smul.u32 %s24, 6
    %s195 = sadd.s32 %s194, 5
    %s196 = smul.u32 %s31, 6
    %s197 = sadd.s32 %s196, 5
    %s198 = ssub.s32 %s23, %s35
    %s199 = ssub.s32 %s195, %s197
    %s200 = sor.u32 %s198, %s199
    %p201 = scmp.eq.s32.totalorder %s200, 0
    %s203 = sadd.s32 %s202, 1
    %s204 = scalar_select %p201, %s202, %s203
    %p207 = pneg %p201
    %p208 = scmp.eq.s32.totalorder %s16, 3
    %p209 = por %p207, %p208
    %p210 = scmp.ne.s32.totalorder %s202, %s205
    %p211 = scmp.eq.s32.totalorder %s16, 0
    %p212 = por %p210, %p211
    %p213 = scmp.ne.s32.totalorder %s202, %s205
    %p214 = scmp.eq.s32.totalorder %s21, 3
    %p215 = por %p213, %p214
    %p216 = scmp.ne.s32.totalorder %s205, %s206
    %p217 = scmp.eq.s32.totalorder %s21, 0
    %p218 = por %p216, %p217
    %p219 = scmp.ne.s32.totalorder %s205, %s206
    %p220 = scmp.eq.s32.totalorder %s22, 3
    %p221 = por %p219, %p220
    %p223 = scmp.ne.s32.totalorder %s206, %s222
    %p224 = scmp.eq.s32.totalorder %s22, 0
    %p225 = por %p223, %p224
    %s226 = smul.u32 %s24, 6
    %s227 = sadd.s32 %s226, 6
    %s228 = smul.u32 %s31, 6
    %s229 = sadd.s32 %s228, 6
    %s230 = ssub.s32 %s23, %s35
    %s231 = ssub.s32 %s227, %s229
    %s232 = sor.u32 %s230, %s231
    %p233 = scmp.eq.s32.totalorder %s232, 0
    %s235 = sadd.s32 %s234, 1
    %s236 = scalar_select %p233, %s234, %s235
    %p239 = pneg %p233
    %p240 = scmp.eq.s32.totalorder %s16, 3
    %p241 = por %p239, %p240
    %p242 = scmp.ne.s32.totalorder %s234, %s237
    %p243 = scmp.eq.s32.totalorder %s16, 0
    %p244 = por %p242, %p243
    %p245 = scmp.ne.s32.totalorder %s234, %s237
    %p246 = scmp.eq.s32.totalorder %s21, 3
    %p247 = por %p245, %p246
    %p248 = scmp.ne.s32.totalorder %s237, %s238
    %p249 = scmp.eq.s32.totalorder %s21, 0
    %p250 = por %p248, %p249
    %p251 = scmp.ne.s32.totalorder %s237, %s238
    %p252 = scmp.eq.s32.totalorder %s22, 3
    %p253 = por %p251, %p252
    %p255 = scmp.ne.s32.totalorder %s238, %s254
    %p256 = scmp.eq.s32.totalorder %s22, 0
    %p257 = por %p255, %p256
    %s258 = smul.u32 %s24, 6
    %s259 = sadd.s32 %s258, 7
    %s260 = smul.u32 %s31, 6
    %s261 = sadd.s32 %s260, 7
    %s262 = ssub.s32 %s23, %s35
    %s263 = ssub.s32 %s259, %s261
    %s264 = sor.u32 %s262, %s263
    %p265 = scmp.eq.s32.totalorder %s264, 0
    %s267 = sadd.s32 %s266, 1
    %s268 = scalar_select %p265, %s266, %s267
    %p271 = pneg %p265
    %p272 = scmp.eq.s32.totalorder %s16, 3
    %p273 = por %p271, %p272
    %p274 = scmp.ne.s32.totalorder %s266, %s269
    %p275 = scmp.eq.s32.totalorder %s16, 0
    %p276 = por %p274, %p275
    %p277 = scmp.ne.s32.totalorder %s266, %s269
    %p278 = scmp.eq.s32.totalorder %s21, 3
    %p279 = por %p277, %p278
    %p280 = scmp.ne.s32.totalorder %s269, %s270
    %p281 = scmp.eq.s32.totalorder %s21, 0
    %p282 = por %p280, %p281
    %p283 = scmp.ne.s32.totalorder %s269, %s270
    %p284 = scmp.eq.s32.totalorder %s22, 3
    %p285 = por %p283, %p284
    %p287 = scmp.ne.s32.totalorder %s270, %s286
    %p288 = scmp.eq.s32.totalorder %s22, 0
    %p289 = por %p287, %p288
    %s291 = sadd.s32 %s290, 1
    %p294 = scmp.eq.s32.totalorder %s16, 3
    %p295 = scmp.ne.s32.totalorder %s290, %s292
    %p296 = scmp.eq.s32.totalorder %s16, 0
    %p297 = por %p295, %p296
    %p298 = scmp.ne.s32.totalorder %s290, %s292
    %p299 = scmp.eq.s32.totalorder %s21, 3
    %p300 = por %p298, %p299
    %p301 = scmp.ne.s32.totalorder %s292, %s293
    %p302 = scmp.eq.s32.totalorder %s21, 0
    %p303 = por %p301, %p302
    %p304 = scmp.ne.s32.totalorder %s292, %s293
    %p305 = scmp.eq.s32.totalorder %s22, 3
    %p306 = por %p304, %p305
    %p308 = scmp.ne.s32.totalorder %s293, %s307
    %p309 = scmp.eq.s32.totalorder %s22, 0
    %p310 = por %p308, %p309
    %s312 = sadd.s32 %s311, 1
    %p315 = scmp.eq.s32.totalorder %s16, 3
    %p316 = scmp.ne.s32.totalorder %s311, %s313
    %p317 = scmp.eq.s32.totalorder %s16, 0
    %p318 = por %p316, %p317
    %p319 = scmp.ne.s32.totalorder %s311, %s313
    %p320 = scmp.eq.s32.totalorder %s21, 3
    %p321 = por %p319, %p320
    %p322 = scmp.ne.s32.totalorder %s313, %s314
    %p323 = scmp.eq.s32.totalorder %s21, 0
    %p324 = por %p322, %p323
    %p325 = scmp.ne.s32.totalorder %s313, %s314
    %p326 = scmp.eq.s32.totalorder %s22, 3
    %p327 = por %p325, %p326
    %p329 = scmp.ne.s32.totalorder %s314, %s328
    %p330 = scmp.eq.s32.totalorder %s22, 0
    %p331 = por %p329, %p330
    %s332 = ssub.s32 %s23, %s35
    %s333 = ssub.s32 %s24, %s31
    %s334 = sor.u32 %s332, %s333
    %p335 = scmp.eq.s32.totalorder %s334, 0
    %s337 = sadd.s32 %s336, 1
    %s338 = scalar_select %p335, %s336, %s337
    %p341 = pneg %p335
    %p342 = scmp.eq.s32.totalorder %s16, 3
    %p343 = por %p341, %p342
    %p344 = scmp.ne.s32.totalorder %s336, %s339
    %p345 = scmp.eq.s32.totalorder %s16, 0
    %p346 = por %p344, %p345
    %p347 = scmp.ne.s32.totalorder %s336, %s339
    %p348 = scmp.eq.s32.totalorder %s21, 3
    %p349 = por %p347, %p348
    %p350 = scmp.ne.s32.totalorder %s339, %s340
    %p351 = scmp.eq.s32.totalorder %s21, 0
    %p352 = por %p350, %p351
    %p353 = scmp.ne.s32.totalorder %s339, %s340
    %p354 = scmp.eq.s32.totalorder %s22, 3
    %p355 = por %p353, %p354
    %p357 = scmp.ne.s32.totalorder %s340, %s356
    %p358 = scmp.eq.s32.totalorder %s22, 0
    %p359 = por %p357, %p358
    %p360 = scmp.le.s32.totalorder 1, %s16
    %p361 = scmp.lt.s32.totalorder %s16, 5
    %p362 = pnand %p360, %p361
    %p363 = pneg %p362
    // Predicated region
    $region9: #{unet_up_conv_block.5} parent=5 // pred_check
      _
    $region10: #{unet_up_conv_block.5} parent=5 // pred_check_branch
      %365 = sbr.rel (%p362) target = $region12
    $region11: #{unet_up_conv_block.5} parent=5 // pred_region
      %s366 = ssub.s32 %s16, 1
      // Predicated region
      $region13: #{unet_up_conv_block.5} parent=11 // pred_check
        %p367 = pneg %p303
      $region14: #{unet_up_conv_block.5} parent=11 // pred_check_branch
        %369 = sbr.rel (%p367) target = $region16
      $region15: #{unet_up_conv_block.5} parent=11 // pred_region
        _
      $region16: #{unet_up_conv_block.5} parent=11 // pred_fallthru
        _
      // Predicated region
      $region17: #{unet_up_conv_block.5} parent=11 // pred_check
        %p370 = pneg %p324
      $region18: #{unet_up_conv_block.5} parent=11 // pred_check_branch
        %372 = sbr.rel (%p370) target = $region20
      $region19: #{unet_up_conv_block.5} parent=11 // pred_region
        _
      $region20: #{unet_up_conv_block.5} parent=11 // pred_fallthru
        _
    $region12: #{unet_up_conv_block.5} parent=5 // pred_fallthru
      _
    %p373 = scmp.lt.s32.totalorder %s16, 4
    // Predicated region
    $region21: #{unet_up_conv_block.5} parent=5 // pred_check
      %p374 = pneg %p373
    $region22: #{unet_up_conv_block.5} parent=5 // pred_check_branch
      %376 = sbr.rel (%p374) target = $region24
    $region23: #{unet_up_conv_block.5} parent=5 // pred_region
      // Predicated region
      $region25: #{unet_up_conv_block.5} parent=23 // pred_check
        %p377 = pneg %p52
      $region26: #{unet_up_conv_block.5} parent=23 // pred_check_branch
        %379 = sbr.rel (%p377) target = $region28
      $region27: #{unet_up_conv_block.5} parent=23 // pred_region
        %s380 = smul.u32 %s24, 6
        %p381 = scmp.lt.s32.totalorder %s23, 1
        %s382 = scalar_select %p381, %s23, 1
        %p383 = scmp.lt.s32.totalorder %s380, 13
        %s384 = scalar_select %p383, %s380, 13
        %s385 = smul.addr %s384, 2
        %s386 = smul.addr %s382, 28
        %s387 = sadd.s32 %s385, %s386
        %s388 = smul.addr %s387, 4
        %s389 = scalar_lea.vmem %s0, %s388
        %s390 = smul.u32 %s24, 6
      $region28: #{unet_up_conv_block.5} parent=23 // pred_fallthru
        _
      // Predicated region
      $region29: #{unet_up_conv_block.5} parent=23 // pred_check
        %p391 = pneg %p84
      $region30: #{unet_up_conv_block.5} parent=23 // pred_check_branch
        %393 = sbr.rel (%p391) target = $region32
      $region31: #{unet_up_conv_block.5} parent=23 // pred_region
        %s394 = smul.u32 %s24, 6
        %s395 = sadd.s32 %s394, 1
        %p396 = scmp.lt.s32.totalorder %s23, 1
        %s397 = scalar_select %p396, %s23, 1
        %p398 = scmp.lt.s32.totalorder %s395, 13
        %s399 = scalar_select %p398, %s395, 13
        %s400 = smul.addr %s399, 2
        %s401 = smul.addr %s397, 28
        %s402 = sadd.s32 %s400, %s401
        %s403 = smul.addr %s402, 4
        %s404 = scalar_lea.vmem %s1, %s403
        %s405 = smul.u32 %s24, 6
        %s406 = sadd.s32 %s405, 1
      $region32: #{unet_up_conv_block.5} parent=23 // pred_fallthru
        _
      // Predicated region
      $region33: #{unet_up_conv_block.5} parent=23 // pred_check
        %p407 = pneg %p116
      $region34: #{unet_up_conv_block.5} parent=23 // pred_check_branch
        %409 = sbr.rel (%p407) target = $region36
      $region35: #{unet_up_conv_block.5} parent=23 // pred_region
        %s410 = smul.u32 %s24, 6
        %s411 = sadd.s32 %s410, 2
        %p412 = scmp.lt.s32.totalorder %s23, 1
        %s413 = scalar_select %p412, %s23, 1
        %p414 = scmp.lt.s32.totalorder %s411, 13
        %s415 = scalar_select %p414, %s411, 13
        %s416 = smul.addr %s415, 2
        %s417 = smul.addr %s413, 28
        %s418 = sadd.s32 %s416, %s417
        %s419 = smul.addr %s418, 4
        %s420 = scalar_lea.vmem %s2, %s419
        %s421 = smul.u32 %s24, 6
        %s422 = sadd.s32 %s421, 2
      $region36: #{unet_up_conv_block.5} parent=23 // pred_fallthru
        _
      // Predicated region
      $region37: #{unet_up_conv_block.5} parent=23 // pred_check
        %p423 = pneg %p148
      $region38: #{unet_up_conv_block.5} parent=23 // pred_check_branch
        %425 = sbr.rel (%p423) target = $region40
      $region39: #{unet_up_conv_block.5} parent=23 // pred_region
        %s426 = smul.u32 %s24, 6
        %s427 = sadd.s32 %s426, 3
        %p428 = scmp.lt.s32.totalorder %s23, 1
        %s429 = scalar_select %p428, %s23, 1
        %p430 = scmp.lt.s32.totalorder %s427, 13
        %s431 = scalar_select %p430, %s427, 13
        %s432 = smul.addr %s431, 2
        %s433 = smul.addr %s429, 28
        %s434 = sadd.s32 %s432, %s433
        %s435 = smul.addr %s434, 4
        %s436 = scalar_lea.vmem %s3, %s435
        %s437 = smul.u32 %s24, 6
        %s438 = sadd.s32 %s437, 3
      $region40: #{unet_up_conv_block.5} parent=23 // pred_fallthru
        _
      // Predicated region
      $region41: #{unet_up_conv_block.5} parent=23 // pred_check
        %p439 = pneg %p180
      $region42: #{unet_up_conv_block.5} parent=23 // pred_check_branch
        %441 = sbr.rel (%p439) target = $region44
      $region43: #{unet_up_conv_block.5} parent=23 // pred_region
        %s442 = smul.u32 %s24, 6
        %s443 = sadd.s32 %s442, 4
        %p444 = scmp.lt.s32.totalorder %s23, 1
        %s445 = scalar_select %p444, %s23, 1
        %p446 = scmp.lt.s32.totalorder %s443, 13
        %s447 = scalar_select %p446, %s443, 13
        %s448 = smul.addr %s447, 2
        %s449 = smul.addr %s445, 28
        %s450 = sadd.s32 %s448, %s449
        %s451 = smul.addr %s450, 4
        %s452 = scalar_lea.vmem %s4, %s451
        %s453 = smul.u32 %s24, 6
        %s454 = sadd.s32 %s453, 4
      $region44: #{unet_up_conv_block.5} parent=23 // pred_fallthru
        _
      // Predicated region
      $region45: #{unet_up_conv_block.5} parent=23 // pred_check
        %p455 = pneg %p212
      $region46: #{unet_up_conv_block.5} parent=23 // pred_check_branch
        %457 = sbr.rel (%p455) target = $region48
      $region47: #{unet_up_conv_block.5} parent=23 // pred_region
        %s458 = smul.u32 %s24, 6
        %s459 = sadd.s32 %s458, 5
        %p460 = scmp.lt.s32.totalorder %s23, 1
        %s461 = scalar_select %p460, %s23, 1
        %p462 = scmp.lt.s32.totalorder %s459, 13
        %s463 = scalar_select %p462, %s459, 13
        %s464 = smul.addr %s463, 2
        %s465 = smul.addr %s461, 28
        %s466 = sadd.s32 %s464, %s465
        %s467 = smul.addr %s466, 4
        %s468 = scalar_lea.vmem %s5, %s467
        %s469 = smul.u32 %s24, 6
        %s470 = sadd.s32 %s469, 5
      $region48: #{unet_up_conv_block.5} parent=23 // pred_fallthru
        _
      // Predicated region
      $region49: #{unet_up_conv_block.5} parent=23 // pred_check
        %p471 = pneg %p244
      $region50: #{unet_up_conv_block.5} parent=23 // pred_check_branch
        %473 = sbr.rel (%p471) target = $region52
      $region51: #{unet_up_conv_block.5} parent=23 // pred_region
        %s474 = smul.u32 %s24, 6
        %s475 = sadd.s32 %s474, 6
        %p476 = scmp.lt.s32.totalorder %s23, 1
        %s477 = scalar_select %p476, %s23, 1
        %p478 = scmp.lt.s32.totalorder %s475, 13
        %s479 = scalar_select %p478, %s475, 13
        %s480 = smul.addr %s479, 2
        %s481 = smul.addr %s477, 28
        %s482 = sadd.s32 %s480, %s481
        %s483 = smul.addr %s482, 4
        %s484 = scalar_lea.vmem %s6, %s483
        %s485 = smul.u32 %s24, 6
        %s486 = sadd.s32 %s485, 6
      $region52: #{unet_up_conv_block.5} parent=23 // pred_fallthru
        _
      // Predicated region
      $region53: #{unet_up_conv_block.5} parent=23 // pred_check
        %p487 = pneg %p276
      $region54: #{unet_up_conv_block.5} parent=23 // pred_check_branch
        %489 = sbr.rel (%p487) target = $region56
      $region55: #{unet_up_conv_block.5} parent=23 // pred_region
        %s490 = smul.u32 %s24, 6
        %s491 = sadd.s32 %s490, 7
        %p492 = scmp.lt.s32.totalorder %s23, 1
        %s493 = scalar_select %p492, %s23, 1
        %p494 = scmp.lt.s32.totalorder %s491, 13
        %s495 = scalar_select %p494, %s491, 13
        %s496 = smul.addr %s495, 2
        %s497 = smul.addr %s493, 28
        %s498 = sadd.s32 %s496, %s497
        %s499 = smul.addr %s498, 4
        %s500 = scalar_lea.vmem %s7, %s499
        %s501 = smul.u32 %s24, 6
        %s502 = sadd.s32 %s501, 7
      $region56: #{unet_up_conv_block.5} parent=23 // pred_fallthru
        _
    $region24: #{unet_up_conv_block.5} parent=5 // pred_fallthru
      _
    %p503 = scmp.le.s32.totalorder 1, %s16
    %p504 = scmp.lt.s32.totalorder %s16, 5
    %p505 = pnand %p503, %p504
    %p506 = pneg %p505
    // Predicated region
    $region57: #{unet_up_conv_block.5} parent=5 // pred_check
      _
    $region58: #{unet_up_conv_block.5} parent=5 // pred_check_branch
      %508 = sbr.rel (%p505) target = $region60
    $region59: #{unet_up_conv_block.5} parent=5 // pred_region
      %s509 = ssub.s32 %s16, 1
      %s510 = smul.u32 %s26, 6
      %p511 = scmp.lt.s32.totalorder %s25, 1
      %s512 = scalar_select %p511, %s25, 1
      %p513 = scmp.lt.s32.totalorder %s510, 13
      %s514 = scalar_select %p513, %s510, 13
      %s515 = smul.addr %s514, 2
      %s516 = smul.addr %s512, 28
      %s517 = sadd.s32 %s515, %s516
      %s518 = smul.addr %s517, 4
      %s519 = scalar_lea.vmem %s0, %s518
      %p520 = pneg %p58
      %p521 = pneg %p55
      %s522 = smul.u32 %s26, 6
      %s523 = sadd.s32 %s522, 1
      %p524 = scmp.lt.s32.totalorder %s25, 1
      %s525 = scalar_select %p524, %s25, 1
      %p526 = scmp.lt.s32.totalorder %s523, 13
      %s527 = scalar_select %p526, %s523, 13
      %s528 = smul.addr %s527, 2
      %s529 = smul.addr %s525, 28
      %s530 = sadd.s32 %s528, %s529
      %s531 = smul.addr %s530, 4
      %s532 = scalar_lea.vmem %s1, %s531
      %p533 = pneg %p90
      %p534 = pneg %p87
      %s535 = smul.u32 %s26, 6
      %s536 = sadd.s32 %s535, 2
      %p537 = scmp.lt.s32.totalorder %s25, 1
      %s538 = scalar_select %p537, %s25, 1
      %p539 = scmp.lt.s32.totalorder %s536, 13
      %s540 = scalar_select %p539, %s536, 13
      %s541 = smul.addr %s540, 2
      %s542 = smul.addr %s538, 28
      %s543 = sadd.s32 %s541, %s542
      %s544 = smul.addr %s543, 4
      %s545 = scalar_lea.vmem %s2, %s544
      %p546 = pneg %p122
      %p547 = pneg %p119
      %s548 = smul.u32 %s26, 6
      %s549 = sadd.s32 %s548, 3
      %p550 = scmp.lt.s32.totalorder %s25, 1
      %s551 = scalar_select %p550, %s25, 1
      %p552 = scmp.lt.s32.totalorder %s549, 13
      %s553 = scalar_select %p552, %s549, 13
      %s554 = smul.addr %s553, 2
      %s555 = smul.addr %s551, 28
      %s556 = sadd.s32 %s554, %s555
      %s557 = smul.addr %s556, 4
      %s558 = scalar_lea.vmem %s3, %s557
      %p559 = pneg %p154
      %p560 = pneg %p151
      %s561 = smul.u32 %s26, 6
      %s562 = sadd.s32 %s561, 4
      %p563 = scmp.lt.s32.totalorder %s25, 1
      %s564 = scalar_select %p563, %s25, 1
      %p565 = scmp.lt.s32.totalorder %s562, 13
      %s566 = scalar_select %p565, %s562, 13
      %s567 = smul.addr %s566, 2
      %s568 = smul.addr %s564, 28
      %s569 = sadd.s32 %s567, %s568
      %s570 = smul.addr %s569, 4
      %s571 = scalar_lea.vmem %s4, %s570
      %p572 = pneg %p186
      %p573 = pneg %p183
      %s574 = smul.u32 %s26, 6
      %s575 = sadd.s32 %s574, 5
      %p576 = scmp.lt.s32.totalorder %s25, 1
      %s577 = scalar_select %p576, %s25, 1
      %p578 = scmp.lt.s32.totalorder %s575, 13
      %s579 = scalar_select %p578, %s575, 13
      %s580 = smul.addr %s579, 2
      %s581 = smul.addr %s577, 28
      %s582 = sadd.s32 %s580, %s581
      %s583 = smul.addr %s582, 4
      %s584 = scalar_lea.vmem %s5, %s583
      %p585 = pneg %p218
      %p586 = pneg %p215
      %s587 = smul.u32 %s26, 6
      %s588 = sadd.s32 %s587, 6
      %p589 = scmp.lt.s32.totalorder %s25, 1
      %s590 = scalar_select %p589, %s25, 1
      %p591 = scmp.lt.s32.totalorder %s588, 13
      %s592 = scalar_select %p591, %s588, 13
      %s593 = smul.addr %s592, 2
      %s594 = smul.addr %s590, 28
      %s595 = sadd.s32 %s593, %s594
      %s596 = smul.addr %s595, 4
      %s597 = scalar_lea.vmem %s6, %s596
      %p598 = pneg %p250
      %p599 = pneg %p247
      %s600 = smul.u32 %s26, 6
      %s601 = sadd.s32 %s600, 7
      %p602 = scmp.lt.s32.totalorder %s25, 1
      %s603 = scalar_select %p602, %s25, 1
      %p604 = scmp.lt.s32.totalorder %s601, 13
      %s605 = scalar_select %p604, %s601, 13
      %s606 = smul.addr %s605, 2
      %s607 = smul.addr %s603, 28
      %s608 = sadd.s32 %s606, %s607
      %s609 = smul.addr %s608, 4
      %s610 = scalar_lea.vmem %s7, %s609
      %p611 = pneg %p282
      %p612 = pneg %p279
      %p613 = pneg %p303
      %p614 = pneg %p300
      %p615 = pneg %p324
      %p616 = pneg %p321
      %p617 = pneg %p352
      %p618 = pneg %p349
      %s619 = smul.u32 6, %s26
      %p620 = scmp.lt.s32.totalorder %s25, 1
      %s621 = scalar_select %p620, %s25, 1
      %p622 = scmp.lt.s32.totalorder %s619, 11
      %s623 = scalar_select %p622, %s619, 11
      %s624 = smul.addr %s623, 2
      %s625 = smul.addr %s621, 24
      %s626 = sadd.s32 %s624, %s625
      %s627 = smul.addr %s626, 8
      %s628 = scalar_lea.vmem %s10, %s627
      %s629 = smul.u32 %s26, 6
      %p630 = scmp.lt.s32.totalorder %s25, 1
      %s631 = scalar_select %p630, %s25, 1
      %p632 = scmp.lt.s32.totalorder %s629, 13
      %s633 = scalar_select %p632, %s629, 13
      %s634 = smul.addr %s633, 2
      %s635 = smul.addr %s631, 28
      %s636 = sadd.s32 %s634, %s635
      %s637 = smul.addr %s636, 4
      %s638 = scalar_lea.vmem %s0, %s637
      %s639 = smul.u32 %s26, 6
      %s640 = smul.u32 %s26, 6
      %s641 = sadd.s32 %s640, 1
      %p642 = scmp.lt.s32.totalorder %s25, 1
      %s643 = scalar_select %p642, %s25, 1
      %p644 = scmp.lt.s32.totalorder %s641, 13
      %s645 = scalar_select %p644, %s641, 13
      %s646 = smul.addr %s645, 2
      %s647 = smul.addr %s643, 28
      %s648 = sadd.s32 %s646, %s647
      %s649 = smul.addr %s648, 4
      %s650 = scalar_lea.vmem %s1, %s649
      %s651 = smul.u32 %s26, 6
      %s652 = sadd.s32 %s651, 1
      %s653 = smul.u32 %s26, 6
      %s654 = sadd.s32 %s653, 2
      %p655 = scmp.lt.s32.totalorder %s25, 1
      %s656 = scalar_select %p655, %s25, 1
      %p657 = scmp.lt.s32.totalorder %s654, 13
      %s658 = scalar_select %p657, %s654, 13
      %s659 = smul.addr %s658, 2
      %s660 = smul.addr %s656, 28
      %s661 = sadd.s32 %s659, %s660
      %s662 = smul.addr %s661, 4
      %s663 = scalar_lea.vmem %s2, %s662
      %s664 = smul.u32 %s26, 6
      %s665 = sadd.s32 %s664, 2
      %s666 = smul.u32 %s26, 6
      %s667 = sadd.s32 %s666, 3
      %p668 = scmp.lt.s32.totalorder %s25, 1
      %s669 = scalar_select %p668, %s25, 1
      %p670 = scmp.lt.s32.totalorder %s667, 13
      %s671 = scalar_select %p670, %s667, 13
      %s672 = smul.addr %s671, 2
      %s673 = smul.addr %s669, 28
      %s674 = sadd.s32 %s672, %s673
      %s675 = smul.addr %s674, 4
      %s676 = scalar_lea.vmem %s3, %s675
      %s677 = smul.u32 %s26, 6
      %s678 = sadd.s32 %s677, 3
      %s679 = smul.u32 %s26, 6
      %s680 = sadd.s32 %s679, 4
      %p681 = scmp.lt.s32.totalorder %s25, 1
      %s682 = scalar_select %p681, %s25, 1
      %p683 = scmp.lt.s32.totalorder %s680, 13
      %s684 = scalar_select %p683, %s680, 13
      %s685 = smul.addr %s684, 2
      %s686 = smul.addr %s682, 28
      %s687 = sadd.s32 %s685, %s686
      %s688 = smul.addr %s687, 4
      %s689 = scalar_lea.vmem %s4, %s688
      %s690 = smul.u32 %s26, 6
      %s691 = sadd.s32 %s690, 4
      %s692 = smul.u32 %s26, 6
      %s693 = sadd.s32 %s692, 5
      %p694 = scmp.lt.s32.totalorder %s25, 1
      %s695 = scalar_select %p694, %s25, 1
      %p696 = scmp.lt.s32.totalorder %s693, 13
      %s697 = scalar_select %p696, %s693, 13
      %s698 = smul.addr %s697, 2
      %s699 = smul.addr %s695, 28
      %s700 = sadd.s32 %s698, %s699
      %s701 = smul.addr %s700, 4
      %s702 = scalar_lea.vmem %s5, %s701
      %s703 = smul.u32 %s26, 6
      %s704 = sadd.s32 %s703, 5
      %s705 = smul.u32 %s26, 6
      %s706 = sadd.s32 %s705, 6
      %p707 = scmp.lt.s32.totalorder %s25, 1
      %s708 = scalar_select %p707, %s25, 1
      %p709 = scmp.lt.s32.totalorder %s706, 13
      %s710 = scalar_select %p709, %s706, 13
      %s711 = smul.addr %s710, 2
      %s712 = smul.addr %s708, 28
      %s713 = sadd.s32 %s711, %s712
      %s714 = smul.addr %s713, 4
      %s715 = scalar_lea.vmem %s6, %s714
      %s716 = smul.u32 %s26, 6
      %s717 = sadd.s32 %s716, 6
      %s718 = smul.u32 %s26, 6
      %s719 = sadd.s32 %s718, 7
      %p720 = scmp.lt.s32.totalorder %s25, 1
      %s721 = scalar_select %p720, %s25, 1
      %p722 = scmp.lt.s32.totalorder %s719, 13
      %s723 = scalar_select %p722, %s719, 13
      %s724 = smul.addr %s723, 2
      %s725 = smul.addr %s721, 28
      %s726 = sadd.s32 %s724, %s725
      %s727 = smul.addr %s726, 4
      %s728 = scalar_lea.vmem %s7, %s727
      %s729 = smul.u32 %s26, 6
      %s730 = sadd.s32 %s729, 7
      %s731 = smul.u32 6, %s26
      %p732 = scmp.lt.s32.totalorder %s25, 1
      %s733 = scalar_select %p732, %s25, 1
      %p734 = scmp.lt.s32.totalorder %s731, 11
      %s735 = scalar_select %p734, %s731, 11
      %s736 = smul.addr %s735, 2
      %s737 = smul.addr %s733, 24
      %s738 = sadd.s32 %s736, %s737
      %s739 = smul.addr %s738, 8
      %s740 = scalar_lea.vmem %s10, %s739
      %s741 = smul.u32 6, %s26
      %v743 = vld [vmem:[%s9] sm:$0x1]
      %v745 = vlaneseq
      %v746 = vshrl.u32 %v745, 7
      %v747 = vsub.s32 0, %v746
      %v748 = vrot.slane %v743, %v747
      %v750 = vadd.f32 %v748, 0.0
      %v751 = vld [vmem:[%s638] sm:$0xf]
      %v752 = vld [vmem:[%s638 + $0x4] sm:$0x7]
      %v753 = vld [vmem:[%s650] sm:$0xf]
      %v754 = vld [vmem:[%s650 + $0x4] sm:$0x7]
      %v755 = vld [vmem:[%s663] sm:$0xf]
      %v756 = vld [vmem:[%s663 + $0x4] sm:$0x7]
      %v757 = vld [vmem:[%s676] sm:$0xf]
      %v758 = vld [vmem:[%s676 + $0x4] sm:$0x7]
      %v759 = vld [vmem:[%s689] sm:$0xf]
      %v760 = vld [vmem:[%s689 + $0x4] sm:$0x7]
      %v761 = vld [vmem:[%s702] sm:$0xf]
      %v762 = vld [vmem:[%s702 + $0x4] sm:$0x7]
      %v763 = vld [vmem:[%s715] sm:$0xf]
      %v764 = vld [vmem:[%s715 + $0x4] sm:$0x7]
      %v765 = vld [vmem:[%s728] sm:$0xf]
      %v766 = vld [vmem:[%s728 + $0x4] sm:$0x7]
      %v769 = vunpack.c.l.b16 %v751
      %v770 = vunpack.c.l.b16 %v752
      %v771 = vpack.c.b16 %v770, %v769
      %v774 = vunpack.c.l.b16 %v753
      %v775 = vunpack.c.l.b16 %v754
      %v776 = vpack.c.b16 %v775, %v774
      %v777 = vrot.slane %v776, 2
      %v780 = vunpack.c.l.b16 %v755
      %v781 = vunpack.c.l.b16 %v756
      %v782 = vpack.c.b16 %v780, %v780
      %v783 = vpack.c.b16 %v781, %v781
      %v786 = vunpack.c.l.b16 %v757
      %v787 = vunpack.c.l.b16 %v758
      %v788 = vpack.c.b16 %v787, %v786
      %v789 = vrot.slane %v788, 6
      %v792 = vunpack.c.l.b16 %v759
      %v793 = vunpack.c.l.b16 %v760
      %v794 = vpack.c.b16 %v793, %v792
      %v797 = vunpack.c.l.b16 %v761
      %v798 = vunpack.c.l.b16 %v762
      %v799 = vpack.c.b16 %v798, %v797
      %v800 = vrot.slane %v799, 2
      %vm802 = vcmask 1045504
      %v805 = vsel %vm802, %v771, %v777
      %vm807 = vcmask 1043456
      %v809 = vsel %vm807, %v777, %v782
      %vm811 = vcmask 1041408
      %v814 = vsel %vm811, %v783, %v789
      %v818 = vsel %vm802, %v794, %v800
      %v820 = vld [vmem:[%s8] sm:$0xf]
      %v821 = vld [vmem:[%s8 + $0x4] sm:$0xf]
      %v822 = vld [vmem:[%s8 + $0x8] sm:$0xf]
      %v823 = vld [vmem:[%s8 + $0xc] sm:$0xf]
      %v824 = vld [vmem:[%s8 + $0x10] sm:$0xf]
      %v825 = vld [vmem:[%s8 + $0x14] sm:$0xf]
      %v826 = vld [vmem:[%s8 + $0x18] sm:$0xf]
      %v827 = vld [vmem:[%s8 + $0x1c] sm:$0xf]
      %v828 = vld [vmem:[%s8 + $0x20] sm:$0xf]
      %v829 = vld [vmem:[%s8 + $0x24] sm:$0xf]
      %v830 = vld [vmem:[%s8 + $0x28] sm:$0xf]
      %v831 = vld [vmem:[%s8 + $0x2c] sm:$0xf]
      %v832 = vld [vmem:[%s8 + $0x30] sm:$0xf]
      %v833 = vld [vmem:[%s8 + $0x34] sm:$0xf]
      %v834 = vld [vmem:[%s8 + $0x38] sm:$0xf]
      %v835 = vld [vmem:[%s8 + $0x3c] sm:$0xf]
      %v852 = vunpack.c.l.b16 %v820
      %v853 = vunpack.c.l.b16 %v821
      %v854 = vunpack.c.l.b16 %v822
      %v855 = vunpack.c.l.b16 %v823
      %v856 = vunpack.c.l.b16 %v824
      %v857 = vunpack.c.l.b16 %v825
      %v858 = vunpack.c.l.b16 %v826
      %v859 = vunpack.c.l.b16 %v827
      %v860 = vunpack.c.l.b16 %v828
      %v861 = vunpack.c.l.b16 %v829
      %v862 = vunpack.c.l.b16 %v830
      %v863 = vunpack.c.l.b16 %v831
      %v864 = vunpack.c.l.b16 %v832
      %v865 = vunpack.c.l.b16 %v833
      %v866 = vunpack.c.l.b16 %v834
      %v867 = vunpack.c.l.b16 %v835
      %v868 = vpack.c.b16 %v853, %v852
      %v869 = vpack.c.b16 %v855, %v854
      %v870 = vpack.c.b16 %v857, %v856
      %v871 = vpack.c.b16 %v859, %v858
      %v872 = vpack.c.b16 %v861, %v860
      %v873 = vpack.c.b16 %v863, %v862
      %v874 = vpack.c.b16 %v865, %v864
      %v875 = vpack.c.b16 %v867, %v866
      %884 = vmatprep.subr.bf16.mxu0 0
      %885 = vmatpush1.bf16.msra.mxu0 %v875
      %886 = vmatprep.subr.bf16.mxu0 0
      %887 = vmatpush1.bf16.msra.mxu0 %v874
      %888 = vmatprep.subr.bf16.mxu0 0
      %889 = vmatpush1.bf16.msra.mxu0 %v873
      %890 = vmatprep.subr.bf16.mxu0 0
      %891 = vmatpush1.bf16.msra.mxu0 %v872
      %892 = vmatprep.subr.bf16.mxu0 0
      %893 = vmatpush1.bf16.msra.mxu0 %v871
      %894 = vmatprep.subr.bf16.mxu0 0
      %895 = vmatpush1.bf16.msra.mxu0 %v870
      %896 = vmatprep.subr.bf16.mxu0 0
      %897 = vmatpush1.bf16.msra.mxu0 %v869
      %898 = vmatprep.subr.bf16.mxu0 0
      %899 = vmatpush1.bf16.msra.mxu0 %v868
      %900 = vmatprep.subr.bf16.mxu0 0
      %901 = vmatpush2.bf16.msra.mxu0 0
      %902 = vmatprep.subr.bf16.mxu0 0
      %903 = vmatpush2.bf16.msra.mxu0 0
      %904 = vmatprep.subr.bf16.mxu0 0
      %905 = vmatpush2.bf16.msra.mxu0 0
      %906 = vmatprep.subr.bf16.mxu0 0
      %907 = vmatpush2.bf16.msra.mxu0 0
      %908 = vmatprep.subr.bf16.mxu0 0
      %909 = vmatpush2.bf16.msra.mxu0 0
      %910 = vmatprep.subr.bf16.mxu0 0
      %911 = vmatpush2.bf16.msra.mxu0 0
      %912 = vmatprep.subr.bf16.mxu0 0
      %913 = vmatpush2.bf16.msra.mxu0 0
      %914 = vmatprep.subr.bf16.mxu0 0
      %915 = vmatpush2.bf16.msra.mxu0 0
      %916 = vmatprep.mubr.bf16.mxu0 0
      %917 = vmatmul.mubr.bf16.gmra.mxu0 %v805
      %v918 = vpop.f32.mrf.mxu0
      %v919 = vadd.f32 0.0, %v918
      %v920 = vpop.f32.mrf.mxu0
      %v921 = vpop.f32.mrf.mxu0
      %v922 = vadd.f32 0.0, %v921
      %v923 = vpop.f32.mrf.mxu0
      %924 = vmatprep.mubr.bf16.mxu0 0
      %925 = vmatmul.mubr.bf16.gmra.mxu0 %v809
      %v926 = vpop.f32.mrf.mxu0
      %v927 = vadd.f32 0.0, %v926
      %v928 = vpop.f32.mrf.mxu0
      %v929 = vpop.f32.mrf.mxu0
      %v930 = vadd.f32 0.0, %v929
      %v931 = vpop.f32.mrf.mxu0
      %932 = vmatprep.mubr.bf16.mxu0 0
      %933 = vmatmul.mubr.bf16.gmra.mxu0 %v814
      %v934 = vpop.f32.mrf.mxu0
      %v935 = vadd.f32 0.0, %v934
      %v936 = vpop.f32.mrf.mxu0
      %v937 = vpop.f32.mrf.mxu0
      %v938 = vadd.f32 0.0, %v937
      %v939 = vpop.f32.mrf.mxu0
      %940 = vmatprep.mubr.bf16.mxu0 0
      %941 = vmatmul.mubr.bf16.gmra.mxu0 %v818
      %v942 = vpop.f32.mrf.mxu0
      %v943 = vadd.f32 0.0, %v942
      %v944 = vpop.f32.mrf.mxu0
      %v945 = vpop.f32.mrf.mxu0
      %v946 = vadd.f32 0.0, %v945
      %v947 = vpop.f32.mrf.mxu0
      %948 = vmatprep.mubr.bf16.mxu0 0
      %949 = vmatmul.mubr.bf16.gmra.mxu0 %v800
      %v950 = vpop.f32.mrf.mxu0
      %v951 = vadd.f32 0.0, %v950
      %v952 = vpop.f32.mrf.mxu0
      %v953 = vpop.f32.mrf.mxu0
      %v954 = vpop.f32.mrf.mxu0
      %955 = vdwg.mxu0
      %v956 = vadd.f32 %v750, %v919
      %v957 = vadd.f32 %v750, %v922
      %v958 = vadd.f32 %v750, %v927
      %v959 = vadd.f32 %v750, %v930
      %v960 = vadd.f32 %v750, %v935
      %v961 = vadd.f32 %v750, %v938
      %v962 = vadd.f32 %v750, %v943
      %v963 = vadd.f32 %v750, %v946
      %v964 = vadd.f32 %v750, %v951
      %v965 = vshrl.u32 %v771, 16
      %v967 = vshll.u32 %v771, 16
      %v969 = vrot.slane %v967, 1
      %v970 = vor.u32 %v965, %v969
      %v972 = vshrl.u32 %v776, 16
      %v974 = vrot.slane %v972, 2
      %v975 = vshll.u32 %v776, 16
      %v977 = vrot.slane %v975, 3
      %v978 = vor.u32 %v974, %v977
      %v979 = vpack.c.b16 %v781, %v780
      %v981 = vshrl.u32 %v979, 16
      %v983 = vrot.slane %v981, 4
      %v984 = vshll.u32 %v979, 16
      %v986 = vrot.slane %v984, 5
      %v987 = vor.u32 %v983, %v986
      %v989 = vshrl.u32 %v788, 16
      %v991 = vrot.slane %v989, 6
      %v992 = vshll.u32 %v788, 16
      %v994 = vrot.slane %v992, 7
      %v995 = vor.u32 %v991, %v994
      %v996 = vshrl.u32 %v794, 16
      %v998 = vshll.u32 %v794, 16
      %v1000 = vrot.slane %v998, 1
      %v1001 = vor.u32 %v996, %v1000
      %v1003 = vshrl.u32 %v799, 16
      %v1005 = vrot.slane %v1003, 2
      %v1006 = vshll.u32 %v799, 16
      %v1008 = vrot.slane %v1006, 3
      %v1009 = vor.u32 %v1005, %v1008
      %v1013 = vsel %vm802, %v970, %v978
      %v1016 = vsel %vm807, %v978, %v987
      %v1019 = vsel %vm811, %v987, %v995
      %v1023 = vsel %vm802, %v1001, %v1009
      %s1025 = scalar_lea.vmem %s8, 64
      %v1026 = vld [vmem:[%s1025] sm:$0xf]
      %v1027 = vld [vmem:[%s1025 + $0x4] sm:$0xf]
      %v1028 = vld [vmem:[%s1025 + $0x8] sm:$0xf]
      %v1029 = vld [vmem:[%s1025 + $0xc] sm:$0xf]
      %v1030 = vld [vmem:[%s1025 + $0x10] sm:$0xf]
      %v1031 = vld [vmem:[%s1025 + $0x14] sm:$0xf]
      %v1032 = vld [vmem:[%s1025 + $0x18] sm:$0xf]
      %v1033 = vld [vmem:[%s1025 + $0x1c] sm:$0xf]
      %v1034 = vld [vmem:[%s1025 + $0x20] sm:$0xf]
      %v1035 = vld [vmem:[%s1025 + $0x24] sm:$0xf]
      %v1036 = vld [vmem:[%s1025 + $0x28] sm:$0xf]
      %v1037 = vld [vmem:[%s1025 + $0x2c] sm:$0xf]
      %v1038 = vld [vmem:[%s1025 + $0x30] sm:$0xf]
      %v1039 = vld [vmem:[%s1025 + $0x34] sm:$0xf]
      %v1040 = vld [vmem:[%s1025 + $0x38] sm:$0xf]
      %v1041 = vld [vmem:[%s1025 + $0x3c] sm:$0xf]
      %v1058 = vunpack.c.l.b16 %v1026
      %v1059 = vunpack.c.l.b16 %v1027
      %v1060 = vunpack.c.l.b16 %v1028
      %v1061 = vunpack.c.l.b16 %v1029
      %v1062 = vunpack.c.l.b16 %v1030
      %v1063 = vunpack.c.l.b16 %v1031
      %v1064 = vunpack.c.l.b16 %v1032
      %v1065 = vunpack.c.l.b16 %v1033
      %v1066 = vunpack.c.l.b16 %v1034
      %v1067 = vunpack.c.l.b16 %v1035
      %v1068 = vunpack.c.l.b16 %v1036
      %v1069 = vunpack.c.l.b16 %v1037
      %v1070 = vunpack.c.l.b16 %v1038
      %v1071 = vunpack.c.l.b16 %v1039
      %v1072 = vunpack.c.l.b16 %v1040
      %v1073 = vunpack.c.l.b16 %v1041
      %v1074 = vpack.c.b16 %v1059, %v1058
      %v1075 = vpack.c.b16 %v1061, %v1060
      %v1076 = vpack.c.b16 %v1063, %v1062
      %v1077 = vpack.c.b16 %v1065, %v1064
      %v1078 = vpack.c.b16 %v1067, %v1066
      %v1079 = vpack.c.b16 %v1069, %v1068
      %v1080 = vpack.c.b16 %v1071, %v1070
      %v1081 = vpack.c.b16 %v1073, %v1072
      %1090 = vmatprep.subr.bf16.mxu0 0
      %1091 = vmatpush1.bf16.msra.mxu0 %v1081
      %1092 = vmatprep.subr.bf16.mxu0 0
      %1093 = vmatpush1.bf16.msra.mxu0 %v1080
      %1094 = vmatprep.subr.bf16.mxu0 0
      %1095 = vmatpush1.bf16.msra.mxu0 %v1079
      %1096 = vmatprep.subr.bf16.mxu0 0
      %1097 = vmatpush1.bf16.msra.mxu0 %v1078
      %1098 = vmatprep.subr.bf16.mxu0 0
      %1099 = vmatpush1.bf16.msra.mxu0 %v1077
      %1100 = vmatprep.subr.bf16.mxu0 0
      %1101 = vmatpush1.bf16.msra.mxu0 %v1076
      %1102 = vmatprep.subr.bf16.mxu0 0
      %1103 = vmatpush1.bf16.msra.mxu0 %v1075
      %1104 = vmatprep.subr.bf16.mxu0 0
      %1105 = vmatpush1.bf16.msra.mxu0 %v1074
      %1106 = vmatprep.subr.bf16.mxu0 0
      %1107 = vmatpush2.bf16.msra.mxu0 0
      %1108 = vmatprep.subr.bf16.mxu0 0
      %1109 = vmatpush2.bf16.msra.mxu0 0
      %1110 = vmatprep.subr.bf16.mxu0 0
      %1111 = vmatpush2.bf16.msra.mxu0 0
      %1112 = vmatprep.subr.bf16.mxu0 0
      %1113 = vmatpush2.bf16.msra.mxu0 0
      %1114 = vmatprep.subr.bf16.mxu0 0
      %1115 = vmatpush2.bf16.msra.mxu0 0
      %1116 = vmatprep.subr.bf16.mxu0 0
      %1117 = vmatpush2.bf16.msra.mxu0 0
      %1118 = vmatprep.subr.bf16.mxu0 0
      %1119 = vmatpush2.bf16.msra.mxu0 0
      %1120 = vmatprep.subr.bf16.mxu0 0
      %1121 = vmatpush2.bf16.msra.mxu0 0
      %1122 = vmatprep.mubr.bf16.mxu0 0
      %1123 = vmatmul.mubr.bf16.gmra.mxu0 %v1013
      %v1124 = vpop.f32.mrf.mxu0
      %v1125 = vadd.f32 0.0, %v1124
      %v1126 = vpop.f32.mrf.mxu0
      %v1127 = vpop.f32.mrf.mxu0
      %v1128 = vadd.f32 0.0, %v1127
      %v1129 = vpop.f32.mrf.mxu0
      %1130 = vmatprep.mubr.bf16.mxu0 0
      %1131 = vmatmul.mubr.bf16.gmra.mxu0 %v1016
      %v1132 = vpop.f32.mrf.mxu0
      %v1133 = vadd.f32 0.0, %v1132
      %v1134 = vpop.f32.mrf.mxu0
      %v1135 = vpop.f32.mrf.mxu0
      %v1136 = vadd.f32 0.0, %v1135
      %v1137 = vpop.f32.mrf.mxu0
      %1138 = vmatprep.mubr.bf16.mxu0 0
      %1139 = vmatmul.mubr.bf16.gmra.mxu0 %v1019
      %v1140 = vpop.f32.mrf.mxu0
      %v1141 = vadd.f32 0.0, %v1140
      %v1142 = vpop.f32.mrf.mxu0
      %v1143 = vpop.f32.mrf.mxu0
      %v1144 = vadd.f32 0.0, %v1143
      %v1145 = vpop.f32.mrf.mxu0
      %1146 = vmatprep.mubr.bf16.mxu0 0
      %1147 = vmatmul.mubr.bf16.gmra.mxu0 %v1023
      %v1148 = vpop.f32.mrf.mxu0
      %v1149 = vadd.f32 0.0, %v1148
      %v1150 = vpop.f32.mrf.mxu0
      %v1151 = vpop.f32.mrf.mxu0
      %v1152 = vadd.f32 0.0, %v1151
      %v1153 = vpop.f32.mrf.mxu0
      %1154 = vmatprep.mubr.bf16.mxu0 0
      %1155 = vmatmul.mubr.bf16.gmra.mxu0 %v1009
      %v1156 = vpop.f32.mrf.mxu0
      %v1157 = vadd.f32 0.0, %v1156
      %v1158 = vpop.f32.mrf.mxu0
      %v1159 = vpop.f32.mrf.mxu0
      %v1160 = vpop.f32.mrf.mxu0
      %1161 = vdwg.mxu0
      %v1162 = vadd.f32 %v956, %v1125
      %v1163 = vadd.f32 %v957, %v1128
      %v1164 = vadd.f32 %v958, %v1133
      %v1165 = vadd.f32 %v959, %v1136
      %v1166 = vadd.f32 %v960, %v1141
      %v1167 = vadd.f32 %v961, %v1144
      %v1168 = vadd.f32 %v962, %v1149
      %v1169 = vadd.f32 %v963, %v1152
      %v1170 = vadd.f32 %v964, %v1157
      %v1171 = vrot.slane %v771, 1
      %v1172 = vrot.slane %v776, 3
      %v1173 = vrot.slane %v979, 5
      %v1174 = vrot.slane %v788, 7
      %v1175 = vrot.slane %v794, 1
      %v1176 = vrot.slane %v799, 3
      %v1180 = vsel %vm802, %v1171, %v1172
      %v1183 = vsel %vm807, %v1172, %v1173
      %v1186 = vsel %vm811, %v1173, %v1174
      %v1190 = vsel %vm802, %v1175, %v1176
      %s1192 = scalar_lea.vmem %s8, 128
      %v1193 = vld [vmem:[%s1192] sm:$0xf]
      %v1194 = vld [vmem:[%s1192 + $0x4] sm:$0xf]
      %v1195 = vld [vmem:[%s1192 + $0x8] sm:$0xf]
      %v1196 = vld [vmem:[%s1192 + $0xc] sm:$0xf]
      %v1197 = vld [vmem:[%s1192 + $0x10] sm:$0xf]
      %v1198 = vld [vmem:[%s1192 + $0x14] sm:$0xf]
      %v1199 = vld [vmem:[%s1192 + $0x18] sm:$0xf]
      %v1200 = vld [vmem:[%s1192 + $0x1c] sm:$0xf]
      %v1201 = vld [vmem:[%s1192 + $0x20] sm:$0xf]
      %v1202 = vld [vmem:[%s1192 + $0x24] sm:$0xf]
      %v1203 = vld [vmem:[%s1192 + $0x28] sm:$0xf]
      %v1204 = vld [vmem:[%s1192 + $0x2c] sm:$0xf]
      %v1205 = vld [vmem:[%s1192 + $0x30] sm:$0xf]
      %v1206 = vld [vmem:[%s1192 + $0x34] sm:$0xf]
      %v1207 = vld [vmem:[%s1192 + $0x38] sm:$0xf]
      %v1208 = vld [vmem:[%s1192 + $0x3c] sm:$0xf]
      %v1225 = vunpack.c.l.b16 %v1193
      %v1226 = vunpack.c.l.b16 %v1194
      %v1227 = vunpack.c.l.b16 %v1195
      %v1228 = vunpack.c.l.b16 %v1196
      %v1229 = vunpack.c.l.b16 %v1197
      %v1230 = vunpack.c.l.b16 %v1198
      %v1231 = vunpack.c.l.b16 %v1199
      %v1232 = vunpack.c.l.b16 %v1200
      %v1233 = vunpack.c.l.b16 %v1201
      %v1234 = vunpack.c.l.b16 %v1202
      %v1235 = vunpack.c.l.b16 %v1203
      %v1236 = vunpack.c.l.b16 %v1204
      %v1237 = vunpack.c.l.b16 %v1205
      %v1238 = vunpack.c.l.b16 %v1206
      %v1239 = vunpack.c.l.b16 %v1207
      %v1240 = vunpack.c.l.b16 %v1208
      %v1241 = vpack.c.b16 %v1226, %v1225
      %v1242 = vpack.c.b16 %v1228, %v1227
      %v1243 = vpack.c.b16 %v1230, %v1229
      %v1244 = vpack.c.b16 %v1232, %v1231
      %v1245 = vpack.c.b16 %v1234, %v1233
      %v1246 = vpack.c.b16 %v1236, %v1235
      %v1247 = vpack.c.b16 %v1238, %v1237
      %v1248 = vpack.c.b16 %v1240, %v1239
      %1257 = vmatprep.subr.bf16.mxu0 0
      %1258 = vmatpush1.bf16.msra.mxu0 %v1248
      %1259 = vmatprep.subr.bf16.mxu0 0
      %1260 = vmatpush1.bf16.msra.mxu0 %v1247
      %1261 = vmatprep.subr.bf16.mxu0 0
      %1262 = vmatpush1.bf16.msra.mxu0 %v1246
      %1263 = vmatprep.subr.bf16.mxu0 0
      %1264 = vmatpush1.bf16.msra.mxu0 %v1245
      %1265 = vmatprep.subr.bf16.mxu0 0
      %1266 = vmatpush1.bf16.msra.mxu0 %v1244
      %1267 = vmatprep.subr.bf16.mxu0 0
      %1268 = vmatpush1.bf16.msra.mxu0 %v1243
      %1269 = vmatprep.subr.bf16.mxu0 0
      %1270 = vmatpush1.bf16.msra.mxu0 %v1242
      %1271 = vmatprep.subr.bf16.mxu0 0
      %1272 = vmatpush1.bf16.msra.mxu0 %v1241
      %1273 = vmatprep.subr.bf16.mxu0 0
      %1274 = vmatpush2.bf16.msra.mxu0 0
      %1275 = vmatprep.subr.bf16.mxu0 0
      %1276 = vmatpush2.bf16.msra.mxu0 0
      %1277 = vmatprep.subr.bf16.mxu0 0
      %1278 = vmatpush2.bf16.msra.mxu0 0
      %1279 = vmatprep.subr.bf16.mxu0 0
      %1280 = vmatpush2.bf16.msra.mxu0 0
      %1281 = vmatprep.subr.bf16.mxu0 0
      %1282 = vmatpush2.bf16.msra.mxu0 0
      %1283 = vmatprep.subr.bf16.mxu0 0
      %1284 = vmatpush2.bf16.msra.mxu0 0
      %1285 = vmatprep.subr.bf16.mxu0 0
      %1286 = vmatpush2.bf16.msra.mxu0 0
      %1287 = vmatprep.subr.bf16.mxu0 0
      %1288 = vmatpush2.bf16.msra.mxu0 0
      %1289 = vmatprep.mubr.bf16.mxu0 0
      %1290 = vmatmul.mubr.bf16.gmra.mxu0 %v1180
      %v1291 = vpop.f32.mrf.mxu0
      %v1292 = vadd.f32 0.0, %v1291
      %v1293 = vpop.f32.mrf.mxu0
      %v1294 = vpop.f32.mrf.mxu0
      %v1295 = vadd.f32 0.0, %v1294
      %v1296 = vpop.f32.mrf.mxu0
      %1297 = vmatprep.mubr.bf16.mxu0 0
      %1298 = vmatmul.mubr.bf16.gmra.mxu0 %v1183
      %v1299 = vpop.f32.mrf.mxu0
      %v1300 = vadd.f32 0.0, %v1299
      %v1301 = vpop.f32.mrf.mxu0
      %v1302 = vpop.f32.mrf.mxu0
      %v1303 = vadd.f32 0.0, %v1302
      %v1304 = vpop.f32.mrf.mxu0
      %1305 = vmatprep.mubr.bf16.mxu0 0
      %1306 = vmatmul.mubr.bf16.gmra.mxu0 %v1186
      %v1307 = vpop.f32.mrf.mxu0
      %v1308 = vadd.f32 0.0, %v1307
      %v1309 = vpop.f32.mrf.mxu0
      %v1310 = vpop.f32.mrf.mxu0
      %v1311 = vadd.f32 0.0, %v1310
      %v1312 = vpop.f32.mrf.mxu0
      %1313 = vmatprep.mubr.bf16.mxu0 0
      %1314 = vmatmul.mubr.bf16.gmra.mxu0 %v1190
      %v1315 = vpop.f32.mrf.mxu0
      %v1316 = vadd.f32 0.0, %v1315
      %v1317 = vpop.f32.mrf.mxu0
      %v1318 = vpop.f32.mrf.mxu0
      %v1319 = vadd.f32 0.0, %v1318
      %v1320 = vpop.f32.mrf.mxu0
      %1321 = vmatprep.mubr.bf16.mxu0 0
      %1322 = vmatmul.mubr.bf16.gmra.mxu0 %v1176
      %v1323 = vpop.f32.mrf.mxu0
      %v1324 = vadd.f32 0.0, %v1323
      %v1325 = vpop.f32.mrf.mxu0
      %v1326 = vpop.f32.mrf.mxu0
      %v1327 = vpop.f32.mrf.mxu0
      %1328 = vdwg.mxu0
      %v1329 = vadd.f32 %v1162, %v1292
      %v1330 = vadd.f32 %v1163, %v1295
      %v1331 = vadd.f32 %v1164, %v1300
      %v1332 = vadd.f32 %v1165, %v1303
      %v1333 = vadd.f32 %v1166, %v1308
      %v1334 = vadd.f32 %v1167, %v1311
      %v1335 = vadd.f32 %v1168, %v1316
      %v1336 = vadd.f32 %v1169, %v1319
      %v1337 = vadd.f32 %v1170, %v1324
      %v1338 = vrot.slane %v979, 2
      %v1339 = vpack.c.b16 %v786, %v786
      %v1340 = vpack.c.b16 %v787, %v787
      %v1341 = vrot.slane %v794, 6
      %v1344 = vunpack.c.l.b16 %v763
      %v1345 = vunpack.c.l.b16 %v764
      %v1346 = vpack.c.b16 %v1345, %v1344
      %v1347 = vrot.slane %v1346, 2
      %v1350 = vsel %vm802, %v776, %v1338
      %v1353 = vsel %vm807, %v1338, %v1339
      %v1357 = vsel %vm811, %v1340, %v1341
      %v1360 = vsel %vm802, %v799, %v1347
      %s1362 = scalar_lea.vmem %s8, 192
      %v1363 = vld [vmem:[%s1362] sm:$0xf]
      %v1364 = vld [vmem:[%s1362 + $0x4] sm:$0xf]
      %v1365 = vld [vmem:[%s1362 + $0x8] sm:$0xf]
      %v1366 = vld [vmem:[%s1362 + $0xc] sm:$0xf]
      %v1367 = vld [vmem:[%s1362 + $0x10] sm:$0xf]
      %v1368 = vld [vmem:[%s1362 + $0x14] sm:$0xf]
      %v1369 = vld [vmem:[%s1362 + $0x18] sm:$0xf]
      %v1370 = vld [vmem:[%s1362 + $0x1c] sm:$0xf]
      %v1371 = vld [vmem:[%s1362 + $0x20] sm:$0xf]
      %v1372 = vld [vmem:[%s1362 + $0x24] sm:$0xf]
      %v1373 = vld [vmem:[%s1362 + $0x28] sm:$0xf]
      %v1374 = vld [vmem:[%s1362 + $0x2c] sm:$0xf]
      %v1375 = vld [vmem:[%s1362 + $0x30] sm:$0xf]
      %v1376 = vld [vmem:[%s1362 + $0x34] sm:$0xf]
      %v1377 = vld [vmem:[%s1362 + $0x38] sm:$0xf]
      %v1378 = vld [vmem:[%s1362 + $0x3c] sm:$0xf]
      %v1395 = vunpack.c.l.b16 %v1363
      %v1396 = vunpack.c.l.b16 %v1364
      %v1397 = vunpack.c.l.b16 %v1365
      %v1398 = vunpack.c.l.b16 %v1366
      %v1399 = vunpack.c.l.b16 %v1367
      %v1400 = vunpack.c.l.b16 %v1368
      %v1401 = vunpack.c.l.b16 %v1369
      %v1402 = vunpack.c.l.b16 %v1370
      %v1403 = vunpack.c.l.b16 %v1371
      %v1404 = vunpack.c.l.b16 %v1372
      %v1405 = vunpack.c.l.b16 %v1373
      %v1406 = vunpack.c.l.b16 %v1374
      %v1407 = vunpack.c.l.b16 %v1375
      %v1408 = vunpack.c.l.b16 %v1376
      %v1409 = vunpack.c.l.b16 %v1377
      %v1410 = vunpack.c.l.b16 %v1378
      %v1411 = vpack.c.b16 %v1396, %v1395
      %v1412 = vpack.c.b16 %v1398, %v1397
      %v1413 = vpack.c.b16 %v1400, %v1399
      %v1414 = vpack.c.b16 %v1402, %v1401
      %v1415 = vpack.c.b16 %v1404, %v1403
      %v1416 = vpack.c.b16 %v1406, %v1405
      %v1417 = vpack.c.b16 %v1408, %v1407
      %v1418 = vpack.c.b16 %v1410, %v1409
      %1427 = vmatprep.subr.bf16.mxu0 0
      %1428 = vmatpush1.bf16.msra.mxu0 %v1418
      %1429 = vmatprep.subr.bf16.mxu0 0
      %1430 = vmatpush1.bf16.msra.mxu0 %v1417
      %1431 = vmatprep.subr.bf16.mxu0 0
      %1432 = vmatpush1.bf16.msra.mxu0 %v1416
      %1433 = vmatprep.subr.bf16.mxu0 0
      %1434 = vmatpush1.bf16.msra.mxu0 %v1415
      %1435 = vmatprep.subr.bf16.mxu0 0
      %1436 = vmatpush1.bf16.msra.mxu0 %v1414
      %1437 = vmatprep.subr.bf16.mxu0 0
      %1438 = vmatpush1.bf16.msra.mxu0 %v1413
      %1439 = vmatprep.subr.bf16.mxu0 0
      %1440 = vmatpush1.bf16.msra.mxu0 %v1412
      %1441 = vmatprep.subr.bf16.mxu0 0
      %1442 = vmatpush1.bf16.msra.mxu0 %v1411
      %1443 = vmatprep.subr.bf16.mxu0 0
      %1444 = vmatpush2.bf16.msra.mxu0 0
      %1445 = vmatprep.subr.bf16.mxu0 0
      %1446 = vmatpush2.bf16.msra.mxu0 0
      %1447 = vmatprep.subr.bf16.mxu0 0
      %1448 = vmatpush2.bf16.msra.mxu0 0
      %1449 = vmatprep.subr.bf16.mxu0 0
      %1450 = vmatpush2.bf16.msra.mxu0 0
      %1451 = vmatprep.subr.bf16.mxu0 0
      %1452 = vmatpush2.bf16.msra.mxu0 0
      %1453 = vmatprep.subr.bf16.mxu0 0
      %1454 = vmatpush2.bf16.msra.mxu0 0
      %1455 = vmatprep.subr.bf16.mxu0 0
      %1456 = vmatpush2.bf16.msra.mxu0 0
      %1457 = vmatprep.subr.bf16.mxu0 0
      %1458 = vmatpush2.bf16.msra.mxu0 0
      %1459 = vmatprep.mubr.bf16.mxu0 0
      %1460 = vmatmul.mubr.bf16.gmra.mxu0 %v1350
      %v1461 = vpop.f32.mrf.mxu0
      %v1462 = vadd.f32 0.0, %v1461
      %v1463 = vpop.f32.mrf.mxu0
      %v1464 = vpop.f32.mrf.mxu0
      %v1465 = vadd.f32 0.0, %v1464
      %v1466 = vpop.f32.mrf.mxu0
      %1467 = vmatprep.mubr.bf16.mxu0 0
      %1468 = vmatmul.mubr.bf16.gmra.mxu0 %v1353
      %v1469 = vpop.f32.mrf.mxu0
      %v1470 = vadd.f32 0.0, %v1469
      %v1471 = vpop.f32.mrf.mxu0
      %v1472 = vpop.f32.mrf.mxu0
      %v1473 = vadd.f32 0.0, %v1472
      %v1474 = vpop.f32.mrf.mxu0
      %1475 = vmatprep.mubr.bf16.mxu0 0
      %1476 = vmatmul.mubr.bf16.gmra.mxu0 %v1357
      %v1477 = vpop.f32.mrf.mxu0
      %v1478 = vadd.f32 0.0, %v1477
      %v1479 = vpop.f32.mrf.mxu0
      %v1480 = vpop.f32.mrf.mxu0
      %v1481 = vadd.f32 0.0, %v1480
      %v1482 = vpop.f32.mrf.mxu0
      %1483 = vmatprep.mubr.bf16.mxu0 0
      %1484 = vmatmul.mubr.bf16.gmra.mxu0 %v1360
      %v1485 = vpop.f32.mrf.mxu0
      %v1486 = vadd.f32 0.0, %v1485
      %v1487 = vpop.f32.mrf.mxu0
      %v1488 = vpop.f32.mrf.mxu0
      %v1489 = vadd.f32 0.0, %v1488
      %v1490 = vpop.f32.mrf.mxu0
      %1491 = vmatprep.mubr.bf16.mxu0 0
      %1492 = vmatmul.mubr.bf16.gmra.mxu0 %v1347
      %v1493 = vpop.f32.mrf.mxu0
      %v1494 = vadd.f32 0.0, %v1493
      %v1495 = vpop.f32.mrf.mxu0
      %v1496 = vpop.f32.mrf.mxu0
      %v1497 = vpop.f32.mrf.mxu0
      %1498 = vdwg.mxu0
      %v1499 = vadd.f32 %v1329, %v1462
      %v1500 = vadd.f32 %v1330, %v1465
      %v1501 = vadd.f32 %v1331, %v1470
      %v1502 = vadd.f32 %v1332, %v1473
      %v1503 = vadd.f32 %v1333, %v1478
      %v1504 = vadd.f32 %v1334, %v1481
      %v1505 = vadd.f32 %v1335, %v1486
      %v1506 = vadd.f32 %v1336, %v1489
      %v1507 = vadd.f32 %v1337, %v1494
      %v1508 = vrot.slane %v975, 1
      %v1509 = vor.u32 %v972, %v1508
      %v1510 = vrot.slane %v981, 2
      %v1511 = vrot.slane %v984, 3
      %v1512 = vor.u32 %v1510, %v1511
      %v1513 = vrot.slane %v989, 4
      %v1514 = vrot.slane %v992, 5
      %v1515 = vor.u32 %v1513, %v1514
      %v1516 = vrot.slane %v996, 6
      %v1517 = vrot.slane %v998, 7
      %v1518 = vor.u32 %v1516, %v1517
      %v1519 = vrot.slane %v1006, 1
      %v1520 = vor.u32 %v1003, %v1519
      %v1522 = vshrl.u32 %v1346, 16
      %v1524 = vrot.slane %v1522, 2
      %v1525 = vshll.u32 %v1346, 16
      %v1527 = vrot.slane %v1525, 3
      %v1528 = vor.u32 %v1524, %v1527
      %v1532 = vsel %vm802, %v1509, %v1512
      %v1535 = vsel %vm807, %v1512, %v1515
      %v1538 = vsel %vm811, %v1515, %v1518
      %v1542 = vsel %vm802, %v1520, %v1528
      %s1544 = scalar_lea.vmem %s8, 256
      %v1545 = vld [vmem:[%s1544] sm:$0xf]
      %v1546 = vld [vmem:[%s1544 + $0x4] sm:$0xf]
      %v1547 = vld [vmem:[%s1544 + $0x8] sm:$0xf]
      %v1548 = vld [vmem:[%s1544 + $0xc] sm:$0xf]
      %v1549 = vld [vmem:[%s1544 + $0x10] sm:$0xf]
      %v1550 = vld [vmem:[%s1544 + $0x14] sm:$0xf]
      %v1551 = vld [vmem:[%s1544 + $0x18] sm:$0xf]
      %v1552 = vld [vmem:[%s1544 + $0x1c] sm:$0xf]
      %v1553 = vld [vmem:[%s1544 + $0x20] sm:$0xf]
      %v1554 = vld [vmem:[%s1544 + $0x24] sm:$0xf]
      %v1555 = vld [vmem:[%s1544 + $0x28] sm:$0xf]
      %v1556 = vld [vmem:[%s1544 + $0x2c] sm:$0xf]
      %v1557 = vld [vmem:[%s1544 + $0x30] sm:$0xf]
      %v1558 = vld [vmem:[%s1544 + $0x34] sm:$0xf]
      %v1559 = vld [vmem:[%s1544 + $0x38] sm:$0xf]
      %v1560 = vld [vmem:[%s1544 + $0x3c] sm:$0xf]
      %v1577 = vunpack.c.l.b16 %v1545
      %v1578 = vunpack.c.l.b16 %v1546
      %v1579 = vunpack.c.l.b16 %v1547
      %v1580 = vunpack.c.l.b16 %v1548
      %v1581 = vunpack.c.l.b16 %v1549
      %v1582 = vunpack.c.l.b16 %v1550
      %v1583 = vunpack.c.l.b16 %v1551
      %v1584 = vunpack.c.l.b16 %v1552
      %v1585 = vunpack.c.l.b16 %v1553
      %v1586 = vunpack.c.l.b16 %v1554
      %v1587 = vunpack.c.l.b16 %v1555
      %v1588 = vunpack.c.l.b16 %v1556
      %v1589 = vunpack.c.l.b16 %v1557
      %v1590 = vunpack.c.l.b16 %v1558
      %v1591 = vunpack.c.l.b16 %v1559
      %v1592 = vunpack.c.l.b16 %v1560
      %v1593 = vpack.c.b16 %v1578, %v1577
      %v1594 = vpack.c.b16 %v1580, %v1579
      %v1595 = vpack.c.b16 %v1582, %v1581
      %v1596 = vpack.c.b16 %v1584, %v1583
      %v1597 = vpack.c.b16 %v1586, %v1585
      %v1598 = vpack.c.b16 %v1588, %v1587
      %v1599 = vpack.c.b16 %v1590, %v1589
      %v1600 = vpack.c.b16 %v1592, %v1591
      %1609 = vmatprep.subr.bf16.mxu0 0
      %1610 = vmatpush1.bf16.msra.mxu0 %v1600
      %1611 = vmatprep.subr.bf16.mxu0 0
      %1612 = vmatpush1.bf16.msra.mxu0 %v1599
      %1613 = vmatprep.subr.bf16.mxu0 0
      %1614 = vmatpush1.bf16.msra.mxu0 %v1598
      %1615 = vmatprep.subr.bf16.mxu0 0
      %1616 = vmatpush1.bf16.msra.mxu0 %v1597
      %1617 = vmatprep.subr.bf16.mxu0 0
      %1618 = vmatpush1.bf16.msra.mxu0 %v1596
      %1619 = vmatprep.subr.bf16.mxu0 0
      %1620 = vmatpush1.bf16.msra.mxu0 %v1595
      %1621 = vmatprep.subr.bf16.mxu0 0
      %1622 = vmatpush1.bf16.msra.mxu0 %v1594
      %1623 = vmatprep.subr.bf16.mxu0 0
      %1624 = vmatpush1.bf16.msra.mxu0 %v1593
      %1625 = vmatprep.subr.bf16.mxu0 0
      %1626 = vmatpush2.bf16.msra.mxu0 0
      %1627 = vmatprep.subr.bf16.mxu0 0
      %1628 = vmatpush2.bf16.msra.mxu0 0
      %1629 = vmatprep.subr.bf16.mxu0 0
      %1630 = vmatpush2.bf16.msra.mxu0 0
      %1631 = vmatprep.subr.bf16.mxu0 0
      %1632 = vmatpush2.bf16.msra.mxu0 0
      %1633 = vmatprep.subr.bf16.mxu0 0
      %1634 = vmatpush2.bf16.msra.mxu0 0
      %1635 = vmatprep.subr.bf16.mxu0 0
      %1636 = vmatpush2.bf16.msra.mxu0 0
      %1637 = vmatprep.subr.bf16.mxu0 0
      %1638 = vmatpush2.bf16.msra.mxu0 0
      %1639 = vmatprep.subr.bf16.mxu0 0
      %1640 = vmatpush2.bf16.msra.mxu0 0
      %1641 = vmatprep.mubr.bf16.mxu0 0
      %1642 = vmatmul.mubr.bf16.gmra.mxu0 %v1532
      %v1643 = vpop.f32.mrf.mxu0
      %v1644 = vadd.f32 0.0, %v1643
      %v1645 = vpop.f32.mrf.mxu0
      %v1646 = vpop.f32.mrf.mxu0
      %v1647 = vadd.f32 0.0, %v1646
      %v1648 = vpop.f32.mrf.mxu0
      %1649 = vmatprep.mubr.bf16.mxu0 0
      %1650 = vmatmul.mubr.bf16.gmra.mxu0 %v1535
      %v1651 = vpop.f32.mrf.mxu0
      %v1652 = vadd.f32 0.0, %v1651
      %v1653 = vpop.f32.mrf.mxu0
      %v1654 = vpop.f32.mrf.mxu0
      %v1655 = vadd.f32 0.0, %v1654
      %v1656 = vpop.f32.mrf.mxu0
      %1657 = vmatprep.mubr.bf16.mxu0 0
      %1658 = vmatmul.mubr.bf16.gmra.mxu0 %v1538
      %v1659 = vpop.f32.mrf.mxu0
      %v1660 = vadd.f32 0.0, %v1659
      %v1661 = vpop.f32.mrf.mxu0
      %v1662 = vpop.f32.mrf.mxu0
      %v1663 = vadd.f32 0.0, %v1662
      %v1664 = vpop.f32.mrf.mxu0
      %1665 = vmatprep.mubr.bf16.mxu0 0
      %1666 = vmatmul.mubr.bf16.gmra.mxu0 %v1542
      %v1667 = vpop.f32.mrf.mxu0
      %v1668 = vadd.f32 0.0, %v1667
      %v1669 = vpop.f32.mrf.mxu0
      %v1670 = vpop.f32.mrf.mxu0
      %v1671 = vadd.f32 0.0, %v1670
      %v1672 = vpop.f32.mrf.mxu0
      %1673 = vmatprep.mubr.bf16.mxu0 0
      %1674 = vmatmul.mubr.bf16.gmra.mxu0 %v1528
      %v1675 = vpop.f32.mrf.mxu0
      %v1676 = vadd.f32 0.0, %v1675
      %v1677 = vpop.f32.mrf.mxu0
      %v1678 = vpop.f32.mrf.mxu0
      %v1679 = vpop.f32.mrf.mxu0
      %1680 = vdwg.mxu0
      %v1681 = vadd.f32 %v1499, %v1644
      %v1682 = vadd.f32 %v1500, %v1647
      %v1683 = vadd.f32 %v1501, %v1652
      %v1684 = vadd.f32 %v1502, %v1655
      %v1685 = vadd.f32 %v1503, %v1660
      %v1686 = vadd.f32 %v1504, %v1663
      %v1687 = vadd.f32 %v1505, %v1668
      %v1688 = vadd.f32 %v1506, %v1671
      %v1689 = vadd.f32 %v1507, %v1676
      %v1690 = vrot.slane %v776, 1
      %v1691 = vrot.slane %v979, 3
      %v1692 = vrot.slane %v788, 5
      %v1693 = vrot.slane %v794, 7
      %v1694 = vrot.slane %v799, 1
      %v1695 = vrot.slane %v1346, 3
      %v1699 = vsel %vm802, %v1690, %v1691
      %v1702 = vsel %vm807, %v1691, %v1692
      %v1705 = vsel %vm811, %v1692, %v1693
      %v1709 = vsel %vm802, %v1694, %v1695
      %s1711 = scalar_lea.vmem %s8, 320
      %v1712 = vld [vmem:[%s1711] sm:$0xf]
      %v1713 = vld [vmem:[%s1711 + $0x4] sm:$0xf]
      %v1714 = vld [vmem:[%s1711 + $0x8] sm:$0xf]
      %v1715 = vld [vmem:[%s1711 + $0xc] sm:$0xf]
      %v1716 = vld [vmem:[%s1711 + $0x10] sm:$0xf]
      %v1717 = vld [vmem:[%s1711 + $0x14] sm:$0xf]
      %v1718 = vld [vmem:[%s1711 + $0x18] sm:$0xf]
      %v1719 = vld [vmem:[%s1711 + $0x1c] sm:$0xf]
      %v1720 = vld [vmem:[%s1711 + $0x20] sm:$0xf]
      %v1721 = vld [vmem:[%s1711 + $0x24] sm:$0xf]
      %v1722 = vld [vmem:[%s1711 + $0x28] sm:$0xf]
      %v1723 = vld [vmem:[%s1711 + $0x2c] sm:$0xf]
      %v1724 = vld [vmem:[%s1711 + $0x30] sm:$0xf]
      %v1725 = vld [vmem:[%s1711 + $0x34] sm:$0xf]
      %v1726 = vld [vmem:[%s1711 + $0x38] sm:$0xf]
      %v1727 = vld [vmem:[%s1711 + $0x3c] sm:$0xf]
      %v1744 = vunpack.c.l.b16 %v1712
      %v1745 = vunpack.c.l.b16 %v1713
      %v1746 = vunpack.c.l.b16 %v1714
      %v1747 = vunpack.c.l.b16 %v1715
      %v1748 = vunpack.c.l.b16 %v1716
      %v1749 = vunpack.c.l.b16 %v1717
      %v1750 = vunpack.c.l.b16 %v1718
      %v1751 = vunpack.c.l.b16 %v1719
      %v1752 = vunpack.c.l.b16 %v1720
      %v1753 = vunpack.c.l.b16 %v1721
      %v1754 = vunpack.c.l.b16 %v1722
      %v1755 = vunpack.c.l.b16 %v1723
      %v1756 = vunpack.c.l.b16 %v1724
      %v1757 = vunpack.c.l.b16 %v1725
      %v1758 = vunpack.c.l.b16 %v1726
      %v1759 = vunpack.c.l.b16 %v1727
      %v1760 = vpack.c.b16 %v1745, %v1744
      %v1761 = vpack.c.b16 %v1747, %v1746
      %v1762 = vpack.c.b16 %v1749, %v1748
      %v1763 = vpack.c.b16 %v1751, %v1750
      %v1764 = vpack.c.b16 %v1753, %v1752
      %v1765 = vpack.c.b16 %v1755, %v1754
      %v1766 = vpack.c.b16 %v1757, %v1756
      %v1767 = vpack.c.b16 %v1759, %v1758
      %1776 = vmatprep.subr.bf16.mxu0 0
      %1777 = vmatpush1.bf16.msra.mxu0 %v1767
      %1778 = vmatprep.subr.bf16.mxu0 0
      %1779 = vmatpush1.bf16.msra.mxu0 %v1766
      %1780 = vmatprep.subr.bf16.mxu0 0
      %1781 = vmatpush1.bf16.msra.mxu0 %v1765
      %1782 = vmatprep.subr.bf16.mxu0 0
      %1783 = vmatpush1.bf16.msra.mxu0 %v1764
      %1784 = vmatprep.subr.bf16.mxu0 0
      %1785 = vmatpush1.bf16.msra.mxu0 %v1763
      %1786 = vmatprep.subr.bf16.mxu0 0
      %1787 = vmatpush1.bf16.msra.mxu0 %v1762
      %1788 = vmatprep.subr.bf16.mxu0 0
      %1789 = vmatpush1.bf16.msra.mxu0 %v1761
      %1790 = vmatprep.subr.bf16.mxu0 0
      %1791 = vmatpush1.bf16.msra.mxu0 %v1760
      %1792 = vmatprep.subr.bf16.mxu0 0
      %1793 = vmatpush2.bf16.msra.mxu0 0
      %1794 = vmatprep.subr.bf16.mxu0 0
      %1795 = vmatpush2.bf16.msra.mxu0 0
      %1796 = vmatprep.subr.bf16.mxu0 0
      %1797 = vmatpush2.bf16.msra.mxu0 0
      %1798 = vmatprep.subr.bf16.mxu0 0
      %1799 = vmatpush2.bf16.msra.mxu0 0
      %1800 = vmatprep.subr.bf16.mxu0 0
      %1801 = vmatpush2.bf16.msra.mxu0 0
      %1802 = vmatprep.subr.bf16.mxu0 0
      %1803 = vmatpush2.bf16.msra.mxu0 0
      %1804 = vmatprep.subr.bf16.mxu0 0
      %1805 = vmatpush2.bf16.msra.mxu0 0
      %1806 = vmatprep.subr.bf16.mxu0 0
      %1807 = vmatpush2.bf16.msra.mxu0 0
      %1808 = vmatprep.mubr.bf16.mxu0 0
      %1809 = vmatmul.mubr.bf16.gmra.mxu0 %v1699
      %v1810 = vpop.f32.mrf.mxu0
      %v1811 = vadd.f32 0.0, %v1810
      %v1812 = vpop.f32.mrf.mxu0
      %v1813 = vpop.f32.mrf.mxu0
      %v1814 = vadd.f32 0.0, %v1813
      %v1815 = vpop.f32.mrf.mxu0
      %1816 = vmatprep.mubr.bf16.mxu0 0
      %1817 = vmatmul.mubr.bf16.gmra.mxu0 %v1702
      %v1818 = vpop.f32.mrf.mxu0
      %v1819 = vadd.f32 0.0, %v1818
      %v1820 = vpop.f32.mrf.mxu0
      %v1821 = vpop.f32.mrf.mxu0
      %v1822 = vadd.f32 0.0, %v1821
      %v1823 = vpop.f32.mrf.mxu0
      %1824 = vmatprep.mubr.bf16.mxu0 0
      %1825 = vmatmul.mubr.bf16.gmra.mxu0 %v1705
      %v1826 = vpop.f32.mrf.mxu0
      %v1827 = vadd.f32 0.0, %v1826
      %v1828 = vpop.f32.mrf.mxu0
      %v1829 = vpop.f32.mrf.mxu0
      %v1830 = vadd.f32 0.0, %v1829
      %v1831 = vpop.f32.mrf.mxu0
      %1832 = vmatprep.mubr.bf16.mxu0 0
      %1833 = vmatmul.mubr.bf16.gmra.mxu0 %v1709
      %v1834 = vpop.f32.mrf.mxu0
      %v1835 = vadd.f32 0.0, %v1834
      %v1836 = vpop.f32.mrf.mxu0
      %v1837 = vpop.f32.mrf.mxu0
      %v1838 = vadd.f32 0.0, %v1837
      %v1839 = vpop.f32.mrf.mxu0
      %1840 = vmatprep.mubr.bf16.mxu0 0
      %1841 = vmatmul.mubr.bf16.gmra.mxu0 %v1695
      %v1842 = vpop.f32.mrf.mxu0
      %v1843 = vadd.f32 0.0, %v1842
      %v1844 = vpop.f32.mrf.mxu0
      %v1845 = vpop.f32.mrf.mxu0
      %v1846 = vpop.f32.mrf.mxu0
      %1847 = vdwg.mxu0
      %v1848 = vadd.f32 %v1681, %v1811
      %v1849 = vadd.f32 %v1682, %v1814
      %v1850 = vadd.f32 %v1683, %v1819
      %v1851 = vadd.f32 %v1684, %v1822
      %v1852 = vadd.f32 %v1685, %v1827
      %v1853 = vadd.f32 %v1686, %v1830
      %v1854 = vadd.f32 %v1687, %v1835
      %v1855 = vadd.f32 %v1688, %v1838
      %v1856 = vadd.f32 %v1689, %v1843
      %v1857 = vrot.slane %v788, 2
      %v1858 = vpack.c.b16 %v792, %v792
      %v1859 = vpack.c.b16 %v793, %v793
      %v1860 = vrot.slane %v799, 6
      %v1863 = vunpack.c.l.b16 %v765
      %v1864 = vunpack.c.l.b16 %v766
      %v1865 = vpack.c.b16 %v1864, %v1863
      %v1866 = vrot.slane %v1865, 2
      %v1869 = vsel %vm802, %v979, %v1857
      %v1872 = vsel %vm807, %v1857, %v1858
      %v1876 = vsel %vm811, %v1859, %v1860
      %v1879 = vsel %vm802, %v1346, %v1866
      %s1881 = scalar_lea.vmem %s8, 384
      %v1882 = vld [vmem:[%s1881] sm:$0xf]
      %v1883 = vld [vmem:[%s1881 + $0x4] sm:$0xf]
      %v1884 = vld [vmem:[%s1881 + $0x8] sm:$0xf]
      %v1885 = vld [vmem:[%s1881 + $0xc] sm:$0xf]
      %v1886 = vld [vmem:[%s1881 + $0x10] sm:$0xf]
      %v1887 = vld [vmem:[%s1881 + $0x14] sm:$0xf]
      %v1888 = vld [vmem:[%s1881 + $0x18] sm:$0xf]
      %v1889 = vld [vmem:[%s1881 + $0x1c] sm:$0xf]
      %v1890 = vld [vmem:[%s1881 + $0x20] sm:$0xf]
      %v1891 = vld [vmem:[%s1881 + $0x24] sm:$0xf]
      %v1892 = vld [vmem:[%s1881 + $0x28] sm:$0xf]
      %v1893 = vld [vmem:[%s1881 + $0x2c] sm:$0xf]
      %v1894 = vld [vmem:[%s1881 + $0x30] sm:$0xf]
      %v1895 = vld [vmem:[%s1881 + $0x34] sm:$0xf]
      %v1896 = vld [vmem:[%s1881 + $0x38] sm:$0xf]
      %v1897 = vld [vmem:[%s1881 + $0x3c] sm:$0xf]
      %v1914 = vunpack.c.l.b16 %v1882
      %v1915 = vunpack.c.l.b16 %v1883
      %v1916 = vunpack.c.l.b16 %v1884
      %v1917 = vunpack.c.l.b16 %v1885
      %v1918 = vunpack.c.l.b16 %v1886
      %v1919 = vunpack.c.l.b16 %v1887
      %v1920 = vunpack.c.l.b16 %v1888
      %v1921 = vunpack.c.l.b16 %v1889
      %v1922 = vunpack.c.l.b16 %v1890
      %v1923 = vunpack.c.l.b16 %v1891
      %v1924 = vunpack.c.l.b16 %v1892
      %v1925 = vunpack.c.l.b16 %v1893
      %v1926 = vunpack.c.l.b16 %v1894
      %v1927 = vunpack.c.l.b16 %v1895
      %v1928 = vunpack.c.l.b16 %v1896
      %v1929 = vunpack.c.l.b16 %v1897
      %v1930 = vpack.c.b16 %v1915, %v1914
      %v1931 = vpack.c.b16 %v1917, %v1916
      %v1932 = vpack.c.b16 %v1919, %v1918
      %v1933 = vpack.c.b16 %v1921, %v1920
      %v1934 = vpack.c.b16 %v1923, %v1922
      %v1935 = vpack.c.b16 %v1925, %v1924
      %v1936 = vpack.c.b16 %v1927, %v1926
      %v1937 = vpack.c.b16 %v1929, %v1928
      %1946 = vmatprep.subr.bf16.mxu0 0
      %1947 = vmatpush1.bf16.msra.mxu0 %v1937
      %1948 = vmatprep.subr.bf16.mxu0 0
      %1949 = vmatpush1.bf16.msra.mxu0 %v1936
      %1950 = vmatprep.subr.bf16.mxu0 0
      %1951 = vmatpush1.bf16.msra.mxu0 %v1935
      %1952 = vmatprep.subr.bf16.mxu0 0
      %1953 = vmatpush1.bf16.msra.mxu0 %v1934
      %1954 = vmatprep.subr.bf16.mxu0 0
      %1955 = vmatpush1.bf16.msra.mxu0 %v1933
      %1956 = vmatprep.subr.bf16.mxu0 0
      %1957 = vmatpush1.bf16.msra.mxu0 %v1932
      %1958 = vmatprep.subr.bf16.mxu0 0
      %1959 = vmatpush1.bf16.msra.mxu0 %v1931
      %1960 = vmatprep.subr.bf16.mxu0 0
      %1961 = vmatpush1.bf16.msra.mxu0 %v1930
      %1962 = vmatprep.subr.bf16.mxu0 0
      %1963 = vmatpush2.bf16.msra.mxu0 0
      %1964 = vmatprep.subr.bf16.mxu0 0
      %1965 = vmatpush2.bf16.msra.mxu0 0
      %1966 = vmatprep.subr.bf16.mxu0 0
      %1967 = vmatpush2.bf16.msra.mxu0 0
      %1968 = vmatprep.subr.bf16.mxu0 0
      %1969 = vmatpush2.bf16.msra.mxu0 0
      %1970 = vmatprep.subr.bf16.mxu0 0
      %1971 = vmatpush2.bf16.msra.mxu0 0
      %1972 = vmatprep.subr.bf16.mxu0 0
      %1973 = vmatpush2.bf16.msra.mxu0 0
      %1974 = vmatprep.subr.bf16.mxu0 0
      %1975 = vmatpush2.bf16.msra.mxu0 0
      %1976 = vmatprep.subr.bf16.mxu0 0
      %1977 = vmatpush2.bf16.msra.mxu0 0
      %1978 = vmatprep.mubr.bf16.mxu0 0
      %1979 = vmatmul.mubr.bf16.gmra.mxu0 %v1869
      %v1980 = vpop.f32.mrf.mxu0
      %v1981 = vadd.f32 0.0, %v1980
      %v1982 = vpop.f32.mrf.mxu0
      %v1983 = vpop.f32.mrf.mxu0
      %v1984 = vadd.f32 0.0, %v1983
      %v1985 = vpop.f32.mrf.mxu0
      %1986 = vmatprep.mubr.bf16.mxu0 0
      %1987 = vmatmul.mubr.bf16.gmra.mxu0 %v1872
      %v1988 = vpop.f32.mrf.mxu0
      %v1989 = vadd.f32 0.0, %v1988
      %v1990 = vpop.f32.mrf.mxu0
      %v1991 = vpop.f32.mrf.mxu0
      %v1992 = vadd.f32 0.0, %v1991
      %v1993 = vpop.f32.mrf.mxu0
      %1994 = vmatprep.mubr.bf16.mxu0 0
      %1995 = vmatmul.mubr.bf16.gmra.mxu0 %v1876
      %v1996 = vpop.f32.mrf.mxu0
      %v1997 = vadd.f32 0.0, %v1996
      %v1998 = vpop.f32.mrf.mxu0
      %v1999 = vpop.f32.mrf.mxu0
      %v2000 = vadd.f32 0.0, %v1999
      %v2001 = vpop.f32.mrf.mxu0
      %2002 = vmatprep.mubr.bf16.mxu0 0
      %2003 = vmatmul.mubr.bf16.gmra.mxu0 %v1879
      %v2004 = vpop.f32.mrf.mxu0
      %v2005 = vadd.f32 0.0, %v2004
      %v2006 = vpop.f32.mrf.mxu0
      %v2007 = vpop.f32.mrf.mxu0
      %v2008 = vadd.f32 0.0, %v2007
      %v2009 = vpop.f32.mrf.mxu0
      %2010 = vmatprep.mubr.bf16.mxu0 0
      %2011 = vmatmul.mubr.bf16.gmra.mxu0 %v1866
      %v2012 = vpop.f32.mrf.mxu0
      %v2013 = vadd.f32 0.0, %v2012
      %v2014 = vpop.f32.mrf.mxu0
      %v2015 = vpop.f32.mrf.mxu0
      %v2016 = vpop.f32.mrf.mxu0
      %2017 = vdwg.mxu0
      %v2018 = vadd.f32 %v1848, %v1981
      %v2019 = vadd.f32 %v1849, %v1984
      %v2020 = vadd.f32 %v1850, %v1989
      %v2021 = vadd.f32 %v1851, %v1992
      %v2022 = vadd.f32 %v1852, %v1997
      %v2023 = vadd.f32 %v1853, %v2000
      %v2024 = vadd.f32 %v1854, %v2005
      %v2025 = vadd.f32 %v1855, %v2008
      %v2026 = vadd.f32 %v1856, %v2013
      %v2027 = vrot.slane %v984, 1
      %v2028 = vor.u32 %v981, %v2027
      %v2029 = vrot.slane %v989, 2
      %v2030 = vrot.slane %v992, 3
      %v2031 = vor.u32 %v2029, %v2030
      %v2032 = vrot.slane %v996, 4
      %v2033 = vrot.slane %v998, 5
      %v2034 = vor.u32 %v2032, %v2033
      %v2035 = vrot.slane %v1003, 6
      %v2036 = vrot.slane %v1006, 7
      %v2037 = vor.u32 %v2035, %v2036
      %v2038 = vrot.slane %v1525, 1
      %v2039 = vor.u32 %v1522, %v2038
      %v2041 = vshrl.u32 %v1865, 16
      %v2043 = vrot.slane %v2041, 2
      %v2044 = vshll.u32 %v1865, 16
      %v2046 = vrot.slane %v2044, 3
      %v2047 = vor.u32 %v2043, %v2046
      %v2051 = vsel %vm802, %v2028, %v2031
      %v2054 = vsel %vm807, %v2031, %v2034
      %v2057 = vsel %vm811, %v2034, %v2037
      %v2061 = vsel %vm802, %v2039, %v2047
      %s2063 = scalar_lea.vmem %s8, 448
      %v2064 = vld [vmem:[%s2063] sm:$0xf]
      %v2065 = vld [vmem:[%s2063 + $0x4] sm:$0xf]
      %v2066 = vld [vmem:[%s2063 + $0x8] sm:$0xf]
      %v2067 = vld [vmem:[%s2063 + $0xc] sm:$0xf]
      %v2068 = vld [vmem:[%s2063 + $0x10] sm:$0xf]
      %v2069 = vld [vmem:[%s2063 + $0x14] sm:$0xf]
      %v2070 = vld [vmem:[%s2063 + $0x18] sm:$0xf]
      %v2071 = vld [vmem:[%s2063 + $0x1c] sm:$0xf]
      %v2072 = vld [vmem:[%s2063 + $0x20] sm:$0xf]
      %v2073 = vld [vmem:[%s2063 + $0x24] sm:$0xf]
      %v2074 = vld [vmem:[%s2063 + $0x28] sm:$0xf]
      %v2075 = vld [vmem:[%s2063 + $0x2c] sm:$0xf]
      %v2076 = vld [vmem:[%s2063 + $0x30] sm:$0xf]
      %v2077 = vld [vmem:[%s2063 + $0x34] sm:$0xf]
      %v2078 = vld [vmem:[%s2063 + $0x38] sm:$0xf]
      %v2079 = vld [vmem:[%s2063 + $0x3c] sm:$0xf]
      %v2096 = vunpack.c.l.b16 %v2064
      %v2097 = vunpack.c.l.b16 %v2065
      %v2098 = vunpack.c.l.b16 %v2066
      %v2099 = vunpack.c.l.b16 %v2067
      %v2100 = vunpack.c.l.b16 %v2068
      %v2101 = vunpack.c.l.b16 %v2069
      %v2102 = vunpack.c.l.b16 %v2070
      %v2103 = vunpack.c.l.b16 %v2071
      %v2104 = vunpack.c.l.b16 %v2072
      %v2105 = vunpack.c.l.b16 %v2073
      %v2106 = vunpack.c.l.b16 %v2074
      %v2107 = vunpack.c.l.b16 %v2075
      %v2108 = vunpack.c.l.b16 %v2076
      %v2109 = vunpack.c.l.b16 %v2077
      %v2110 = vunpack.c.l.b16 %v2078
      %v2111 = vunpack.c.l.b16 %v2079
      %v2112 = vpack.c.b16 %v2097, %v2096
      %v2113 = vpack.c.b16 %v2099, %v2098
      %v2114 = vpack.c.b16 %v2101, %v2100
      %v2115 = vpack.c.b16 %v2103, %v2102
      %v2116 = vpack.c.b16 %v2105, %v2104
      %v2117 = vpack.c.b16 %v2107, %v2106
      %v2118 = vpack.c.b16 %v2109, %v2108
      %v2119 = vpack.c.b16 %v2111, %v2110
      %2128 = vmatprep.subr.bf16.mxu0 0
      %2129 = vmatpush1.bf16.msra.mxu0 %v2119
      %2130 = vmatprep.subr.bf16.mxu0 0
      %2131 = vmatpush1.bf16.msra.mxu0 %v2118
      %2132 = vmatprep.subr.bf16.mxu0 0
      %2133 = vmatpush1.bf16.msra.mxu0 %v2117
      %2134 = vmatprep.subr.bf16.mxu0 0
      %2135 = vmatpush1.bf16.msra.mxu0 %v2116
      %2136 = vmatprep.subr.bf16.mxu0 0
      %2137 = vmatpush1.bf16.msra.mxu0 %v2115
      %2138 = vmatprep.subr.bf16.mxu0 0
      %2139 = vmatpush1.bf16.msra.mxu0 %v2114
      %2140 = vmatprep.subr.bf16.mxu0 0
      %2141 = vmatpush1.bf16.msra.mxu0 %v2113
      %2142 = vmatprep.subr.bf16.mxu0 0
      %2143 = vmatpush1.bf16.msra.mxu0 %v2112
      %2144 = vmatprep.subr.bf16.mxu0 0
      %2145 = vmatpush2.bf16.msra.mxu0 0
      %2146 = vmatprep.subr.bf16.mxu0 0
      %2147 = vmatpush2.bf16.msra.mxu0 0
      %2148 = vmatprep.subr.bf16.mxu0 0
      %2149 = vmatpush2.bf16.msra.mxu0 0
      %2150 = vmatprep.subr.bf16.mxu0 0
      %2151 = vmatpush2.bf16.msra.mxu0 0
      %2152 = vmatprep.subr.bf16.mxu0 0
      %2153 = vmatpush2.bf16.msra.mxu0 0
      %2154 = vmatprep.subr.bf16.mxu0 0
      %2155 = vmatpush2.bf16.msra.mxu0 0
      %2156 = vmatprep.subr.bf16.mxu0 0
      %2157 = vmatpush2.bf16.msra.mxu0 0
      %2158 = vmatprep.subr.bf16.mxu0 0
      %2159 = vmatpush2.bf16.msra.mxu0 0
      %2160 = vmatprep.mubr.bf16.mxu0 0
      %2161 = vmatmul.mubr.bf16.gmra.mxu0 %v2051
      %v2162 = vpop.f32.mrf.mxu0
      %v2163 = vadd.f32 0.0, %v2162
      %v2164 = vpop.f32.mrf.mxu0
      %v2165 = vpop.f32.mrf.mxu0
      %v2166 = vadd.f32 0.0, %v2165
      %v2167 = vpop.f32.mrf.mxu0
      %2168 = vmatprep.mubr.bf16.mxu0 0
      %2169 = vmatmul.mubr.bf16.gmra.mxu0 %v2054
      %v2170 = vpop.f32.mrf.mxu0
      %v2171 = vadd.f32 0.0, %v2170
      %v2172 = vpop.f32.mrf.mxu0
      %v2173 = vpop.f32.mrf.mxu0
      %v2174 = vadd.f32 0.0, %v2173
      %v2175 = vpop.f32.mrf.mxu0
      %2176 = vmatprep.mubr.bf16.mxu0 0
      %2177 = vmatmul.mubr.bf16.gmra.mxu0 %v2057
      %v2178 = vpop.f32.mrf.mxu0
      %v2179 = vadd.f32 0.0, %v2178
      %v2180 = vpop.f32.mrf.mxu0
      %v2181 = vpop.f32.mrf.mxu0
      %v2182 = vadd.f32 0.0, %v2181
      %v2183 = vpop.f32.mrf.mxu0
      %2184 = vmatprep.mubr.bf16.mxu0 0
      %2185 = vmatmul.mubr.bf16.gmra.mxu0 %v2061
      %v2186 = vpop.f32.mrf.mxu0
      %v2187 = vadd.f32 0.0, %v2186
      %v2188 = vpop.f32.mrf.mxu0
      %v2189 = vpop.f32.mrf.mxu0
      %v2190 = vadd.f32 0.0, %v2189
      %v2191 = vpop.f32.mrf.mxu0
      %2192 = vmatprep.mubr.bf16.mxu0 0
      %2193 = vmatmul.mubr.bf16.gmra.mxu0 %v2047
      %v2194 = vpop.f32.mrf.mxu0
      %v2195 = vadd.f32 0.0, %v2194
      %v2196 = vpop.f32.mrf.mxu0
      %v2197 = vpop.f32.mrf.mxu0
      %v2198 = vpop.f32.mrf.mxu0
      %2199 = vdwg.mxu0
      %v2200 = vadd.f32 %v2018, %v2163
      %v2201 = vadd.f32 %v2019, %v2166
      %v2202 = vadd.f32 %v2020, %v2171
      %v2203 = vadd.f32 %v2021, %v2174
      %v2204 = vadd.f32 %v2022, %v2179
      %v2205 = vadd.f32 %v2023, %v2182
      %v2206 = vadd.f32 %v2024, %v2187
      %v2207 = vadd.f32 %v2025, %v2190
      %v2208 = vadd.f32 %v2026, %v2195
      %v2209 = vrot.slane %v979, 1
      %v2210 = vrot.slane %v788, 3
      %v2211 = vrot.slane %v794, 5
      %v2212 = vrot.slane %v799, 7
      %v2213 = vrot.slane %v1346, 1
      %v2214 = vrot.slane %v1865, 3
      %v2218 = vsel %vm802, %v2209, %v2210
      %v2221 = vsel %vm807, %v2210, %v2211
      %v2224 = vsel %vm811, %v2211, %v2212
      %v2228 = vsel %vm802, %v2213, %v2214
      %s2230 = scalar_lea.vmem %s8, 512
      %v2231 = vld [vmem:[%s2230] sm:$0xf]
      %v2232 = vld [vmem:[%s2230 + $0x4] sm:$0xf]
      %v2233 = vld [vmem:[%s2230 + $0x8] sm:$0xf]
      %v2234 = vld [vmem:[%s2230 + $0xc] sm:$0xf]
      %v2235 = vld [vmem:[%s2230 + $0x10] sm:$0xf]
      %v2236 = vld [vmem:[%s2230 + $0x14] sm:$0xf]
      %v2237 = vld [vmem:[%s2230 + $0x18] sm:$0xf]
      %v2238 = vld [vmem:[%s2230 + $0x1c] sm:$0xf]
      %v2239 = vld [vmem:[%s2230 + $0x20] sm:$0xf]
      %v2240 = vld [vmem:[%s2230 + $0x24] sm:$0xf]
      %v2241 = vld [vmem:[%s2230 + $0x28] sm:$0xf]
      %v2242 = vld [vmem:[%s2230 + $0x2c] sm:$0xf]
      %v2243 = vld [vmem:[%s2230 + $0x30] sm:$0xf]
      %v2244 = vld [vmem:[%s2230 + $0x34] sm:$0xf]
      %v2245 = vld [vmem:[%s2230 + $0x38] sm:$0xf]
      %v2246 = vld [vmem:[%s2230 + $0x3c] sm:$0xf]
      %v2263 = vunpack.c.l.b16 %v2231
      %v2264 = vunpack.c.l.b16 %v2232
      %v2265 = vunpack.c.l.b16 %v2233
      %v2266 = vunpack.c.l.b16 %v2234
      %v2267 = vunpack.c.l.b16 %v2235
      %v2268 = vunpack.c.l.b16 %v2236
      %v2269 = vunpack.c.l.b16 %v2237
      %v2270 = vunpack.c.l.b16 %v2238
      %v2271 = vunpack.c.l.b16 %v2239
      %v2272 = vunpack.c.l.b16 %v2240
      %v2273 = vunpack.c.l.b16 %v2241
      %v2274 = vunpack.c.l.b16 %v2242
      %v2275 = vunpack.c.l.b16 %v2243
      %v2276 = vunpack.c.l.b16 %v2244
      %v2277 = vunpack.c.l.b16 %v2245
      %v2278 = vunpack.c.l.b16 %v2246
      %v2279 = vpack.c.b16 %v2264, %v2263
      %v2280 = vpack.c.b16 %v2266, %v2265
      %v2281 = vpack.c.b16 %v2268, %v2267
      %v2282 = vpack.c.b16 %v2270, %v2269
      %v2283 = vpack.c.b16 %v2272, %v2271
      %v2284 = vpack.c.b16 %v2274, %v2273
      %v2285 = vpack.c.b16 %v2276, %v2275
      %v2286 = vpack.c.b16 %v2278, %v2277
      %2295 = vmatprep.subr.bf16.mxu0 0
      %2296 = vmatpush1.bf16.msra.mxu0 %v2286
      %2297 = vmatprep.subr.bf16.mxu0 0
      %2298 = vmatpush1.bf16.msra.mxu0 %v2285
      %2299 = vmatprep.subr.bf16.mxu0 0
      %2300 = vmatpush1.bf16.msra.mxu0 %v2284
      %2301 = vmatprep.subr.bf16.mxu0 0
      %2302 = vmatpush1.bf16.msra.mxu0 %v2283
      %2303 = vmatprep.subr.bf16.mxu0 0
      %2304 = vmatpush1.bf16.msra.mxu0 %v2282
      %2305 = vmatprep.subr.bf16.mxu0 0
      %2306 = vmatpush1.bf16.msra.mxu0 %v2281
      %2307 = vmatprep.subr.bf16.mxu0 0
      %2308 = vmatpush1.bf16.msra.mxu0 %v2280
      %2309 = vmatprep.subr.bf16.mxu0 0
      %2310 = vmatpush1.bf16.msra.mxu0 %v2279
      %2311 = vmatprep.subr.bf16.mxu0 0
      %2312 = vmatpush2.bf16.msra.mxu0 0
      %2313 = vmatprep.subr.bf16.mxu0 0
      %2314 = vmatpush2.bf16.msra.mxu0 0
      %2315 = vmatprep.subr.bf16.mxu0 0
      %2316 = vmatpush2.bf16.msra.mxu0 0
      %2317 = vmatprep.subr.bf16.mxu0 0
      %2318 = vmatpush2.bf16.msra.mxu0 0
      %2319 = vmatprep.subr.bf16.mxu0 0
      %2320 = vmatpush2.bf16.msra.mxu0 0
      %2321 = vmatprep.subr.bf16.mxu0 0
      %2322 = vmatpush2.bf16.msra.mxu0 0
      %2323 = vmatprep.subr.bf16.mxu0 0
      %2324 = vmatpush2.bf16.msra.mxu0 0
      %2325 = vmatprep.subr.bf16.mxu0 0
      %2326 = vmatpush2.bf16.msra.mxu0 0
      %2327 = vmatprep.mubr.bf16.mxu0 0
      %2328 = vmatmul.mubr.bf16.gmra.mxu0 %v2218
      %v2329 = vpop.f32.mrf.mxu0
      %v2330 = vadd.f32 0.0, %v2329
      %v2331 = vpop.f32.mrf.mxu0
      %v2332 = vpop.f32.mrf.mxu0
      %v2333 = vadd.f32 0.0, %v2332
      %v2334 = vpop.f32.mrf.mxu0
      %2335 = vmatprep.mubr.bf16.mxu0 0
      %2336 = vmatmul.mubr.bf16.gmra.mxu0 %v2221
      %v2337 = vpop.f32.mrf.mxu0
      %v2338 = vadd.f32 0.0, %v2337
      %v2339 = vpop.f32.mrf.mxu0
      %v2340 = vpop.f32.mrf.mxu0
      %v2341 = vadd.f32 0.0, %v2340
      %v2342 = vpop.f32.mrf.mxu0
      %2343 = vmatprep.mubr.bf16.mxu0 0
      %2344 = vmatmul.mubr.bf16.gmra.mxu0 %v2224
      %v2345 = vpop.f32.mrf.mxu0
      %v2346 = vadd.f32 0.0, %v2345
      %v2347 = vpop.f32.mrf.mxu0
      %v2348 = vpop.f32.mrf.mxu0
      %v2349 = vadd.f32 0.0, %v2348
      %v2350 = vpop.f32.mrf.mxu0
      %2351 = vmatprep.mubr.bf16.mxu0 0
      %2352 = vmatmul.mubr.bf16.gmra.mxu0 %v2228
      %v2353 = vpop.f32.mrf.mxu0
      %v2354 = vadd.f32 0.0, %v2353
      %v2355 = vpop.f32.mrf.mxu0
      %v2356 = vpop.f32.mrf.mxu0
      %v2357 = vadd.f32 0.0, %v2356
      %v2358 = vpop.f32.mrf.mxu0
      %2359 = vmatprep.mubr.bf16.mxu0 0
      %2360 = vmatmul.mubr.bf16.gmra.mxu0 %v2214
      %v2361 = vpop.f32.mrf.mxu0
      %v2362 = vadd.f32 0.0, %v2361
      %v2363 = vpop.f32.mrf.mxu0
      %v2364 = vpop.f32.mrf.mxu0
      %v2365 = vpop.f32.mrf.mxu0
      %2366 = vdwg.mxu0
      %v2367 = vadd.f32 %v2200, %v2330
      %v2368 = vadd.f32 %v2201, %v2333
      %v2369 = vadd.f32 %v2202, %v2338
      %v2370 = vadd.f32 %v2203, %v2341
      %v2371 = vadd.f32 %v2204, %v2346
      %v2372 = vadd.f32 %v2205, %v2349
      %v2373 = vadd.f32 %v2206, %v2354
      %v2374 = vadd.f32 %v2207, %v2357
      %v2375 = vadd.f32 %v2208, %v2362
      %v2376 = vmax.f32 %v2367, 0.0
      %v2377 = vmax.f32 %v2368, 0.0
      %2378 = vst [vmem:[%s740] sm:$0xff] %v2376
      %2379 = vst [vmem:[%s740 + $0x8] sm:$0xf] %v2377
      %v2380 = vmax.f32 %v2369, 0.0
      %s2381 = scalar_lea.vmem %s740, 16
      %2382 = vst [vmem:[%s2381 - $0x4] sm:$0xf0] %v2377
      %2383 = vst [vmem:[%s2381 + $0x4] sm:$0xff] %v2380
      %v2384 = vmax.f32 %v2370, 0.0
      %v2385 = vmax.f32 %v2371, 0.0
      %s2386 = scalar_lea.vmem %s740, 32
      %2387 = vst [vmem:[%s2386] sm:$0xff] %v2384
      %2388 = vst [vmem:[%s2386 + $0x8] sm:$0xf] %v2385
      %v2389 = vmax.f32 %v2372, 0.0
      %s2390 = scalar_lea.vmem %s740, 48
      %2391 = vst [vmem:[%s2390 - $0x4] sm:$0xf0] %v2385
      %2392 = vst [vmem:[%s2390 + $0x4] sm:$0xff] %v2389
      %v2393 = vmax.f32 %v2373, 0.0
      %v2394 = vmax.f32 %v2374, 0.0
      %s2395 = scalar_lea.vmem %s740, 64
      %2396 = vst [vmem:[%s2395] sm:$0xff] %v2393
      %2397 = vst [vmem:[%s2395 + $0x8] sm:$0xf] %v2394
      %v2398 = vmax.f32 %v2375, 0.0
      %s2399 = scalar_lea.vmem %s740, 80
      %2400 = vst [vmem:[%s2399 - $0x4] sm:$0xf0] %v2394
      %2401 = vst [vmem:[%s2399 + $0x4] sm:$0xff] %v2398
      %s2402 = smul.u32 6, %s26
      %p2403 = scmp.lt.s32.totalorder %s25, 1
      %s2404 = scalar_select %p2403, %s25, 1
      %p2405 = scmp.lt.s32.totalorder %s2402, 11
      %s2406 = scalar_select %p2405, %s2402, 11
      %s2407 = smul.addr %s2406, 2
      %s2408 = smul.addr %s2404, 24
      %s2409 = sadd.s32 %s2407, %s2408
      %s2410 = smul.addr %s2409, 8
      %s2411 = scalar_lea.vmem %s10, %s2410
      // Predicated region
      $region61: #{unet_up_conv_block.5} parent=59 // pred_check
        %p2412 = pneg %p349
      $region62: #{unet_up_conv_block.5} parent=59 // pred_check_branch
        %2414 = sbr.rel (%p2412) target = $region64
      $region63: #{unet_up_conv_block.5} parent=59 // pred_region
        %s2415 = smul.u32 6, %s26
      $region64: #{unet_up_conv_block.5} parent=59 // pred_fallthru
        _
    $region60: #{unet_up_conv_block.5} parent=5 // pred_fallthru
      _
    %p2416 = scmp.le.s32.totalorder 2, %s16
    // Predicated region
    $region65: #{unet_up_conv_block.5} parent=5 // pred_check
      %p2417 = pneg %p2416
    $region66: #{unet_up_conv_block.5} parent=5 // pred_check_branch
      %2419 = sbr.rel (%p2417) target = $region68
    $region67: #{unet_up_conv_block.5} parent=5 // pred_region
      %s2420 = ssub.s32 %s16, 2
      // Predicated region
      $region69: #{unet_up_conv_block.5} parent=67 // pred_check
        %p2421 = pneg %p355
      $region70: #{unet_up_conv_block.5} parent=67 // pred_check_branch
        %2423 = sbr.rel (%p2421) target = $region72
      $region71: #{unet_up_conv_block.5} parent=67 // pred_region
        %s2424 = smul.u32 6, %s28
        %p2425 = scmp.lt.s32.totalorder %s27, 1
        %s2426 = scalar_select %p2425, %s27, 1
        %p2427 = scmp.lt.s32.totalorder %s2424, 11
        %s2428 = scalar_select %p2427, %s2424, 11
        %s2429 = smul.addr %s2428, 2
        %s2430 = smul.addr %s2426, 24
        %s2431 = sadd.s32 %s2429, %s2430
        %s2432 = smul.addr %s2431, 8
        %s2433 = scalar_lea.vmem %s10, %s2432
      $region72: #{unet_up_conv_block.5} parent=67 // pred_fallthru
        _
    $region68: #{unet_up_conv_block.5} parent=5 // pred_fallthru
      _
  $region6: #{unet_up_conv_block.5} parent=0 // loop_footer
    %s20 = sadd.s32 1, %s16
  $region7: #{unet_up_conv_block.5} parent=0 // loop_footer_branch
    %15 = sbr.rel target = $region3
  $region8: #{unet_up_conv_block.5} parent=0 // loop_exit
    _

// kernel: unet_up_conv_block.4
$region0: #{unet_up_conv_block.4}
  #allocation0 [shape = 'u32[]', space=smem, size = 0x4, offset = 0x4, fixed_abs, tag = 'smem constant byte address 0x4 - core index']
  #allocation1 [shape = 'u32[144,128]{1,0:T(1,128)}', space=vmem, size = 0x12000, scoped, tag = 'internal scratch']
  %s0 = inlined_call_operand.vmem [shape: bf16[2,16,16,4], index: 0, kind: input, shape index: {}, may-alias: {0,1,2,3,4,5,6,7,8}]
  %s1 = inlined_call_operand.vmem [shape: bf16[2,16,16,4], index: 1, kind: input, shape index: {}, may-alias: {0,1,2,3,4,5,6,7,8}]
  %s2 = inlined_call_operand.vmem [shape: bf16[2,16,16,4], index: 2, kind: input, shape index: {}, may-alias: {0,1,2,3,4,5,6,7,8}]
  %s3 = inlined_call_operand.vmem [shape: bf16[2,16,16,4], index: 3, kind: input, shape index: {}, may-alias: {0,1,2,3,4,5,6,7,8}]
  %s4 = inlined_call_operand.vmem [shape: bf16[2,16,16,4], index: 4, kind: input, shape index: {}, may-alias: {0,1,2,3,4,5,6,7,8}]
  %s5 = inlined_call_operand.vmem [shape: bf16[2,16,16,4], index: 5, kind: input, shape index: {}, may-alias: {0,1,2,3,4,5,6,7,8}]
  %s6 = inlined_call_operand.vmem [shape: bf16[2,16,16,4], index: 6, kind: input, shape index: {}, may-alias: {0,1,2,3,4,5,6,7,8}]
  %s7 = inlined_call_operand.vmem [shape: bf16[2,16,16,4], index: 7, kind: input, shape index: {}, may-alias: {0,1,2,3,4,5,6,7,8}]
  %s8 = inlined_call_operand.vmem [shape: bf16[2,16,16,4], index: 8, kind: input, shape index: {}, may-alias: {0,1,2,3,4,5,6,7,8}]
  %s9 = inlined_call_operand.vmem [shape: bf16[3,3,4,128], index: 9, kind: input, shape index: {}]
  %s10 = inlined_call_operand.vmem [shape: f32[2,20,20,4], index: 10, kind: input, shape index: {}, may-alias: {10,11,12,13,14,15,16,17,18}]
  %s11 = inlined_call_operand.vmem [shape: f32[2,20,20,4], index: 11, kind: input, shape index: {}, may-alias: {10,11,12,13,14,15,16,17,18}]
  %s12 = inlined_call_operand.vmem [shape: f32[2,20,20,4], index: 12, kind: input, shape index: {}, may-alias: {10,11,12,13,14,15,16,17,18}]
  %s13 = inlined_call_operand.vmem [shape: f32[2,20,20,4], index: 13, kind: input, shape index: {}, may-alias: {10,11,12,13,14,15,16,17,18}]
  %s14 = inlined_call_operand.vmem [shape: f32[2,20,20,4], index: 14, kind: input, shape index: {}, may-alias: {10,11,12,13,14,15,16,17,18}]
  %s15 = inlined_call_operand.vmem [shape: f32[2,20,20,4], index: 15, kind: input, shape index: {}, may-alias: {10,11,12,13,14,15,16,17,18}]
  %s16 = inlined_call_operand.vmem [shape: f32[2,20,20,4], index: 16, kind: input, shape index: {}, may-alias: {10,11,12,13,14,15,16,17,18}]
  %s17 = inlined_call_operand.vmem [shape: f32[2,20,20,4], index: 17, kind: input, shape index: {}, may-alias: {10,11,12,13,14,15,16,17,18}]
  %s18 = inlined_call_operand.vmem [shape: f32[2,20,20,4], index: 18, kind: input, shape index: {}, may-alias: {10,11,12,13,14,15,16,17,18}]
  %s19 = inlined_call_operand.vmem [shape: bf16[3,3,4,128], index: 19, kind: input, shape index: {}]
  %s20 = inlined_call_operand.vmem [shape: f32[1,128], index: 20, kind: input, shape index: {}]
  %s21 = inlined_call_operand.vmem [shape: bf16[2,14,14,128], index: 21, kind: output, shape index: {}]
  %s22 = sld [smem:[#allocation0]]
  $region117: #{unet_up_conv_block.4} parent=0
    _
  %s24 = ssub.s32 1, %s22
  %s25 = scalar_select 0, %s24, %s22
  loop: start=0, step=1, limit=6
  $region2: #{unet_up_conv_block.4} parent=0 // loop_pre_header
    _
  $region3: #{unet_up_conv_block.4} parent=0 // loop_header
    %s27 = sphi 0, %s31
    %p28 = scmp.ge.s32.totalorder %s27, 6
    %s34 = sphi 0, %s46
    %s35 = sphi 0, %s42
    %s36 = sphi 0, %s34
    %s37 = sphi 0, %s35
    %s38 = sphi 0, %s36
    %s39 = sphi 0, %s37
    %s53 = sphi 0, %s55
    %s56 = sphi 0, %s53
    %s57 = sphi 0, %s56
    %s73 = sphi 0, %s57
    %s85 = sphi 0, %s87
    %s88 = sphi 0, %s85
    %s89 = sphi 0, %s88
    %s105 = sphi 0, %s89
    %s117 = sphi 0, %s119
    %s120 = sphi 0, %s117
    %s121 = sphi 0, %s120
    %s137 = sphi 0, %s121
    %s149 = sphi 0, %s151
    %s152 = sphi 0, %s149
    %s153 = sphi 0, %s152
    %s169 = sphi 0, %s153
    %s181 = sphi 0, %s183
    %s184 = sphi 0, %s181
    %s185 = sphi 0, %s184
    %s201 = sphi 0, %s185
    %s213 = sphi 0, %s215
    %s216 = sphi 0, %s213
    %s217 = sphi 0, %s216
    %s233 = sphi 0, %s217
    %s245 = sphi 0, %s247
    %s248 = sphi 0, %s245
    %s249 = sphi 0, %s248
    %s265 = sphi 0, %s249
    %s277 = sphi 0, %s279
    %s280 = sphi 0, %s277
    %s281 = sphi 0, %s280
    %s297 = sphi 0, %s281
    %s309 = sphi 0, %s311
    %s312 = sphi 0, %s309
    %s313 = sphi 0, %s312
    %s329 = sphi 0, %s313
    %s333 = sphi 0, %s333
    %s335 = sphi 0, %s333
    %s336 = sphi 0, %s335
    %s350 = sphi 0, %s336
    %s362 = sphi 0, %s364
    %s365 = sphi 0, %s362
    %s366 = sphi 0, %s365
    %s382 = sphi 0, %s366
    %s394 = sphi 0, %s396
    %s397 = sphi 0, %s394
    %s398 = sphi 0, %s397
    %s414 = sphi 0, %s398
    %s426 = sphi 0, %s428
    %s429 = sphi 0, %s426
    %s430 = sphi 0, %s429
    %s446 = sphi 0, %s430
    %s458 = sphi 0, %s460
    %s461 = sphi 0, %s458
    %s462 = sphi 0, %s461
    %s478 = sphi 0, %s462
    %s490 = sphi 0, %s492
    %s493 = sphi 0, %s490
    %s494 = sphi 0, %s493
    %s510 = sphi 0, %s494
    %s522 = sphi 0, %s524
    %s525 = sphi 0, %s522
    %s526 = sphi 0, %s525
    %s542 = sphi 0, %s526
    %s554 = sphi 0, %s556
    %s557 = sphi 0, %s554
    %s558 = sphi 0, %s557
    %s574 = sphi 0, %s558
    %s586 = sphi 0, %s588
    %s589 = sphi 0, %s586
    %s590 = sphi 0, %s589
    %s606 = sphi 0, %s590
    %s618 = sphi 0, %s620
    %s621 = sphi 0, %s618
    %s622 = sphi 0, %s621
    %s638 = sphi 0, %s622
    %s642 = sphi 0, %s642
    %s644 = sphi 0, %s642
    %s645 = sphi 0, %s644
    %s659 = sphi 0, %s645
    %s663 = sphi 0, %s663
    %s665 = sphi 0, %s663
    %s666 = sphi 0, %s665
    %s680 = sphi 0, %s666
    %s688 = sphi 0, %s690
    %s691 = sphi 0, %s688
    %s692 = sphi 0, %s691
    %s708 = sphi 0, %s692
  $region4: #{unet_up_conv_block.4} parent=0 // loop_header_branch
    %30 = sbr.rel (%p28) target = $region8
  $region5: #{unet_up_conv_block.4} parent=0 // loop_body
    %s32 = ssub.s32 %s27, 1
    %s33 = ssub.s32 %s27, 2
    %s40 = sadd.s32 1, %s35
    %p41 = scmp.ge.s32.totalorder %s40, 2
    %s42 = scalar_select %p41, 0, %s40
    %s43 = sadd.s32 1, %s34
    %s44 = scalar_select %p41, %s43, %s34
    %p45 = scmp.ge.s32.totalorder %s44, 2
    %s46 = scalar_select %p45, 0, %s44
    %s47 = smul.u32 %s35, 7
    %s48 = smul.u32 %s42, 7
    %s49 = ssub.s32 %s34, %s46
    %s50 = ssub.s32 %s47, %s48
    %s51 = sor.u32 %s49, %s50
    %p52 = scmp.eq.s32.totalorder %s51, 0
    %s54 = sadd.s32 %s53, 1
    %s55 = scalar_select %p52, %s53, %s54
    %p58 = pneg %p52
    %p59 = scmp.eq.s32.totalorder %s27, 3
    %p60 = por %p58, %p59
    %p61 = scmp.ne.s32.totalorder %s53, %s56
    %p62 = scmp.eq.s32.totalorder %s27, 0
    %p63 = por %p61, %p62
    %p64 = scmp.ne.s32.totalorder %s53, %s56
    %p65 = scmp.eq.s32.totalorder %s32, 3
    %p66 = por %p64, %p65
    %p67 = scmp.ne.s32.totalorder %s56, %s57
    %p68 = scmp.eq.s32.totalorder %s32, 0
    %p69 = por %p67, %p68
    %p70 = scmp.ne.s32.totalorder %s56, %s57
    %p71 = scmp.eq.s32.totalorder %s33, 3
    %p72 = por %p70, %p71
    %p74 = scmp.ne.s32.totalorder %s57, %s73
    %p75 = scmp.eq.s32.totalorder %s33, 0
    %p76 = por %p74, %p75
    %s77 = smul.u32 %s35, 7
    %s78 = sadd.s32 %s77, 1
    %s79 = smul.u32 %s42, 7
    %s80 = sadd.s32 %s79, 1
    %s81 = ssub.s32 %s34, %s46
    %s82 = ssub.s32 %s78, %s80
    %s83 = sor.u32 %s81, %s82
    %p84 = scmp.eq.s32.totalorder %s83, 0
    %s86 = sadd.s32 %s85, 1
    %s87 = scalar_select %p84, %s85, %s86
    %p90 = pneg %p84
    %p91 = scmp.eq.s32.totalorder %s27, 3
    %p92 = por %p90, %p91
    %p93 = scmp.ne.s32.totalorder %s85, %s88
    %p94 = scmp.eq.s32.totalorder %s27, 0
    %p95 = por %p93, %p94
    %p96 = scmp.ne.s32.totalorder %s85, %s88
    %p97 = scmp.eq.s32.totalorder %s32, 3
    %p98 = por %p96, %p97
    %p99 = scmp.ne.s32.totalorder %s88, %s89
    %p100 = scmp.eq.s32.totalorder %s32, 0
    %p101 = por %p99, %p100
    %p102 = scmp.ne.s32.totalorder %s88, %s89
    %p103 = scmp.eq.s32.totalorder %s33, 3
    %p104 = por %p102, %p103
    %p106 = scmp.ne.s32.totalorder %s89, %s105
    %p107 = scmp.eq.s32.totalorder %s33, 0
    %p108 = por %p106, %p107
    %s109 = smul.u32 %s35, 7
    %s110 = sadd.s32 %s109, 2
    %s111 = smul.u32 %s42, 7
    %s112 = sadd.s32 %s111, 2
    %s113 = ssub.s32 %s34, %s46
    %s114 = ssub.s32 %s110, %s112
    %s115 = sor.u32 %s113, %s114
    %p116 = scmp.eq.s32.totalorder %s115, 0
    %s118 = sadd.s32 %s117, 1
    %s119 = scalar_select %p116, %s117, %s118
    %p122 = pneg %p116
    %p123 = scmp.eq.s32.totalorder %s27, 3
    %p124 = por %p122, %p123
    %p125 = scmp.ne.s32.totalorder %s117, %s120
    %p126 = scmp.eq.s32.totalorder %s27, 0
    %p127 = por %p125, %p126
    %p128 = scmp.ne.s32.totalorder %s117, %s120
    %p129 = scmp.eq.s32.totalorder %s32, 3
    %p130 = por %p128, %p129
    %p131 = scmp.ne.s32.totalorder %s120, %s121
    %p132 = scmp.eq.s32.totalorder %s32, 0
    %p133 = por %p131, %p132
    %p134 = scmp.ne.s32.totalorder %s120, %s121
    %p135 = scmp.eq.s32.totalorder %s33, 3
    %p136 = por %p134, %p135
    %p138 = scmp.ne.s32.totalorder %s121, %s137
    %p139 = scmp.eq.s32.totalorder %s33, 0
    %p140 = por %p138, %p139
    %s141 = smul.u32 %s35, 7
    %s142 = sadd.s32 %s141, 3
    %s143 = smul.u32 %s42, 7
    %s144 = sadd.s32 %s143, 3
    %s145 = ssub.s32 %s34, %s46
    %s146 = ssub.s32 %s142, %s144
    %s147 = sor.u32 %s145, %s146
    %p148 = scmp.eq.s32.totalorder %s147, 0
    %s150 = sadd.s32 %s149, 1
    %s151 = scalar_select %p148, %s149, %s150
    %p154 = pneg %p148
    %p155 = scmp.eq.s32.totalorder %s27, 3
    %p156 = por %p154, %p155
    %p157 = scmp.ne.s32.totalorder %s149, %s152
    %p158 = scmp.eq.s32.totalorder %s27, 0
    %p159 = por %p157, %p158
    %p160 = scmp.ne.s32.totalorder %s149, %s152
    %p161 = scmp.eq.s32.totalorder %s32, 3
    %p162 = por %p160, %p161
    %p163 = scmp.ne.s32.totalorder %s152, %s153
    %p164 = scmp.eq.s32.totalorder %s32, 0
    %p165 = por %p163, %p164
    %p166 = scmp.ne.s32.totalorder %s152, %s153
    %p167 = scmp.eq.s32.totalorder %s33, 3
    %p168 = por %p166, %p167
    %p170 = scmp.ne.s32.totalorder %s153, %s169
    %p171 = scmp.eq.s32.totalorder %s33, 0
    %p172 = por %p170, %p171
    %s173 = smul.u32 %s35, 7
    %s174 = sadd.s32 %s173, 4
    %s175 = smul.u32 %s42, 7
    %s176 = sadd.s32 %s175, 4
    %s177 = ssub.s32 %s34, %s46
    %s178 = ssub.s32 %s174, %s176
    %s179 = sor.u32 %s177, %s178
    %p180 = scmp.eq.s32.totalorder %s179, 0
    %s182 = sadd.s32 %s181, 1
    %s183 = scalar_select %p180, %s181, %s182
    %p186 = pneg %p180
    %p187 = scmp.eq.s32.totalorder %s27, 3
    %p188 = por %p186, %p187
    %p189 = scmp.ne.s32.totalorder %s181, %s184
    %p190 = scmp.eq.s32.totalorder %s27, 0
    %p191 = por %p189, %p190
    %p192 = scmp.ne.s32.totalorder %s181, %s184
    %p193 = scmp.eq.s32.totalorder %s32, 3
    %p194 = por %p192, %p193
    %p195 = scmp.ne.s32.totalorder %s184, %s185
    %p196 = scmp.eq.s32.totalorder %s32, 0
    %p197 = por %p195, %p196
    %p198 = scmp.ne.s32.totalorder %s184, %s185
    %p199 = scmp.eq.s32.totalorder %s33, 3
    %p200 = por %p198, %p199
    %p202 = scmp.ne.s32.totalorder %s185, %s201
    %p203 = scmp.eq.s32.totalorder %s33, 0
    %p204 = por %p202, %p203
    %s205 = smul.u32 %s35, 7
    %s206 = sadd.s32 %s205, 5
    %s207 = smul.u32 %s42, 7
    %s208 = sadd.s32 %s207, 5
    %s209 = ssub.s32 %s34, %s46
    %s210 = ssub.s32 %s206, %s208
    %s211 = sor.u32 %s209, %s210
    %p212 = scmp.eq.s32.totalorder %s211, 0
    %s214 = sadd.s32 %s213, 1
    %s215 = scalar_select %p212, %s213, %s214
    %p218 = pneg %p212
    %p219 = scmp.eq.s32.totalorder %s27, 3
    %p220 = por %p218, %p219
    %p221 = scmp.ne.s32.totalorder %s213, %s216
    %p222 = scmp.eq.s32.totalorder %s27, 0
    %p223 = por %p221, %p222
    %p224 = scmp.ne.s32.totalorder %s213, %s216
    %p225 = scmp.eq.s32.totalorder %s32, 3
    %p226 = por %p224, %p225
    %p227 = scmp.ne.s32.totalorder %s216, %s217
    %p228 = scmp.eq.s32.totalorder %s32, 0
    %p229 = por %p227, %p228
    %p230 = scmp.ne.s32.totalorder %s216, %s217
    %p231 = scmp.eq.s32.totalorder %s33, 3
    %p232 = por %p230, %p231
    %p234 = scmp.ne.s32.totalorder %s217, %s233
    %p235 = scmp.eq.s32.totalorder %s33, 0
    %p236 = por %p234, %p235
    %s237 = smul.u32 %s35, 7
    %s238 = sadd.s32 %s237, 6
    %s239 = smul.u32 %s42, 7
    %s240 = sadd.s32 %s239, 6
    %s241 = ssub.s32 %s34, %s46
    %s242 = ssub.s32 %s238, %s240
    %s243 = sor.u32 %s241, %s242
    %p244 = scmp.eq.s32.totalorder %s243, 0
    %s246 = sadd.s32 %s245, 1
    %s247 = scalar_select %p244, %s245, %s246
    %p250 = pneg %p244
    %p251 = scmp.eq.s32.totalorder %s27, 3
    %p252 = por %p250, %p251
    %p253 = scmp.ne.s32.totalorder %s245, %s248
    %p254 = scmp.eq.s32.totalorder %s27, 0
    %p255 = por %p253, %p254
    %p256 = scmp.ne.s32.totalorder %s245, %s248
    %p257 = scmp.eq.s32.totalorder %s32, 3
    %p258 = por %p256, %p257
    %p259 = scmp.ne.s32.totalorder %s248, %s249
    %p260 = scmp.eq.s32.totalorder %s32, 0
    %p261 = por %p259, %p260
    %p262 = scmp.ne.s32.totalorder %s248, %s249
    %p263 = scmp.eq.s32.totalorder %s33, 3
    %p264 = por %p262, %p263
    %p266 = scmp.ne.s32.totalorder %s249, %s265
    %p267 = scmp.eq.s32.totalorder %s33, 0
    %p268 = por %p266, %p267
    %s269 = smul.u32 %s35, 7
    %s270 = sadd.s32 %s269, 7
    %s271 = smul.u32 %s42, 7
    %s272 = sadd.s32 %s271, 7
    %s273 = ssub.s32 %s34, %s46
    %s274 = ssub.s32 %s270, %s272
    %s275 = sor.u32 %s273, %s274
    %p276 = scmp.eq.s32.totalorder %s275, 0
    %s278 = sadd.s32 %s277, 1
    %s279 = scalar_select %p276, %s277, %s278
    %p282 = pneg %p276
    %p283 = scmp.eq.s32.totalorder %s27, 3
    %p284 = por %p282, %p283
    %p285 = scmp.ne.s32.totalorder %s277, %s280
    %p286 = scmp.eq.s32.totalorder %s27, 0
    %p287 = por %p285, %p286
    %p288 = scmp.ne.s32.totalorder %s277, %s280
    %p289 = scmp.eq.s32.totalorder %s32, 3
    %p290 = por %p288, %p289
    %p291 = scmp.ne.s32.totalorder %s280, %s281
    %p292 = scmp.eq.s32.totalorder %s32, 0
    %p293 = por %p291, %p292
    %p294 = scmp.ne.s32.totalorder %s280, %s281
    %p295 = scmp.eq.s32.totalorder %s33, 3
    %p296 = por %p294, %p295
    %p298 = scmp.ne.s32.totalorder %s281, %s297
    %p299 = scmp.eq.s32.totalorder %s33, 0
    %p300 = por %p298, %p299
    %s301 = smul.u32 %s35, 7
    %s302 = sadd.s32 %s301, 8
    %s303 = smul.u32 %s42, 7
    %s304 = sadd.s32 %s303, 8
    %s305 = ssub.s32 %s34, %s46
    %s306 = ssub.s32 %s302, %s304
    %s307 = sor.u32 %s305, %s306
    %p308 = scmp.eq.s32.totalorder %s307, 0
    %s310 = sadd.s32 %s309, 1
    %s311 = scalar_select %p308, %s309, %s310
    %p314 = pneg %p308
    %p315 = scmp.eq.s32.totalorder %s27, 3
    %p316 = por %p314, %p315
    %p317 = scmp.ne.s32.totalorder %s309, %s312
    %p318 = scmp.eq.s32.totalorder %s27, 0
    %p319 = por %p317, %p318
    %p320 = scmp.ne.s32.totalorder %s309, %s312
    %p321 = scmp.eq.s32.totalorder %s32, 3
    %p322 = por %p320, %p321
    %p323 = scmp.ne.s32.totalorder %s312, %s313
    %p324 = scmp.eq.s32.totalorder %s32, 0
    %p325 = por %p323, %p324
    %p326 = scmp.ne.s32.totalorder %s312, %s313
    %p327 = scmp.eq.s32.totalorder %s33, 3
    %p328 = por %p326, %p327
    %p330 = scmp.ne.s32.totalorder %s313, %s329
    %p331 = scmp.eq.s32.totalorder %s33, 0
    %p332 = por %p330, %p331
    %s334 = sadd.s32 %s333, 1
    %p337 = scmp.eq.s32.totalorder %s27, 3
    %p338 = scmp.ne.s32.totalorder %s333, %s335
    %p339 = scmp.eq.s32.totalorder %s27, 0
    %p340 = por %p338, %p339
    %p341 = scmp.ne.s32.totalorder %s333, %s335
    %p342 = scmp.eq.s32.totalorder %s32, 3
    %p343 = por %p341, %p342
    %p344 = scmp.ne.s32.totalorder %s335, %s336
    %p345 = scmp.eq.s32.totalorder %s32, 0
    %p346 = por %p344, %p345
    %p347 = scmp.ne.s32.totalorder %s335, %s336
    %p348 = scmp.eq.s32.totalorder %s33, 3
    %p349 = por %p347, %p348
    %p351 = scmp.ne.s32.totalorder %s336, %s350
    %p352 = scmp.eq.s32.totalorder %s33, 0
    %p353 = por %p351, %p352
    %s354 = smul.u32 %s35, 7
    %s355 = sadd.s32 %s354, 2
    %s356 = smul.u32 %s42, 7
    %s357 = sadd.s32 %s356, 2
    %s358 = ssub.s32 %s34, %s46
    %s359 = ssub.s32 %s355, %s357
    %s360 = sor.u32 %s358, %s359
    %p361 = scmp.eq.s32.totalorder %s360, 0
    %s363 = sadd.s32 %s362, 1
    %s364 = scalar_select %p361, %s362, %s363
    %p367 = pneg %p361
    %p368 = scmp.eq.s32.totalorder %s27, 3
    %p369 = por %p367, %p368
    %p370 = scmp.ne.s32.totalorder %s362, %s365
    %p371 = scmp.eq.s32.totalorder %s27, 0
    %p372 = por %p370, %p371
    %p373 = scmp.ne.s32.totalorder %s362, %s365
    %p374 = scmp.eq.s32.totalorder %s32, 3
    %p375 = por %p373, %p374
    %p376 = scmp.ne.s32.totalorder %s365, %s366
    %p377 = scmp.eq.s32.totalorder %s32, 0
    %p378 = por %p376, %p377
    %p379 = scmp.ne.s32.totalorder %s365, %s366
    %p380 = scmp.eq.s32.totalorder %s33, 3
    %p381 = por %p379, %p380
    %p383 = scmp.ne.s32.totalorder %s366, %s382
    %p384 = scmp.eq.s32.totalorder %s33, 0
    %p385 = por %p383, %p384
    %s386 = smul.u32 %s35, 7
    %s387 = sadd.s32 %s386, 3
    %s388 = smul.u32 %s42, 7
    %s389 = sadd.s32 %s388, 3
    %s390 = ssub.s32 %s34, %s46
    %s391 = ssub.s32 %s387, %s389
    %s392 = sor.u32 %s390, %s391
    %p393 = scmp.eq.s32.totalorder %s392, 0
    %s395 = sadd.s32 %s394, 1
    %s396 = scalar_select %p393, %s394, %s395
    %p399 = pneg %p393
    %p400 = scmp.eq.s32.totalorder %s27, 3
    %p401 = por %p399, %p400
    %p402 = scmp.ne.s32.totalorder %s394, %s397
    %p403 = scmp.eq.s32.totalorder %s27, 0
    %p404 = por %p402, %p403
    %p405 = scmp.ne.s32.totalorder %s394, %s397
    %p406 = scmp.eq.s32.totalorder %s32, 3
    %p407 = por %p405, %p406
    %p408 = scmp.ne.s32.totalorder %s397, %s398
    %p409 = scmp.eq.s32.totalorder %s32, 0
    %p410 = por %p408, %p409
    %p411 = scmp.ne.s32.totalorder %s397, %s398
    %p412 = scmp.eq.s32.totalorder %s33, 3
    %p413 = por %p411, %p412
    %p415 = scmp.ne.s32.totalorder %s398, %s414
    %p416 = scmp.eq.s32.totalorder %s33, 0
    %p417 = por %p415, %p416
    %s418 = smul.u32 %s35, 7
    %s419 = sadd.s32 %s418, 4
    %s420 = smul.u32 %s42, 7
    %s421 = sadd.s32 %s420, 4
    %s422 = ssub.s32 %s34, %s46
    %s423 = ssub.s32 %s419, %s421
    %s424 = sor.u32 %s422, %s423
    %p425 = scmp.eq.s32.totalorder %s424, 0
    %s427 = sadd.s32 %s426, 1
    %s428 = scalar_select %p425, %s426, %s427
    %p431 = pneg %p425
    %p432 = scmp.eq.s32.totalorder %s27, 3
    %p433 = por %p431, %p432
    %p434 = scmp.ne.s32.totalorder %s426, %s429
    %p435 = scmp.eq.s32.totalorder %s27, 0
    %p436 = por %p434, %p435
    %p437 = scmp.ne.s32.totalorder %s426, %s429
    %p438 = scmp.eq.s32.totalorder %s32, 3
    %p439 = por %p437, %p438
    %p440 = scmp.ne.s32.totalorder %s429, %s430
    %p441 = scmp.eq.s32.totalorder %s32, 0
    %p442 = por %p440, %p441
    %p443 = scmp.ne.s32.totalorder %s429, %s430
    %p444 = scmp.eq.s32.totalorder %s33, 3
    %p445 = por %p443, %p444
    %p447 = scmp.ne.s32.totalorder %s430, %s446
    %p448 = scmp.eq.s32.totalorder %s33, 0
    %p449 = por %p447, %p448
    %s450 = smul.u32 %s35, 7
    %s451 = sadd.s32 %s450, 5
    %s452 = smul.u32 %s42, 7
    %s453 = sadd.s32 %s452, 5
    %s454 = ssub.s32 %s34, %s46
    %s455 = ssub.s32 %s451, %s453
    %s456 = sor.u32 %s454, %s455
    %p457 = scmp.eq.s32.totalorder %s456, 0
    %s459 = sadd.s32 %s458, 1
    %s460 = scalar_select %p457, %s458, %s459
    %p463 = pneg %p457
    %p464 = scmp.eq.s32.totalorder %s27, 3
    %p465 = por %p463, %p464
    %p466 = scmp.ne.s32.totalorder %s458, %s461
    %p467 = scmp.eq.s32.totalorder %s27, 0
    %p468 = por %p466, %p467
    %p469 = scmp.ne.s32.totalorder %s458, %s461
    %p470 = scmp.eq.s32.totalorder %s32, 3
    %p471 = por %p469, %p470
    %p472 = scmp.ne.s32.totalorder %s461, %s462
    %p473 = scmp.eq.s32.totalorder %s32, 0
    %p474 = por %p472, %p473
    %p475 = scmp.ne.s32.totalorder %s461, %s462
    %p476 = scmp.eq.s32.totalorder %s33, 3
    %p477 = por %p475, %p476
    %p479 = scmp.ne.s32.totalorder %s462, %s478
    %p480 = scmp.eq.s32.totalorder %s33, 0
    %p481 = por %p479, %p480
    %s482 = smul.u32 %s35, 7
    %s483 = sadd.s32 %s482, 6
    %s484 = smul.u32 %s42, 7
    %s485 = sadd.s32 %s484, 6
    %s486 = ssub.s32 %s34, %s46
    %s487 = ssub.s32 %s483, %s485
    %s488 = sor.u32 %s486, %s487
    %p489 = scmp.eq.s32.totalorder %s488, 0
    %s491 = sadd.s32 %s490, 1
    %s492 = scalar_select %p489, %s490, %s491
    %p495 = pneg %p489
    %p496 = scmp.eq.s32.totalorder %s27, 3
    %p497 = por %p495, %p496
    %p498 = scmp.ne.s32.totalorder %s490, %s493
    %p499 = scmp.eq.s32.totalorder %s27, 0
    %p500 = por %p498, %p499
    %p501 = scmp.ne.s32.totalorder %s490, %s493
    %p502 = scmp.eq.s32.totalorder %s32, 3
    %p503 = por %p501, %p502
    %p504 = scmp.ne.s32.totalorder %s493, %s494
    %p505 = scmp.eq.s32.totalorder %s32, 0
    %p506 = por %p504, %p505
    %p507 = scmp.ne.s32.totalorder %s493, %s494
    %p508 = scmp.eq.s32.totalorder %s33, 3
    %p509 = por %p507, %p508
    %p511 = scmp.ne.s32.totalorder %s494, %s510
    %p512 = scmp.eq.s32.totalorder %s33, 0
    %p513 = por %p511, %p512
    %s514 = smul.u32 %s35, 7
    %s515 = sadd.s32 %s514, 7
    %s516 = smul.u32 %s42, 7
    %s517 = sadd.s32 %s516, 7
    %s518 = ssub.s32 %s34, %s46
    %s519 = ssub.s32 %s515, %s517
    %s520 = sor.u32 %s518, %s519
    %p521 = scmp.eq.s32.totalorder %s520, 0
    %s523 = sadd.s32 %s522, 1
    %s524 = scalar_select %p521, %s522, %s523
    %p527 = pneg %p521
    %p528 = scmp.eq.s32.totalorder %s27, 3
    %p529 = por %p527, %p528
    %p530 = scmp.ne.s32.totalorder %s522, %s525
    %p531 = scmp.eq.s32.totalorder %s27, 0
    %p532 = por %p530, %p531
    %p533 = scmp.ne.s32.totalorder %s522, %s525
    %p534 = scmp.eq.s32.totalorder %s32, 3
    %p535 = por %p533, %p534
    %p536 = scmp.ne.s32.totalorder %s525, %s526
    %p537 = scmp.eq.s32.totalorder %s32, 0
    %p538 = por %p536, %p537
    %p539 = scmp.ne.s32.totalorder %s525, %s526
    %p540 = scmp.eq.s32.totalorder %s33, 3
    %p541 = por %p539, %p540
    %p543 = scmp.ne.s32.totalorder %s526, %s542
    %p544 = scmp.eq.s32.totalorder %s33, 0
    %p545 = por %p543, %p544
    %s546 = smul.u32 %s35, 7
    %s547 = sadd.s32 %s546, 8
    %s548 = smul.u32 %s42, 7
    %s549 = sadd.s32 %s548, 8
    %s550 = ssub.s32 %s34, %s46
    %s551 = ssub.s32 %s547, %s549
    %s552 = sor.u32 %s550, %s551
    %p553 = scmp.eq.s32.totalorder %s552, 0
    %s555 = sadd.s32 %s554, 1
    %s556 = scalar_select %p553, %s554, %s555
    %p559 = pneg %p553
    %p560 = scmp.eq.s32.totalorder %s27, 3
    %p561 = por %p559, %p560
    %p562 = scmp.ne.s32.totalorder %s554, %s557
    %p563 = scmp.eq.s32.totalorder %s27, 0
    %p564 = por %p562, %p563
    %p565 = scmp.ne.s32.totalorder %s554, %s557
    %p566 = scmp.eq.s32.totalorder %s32, 3
    %p567 = por %p565, %p566
    %p568 = scmp.ne.s32.totalorder %s557, %s558
    %p569 = scmp.eq.s32.totalorder %s32, 0
    %p570 = por %p568, %p569
    %p571 = scmp.ne.s32.totalorder %s557, %s558
    %p572 = scmp.eq.s32.totalorder %s33, 3
    %p573 = por %p571, %p572
    %p575 = scmp.ne.s32.totalorder %s558, %s574
    %p576 = scmp.eq.s32.totalorder %s33, 0
    %p577 = por %p575, %p576
    %s578 = smul.u32 %s35, 7
    %s579 = sadd.s32 %s578, 9
    %s580 = smul.u32 %s42, 7
    %s581 = sadd.s32 %s580, 9
    %s582 = ssub.s32 %s34, %s46
    %s583 = ssub.s32 %s579, %s581
    %s584 = sor.u32 %s582, %s583
    %p585 = scmp.eq.s32.totalorder %s584, 0
    %s587 = sadd.s32 %s586, 1
    %s588 = scalar_select %p585, %s586, %s587
    %p591 = pneg %p585
    %p592 = scmp.eq.s32.totalorder %s27, 3
    %p593 = por %p591, %p592
    %p594 = scmp.ne.s32.totalorder %s586, %s589
    %p595 = scmp.eq.s32.totalorder %s27, 0
    %p596 = por %p594, %p595
    %p597 = scmp.ne.s32.totalorder %s586, %s589
    %p598 = scmp.eq.s32.totalorder %s32, 3
    %p599 = por %p597, %p598
    %p600 = scmp.ne.s32.totalorder %s589, %s590
    %p601 = scmp.eq.s32.totalorder %s32, 0
    %p602 = por %p600, %p601
    %p603 = scmp.ne.s32.totalorder %s589, %s590
    %p604 = scmp.eq.s32.totalorder %s33, 3
    %p605 = por %p603, %p604
    %p607 = scmp.ne.s32.totalorder %s590, %s606
    %p608 = scmp.eq.s32.totalorder %s33, 0
    %p609 = por %p607, %p608
    %s610 = smul.u32 %s35, 7
    %s611 = sadd.s32 %s610, 10
    %s612 = smul.u32 %s42, 7
    %s613 = sadd.s32 %s612, 10
    %s614 = ssub.s32 %s34, %s46
    %s615 = ssub.s32 %s611, %s613
    %s616 = sor.u32 %s614, %s615
    %p617 = scmp.eq.s32.totalorder %s616, 0
    %s619 = sadd.s32 %s618, 1
    %s620 = scalar_select %p617, %s618, %s619
    %p623 = pneg %p617
    %p624 = scmp.eq.s32.totalorder %s27, 3
    %p625 = por %p623, %p624
    %p626 = scmp.ne.s32.totalorder %s618, %s621
    %p627 = scmp.eq.s32.totalorder %s27, 0
    %p628 = por %p626, %p627
    %p629 = scmp.ne.s32.totalorder %s618, %s621
    %p630 = scmp.eq.s32.totalorder %s32, 3
    %p631 = por %p629, %p630
    %p632 = scmp.ne.s32.totalorder %s621, %s622
    %p633 = scmp.eq.s32.totalorder %s32, 0
    %p634 = por %p632, %p633
    %p635 = scmp.ne.s32.totalorder %s621, %s622
    %p636 = scmp.eq.s32.totalorder %s33, 3
    %p637 = por %p635, %p636
    %p639 = scmp.ne.s32.totalorder %s622, %s638
    %p640 = scmp.eq.s32.totalorder %s33, 0
    %p641 = por %p639, %p640
    %s643 = sadd.s32 %s642, 1
    %p646 = scmp.eq.s32.totalorder %s27, 3
    %p647 = scmp.ne.s32.totalorder %s642, %s644
    %p648 = scmp.eq.s32.totalorder %s27, 0
    %p649 = por %p647, %p648
    %p650 = scmp.ne.s32.totalorder %s642, %s644
    %p651 = scmp.eq.s32.totalorder %s32, 3
    %p652 = por %p650, %p651
    %p653 = scmp.ne.s32.totalorder %s644, %s645
    %p654 = scmp.eq.s32.totalorder %s32, 0
    %p655 = por %p653, %p654
    %p656 = scmp.ne.s32.totalorder %s644, %s645
    %p657 = scmp.eq.s32.totalorder %s33, 3
    %p658 = por %p656, %p657
    %p660 = scmp.ne.s32.totalorder %s645, %s659
    %p661 = scmp.eq.s32.totalorder %s33, 0
    %p662 = por %p660, %p661
    %s664 = sadd.s32 %s663, 1
    %p667 = scmp.eq.s32.totalorder %s27, 3
    %p668 = scmp.ne.s32.totalorder %s663, %s665
    %p669 = scmp.eq.s32.totalorder %s27, 0
    %p670 = por %p668, %p669
    %p671 = scmp.ne.s32.totalorder %s663, %s665
    %p672 = scmp.eq.s32.totalorder %s32, 3
    %p673 = por %p671, %p672
    %p674 = scmp.ne.s32.totalorder %s665, %s666
    %p675 = scmp.eq.s32.totalorder %s32, 0
    %p676 = por %p674, %p675
    %p677 = scmp.ne.s32.totalorder %s665, %s666
    %p678 = scmp.eq.s32.totalorder %s33, 3
    %p679 = por %p677, %p678
    %p681 = scmp.ne.s32.totalorder %s666, %s680
    %p682 = scmp.eq.s32.totalorder %s33, 0
    %p683 = por %p681, %p682
    %s684 = ssub.s32 %s34, %s46
    %s685 = ssub.s32 %s35, %s42
    %s686 = sor.u32 %s684, %s685
    %p687 = scmp.eq.s32.totalorder %s686, 0
    %s689 = sadd.s32 %s688, 1
    %s690 = scalar_select %p687, %s688, %s689
    %p693 = pneg %p687
    %p694 = scmp.eq.s32.totalorder %s27, 3
    %p695 = por %p693, %p694
    %p696 = scmp.ne.s32.totalorder %s688, %s691
    %p697 = scmp.eq.s32.totalorder %s27, 0
    %p698 = por %p696, %p697
    %p699 = scmp.ne.s32.totalorder %s688, %s691
    %p700 = scmp.eq.s32.totalorder %s32, 3
    %p701 = por %p699, %p700
    %p702 = scmp.ne.s32.totalorder %s691, %s692
    %p703 = scmp.eq.s32.totalorder %s32, 0
    %p704 = por %p702, %p703
    %p705 = scmp.ne.s32.totalorder %s691, %s692
    %p706 = scmp.eq.s32.totalorder %s33, 3
    %p707 = por %p705, %p706
    %p709 = scmp.ne.s32.totalorder %s692, %s708
    %p710 = scmp.eq.s32.totalorder %s33, 0
    %p711 = por %p709, %p710
    %p712 = scmp.le.s32.totalorder 1, %s27
    %p713 = scmp.lt.s32.totalorder %s27, 5
    %p714 = pnand %p712, %p713
    %p715 = pneg %p714
    // Predicated region
    $region9: #{unet_up_conv_block.4} parent=5 // pred_check
      _
    $region10: #{unet_up_conv_block.4} parent=5 // pred_check_branch
      %717 = sbr.rel (%p714) target = $region12
    $region11: #{unet_up_conv_block.4} parent=5 // pred_region
      %s718 = ssub.s32 %s27, 1
      // Predicated region
      $region13: #{unet_up_conv_block.4} parent=11 // pred_check
        %p719 = pneg %p346
      $region14: #{unet_up_conv_block.4} parent=11 // pred_check_branch
        %721 = sbr.rel (%p719) target = $region16
      $region15: #{unet_up_conv_block.4} parent=11 // pred_region
        _
      $region16: #{unet_up_conv_block.4} parent=11 // pred_fallthru
        _
      // Predicated region
      $region17: #{unet_up_conv_block.4} parent=11 // pred_check
        %p722 = pneg %p655
      $region18: #{unet_up_conv_block.4} parent=11 // pred_check_branch
        %724 = sbr.rel (%p722) target = $region20
      $region19: #{unet_up_conv_block.4} parent=11 // pred_region
        _
      $region20: #{unet_up_conv_block.4} parent=11 // pred_fallthru
        _
      // Predicated region
      $region21: #{unet_up_conv_block.4} parent=11 // pred_check
        %p725 = pneg %p676
      $region22: #{unet_up_conv_block.4} parent=11 // pred_check_branch
        %727 = sbr.rel (%p725) target = $region24
      $region23: #{unet_up_conv_block.4} parent=11 // pred_region
        _
      $region24: #{unet_up_conv_block.4} parent=11 // pred_fallthru
        _
    $region12: #{unet_up_conv_block.4} parent=5 // pred_fallthru
      _
    %p728 = scmp.lt.s32.totalorder %s27, 4
    // Predicated region
    $region25: #{unet_up_conv_block.4} parent=5 // pred_check
      %p729 = pneg %p728
    $region26: #{unet_up_conv_block.4} parent=5 // pred_check_branch
      %731 = sbr.rel (%p729) target = $region28
    $region27: #{unet_up_conv_block.4} parent=5 // pred_region
      // Predicated region
      $region29: #{unet_up_conv_block.4} parent=27 // pred_check
        %p732 = pneg %p63
      $region30: #{unet_up_conv_block.4} parent=27 // pred_check_branch
        %734 = sbr.rel (%p732) target = $region32
      $region31: #{unet_up_conv_block.4} parent=27 // pred_region
        %s735 = smul.u32 %s35, 7
        %p736 = scmp.lt.s32.totalorder %s34, 1
        %s737 = scalar_select %p736, %s34, 1
        %p738 = scmp.lt.s32.totalorder %s735, 15
        %s739 = scalar_select %p738, %s735, 15
        %s740 = smul.addr %s739, 2
        %s741 = smul.addr %s737, 32
        %s742 = sadd.s32 %s740, %s741
        %s743 = smul.addr %s742, 4
        %s744 = scalar_lea.vmem %s0, %s743
        %s745 = smul.u32 %s35, 7
      $region32: #{unet_up_conv_block.4} parent=27 // pred_fallthru
        _
      // Predicated region
      $region33: #{unet_up_conv_block.4} parent=27 // pred_check
        %p746 = pneg %p95
      $region34: #{unet_up_conv_block.4} parent=27 // pred_check_branch
        %748 = sbr.rel (%p746) target = $region36
      $region35: #{unet_up_conv_block.4} parent=27 // pred_region
        %s749 = smul.u32 %s35, 7
        %s750 = sadd.s32 %s749, 1
        %p751 = scmp.lt.s32.totalorder %s34, 1
        %s752 = scalar_select %p751, %s34, 1
        %p753 = scmp.lt.s32.totalorder %s750, 15
        %s754 = scalar_select %p753, %s750, 15
        %s755 = smul.addr %s754, 2
        %s756 = smul.addr %s752, 32
        %s757 = sadd.s32 %s755, %s756
        %s758 = smul.addr %s757, 4
        %s759 = scalar_lea.vmem %s1, %s758
        %s760 = smul.u32 %s35, 7
        %s761 = sadd.s32 %s760, 1
      $region36: #{unet_up_conv_block.4} parent=27 // pred_fallthru
        _
      // Predicated region
      $region37: #{unet_up_conv_block.4} parent=27 // pred_check
        %p762 = pneg %p127
      $region38: #{unet_up_conv_block.4} parent=27 // pred_check_branch
        %764 = sbr.rel (%p762) target = $region40
      $region39: #{unet_up_conv_block.4} parent=27 // pred_region
        %s765 = smul.u32 %s35, 7
        %s766 = sadd.s32 %s765, 2
        %p767 = scmp.lt.s32.totalorder %s34, 1
        %s768 = scalar_select %p767, %s34, 1
        %p769 = scmp.lt.s32.totalorder %s766, 15
        %s770 = scalar_select %p769, %s766, 15
        %s771 = smul.addr %s770, 2
        %s772 = smul.addr %s768, 32
        %s773 = sadd.s32 %s771, %s772
        %s774 = smul.addr %s773, 4
        %s775 = scalar_lea.vmem %s2, %s774
        %s776 = smul.u32 %s35, 7
        %s777 = sadd.s32 %s776, 2
      $region40: #{unet_up_conv_block.4} parent=27 // pred_fallthru
        _
      // Predicated region
      $region41: #{unet_up_conv_block.4} parent=27 // pred_check
        %p778 = pneg %p159
      $region42: #{unet_up_conv_block.4} parent=27 // pred_check_branch
        %780 = sbr.rel (%p778) target = $region44
      $region43: #{unet_up_conv_block.4} parent=27 // pred_region
        %s781 = smul.u32 %s35, 7
        %s782 = sadd.s32 %s781, 3
        %p783 = scmp.lt.s32.totalorder %s34, 1
        %s784 = scalar_select %p783, %s34, 1
        %p785 = scmp.lt.s32.totalorder %s782, 15
        %s786 = scalar_select %p785, %s782, 15
        %s787 = smul.addr %s786, 2
        %s788 = smul.addr %s784, 32
        %s789 = sadd.s32 %s787, %s788
        %s790 = smul.addr %s789, 4
        %s791 = scalar_lea.vmem %s3, %s790
        %s792 = smul.u32 %s35, 7
        %s793 = sadd.s32 %s792, 3
      $region44: #{unet_up_conv_block.4} parent=27 // pred_fallthru
        _
      // Predicated region
      $region45: #{unet_up_conv_block.4} parent=27 // pred_check
        %p794 = pneg %p191
      $region46: #{unet_up_conv_block.4} parent=27 // pred_check_branch
        %796 = sbr.rel (%p794) target = $region48
      $region47: #{unet_up_conv_block.4} parent=27 // pred_region
        %s797 = smul.u32 %s35, 7
        %s798 = sadd.s32 %s797, 4
        %p799 = scmp.lt.s32.totalorder %s34, 1
        %s800 = scalar_select %p799, %s34, 1
        %p801 = scmp.lt.s32.totalorder %s798, 15
        %s802 = scalar_select %p801, %s798, 15
        %s803 = smul.addr %s802, 2
        %s804 = smul.addr %s800, 32
        %s805 = sadd.s32 %s803, %s804
        %s806 = smul.addr %s805, 4
        %s807 = scalar_lea.vmem %s4, %s806
        %s808 = smul.u32 %s35, 7
        %s809 = sadd.s32 %s808, 4
      $region48: #{unet_up_conv_block.4} parent=27 // pred_fallthru
        _
      // Predicated region
      $region49: #{unet_up_conv_block.4} parent=27 // pred_check
        %p810 = pneg %p223
      $region50: #{unet_up_conv_block.4} parent=27 // pred_check_branch
        %812 = sbr.rel (%p810) target = $region52
      $region51: #{unet_up_conv_block.4} parent=27 // pred_region
        %s813 = smul.u32 %s35, 7
        %s814 = sadd.s32 %s813, 5
        %p815 = scmp.lt.s32.totalorder %s34, 1
        %s816 = scalar_select %p815, %s34, 1
        %p817 = scmp.lt.s32.totalorder %s814, 15
        %s818 = scalar_select %p817, %s814, 15
        %s819 = smul.addr %s818, 2
        %s820 = smul.addr %s816, 32
        %s821 = sadd.s32 %s819, %s820
        %s822 = smul.addr %s821, 4
        %s823 = scalar_lea.vmem %s5, %s822
        %s824 = smul.u32 %s35, 7
        %s825 = sadd.s32 %s824, 5
      $region52: #{unet_up_conv_block.4} parent=27 // pred_fallthru
        _
      // Predicated region
      $region53: #{unet_up_conv_block.4} parent=27 // pred_check
        %p826 = pneg %p255
      $region54: #{unet_up_conv_block.4} parent=27 // pred_check_branch
        %828 = sbr.rel (%p826) target = $region56
      $region55: #{unet_up_conv_block.4} parent=27 // pred_region
        %s829 = smul.u32 %s35, 7
        %s830 = sadd.s32 %s829, 6
        %p831 = scmp.lt.s32.totalorder %s34, 1
        %s832 = scalar_select %p831, %s34, 1
        %p833 = scmp.lt.s32.totalorder %s830, 15
        %s834 = scalar_select %p833, %s830, 15
        %s835 = smul.addr %s834, 2
        %s836 = smul.addr %s832, 32
        %s837 = sadd.s32 %s835, %s836
        %s838 = smul.addr %s837, 4
        %s839 = scalar_lea.vmem %s6, %s838
        %s840 = smul.u32 %s35, 7
        %s841 = sadd.s32 %s840, 6
      $region56: #{unet_up_conv_block.4} parent=27 // pred_fallthru
        _
      // Predicated region
      $region57: #{unet_up_conv_block.4} parent=27 // pred_check
        %p842 = pneg %p287
      $region58: #{unet_up_conv_block.4} parent=27 // pred_check_branch
        %844 = sbr.rel (%p842) target = $region60
      $region59: #{unet_up_conv_block.4} parent=27 // pred_region
        %s845 = smul.u32 %s35, 7
        %s846 = sadd.s32 %s845, 7
        %p847 = scmp.lt.s32.totalorder %s34, 1
        %s848 = scalar_select %p847, %s34, 1
        %p849 = scmp.lt.s32.totalorder %s846, 15
        %s850 = scalar_select %p849, %s846, 15
        %s851 = smul.addr %s850, 2
        %s852 = smul.addr %s848, 32
        %s853 = sadd.s32 %s851, %s852
        %s854 = smul.addr %s853, 4
        %s855 = scalar_lea.vmem %s7, %s854
        %s856 = smul.u32 %s35, 7
        %s857 = sadd.s32 %s856, 7
      $region60: #{unet_up_conv_block.4} parent=27 // pred_fallthru
        _
      // Predicated region
      $region61: #{unet_up_conv_block.4} parent=27 // pred_check
        %p858 = pneg %p319
      $region62: #{unet_up_conv_block.4} parent=27 // pred_check_branch
        %860 = sbr.rel (%p858) target = $region64
      $region63: #{unet_up_conv_block.4} parent=27 // pred_region
        %s861 = smul.u32 %s35, 7
        %s862 = sadd.s32 %s861, 8
        %p863 = scmp.lt.s32.totalorder %s34, 1
        %s864 = scalar_select %p863, %s34, 1
        %p865 = scmp.lt.s32.totalorder %s862, 15
        %s866 = scalar_select %p865, %s862, 15
        %s867 = smul.addr %s866, 2
        %s868 = smul.addr %s864, 32
        %s869 = sadd.s32 %s867, %s868
        %s870 = smul.addr %s869, 4
        %s871 = scalar_lea.vmem %s8, %s870
        %s872 = smul.u32 %s35, 7
        %s873 = sadd.s32 %s872, 8
      $region64: #{unet_up_conv_block.4} parent=27 // pred_fallthru
        _
      // Predicated region
      $region65: #{unet_up_conv_block.4} parent=27 // pred_check
        %p874 = pneg %p372
      $region66: #{unet_up_conv_block.4} parent=27 // pred_check_branch
        %876 = sbr.rel (%p874) target = $region68
      $region67: #{unet_up_conv_block.4} parent=27 // pred_region
        %s877 = smul.u32 %s35, 7
        %s878 = sadd.s32 %s877, 2
        %p879 = scmp.lt.s32.totalorder %s34, 1
        %s880 = scalar_select %p879, %s34, 1
        %p881 = scmp.lt.s32.totalorder %s878, 19
        %s882 = scalar_select %p881, %s878, 19
        %s883 = smul.addr %s882, 3
        %s884 = smul.addr %s880, 60
        %s885 = sadd.s32 %s883, %s884
        %s886 = smul.addr %s885, 8
        %s887 = scalar_lea.vmem %s10, %s886
        %s888 = smul.u32 %s35, 7
        %s889 = sadd.s32 %s888, 2
      $region68: #{unet_up_conv_block.4} parent=27 // pred_fallthru
        _
      // Predicated region
      $region69: #{unet_up_conv_block.4} parent=27 // pred_check
        %p890 = pneg %p404
      $region70: #{unet_up_conv_block.4} parent=27 // pred_check_branch
        %892 = sbr.rel (%p890) target = $region72
      $region71: #{unet_up_conv_block.4} parent=27 // pred_region
        %s893 = smul.u32 %s35, 7
        %s894 = sadd.s32 %s893, 3
        %p895 = scmp.lt.s32.totalorder %s34, 1
        %s896 = scalar_select %p895, %s34, 1
        %p897 = scmp.lt.s32.totalorder %s894, 19
        %s898 = scalar_select %p897, %s894, 19
        %s899 = smul.addr %s898, 3
        %s900 = smul.addr %s896, 60
        %s901 = sadd.s32 %s899, %s900
        %s902 = smul.addr %s901, 8
        %s903 = scalar_lea.vmem %s11, %s902
        %s904 = smul.u32 %s35, 7
        %s905 = sadd.s32 %s904, 3
      $region72: #{unet_up_conv_block.4} parent=27 // pred_fallthru
        _
      // Predicated region
      $region73: #{unet_up_conv_block.4} parent=27 // pred_check
        %p906 = pneg %p436
      $region74: #{unet_up_conv_block.4} parent=27 // pred_check_branch
        %908 = sbr.rel (%p906) target = $region76
      $region75: #{unet_up_conv_block.4} parent=27 // pred_region
        %s909 = smul.u32 %s35, 7
        %s910 = sadd.s32 %s909, 4
        %p911 = scmp.lt.s32.totalorder %s34, 1
        %s912 = scalar_select %p911, %s34, 1
        %p913 = scmp.lt.s32.totalorder %s910, 19
        %s914 = scalar_select %p913, %s910, 19
        %s915 = smul.addr %s914, 3
        %s916 = smul.addr %s912, 60
        %s917 = sadd.s32 %s915, %s916
        %s918 = smul.addr %s917, 8
        %s919 = scalar_lea.vmem %s12, %s918
        %s920 = smul.u32 %s35, 7
        %s921 = sadd.s32 %s920, 4
      $region76: #{unet_up_conv_block.4} parent=27 // pred_fallthru
        _
      // Predicated region
      $region77: #{unet_up_conv_block.4} parent=27 // pred_check
        %p922 = pneg %p468
      $region78: #{unet_up_conv_block.4} parent=27 // pred_check_branch
        %924 = sbr.rel (%p922) target = $region80
      $region79: #{unet_up_conv_block.4} parent=27 // pred_region
        %s925 = smul.u32 %s35, 7
        %s926 = sadd.s32 %s925, 5
        %p927 = scmp.lt.s32.totalorder %s34, 1
        %s928 = scalar_select %p927, %s34, 1
        %p929 = scmp.lt.s32.totalorder %s926, 19
        %s930 = scalar_select %p929, %s926, 19
        %s931 = smul.addr %s930, 3
        %s932 = smul.addr %s928, 60
        %s933 = sadd.s32 %s931, %s932
        %s934 = smul.addr %s933, 8
        %s935 = scalar_lea.vmem %s13, %s934
        %s936 = smul.u32 %s35, 7
        %s937 = sadd.s32 %s936, 5
      $region80: #{unet_up_conv_block.4} parent=27 // pred_fallthru
        _
      // Predicated region
      $region81: #{unet_up_conv_block.4} parent=27 // pred_check
        %p938 = pneg %p500
      $region82: #{unet_up_conv_block.4} parent=27 // pred_check_branch
        %940 = sbr.rel (%p938) target = $region84
      $region83: #{unet_up_conv_block.4} parent=27 // pred_region
        %s941 = smul.u32 %s35, 7
        %s942 = sadd.s32 %s941, 6
        %p943 = scmp.lt.s32.totalorder %s34, 1
        %s944 = scalar_select %p943, %s34, 1
        %p945 = scmp.lt.s32.totalorder %s942, 19
        %s946 = scalar_select %p945, %s942, 19
        %s947 = smul.addr %s946, 3
        %s948 = smul.addr %s944, 60
        %s949 = sadd.s32 %s947, %s948
        %s950 = smul.addr %s949, 8
        %s951 = scalar_lea.vmem %s14, %s950
        %s952 = smul.u32 %s35, 7
        %s953 = sadd.s32 %s952, 6
      $region84: #{unet_up_conv_block.4} parent=27 // pred_fallthru
        _
      // Predicated region
      $region85: #{unet_up_conv_block.4} parent=27 // pred_check
        %p954 = pneg %p532
      $region86: #{unet_up_conv_block.4} parent=27 // pred_check_branch
        %956 = sbr.rel (%p954) target = $region88
      $region87: #{unet_up_conv_block.4} parent=27 // pred_region
        %s957 = smul.u32 %s35, 7
        %s958 = sadd.s32 %s957, 7
        %p959 = scmp.lt.s32.totalorder %s34, 1
        %s960 = scalar_select %p959, %s34, 1
        %p961 = scmp.lt.s32.totalorder %s958, 19
        %s962 = scalar_select %p961, %s958, 19
        %s963 = smul.addr %s962, 3
        %s964 = smul.addr %s960, 60
        %s965 = sadd.s32 %s963, %s964
        %s966 = smul.addr %s965, 8
        %s967 = scalar_lea.vmem %s15, %s966
        %s968 = smul.u32 %s35, 7
        %s969 = sadd.s32 %s968, 7
      $region88: #{unet_up_conv_block.4} parent=27 // pred_fallthru
        _
      // Predicated region
      $region89: #{unet_up_conv_block.4} parent=27 // pred_check
        %p970 = pneg %p564
      $region90: #{unet_up_conv_block.4} parent=27 // pred_check_branch
        %972 = sbr.rel (%p970) target = $region92
      $region91: #{unet_up_conv_block.4} parent=27 // pred_region
        %s973 = smul.u32 %s35, 7
        %s974 = sadd.s32 %s973, 8
        %p975 = scmp.lt.s32.totalorder %s34, 1
        %s976 = scalar_select %p975, %s34, 1
        %p977 = scmp.lt.s32.totalorder %s974, 19
        %s978 = scalar_select %p977, %s974, 19
        %s979 = smul.addr %s978, 3
        %s980 = smul.addr %s976, 60
        %s981 = sadd.s32 %s979, %s980
        %s982 = smul.addr %s981, 8
        %s983 = scalar_lea.vmem %s16, %s982
        %s984 = smul.u32 %s35, 7
        %s985 = sadd.s32 %s984, 8
      $region92: #{unet_up_conv_block.4} parent=27 // pred_fallthru
        _
      // Predicated region
      $region93: #{unet_up_conv_block.4} parent=27 // pred_check
        %p986 = pneg %p596
      $region94: #{unet_up_conv_block.4} parent=27 // pred_check_branch
        %988 = sbr.rel (%p986) target = $region96
      $region95: #{unet_up_conv_block.4} parent=27 // pred_region
        %s989 = smul.u32 %s35, 7
        %s990 = sadd.s32 %s989, 9
        %p991 = scmp.lt.s32.totalorder %s34, 1
        %s992 = scalar_select %p991, %s34, 1
        %p993 = scmp.lt.s32.totalorder %s990, 19
        %s994 = scalar_select %p993, %s990, 19
        %s995 = smul.addr %s994, 3
        %s996 = smul.addr %s992, 60
        %s997 = sadd.s32 %s995, %s996
        %s998 = smul.addr %s997, 8
        %s999 = scalar_lea.vmem %s17, %s998
        %s1000 = smul.u32 %s35, 7
        %s1001 = sadd.s32 %s1000, 9
      $region96: #{unet_up_conv_block.4} parent=27 // pred_fallthru
        _
      // Predicated region
      $region97: #{unet_up_conv_block.4} parent=27 // pred_check
        %p1002 = pneg %p628
      $region98: #{unet_up_conv_block.4} parent=27 // pred_check_branch
        %1004 = sbr.rel (%p1002) target = $region100
      $region99: #{unet_up_conv_block.4} parent=27 // pred_region
        %s1005 = smul.u32 %s35, 7
        %s1006 = sadd.s32 %s1005, 10
        %p1007 = scmp.lt.s32.totalorder %s34, 1
        %s1008 = scalar_select %p1007, %s34, 1
        %p1009 = scmp.lt.s32.totalorder %s1006, 19
        %s1010 = scalar_select %p1009, %s1006, 19
        %s1011 = smul.addr %s1010, 3
        %s1012 = smul.addr %s1008, 60
        %s1013 = sadd.s32 %s1011, %s1012
        %s1014 = smul.addr %s1013, 8
        %s1015 = scalar_lea.vmem %s18, %s1014
        %s1016 = smul.u32 %s35, 7
        %s1017 = sadd.s32 %s1016, 10
      $region100: #{unet_up_conv_block.4} parent=27 // pred_fallthru
        _
    $region28: #{unet_up_conv_block.4} parent=5 // pred_fallthru
      _
    %p1018 = scmp.le.s32.totalorder 1, %s27
    %p1019 = scmp.lt.s32.totalorder %s27, 5
    %p1020 = pnand %p1018, %p1019
    %p1021 = pneg %p1020
    // Predicated region
    $region101: #{unet_up_conv_block.4} parent=5 // pred_check
      _
    $region102: #{unet_up_conv_block.4} parent=5 // pred_check_branch
      %1023 = sbr.rel (%p1020) target = $region104
    $region103: #{unet_up_conv_block.4} parent=5 // pred_region
      %s1024 = ssub.s32 %s27, 1
      %s1025 = smul.u32 %s37, 7
      %p1026 = scmp.lt.s32.totalorder %s36, 1
      %s1027 = scalar_select %p1026, %s36, 1
      %p1028 = scmp.lt.s32.totalorder %s1025, 15
      %s1029 = scalar_select %p1028, %s1025, 15
      %s1030 = smul.addr %s1029, 2
      %s1031 = smul.addr %s1027, 32
      %s1032 = sadd.s32 %s1030, %s1031
      %s1033 = smul.addr %s1032, 4
      %s1034 = scalar_lea.vmem %s0, %s1033
      %p1035 = pneg %p69
      %p1036 = pneg %p66
      %s1037 = smul.u32 %s37, 7
      %s1038 = sadd.s32 %s1037, 1
      %p1039 = scmp.lt.s32.totalorder %s36, 1
      %s1040 = scalar_select %p1039, %s36, 1
      %p1041 = scmp.lt.s32.totalorder %s1038, 15
      %s1042 = scalar_select %p1041, %s1038, 15
      %s1043 = smul.addr %s1042, 2
      %s1044 = smul.addr %s1040, 32
      %s1045 = sadd.s32 %s1043, %s1044
      %s1046 = smul.addr %s1045, 4
      %s1047 = scalar_lea.vmem %s1, %s1046
      %p1048 = pneg %p101
      %p1049 = pneg %p98
      %s1050 = smul.u32 %s37, 7
      %s1051 = sadd.s32 %s1050, 2
      %p1052 = scmp.lt.s32.totalorder %s36, 1
      %s1053 = scalar_select %p1052, %s36, 1
      %p1054 = scmp.lt.s32.totalorder %s1051, 15
      %s1055 = scalar_select %p1054, %s1051, 15
      %s1056 = smul.addr %s1055, 2
      %s1057 = smul.addr %s1053, 32
      %s1058 = sadd.s32 %s1056, %s1057
      %s1059 = smul.addr %s1058, 4
      %s1060 = scalar_lea.vmem %s2, %s1059
      %p1061 = pneg %p133
      %p1062 = pneg %p130
      %s1063 = smul.u32 %s37, 7
      %s1064 = sadd.s32 %s1063, 3
      %p1065 = scmp.lt.s32.totalorder %s36, 1
      %s1066 = scalar_select %p1065, %s36, 1
      %p1067 = scmp.lt.s32.totalorder %s1064, 15
      %s1068 = scalar_select %p1067, %s1064, 15
      %s1069 = smul.addr %s1068, 2
      %s1070 = smul.addr %s1066, 32
      %s1071 = sadd.s32 %s1069, %s1070
      %s1072 = smul.addr %s1071, 4
      %s1073 = scalar_lea.vmem %s3, %s1072
      %p1074 = pneg %p165
      %p1075 = pneg %p162
      %s1076 = smul.u32 %s37, 7
      %s1077 = sadd.s32 %s1076, 4
      %p1078 = scmp.lt.s32.totalorder %s36, 1
      %s1079 = scalar_select %p1078, %s36, 1
      %p1080 = scmp.lt.s32.totalorder %s1077, 15
      %s1081 = scalar_select %p1080, %s1077, 15
      %s1082 = smul.addr %s1081, 2
      %s1083 = smul.addr %s1079, 32
      %s1084 = sadd.s32 %s1082, %s1083
      %s1085 = smul.addr %s1084, 4
      %s1086 = scalar_lea.vmem %s4, %s1085
      %p1087 = pneg %p197
      %p1088 = pneg %p194
      %s1089 = smul.u32 %s37, 7
      %s1090 = sadd.s32 %s1089, 5
      %p1091 = scmp.lt.s32.totalorder %s36, 1
      %s1092 = scalar_select %p1091, %s36, 1
      %p1093 = scmp.lt.s32.totalorder %s1090, 15
      %s1094 = scalar_select %p1093, %s1090, 15
      %s1095 = smul.addr %s1094, 2
      %s1096 = smul.addr %s1092, 32
      %s1097 = sadd.s32 %s1095, %s1096
      %s1098 = smul.addr %s1097, 4
      %s1099 = scalar_lea.vmem %s5, %s1098
      %p1100 = pneg %p229
      %p1101 = pneg %p226
      %s1102 = smul.u32 %s37, 7
      %s1103 = sadd.s32 %s1102, 6
      %p1104 = scmp.lt.s32.totalorder %s36, 1
      %s1105 = scalar_select %p1104, %s36, 1
      %p1106 = scmp.lt.s32.totalorder %s1103, 15
      %s1107 = scalar_select %p1106, %s1103, 15
      %s1108 = smul.addr %s1107, 2
      %s1109 = smul.addr %s1105, 32
      %s1110 = sadd.s32 %s1108, %s1109
      %s1111 = smul.addr %s1110, 4
      %s1112 = scalar_lea.vmem %s6, %s1111
      %p1113 = pneg %p261
      %p1114 = pneg %p258
      %s1115 = smul.u32 %s37, 7
      %s1116 = sadd.s32 %s1115, 7
      %p1117 = scmp.lt.s32.totalorder %s36, 1
      %s1118 = scalar_select %p1117, %s36, 1
      %p1119 = scmp.lt.s32.totalorder %s1116, 15
      %s1120 = scalar_select %p1119, %s1116, 15
      %s1121 = smul.addr %s1120, 2
      %s1122 = smul.addr %s1118, 32
      %s1123 = sadd.s32 %s1121, %s1122
      %s1124 = smul.addr %s1123, 4
      %s1125 = scalar_lea.vmem %s7, %s1124
      %p1126 = pneg %p293
      %p1127 = pneg %p290
      %s1128 = smul.u32 %s37, 7
      %s1129 = sadd.s32 %s1128, 8
      %p1130 = scmp.lt.s32.totalorder %s36, 1
      %s1131 = scalar_select %p1130, %s36, 1
      %p1132 = scmp.lt.s32.totalorder %s1129, 15
      %s1133 = scalar_select %p1132, %s1129, 15
      %s1134 = smul.addr %s1133, 2
      %s1135 = smul.addr %s1131, 32
      %s1136 = sadd.s32 %s1134, %s1135
      %s1137 = smul.addr %s1136, 4
      %s1138 = scalar_lea.vmem %s8, %s1137
      %p1139 = pneg %p325
      %p1140 = pneg %p322
      %p1141 = pneg %p346
      %p1142 = pneg %p343
      %s1143 = smul.u32 %s37, 7
      %s1144 = sadd.s32 %s1143, 2
      %p1145 = scmp.lt.s32.totalorder %s36, 1
      %s1146 = scalar_select %p1145, %s36, 1
      %p1147 = scmp.lt.s32.totalorder %s1144, 19
      %s1148 = scalar_select %p1147, %s1144, 19
      %s1149 = smul.addr %s1148, 3
      %s1150 = smul.addr %s1146, 60
      %s1151 = sadd.s32 %s1149, %s1150
      %s1152 = smul.addr %s1151, 8
      %s1153 = scalar_lea.vmem %s10, %s1152
      %p1154 = pneg %p378
      %p1155 = pneg %p375
      %s1156 = smul.u32 %s37, 7
      %s1157 = sadd.s32 %s1156, 3
      %p1158 = scmp.lt.s32.totalorder %s36, 1
      %s1159 = scalar_select %p1158, %s36, 1
      %p1160 = scmp.lt.s32.totalorder %s1157, 19
      %s1161 = scalar_select %p1160, %s1157, 19
      %s1162 = smul.addr %s1161, 3
      %s1163 = smul.addr %s1159, 60
      %s1164 = sadd.s32 %s1162, %s1163
      %s1165 = smul.addr %s1164, 8
      %s1166 = scalar_lea.vmem %s11, %s1165
      %p1167 = pneg %p410
      %p1168 = pneg %p407
      %s1169 = smul.u32 %s37, 7
      %s1170 = sadd.s32 %s1169, 4
      %p1171 = scmp.lt.s32.totalorder %s36, 1
      %s1172 = scalar_select %p1171, %s36, 1
      %p1173 = scmp.lt.s32.totalorder %s1170, 19
      %s1174 = scalar_select %p1173, %s1170, 19
      %s1175 = smul.addr %s1174, 3
      %s1176 = smul.addr %s1172, 60
      %s1177 = sadd.s32 %s1175, %s1176
      %s1178 = smul.addr %s1177, 8
      %s1179 = scalar_lea.vmem %s12, %s1178
      %p1180 = pneg %p442
      %p1181 = pneg %p439
      %s1182 = smul.u32 %s37, 7
      %s1183 = sadd.s32 %s1182, 5
      %p1184 = scmp.lt.s32.totalorder %s36, 1
      %s1185 = scalar_select %p1184, %s36, 1
      %p1186 = scmp.lt.s32.totalorder %s1183, 19
      %s1187 = scalar_select %p1186, %s1183, 19
      %s1188 = smul.addr %s1187, 3
      %s1189 = smul.addr %s1185, 60
      %s1190 = sadd.s32 %s1188, %s1189
      %s1191 = smul.addr %s1190, 8
      %s1192 = scalar_lea.vmem %s13, %s1191
      %p1193 = pneg %p474
      %p1194 = pneg %p471
      %s1195 = smul.u32 %s37, 7
      %s1196 = sadd.s32 %s1195, 6
      %p1197 = scmp.lt.s32.totalorder %s36, 1
      %s1198 = scalar_select %p1197, %s36, 1
      %p1199 = scmp.lt.s32.totalorder %s1196, 19
      %s1200 = scalar_select %p1199, %s1196, 19
      %s1201 = smul.addr %s1200, 3
      %s1202 = smul.addr %s1198, 60
      %s1203 = sadd.s32 %s1201, %s1202
      %s1204 = smul.addr %s1203, 8
      %s1205 = scalar_lea.vmem %s14, %s1204
      %p1206 = pneg %p506
      %p1207 = pneg %p503
      %s1208 = smul.u32 %s37, 7
      %s1209 = sadd.s32 %s1208, 7
      %p1210 = scmp.lt.s32.totalorder %s36, 1
      %s1211 = scalar_select %p1210, %s36, 1
      %p1212 = scmp.lt.s32.totalorder %s1209, 19
      %s1213 = scalar_select %p1212, %s1209, 19
      %s1214 = smul.addr %s1213, 3
      %s1215 = smul.addr %s1211, 60
      %s1216 = sadd.s32 %s1214, %s1215
      %s1217 = smul.addr %s1216, 8
      %s1218 = scalar_lea.vmem %s15, %s1217
      %p1219 = pneg %p538
      %p1220 = pneg %p535
      %s1221 = smul.u32 %s37, 7
      %s1222 = sadd.s32 %s1221, 8
      %p1223 = scmp.lt.s32.totalorder %s36, 1
      %s1224 = scalar_select %p1223, %s36, 1
      %p1225 = scmp.lt.s32.totalorder %s1222, 19
      %s1226 = scalar_select %p1225, %s1222, 19
      %s1227 = smul.addr %s1226, 3
      %s1228 = smul.addr %s1224, 60
      %s1229 = sadd.s32 %s1227, %s1228
      %s1230 = smul.addr %s1229, 8
      %s1231 = scalar_lea.vmem %s16, %s1230
      %p1232 = pneg %p570
      %p1233 = pneg %p567
      %s1234 = smul.u32 %s37, 7
      %s1235 = sadd.s32 %s1234, 9
      %p1236 = scmp.lt.s32.totalorder %s36, 1
      %s1237 = scalar_select %p1236, %s36, 1
      %p1238 = scmp.lt.s32.totalorder %s1235, 19
      %s1239 = scalar_select %p1238, %s1235, 19
      %s1240 = smul.addr %s1239, 3
      %s1241 = smul.addr %s1237, 60
      %s1242 = sadd.s32 %s1240, %s1241
      %s1243 = smul.addr %s1242, 8
      %s1244 = scalar_lea.vmem %s17, %s1243
      %p1245 = pneg %p602
      %p1246 = pneg %p599
      %s1247 = smul.u32 %s37, 7
      %s1248 = sadd.s32 %s1247, 10
      %p1249 = scmp.lt.s32.totalorder %s36, 1
      %s1250 = scalar_select %p1249, %s36, 1
      %p1251 = scmp.lt.s32.totalorder %s1248, 19
      %s1252 = scalar_select %p1251, %s1248, 19
      %s1253 = smul.addr %s1252, 3
      %s1254 = smul.addr %s1250, 60
      %s1255 = sadd.s32 %s1253, %s1254
      %s1256 = smul.addr %s1255, 8
      %s1257 = scalar_lea.vmem %s18, %s1256
      %p1258 = pneg %p634
      %p1259 = pneg %p631
      %p1260 = pneg %p655
      %p1261 = pneg %p652
      %p1262 = pneg %p676
      %p1263 = pneg %p673
      %p1264 = pneg %p704
      %p1265 = pneg %p701
      %s1266 = smul.u32 7, %s37
      %p1267 = scmp.lt.s32.totalorder %s36, 1
      %s1268 = scalar_select %p1267, %s36, 1
      %p1269 = scmp.lt.s32.totalorder %s1266, 13
      %s1270 = scalar_select %p1269, %s1266, 13
      %s1271 = smul.addr %s1270, 2
      %s1272 = smul.addr %s1268, 28
      %s1273 = sadd.s32 %s1271, %s1272
      %s1274 = smul.addr %s1273, 4
      %s1275 = scalar_lea.vmem %s21, %s1274
      %s1276 = smul.u32 %s37, 7
      %p1277 = scmp.lt.s32.totalorder %s36, 1
      %s1278 = scalar_select %p1277, %s36, 1
      %p1279 = scmp.lt.s32.totalorder %s1276, 15
      %s1280 = scalar_select %p1279, %s1276, 15
      %s1281 = smul.addr %s1280, 2
      %s1282 = smul.addr %s1278, 32
      %s1283 = sadd.s32 %s1281, %s1282
      %s1284 = smul.addr %s1283, 4
      %s1285 = scalar_lea.vmem %s0, %s1284
      %s1286 = smul.u32 %s37, 7
      %s1287 = smul.u32 %s37, 7
      %s1288 = sadd.s32 %s1287, 1
      %p1289 = scmp.lt.s32.totalorder %s36, 1
      %s1290 = scalar_select %p1289, %s36, 1
      %p1291 = scmp.lt.s32.totalorder %s1288, 15
      %s1292 = scalar_select %p1291, %s1288, 15
      %s1293 = smul.addr %s1292, 2
      %s1294 = smul.addr %s1290, 32
      %s1295 = sadd.s32 %s1293, %s1294
      %s1296 = smul.addr %s1295, 4
      %s1297 = scalar_lea.vmem %s1, %s1296
      %s1298 = smul.u32 %s37, 7
      %s1299 = sadd.s32 %s1298, 1
      %s1300 = smul.u32 %s37, 7
      %s1301 = sadd.s32 %s1300, 2
      %p1302 = scmp.lt.s32.totalorder %s36, 1
      %s1303 = scalar_select %p1302, %s36, 1
      %p1304 = scmp.lt.s32.totalorder %s1301, 15
      %s1305 = scalar_select %p1304, %s1301, 15
      %s1306 = smul.addr %s1305, 2
      %s1307 = smul.addr %s1303, 32
      %s1308 = sadd.s32 %s1306, %s1307
      %s1309 = smul.addr %s1308, 4
      %s1310 = scalar_lea.vmem %s2, %s1309
      %s1311 = smul.u32 %s37, 7
      %s1312 = sadd.s32 %s1311, 2
      %s1313 = smul.u32 %s37, 7
      %s1314 = sadd.s32 %s1313, 3
      %p1315 = scmp.lt.s32.totalorder %s36, 1
      %s1316 = scalar_select %p1315, %s36, 1
      %p1317 = scmp.lt.s32.totalorder %s1314, 15
      %s1318 = scalar_select %p1317, %s1314, 15
      %s1319 = smul.addr %s1318, 2
      %s1320 = smul.addr %s1316, 32
      %s1321 = sadd.s32 %s1319, %s1320
      %s1322 = smul.addr %s1321, 4
      %s1323 = scalar_lea.vmem %s3, %s1322
      %s1324 = smul.u32 %s37, 7
      %s1325 = sadd.s32 %s1324, 3
      %s1326 = smul.u32 %s37, 7
      %s1327 = sadd.s32 %s1326, 4
      %p1328 = scmp.lt.s32.totalorder %s36, 1
      %s1329 = scalar_select %p1328, %s36, 1
      %p1330 = scmp.lt.s32.totalorder %s1327, 15
      %s1331 = scalar_select %p1330, %s1327, 15
      %s1332 = smul.addr %s1331, 2
      %s1333 = smul.addr %s1329, 32
      %s1334 = sadd.s32 %s1332, %s1333
      %s1335 = smul.addr %s1334, 4
      %s1336 = scalar_lea.vmem %s4, %s1335
      %s1337 = smul.u32 %s37, 7
      %s1338 = sadd.s32 %s1337, 4
      %s1339 = smul.u32 %s37, 7
      %s1340 = sadd.s32 %s1339, 5
      %p1341 = scmp.lt.s32.totalorder %s36, 1
      %s1342 = scalar_select %p1341, %s36, 1
      %p1343 = scmp.lt.s32.totalorder %s1340, 15
      %s1344 = scalar_select %p1343, %s1340, 15
      %s1345 = smul.addr %s1344, 2
      %s1346 = smul.addr %s1342, 32
      %s1347 = sadd.s32 %s1345, %s1346
      %s1348 = smul.addr %s1347, 4
      %s1349 = scalar_lea.vmem %s5, %s1348
      %s1350 = smul.u32 %s37, 7
      %s1351 = sadd.s32 %s1350, 5
      %s1352 = smul.u32 %s37, 7
      %s1353 = sadd.s32 %s1352, 6
      %p1354 = scmp.lt.s32.totalorder %s36, 1
      %s1355 = scalar_select %p1354, %s36, 1
      %p1356 = scmp.lt.s32.totalorder %s1353, 15
      %s1357 = scalar_select %p1356, %s1353, 15
      %s1358 = smul.addr %s1357, 2
      %s1359 = smul.addr %s1355, 32
      %s1360 = sadd.s32 %s1358, %s1359
      %s1361 = smul.addr %s1360, 4
      %s1362 = scalar_lea.vmem %s6, %s1361
      %s1363 = smul.u32 %s37, 7
      %s1364 = sadd.s32 %s1363, 6
      %s1365 = smul.u32 %s37, 7
      %s1366 = sadd.s32 %s1365, 7
      %p1367 = scmp.lt.s32.totalorder %s36, 1
      %s1368 = scalar_select %p1367, %s36, 1
      %p1369 = scmp.lt.s32.totalorder %s1366, 15
      %s1370 = scalar_select %p1369, %s1366, 15
      %s1371 = smul.addr %s1370, 2
      %s1372 = smul.addr %s1368, 32
      %s1373 = sadd.s32 %s1371, %s1372
      %s1374 = smul.addr %s1373, 4
      %s1375 = scalar_lea.vmem %s7, %s1374
      %s1376 = smul.u32 %s37, 7
      %s1377 = sadd.s32 %s1376, 7
      %s1378 = smul.u32 %s37, 7
      %s1379 = sadd.s32 %s1378, 8
      %p1380 = scmp.lt.s32.totalorder %s36, 1
      %s1381 = scalar_select %p1380, %s36, 1
      %p1382 = scmp.lt.s32.totalorder %s1379, 15
      %s1383 = scalar_select %p1382, %s1379, 15
      %s1384 = smul.addr %s1383, 2
      %s1385 = smul.addr %s1381, 32
      %s1386 = sadd.s32 %s1384, %s1385
      %s1387 = smul.addr %s1386, 4
      %s1388 = scalar_lea.vmem %s8, %s1387
      %s1389 = smul.u32 %s37, 7
      %s1390 = sadd.s32 %s1389, 8
      %s1391 = smul.u32 %s37, 7
      %s1392 = sadd.s32 %s1391, 2
      %p1393 = scmp.lt.s32.totalorder %s36, 1
      %s1394 = scalar_select %p1393, %s36, 1
      %p1395 = scmp.lt.s32.totalorder %s1392, 19
      %s1396 = scalar_select %p1395, %s1392, 19
      %s1397 = smul.addr %s1396, 3
      %s1398 = smul.addr %s1394, 60
      %s1399 = sadd.s32 %s1397, %s1398
      %s1400 = smul.addr %s1399, 8
      %s1401 = scalar_lea.vmem %s10, %s1400
      %s1402 = smul.u32 %s37, 7
      %s1403 = sadd.s32 %s1402, 2
      %s1404 = smul.u32 %s37, 7
      %s1405 = sadd.s32 %s1404, 3
      %p1406 = scmp.lt.s32.totalorder %s36, 1
      %s1407 = scalar_select %p1406, %s36, 1
      %p1408 = scmp.lt.s32.totalorder %s1405, 19
      %s1409 = scalar_select %p1408, %s1405, 19
      %s1410 = smul.addr %s1409, 3
      %s1411 = smul.addr %s1407, 60
      %s1412 = sadd.s32 %s1410, %s1411
      %s1413 = smul.addr %s1412, 8
      %s1414 = scalar_lea.vmem %s11, %s1413
      %s1415 = smul.u32 %s37, 7
      %s1416 = sadd.s32 %s1415, 3
      %s1417 = smul.u32 %s37, 7
      %s1418 = sadd.s32 %s1417, 4
      %p1419 = scmp.lt.s32.totalorder %s36, 1
      %s1420 = scalar_select %p1419, %s36, 1
      %p1421 = scmp.lt.s32.totalorder %s1418, 19
      %s1422 = scalar_select %p1421, %s1418, 19
      %s1423 = smul.addr %s1422, 3
      %s1424 = smul.addr %s1420, 60
      %s1425 = sadd.s32 %s1423, %s1424
      %s1426 = smul.addr %s1425, 8
      %s1427 = scalar_lea.vmem %s12, %s1426
      %s1428 = smul.u32 %s37, 7
      %s1429 = sadd.s32 %s1428, 4
      %s1430 = smul.u32 %s37, 7
      %s1431 = sadd.s32 %s1430, 5
      %p1432 = scmp.lt.s32.totalorder %s36, 1
      %s1433 = scalar_select %p1432, %s36, 1
      %p1434 = scmp.lt.s32.totalorder %s1431, 19
      %s1435 = scalar_select %p1434, %s1431, 19
      %s1436 = smul.addr %s1435, 3
      %s1437 = smul.addr %s1433, 60
      %s1438 = sadd.s32 %s1436, %s1437
      %s1439 = smul.addr %s1438, 8
      %s1440 = scalar_lea.vmem %s13, %s1439
      %s1441 = smul.u32 %s37, 7
      %s1442 = sadd.s32 %s1441, 5
      %s1443 = smul.u32 %s37, 7
      %s1444 = sadd.s32 %s1443, 6
      %p1445 = scmp.lt.s32.totalorder %s36, 1
      %s1446 = scalar_select %p1445, %s36, 1
      %p1447 = scmp.lt.s32.totalorder %s1444, 19
      %s1448 = scalar_select %p1447, %s1444, 19
      %s1449 = smul.addr %s1448, 3
      %s1450 = smul.addr %s1446, 60
      %s1451 = sadd.s32 %s1449, %s1450
      %s1452 = smul.addr %s1451, 8
      %s1453 = scalar_lea.vmem %s14, %s1452
      %s1454 = smul.u32 %s37, 7
      %s1455 = sadd.s32 %s1454, 6
      %s1456 = smul.u32 %s37, 7
      %s1457 = sadd.s32 %s1456, 7
      %p1458 = scmp.lt.s32.totalorder %s36, 1
      %s1459 = scalar_select %p1458, %s36, 1
      %p1460 = scmp.lt.s32.totalorder %s1457, 19
      %s1461 = scalar_select %p1460, %s1457, 19
      %s1462 = smul.addr %s1461, 3
      %s1463 = smul.addr %s1459, 60
      %s1464 = sadd.s32 %s1462, %s1463
      %s1465 = smul.addr %s1464, 8
      %s1466 = scalar_lea.vmem %s15, %s1465
      %s1467 = smul.u32 %s37, 7
      %s1468 = sadd.s32 %s1467, 7
      %s1469 = smul.u32 %s37, 7
      %s1470 = sadd.s32 %s1469, 8
      %p1471 = scmp.lt.s32.totalorder %s36, 1
      %s1472 = scalar_select %p1471, %s36, 1
      %p1473 = scmp.lt.s32.totalorder %s1470, 19
      %s1474 = scalar_select %p1473, %s1470, 19
      %s1475 = smul.addr %s1474, 3
      %s1476 = smul.addr %s1472, 60
      %s1477 = sadd.s32 %s1475, %s1476
      %s1478 = smul.addr %s1477, 8
      %s1479 = scalar_lea.vmem %s16, %s1478
      %s1480 = smul.u32 %s37, 7
      %s1481 = sadd.s32 %s1480, 8
      %s1482 = smul.u32 %s37, 7
      %s1483 = sadd.s32 %s1482, 9
      %p1484 = scmp.lt.s32.totalorder %s36, 1
      %s1485 = scalar_select %p1484, %s36, 1
      %p1486 = scmp.lt.s32.totalorder %s1483, 19
      %s1487 = scalar_select %p1486, %s1483, 19
      %s1488 = smul.addr %s1487, 3
      %s1489 = smul.addr %s1485, 60
      %s1490 = sadd.s32 %s1488, %s1489
      %s1491 = smul.addr %s1490, 8
      %s1492 = scalar_lea.vmem %s17, %s1491
      %s1493 = smul.u32 %s37, 7
      %s1494 = sadd.s32 %s1493, 9
      %s1495 = smul.u32 %s37, 7
      %s1496 = sadd.s32 %s1495, 10
      %p1497 = scmp.lt.s32.totalorder %s36, 1
      %s1498 = scalar_select %p1497, %s36, 1
      %p1499 = scmp.lt.s32.totalorder %s1496, 19
      %s1500 = scalar_select %p1499, %s1496, 19
      %s1501 = smul.addr %s1500, 3
      %s1502 = smul.addr %s1498, 60
      %s1503 = sadd.s32 %s1501, %s1502
      %s1504 = smul.addr %s1503, 8
      %s1505 = scalar_lea.vmem %s18, %s1504
      %s1506 = smul.u32 %s37, 7
      %s1507 = sadd.s32 %s1506, 10
      %s1508 = smul.u32 7, %s37
      %p1509 = scmp.lt.s32.totalorder %s36, 1
      %s1510 = scalar_select %p1509, %s36, 1
      %p1511 = scmp.lt.s32.totalorder %s1508, 13
      %s1512 = scalar_select %p1511, %s1508, 13
      %s1513 = smul.addr %s1512, 2
      %s1514 = smul.addr %s1510, 28
      %s1515 = sadd.s32 %s1513, %s1514
      %s1516 = smul.addr %s1515, 4
      %s1517 = scalar_lea.vmem %s21, %s1516
      %s1518 = smul.u32 7, %s37
      %v1520 = vld [vmem:[%s20] sm:$0x1]
      %v1522 = vlaneseq
      %v1523 = vshrl.u32 %v1522, 7
      %v1524 = vsub.s32 0, %v1523
      %v1525 = vrot.slane %v1520, %v1524
      %v1527 = vadd.f32 %v1525, 0.0
      %v1528 = vld [vmem:[%s1285] sm:$0xf]
      %v1529 = vld [vmem:[%s1285 + $0x4] sm:$0xf]
      %v1530 = vld [vmem:[%s1297] sm:$0xf]
      %v1531 = vld [vmem:[%s1297 + $0x4] sm:$0xf]
      %v1532 = vld [vmem:[%s1310] sm:$0xf]
      %v1533 = vld [vmem:[%s1310 + $0x4] sm:$0xf]
      %v1534 = vld [vmem:[%s1323] sm:$0xf]
      %v1535 = vld [vmem:[%s1323 + $0x4] sm:$0xf]
      %v1536 = vld [vmem:[%s1336] sm:$0xf]
      %v1537 = vld [vmem:[%s1336 + $0x4] sm:$0xf]
      %v1538 = vld [vmem:[%s1349] sm:$0xf]
      %v1539 = vld [vmem:[%s1349 + $0x4] sm:$0xf]
      %v1540 = vld [vmem:[%s1362] sm:$0xf]
      %v1541 = vld [vmem:[%s1362 + $0x4] sm:$0xf]
      %v1542 = vld [vmem:[%s1375] sm:$0xf]
      %v1543 = vld [vmem:[%s1375 + $0x4] sm:$0xf]
      %v1544 = vld [vmem:[%s1388] sm:$0xf]
      %v1545 = vld [vmem:[%s1388 + $0x4] sm:$0xf]
      %v1548 = vunpack.c.l.b16 %v1528
      %v1549 = vunpack.c.l.b16 %v1529
      %v1550 = vpack.c.b16 %v1549, %v1548
      %v1553 = vunpack.c.l.b16 %v1530
      %v1554 = vunpack.c.l.b16 %v1531
      %v1555 = vpack.c.b16 %v1554, %v1553
      %v1556 = vrot.slane %v1555, 1
      %v1559 = vunpack.c.l.b16 %v1532
      %v1560 = vunpack.c.l.b16 %v1533
      %v1561 = vpack.c.b16 %v1560, %v1559
      %v1562 = vrot.slane %v1561, 2
      %v1565 = vunpack.c.l.b16 %v1534
      %v1566 = vunpack.c.l.b16 %v1535
      %v1567 = vpack.c.b16 %v1566, %v1565
      %v1568 = vrot.slane %v1567, 3
      %v1571 = vunpack.c.l.b16 %v1536
      %v1572 = vunpack.c.l.b16 %v1537
      %v1573 = vpack.c.b16 %v1571, %v1571
      %v1574 = vpack.c.b16 %v1572, %v1572
      %v1577 = vunpack.c.l.b16 %v1538
      %v1578 = vunpack.c.l.b16 %v1539
      %v1579 = vpack.c.b16 %v1578, %v1577
      %v1580 = vrot.slane %v1579, 5
      %v1583 = vunpack.c.l.b16 %v1540
      %v1584 = vunpack.c.l.b16 %v1541
      %v1585 = vpack.c.b16 %v1584, %v1583
      %v1586 = vrot.slane %v1585, 6
      %vm1587 = vcmask 1046528
      %v1590 = vsel %vm1587, %v1550, %v1556
      %vm1591 = vcmask 1045504
      %v1593 = vsel %vm1591, %v1556, %v1562
      %vm1594 = vcmask 1044480
      %v1596 = vsel %vm1594, %v1562, %v1568
      %vm1597 = vcmask 1043456
      %v1599 = vsel %vm1597, %v1568, %v1573
      %vm1600 = vcmask 1042432
      %v1603 = vsel %vm1600, %v1574, %v1580
      %vm1604 = vcmask 1041408
      %v1606 = vsel %vm1604, %v1580, %v1586
      %v1607 = vld [vmem:[%s9] sm:$0x3]
      %vm1608 = vcmask 31744
      %v1609 = vsel %vm1608, %v1590, 0
      %v1611 = vsel %vm1608, %v1593, 0
      %v1613 = vsel %vm1608, %v1596, 0
      %v1615 = vsel %vm1608, %v1599, 0
      %v1617 = vsel %vm1608, %v1603, 0
      %v1619 = vsel %vm1608, %v1606, 0
      %v1621 = vsel %vm1608, %v1586, 0
      %v1624 = vsel %vm1604, %v1607, 0
      %1626 = vmatprep.subr.bf16.mxu0 0
      %1627 = vmatpush1.bf16.msra.mxu0 0
      %1628 = vmatprep.subr.bf16.mxu0 0
      %1629 = vmatpush1.bf16.msra.mxu0 0
      %1630 = vmatprep.subr.bf16.mxu0 0
      %1631 = vmatpush1.bf16.msra.mxu0 0
      %1632 = vmatprep.subr.bf16.mxu0 0
      %1633 = vmatpush1.bf16.msra.mxu0 0
      %1634 = vmatprep.subr.bf16.mxu0 0
      %1635 = vmatpush1.bf16.msra.mxu0 0
      %1636 = vmatprep.subr.bf16.mxu0 0
      %1637 = vmatpush1.bf16.msra.mxu0 0
      %1638 = vmatprep.subr.bf16.mxu0 0
      %1639 = vmatpush1.bf16.msra.mxu0 0
      %1640 = vmatprep.subr.bf16.mxu0 0
      %1641 = vmatpush1.bf16.msra.mxu0 %v1624
      %1642 = vmatprep.subr.bf16.mxu0 0
      %1643 = vmatpush2.bf16.msra.mxu0 0
      %1644 = vmatprep.subr.bf16.mxu0 0
      %1645 = vmatpush2.bf16.msra.mxu0 0
      %1646 = vmatprep.subr.bf16.mxu0 0
      %1647 = vmatpush2.bf16.msra.mxu0 0
      %1648 = vmatprep.subr.bf16.mxu0 0
      %1649 = vmatpush2.bf16.msra.mxu0 0
      %1650 = vmatprep.subr.bf16.mxu0 0
      %1651 = vmatpush2.bf16.msra.mxu0 0
      %1652 = vmatprep.subr.bf16.mxu0 0
      %1653 = vmatpush2.bf16.msra.mxu0 0
      %1654 = vmatprep.subr.bf16.mxu0 0
      %1655 = vmatpush2.bf16.msra.mxu0 0
      %1656 = vmatprep.subr.bf16.mxu0 0
      %1657 = vmatpush2.bf16.msra.mxu0 0
      %1658 = vmatprep.mubr.bf16.mxu0 0
      %1659 = vmatmul.mubr.bf16.gmra.mxu0 %v1609
      %v1660 = vpop.f32.mrf.mxu0
      %v1661 = vadd.f32 0.0, %v1660
      %v1662 = vpop.f32.mrf.mxu0
      %v1663 = vpop.f32.mrf.mxu0
      %v1664 = vadd.f32 0.0, %v1663
      %v1665 = vpop.f32.mrf.mxu0
      %1666 = vmatprep.mubr.bf16.mxu0 0
      %1667 = vmatmul.mubr.bf16.gmra.mxu0 %v1611
      %v1668 = vpop.f32.mrf.mxu0
      %v1669 = vadd.f32 0.0, %v1668
      %v1670 = vpop.f32.mrf.mxu0
      %v1671 = vpop.f32.mrf.mxu0
      %v1672 = vadd.f32 0.0, %v1671
      %v1673 = vpop.f32.mrf.mxu0
      %1674 = vmatprep.mubr.bf16.mxu0 0
      %1675 = vmatmul.mubr.bf16.gmra.mxu0 %v1613
      %v1676 = vpop.f32.mrf.mxu0
      %v1677 = vadd.f32 0.0, %v1676
      %v1678 = vpop.f32.mrf.mxu0
      %v1679 = vpop.f32.mrf.mxu0
      %v1680 = vadd.f32 0.0, %v1679
      %v1681 = vpop.f32.mrf.mxu0
      %1682 = vmatprep.mubr.bf16.mxu0 0
      %1683 = vmatmul.mubr.bf16.gmra.mxu0 %v1615
      %v1684 = vpop.f32.mrf.mxu0
      %v1685 = vadd.f32 0.0, %v1684
      %v1686 = vpop.f32.mrf.mxu0
      %v1687 = vpop.f32.mrf.mxu0
      %v1688 = vadd.f32 0.0, %v1687
      %v1689 = vpop.f32.mrf.mxu0
      %1690 = vmatprep.mubr.bf16.mxu0 0
      %1691 = vmatmul.mubr.bf16.gmra.mxu0 %v1617
      %v1692 = vpop.f32.mrf.mxu0
      %v1693 = vadd.f32 0.0, %v1692
      %v1694 = vpop.f32.mrf.mxu0
      %v1695 = vpop.f32.mrf.mxu0
      %v1696 = vadd.f32 0.0, %v1695
      %v1697 = vpop.f32.mrf.mxu0
      %1698 = vmatprep.mubr.bf16.mxu0 0
      %1699 = vmatmul.mubr.bf16.gmra.mxu0 %v1619
      %v1700 = vpop.f32.mrf.mxu0
      %v1701 = vadd.f32 0.0, %v1700
      %v1702 = vpop.f32.mrf.mxu0
      %v1703 = vpop.f32.mrf.mxu0
      %v1704 = vadd.f32 0.0, %v1703
      %v1705 = vpop.f32.mrf.mxu0
      %1706 = vmatprep.mubr.bf16.mxu0 0
      %1707 = vmatmul.mubr.bf16.gmra.mxu0 %v1621
      %v1708 = vpop.f32.mrf.mxu0
      %v1709 = vadd.f32 0.0, %v1708
      %v1710 = vpop.f32.mrf.mxu0
      %v1711 = vpop.f32.mrf.mxu0
      %v1712 = vpop.f32.mrf.mxu0
      %1713 = vdwg.mxu0
      %v1714 = vadd.f32 %v1527, %v1661
      %v1715 = vadd.f32 %v1527, %v1664
      %v1716 = vadd.f32 %v1527, %v1669
      %v1717 = vadd.f32 %v1527, %v1672
      %v1718 = vadd.f32 %v1527, %v1677
      %v1719 = vadd.f32 %v1527, %v1680
      %v1720 = vadd.f32 %v1527, %v1685
      %v1721 = vadd.f32 %v1527, %v1688
      %v1722 = vadd.f32 %v1527, %v1693
      %v1723 = vadd.f32 %v1527, %v1696
      %v1724 = vadd.f32 %v1527, %v1701
      %v1725 = vadd.f32 %v1527, %v1704
      %v1726 = vadd.f32 %v1527, %v1709
      %v1727 = vshrl.u32 %v1550, 16
      %v1729 = vshll.u32 %v1550, 16
      %v1731 = vrot.slane %v1729, 1
      %v1732 = vor.u32 %v1727, %v1731
      %v1734 = vshrl.u32 %v1555, 16
      %v1736 = vrot.slane %v1734, 1
      %v1737 = vshll.u32 %v1555, 16
      %v1739 = vrot.slane %v1737, 2
      %v1740 = vor.u32 %v1736, %v1739
      %v1742 = vshrl.u32 %v1561, 16
      %v1744 = vrot.slane %v1742, 2
      %v1745 = vshll.u32 %v1561, 16
      %v1747 = vrot.slane %v1745, 3
      %v1748 = vor.u32 %v1744, %v1747
      %v1750 = vshrl.u32 %v1567, 16
      %v1752 = vrot.slane %v1750, 3
      %v1753 = vshll.u32 %v1567, 16
      %v1755 = vrot.slane %v1753, 4
      %v1756 = vor.u32 %v1752, %v1755
      %v1757 = vpack.c.b16 %v1572, %v1571
      %v1759 = vshrl.u32 %v1757, 16
      %v1761 = vrot.slane %v1759, 4
      %v1762 = vshll.u32 %v1757, 16
      %v1764 = vrot.slane %v1762, 5
      %v1765 = vor.u32 %v1761, %v1764
      %v1767 = vshrl.u32 %v1579, 16
      %v1769 = vrot.slane %v1767, 5
      %v1770 = vshll.u32 %v1579, 16
      %v1772 = vrot.slane %v1770, 6
      %v1773 = vor.u32 %v1769, %v1772
      %v1775 = vshrl.u32 %v1585, 16
      %v1777 = vrot.slane %v1775, 6
      %v1778 = vshll.u32 %v1585, 16
      %v1780 = vrot.slane %v1778, 7
      %v1781 = vor.u32 %v1777, %v1780
      %v1784 = vsel %vm1587, %v1732, %v1740
      %v1786 = vsel %vm1591, %v1740, %v1748
      %v1788 = vsel %vm1594, %v1748, %v1756
      %v1790 = vsel %vm1597, %v1756, %v1765
      %v1792 = vsel %vm1600, %v1765, %v1773
      %v1794 = vsel %vm1604, %v1773, %v1781
      %s1795 = scalar_lea.vmem %s9, 2
      %v1796 = vld [vmem:[%s1795] sm:$0x3]
      %v1797 = vsel %vm1608, %v1784, 0
      %v1799 = vsel %vm1608, %v1786, 0
      %v1801 = vsel %vm1608, %v1788, 0
      %v1803 = vsel %vm1608, %v1790, 0
      %v1805 = vsel %vm1608, %v1792, 0
      %v1807 = vsel %vm1608, %v1794, 0
      %v1809 = vsel %vm1608, %v1781, 0
      %v1812 = vsel %vm1604, %v1796, 0
      %1814 = vmatprep.subr.bf16.mxu0 0
      %1815 = vmatpush1.bf16.msra.mxu0 0
      %1816 = vmatprep.subr.bf16.mxu0 0
      %1817 = vmatpush1.bf16.msra.mxu0 0
      %1818 = vmatprep.subr.bf16.mxu0 0
      %1819 = vmatpush1.bf16.msra.mxu0 0
      %1820 = vmatprep.subr.bf16.mxu0 0
      %1821 = vmatpush1.bf16.msra.mxu0 0
      %1822 = vmatprep.subr.bf16.mxu0 0
      %1823 = vmatpush1.bf16.msra.mxu0 0
      %1824 = vmatprep.subr.bf16.mxu0 0
      %1825 = vmatpush1.bf16.msra.mxu0 0
      %1826 = vmatprep.subr.bf16.mxu0 0
      %1827 = vmatpush1.bf16.msra.mxu0 0
      %1828 = vmatprep.subr.bf16.mxu0 0
      %1829 = vmatpush1.bf16.msra.mxu0 %v1812
      %1830 = vmatprep.subr.bf16.mxu0 0
      %1831 = vmatpush2.bf16.msra.mxu0 0
      %1832 = vmatprep.subr.bf16.mxu0 0
      %1833 = vmatpush2.bf16.msra.mxu0 0
      %1834 = vmatprep.subr.bf16.mxu0 0
      %1835 = vmatpush2.bf16.msra.mxu0 0
      %1836 = vmatprep.subr.bf16.mxu0 0
      %1837 = vmatpush2.bf16.msra.mxu0 0
      %1838 = vmatprep.subr.bf16.mxu0 0
      %1839 = vmatpush2.bf16.msra.mxu0 0
      %1840 = vmatprep.subr.bf16.mxu0 0
      %1841 = vmatpush2.bf16.msra.mxu0 0
      %1842 = vmatprep.subr.bf16.mxu0 0
      %1843 = vmatpush2.bf16.msra.mxu0 0
      %1844 = vmatprep.subr.bf16.mxu0 0
      %1845 = vmatpush2.bf16.msra.mxu0 0
      %1846 = vmatprep.mubr.bf16.mxu0 0
      %1847 = vmatmul.mubr.bf16.gmra.mxu0 %v1797
      %v1848 = vpop.f32.mrf.mxu0
      %v1849 = vadd.f32 0.0, %v1848
      %v1850 = vpop.f32.mrf.mxu0
      %v1851 = vpop.f32.mrf.mxu0
      %v1852 = vadd.f32 0.0, %v1851
      %v1853 = vpop.f32.mrf.mxu0
      %1854 = vmatprep.mubr.bf16.mxu0 0
      %1855 = vmatmul.mubr.bf16.gmra.mxu0 %v1799
      %v1856 = vpop.f32.mrf.mxu0
      %v1857 = vadd.f32 0.0, %v1856
      %v1858 = vpop.f32.mrf.mxu0
      %v1859 = vpop.f32.mrf.mxu0
      %v1860 = vadd.f32 0.0, %v1859
      %v1861 = vpop.f32.mrf.mxu0
      %1862 = vmatprep.mubr.bf16.mxu0 0
      %1863 = vmatmul.mubr.bf16.gmra.mxu0 %v1801
      %v1864 = vpop.f32.mrf.mxu0
      %v1865 = vadd.f32 0.0, %v1864
      %v1866 = vpop.f32.mrf.mxu0
      %v1867 = vpop.f32.mrf.mxu0
      %v1868 = vadd.f32 0.0, %v1867
      %v1869 = vpop.f32.mrf.mxu0
      %1870 = vmatprep.mubr.bf16.mxu0 0
      %1871 = vmatmul.mubr.bf16.gmra.mxu0 %v1803
      %v1872 = vpop.f32.mrf.mxu0
      %v1873 = vadd.f32 0.0, %v1872
      %v1874 = vpop.f32.mrf.mxu0
      %v1875 = vpop.f32.mrf.mxu0
      %v1876 = vadd.f32 0.0, %v1875
      %v1877 = vpop.f32.mrf.mxu0
      %1878 = vmatprep.mubr.bf16.mxu0 0
      %1879 = vmatmul.mubr.bf16.gmra.mxu0 %v1805
      %v1880 = vpop.f32.mrf.mxu0
      %v1881 = vadd.f32 0.0, %v1880
      %v1882 = vpop.f32.mrf.mxu0
      %v1883 = vpop.f32.mrf.mxu0
      %v1884 = vadd.f32 0.0, %v1883
      %v1885 = vpop.f32.mrf.mxu0
      %1886 = vmatprep.mubr.bf16.mxu0 0
      %1887 = vmatmul.mubr.bf16.gmra.mxu0 %v1807
      %v1888 = vpop.f32.mrf.mxu0
      %v1889 = vadd.f32 0.0, %v1888
      %v1890 = vpop.f32.mrf.mxu0
      %v1891 = vpop.f32.mrf.mxu0
      %v1892 = vadd.f32 0.0, %v1891
      %v1893 = vpop.f32.mrf.mxu0
      %1894 = vmatprep.mubr.bf16.mxu0 0
      %1895 = vmatmul.mubr.bf16.gmra.mxu0 %v1809
      %v1896 = vpop.f32.mrf.mxu0
      %v1897 = vadd.f32 0.0, %v1896
      %v1898 = vpop.f32.mrf.mxu0
      %v1899 = vpop.f32.mrf.mxu0
      %v1900 = vpop.f32.mrf.mxu0
      %1901 = vdwg.mxu0
      %v1902 = vadd.f32 %v1714, %v1849
      %v1903 = vadd.f32 %v1715, %v1852
      %v1904 = vadd.f32 %v1716, %v1857
      %v1905 = vadd.f32 %v1717, %v1860
      %v1906 = vadd.f32 %v1718, %v1865
      %v1907 = vadd.f32 %v1719, %v1868
      %v1908 = vadd.f32 %v1720, %v1873
      %v1909 = vadd.f32 %v1721, %v1876
      %v1910 = vadd.f32 %v1722, %v1881
      %v1911 = vadd.f32 %v1723, %v1884
      %v1912 = vadd.f32 %v1724, %v1889
      %v1913 = vadd.f32 %v1725, %v1892
      %v1914 = vadd.f32 %v1726, %v1897
      %v1915 = vrot.slane %v1550, 1
      %v1916 = vrot.slane %v1555, 2
      %v1917 = vrot.slane %v1561, 3
      %v1918 = vpack.c.b16 %v1565, %v1565
      %v1919 = vpack.c.b16 %v1566, %v1566
      %v1920 = vrot.slane %v1757, 5
      %v1921 = vrot.slane %v1579, 6
      %v1922 = vrot.slane %v1585, 7
      %v1925 = vsel %vm1587, %v1915, %v1916
      %v1927 = vsel %vm1591, %v1916, %v1917
      %v1929 = vsel %vm1594, %v1917, %v1918
      %v1932 = vsel %vm1597, %v1919, %v1920
      %v1934 = vsel %vm1600, %v1920, %v1921
      %v1936 = vsel %vm1604, %v1921, %v1922
      %s1937 = scalar_lea.vmem %s9, 4
      %v1938 = vld [vmem:[%s1937] sm:$0x3]
      %v1939 = vsel %vm1608, %v1925, 0
      %v1941 = vsel %vm1608, %v1927, 0
      %v1943 = vsel %vm1608, %v1929, 0
      %v1945 = vsel %vm1608, %v1932, 0
      %v1947 = vsel %vm1608, %v1934, 0
      %v1949 = vsel %vm1608, %v1936, 0
      %v1951 = vsel %vm1608, %v1922, 0
      %v1954 = vsel %vm1604, %v1938, 0
      %1956 = vmatprep.subr.bf16.mxu0 0
      %1957 = vmatpush1.bf16.msra.mxu0 0
      %1958 = vmatprep.subr.bf16.mxu0 0
      %1959 = vmatpush1.bf16.msra.mxu0 0
      %1960 = vmatprep.subr.bf16.mxu0 0
      %1961 = vmatpush1.bf16.msra.mxu0 0
      %1962 = vmatprep.subr.bf16.mxu0 0
      %1963 = vmatpush1.bf16.msra.mxu0 0
      %1964 = vmatprep.subr.bf16.mxu0 0
      %1965 = vmatpush1.bf16.msra.mxu0 0
      %1966 = vmatprep.subr.bf16.mxu0 0
      %1967 = vmatpush1.bf16.msra.mxu0 0
      %1968 = vmatprep.subr.bf16.mxu0 0
      %1969 = vmatpush1.bf16.msra.mxu0 0
      %1970 = vmatprep.subr.bf16.mxu0 0
      %1971 = vmatpush1.bf16.msra.mxu0 %v1954
      %1972 = vmatprep.subr.bf16.mxu0 0
      %1973 = vmatpush2.bf16.msra.mxu0 0
      %1974 = vmatprep.subr.bf16.mxu0 0
      %1975 = vmatpush2.bf16.msra.mxu0 0
      %1976 = vmatprep.subr.bf16.mxu0 0
      %1977 = vmatpush2.bf16.msra.mxu0 0
      %1978 = vmatprep.subr.bf16.mxu0 0
      %1979 = vmatpush2.bf16.msra.mxu0 0
      %1980 = vmatprep.subr.bf16.mxu0 0
      %1981 = vmatpush2.bf16.msra.mxu0 0
      %1982 = vmatprep.subr.bf16.mxu0 0
      %1983 = vmatpush2.bf16.msra.mxu0 0
      %1984 = vmatprep.subr.bf16.mxu0 0
      %1985 = vmatpush2.bf16.msra.mxu0 0
      %1986 = vmatprep.subr.bf16.mxu0 0
      %1987 = vmatpush2.bf16.msra.mxu0 0
      %1988 = vmatprep.mubr.bf16.mxu0 0
      %1989 = vmatmul.mubr.bf16.gmra.mxu0 %v1939
      %v1990 = vpop.f32.mrf.mxu0
      %v1991 = vadd.f32 0.0, %v1990
      %v1992 = vpop.f32.mrf.mxu0
      %v1993 = vpop.f32.mrf.mxu0
      %v1994 = vadd.f32 0.0, %v1993
      %v1995 = vpop.f32.mrf.mxu0
      %1996 = vmatprep.mubr.bf16.mxu0 0
      %1997 = vmatmul.mubr.bf16.gmra.mxu0 %v1941
      %v1998 = vpop.f32.mrf.mxu0
      %v1999 = vadd.f32 0.0, %v1998
      %v2000 = vpop.f32.mrf.mxu0
      %v2001 = vpop.f32.mrf.mxu0
      %v2002 = vadd.f32 0.0, %v2001
      %v2003 = vpop.f32.mrf.mxu0
      %2004 = vmatprep.mubr.bf16.mxu0 0
      %2005 = vmatmul.mubr.bf16.gmra.mxu0 %v1943
      %v2006 = vpop.f32.mrf.mxu0
      %v2007 = vadd.f32 0.0, %v2006
      %v2008 = vpop.f32.mrf.mxu0
      %v2009 = vpop.f32.mrf.mxu0
      %v2010 = vadd.f32 0.0, %v2009
      %v2011 = vpop.f32.mrf.mxu0
      %2012 = vmatprep.mubr.bf16.mxu0 0
      %2013 = vmatmul.mubr.bf16.gmra.mxu0 %v1945
      %v2014 = vpop.f32.mrf.mxu0
      %v2015 = vadd.f32 0.0, %v2014
      %v2016 = vpop.f32.mrf.mxu0
      %v2017 = vpop.f32.mrf.mxu0
      %v2018 = vadd.f32 0.0, %v2017
      %v2019 = vpop.f32.mrf.mxu0
      %2020 = vmatprep.mubr.bf16.mxu0 0
      %2021 = vmatmul.mubr.bf16.gmra.mxu0 %v1947
      %v2022 = vpop.f32.mrf.mxu0
      %v2023 = vadd.f32 0.0, %v2022
      %v2024 = vpop.f32.mrf.mxu0
      %v2025 = vpop.f32.mrf.mxu0
      %v2026 = vadd.f32 0.0, %v2025
      %v2027 = vpop.f32.mrf.mxu0
      %2028 = vmatprep.mubr.bf16.mxu0 0
      %2029 = vmatmul.mubr.bf16.gmra.mxu0 %v1949
      %v2030 = vpop.f32.mrf.mxu0
      %v2031 = vadd.f32 0.0, %v2030
      %v2032 = vpop.f32.mrf.mxu0
      %v2033 = vpop.f32.mrf.mxu0
      %v2034 = vadd.f32 0.0, %v2033
      %v2035 = vpop.f32.mrf.mxu0
      %2036 = vmatprep.mubr.bf16.mxu0 0
      %2037 = vmatmul.mubr.bf16.gmra.mxu0 %v1951
      %v2038 = vpop.f32.mrf.mxu0
      %v2039 = vadd.f32 0.0, %v2038
      %v2040 = vpop.f32.mrf.mxu0
      %v2041 = vpop.f32.mrf.mxu0
      %v2042 = vpop.f32.mrf.mxu0
      %2043 = vdwg.mxu0
      %v2044 = vadd.f32 %v1902, %v1991
      %v2045 = vadd.f32 %v1903, %v1994
      %v2046 = vadd.f32 %v1904, %v1999
      %v2047 = vadd.f32 %v1905, %v2002
      %v2048 = vadd.f32 %v1906, %v2007
      %v2049 = vadd.f32 %v1907, %v2010
      %v2050 = vadd.f32 %v1908, %v2015
      %v2051 = vadd.f32 %v1909, %v2018
      %v2052 = vadd.f32 %v1910, %v2023
      %v2053 = vadd.f32 %v1911, %v2026
      %v2054 = vadd.f32 %v1912, %v2031
      %v2055 = vadd.f32 %v1913, %v2034
      %v2056 = vadd.f32 %v1914, %v2039
      %v2057 = vrot.slane %v1561, 1
      %v2058 = vrot.slane %v1567, 2
      %v2059 = vrot.slane %v1757, 3
      %v2060 = vpack.c.b16 %v1577, %v1577
      %v2061 = vpack.c.b16 %v1578, %v1578
      %v2062 = vrot.slane %v1585, 5
      %v2065 = vunpack.c.l.b16 %v1542
      %v2066 = vunpack.c.l.b16 %v1543
      %v2067 = vpack.c.b16 %v2066, %v2065
      %v2068 = vrot.slane %v2067, 6
      %v2070 = vsel %vm1587, %v1555, %v2057
      %v2072 = vsel %vm1591, %v2057, %v2058
      %v2074 = vsel %vm1594, %v2058, %v2059
      %v2076 = vsel %vm1597, %v2059, %v2060
      %v2079 = vsel %vm1600, %v2061, %v2062
      %v2081 = vsel %vm1604, %v2062, %v2068
      %s2082 = scalar_lea.vmem %s9, 6
      %v2083 = vld [vmem:[%s2082] sm:$0x3]
      %v2084 = vsel %vm1608, %v2070, 0
      %v2086 = vsel %vm1608, %v2072, 0
      %v2088 = vsel %vm1608, %v2074, 0
      %v2090 = vsel %vm1608, %v2076, 0
      %v2092 = vsel %vm1608, %v2079, 0
      %v2094 = vsel %vm1608, %v2081, 0
      %v2096 = vsel %vm1608, %v2068, 0
      %v2099 = vsel %vm1604, %v2083, 0
      %2101 = vmatprep.subr.bf16.mxu0 0
      %2102 = vmatpush1.bf16.msra.mxu0 0
      %2103 = vmatprep.subr.bf16.mxu0 0
      %2104 = vmatpush1.bf16.msra.mxu0 0
      %2105 = vmatprep.subr.bf16.mxu0 0
      %2106 = vmatpush1.bf16.msra.mxu0 0
      %2107 = vmatprep.subr.bf16.mxu0 0
      %2108 = vmatpush1.bf16.msra.mxu0 0
      %2109 = vmatprep.subr.bf16.mxu0 0
      %2110 = vmatpush1.bf16.msra.mxu0 0
      %2111 = vmatprep.subr.bf16.mxu0 0
      %2112 = vmatpush1.bf16.msra.mxu0 0
      %2113 = vmatprep.subr.bf16.mxu0 0
      %2114 = vmatpush1.bf16.msra.mxu0 0
      %2115 = vmatprep.subr.bf16.mxu0 0
      %2116 = vmatpush1.bf16.msra.mxu0 %v2099
      %2117 = vmatprep.subr.bf16.mxu0 0
      %2118 = vmatpush2.bf16.msra.mxu0 0
      %2119 = vmatprep.subr.bf16.mxu0 0
      %2120 = vmatpush2.bf16.msra.mxu0 0
      %2121 = vmatprep.subr.bf16.mxu0 0
      %2122 = vmatpush2.bf16.msra.mxu0 0
      %2123 = vmatprep.subr.bf16.mxu0 0
      %2124 = vmatpush2.bf16.msra.mxu0 0
      %2125 = vmatprep.subr.bf16.mxu0 0
      %2126 = vmatpush2.bf16.msra.mxu0 0
      %2127 = vmatprep.subr.bf16.mxu0 0
      %2128 = vmatpush2.bf16.msra.mxu0 0
      %2129 = vmatprep.subr.bf16.mxu0 0
      %2130 = vmatpush2.bf16.msra.mxu0 0
      %2131 = vmatprep.subr.bf16.mxu0 0
      %2132 = vmatpush2.bf16.msra.mxu0 0
      %2133 = vmatprep.mubr.bf16.mxu0 0
      %2134 = vmatmul.mubr.bf16.gmra.mxu0 %v2084
      %v2135 = vpop.f32.mrf.mxu0
      %v2136 = vadd.f32 0.0, %v2135
      %v2137 = vpop.f32.mrf.mxu0
      %v2138 = vpop.f32.mrf.mxu0
      %v2139 = vadd.f32 0.0, %v2138
      %v2140 = vpop.f32.mrf.mxu0
      %2141 = vmatprep.mubr.bf16.mxu0 0
      %2142 = vmatmul.mubr.bf16.gmra.mxu0 %v2086
      %v2143 = vpop.f32.mrf.mxu0
      %v2144 = vadd.f32 0.0, %v2143
      %v2145 = vpop.f32.mrf.mxu0
      %v2146 = vpop.f32.mrf.mxu0
      %v2147 = vadd.f32 0.0, %v2146
      %v2148 = vpop.f32.mrf.mxu0
      %2149 = vmatprep.mubr.bf16.mxu0 0
      %2150 = vmatmul.mubr.bf16.gmra.mxu0 %v2088
      %v2151 = vpop.f32.mrf.mxu0
      %v2152 = vadd.f32 0.0, %v2151
      %v2153 = vpop.f32.mrf.mxu0
      %v2154 = vpop.f32.mrf.mxu0
      %v2155 = vadd.f32 0.0, %v2154
      %v2156 = vpop.f32.mrf.mxu0
      %2157 = vmatprep.mubr.bf16.mxu0 0
      %2158 = vmatmul.mubr.bf16.gmra.mxu0 %v2090
      %v2159 = vpop.f32.mrf.mxu0
      %v2160 = vadd.f32 0.0, %v2159
      %v2161 = vpop.f32.mrf.mxu0
      %v2162 = vpop.f32.mrf.mxu0
      %v2163 = vadd.f32 0.0, %v2162
      %v2164 = vpop.f32.mrf.mxu0
      %2165 = vmatprep.mubr.bf16.mxu0 0
      %2166 = vmatmul.mubr.bf16.gmra.mxu0 %v2092
      %v2167 = vpop.f32.mrf.mxu0
      %v2168 = vadd.f32 0.0, %v2167
      %v2169 = vpop.f32.mrf.mxu0
      %v2170 = vpop.f32.mrf.mxu0
      %v2171 = vadd.f32 0.0, %v2170
      %v2172 = vpop.f32.mrf.mxu0
      %2173 = vmatprep.mubr.bf16.mxu0 0
      %2174 = vmatmul.mubr.bf16.gmra.mxu0 %v2094
      %v2175 = vpop.f32.mrf.mxu0
      %v2176 = vadd.f32 0.0, %v2175
      %v2177 = vpop.f32.mrf.mxu0
      %v2178 = vpop.f32.mrf.mxu0
      %v2179 = vadd.f32 0.0, %v2178
      %v2180 = vpop.f32.mrf.mxu0
      %2181 = vmatprep.mubr.bf16.mxu0 0
      %2182 = vmatmul.mubr.bf16.gmra.mxu0 %v2096
      %v2183 = vpop.f32.mrf.mxu0
      %v2184 = vadd.f32 0.0, %v2183
      %v2185 = vpop.f32.mrf.mxu0
      %v2186 = vpop.f32.mrf.mxu0
      %v2187 = vpop.f32.mrf.mxu0
      %2188 = vdwg.mxu0
      %v2189 = vadd.f32 %v2044, %v2136
      %v2190 = vadd.f32 %v2045, %v2139
      %v2191 = vadd.f32 %v2046, %v2144
      %v2192 = vadd.f32 %v2047, %v2147
      %v2193 = vadd.f32 %v2048, %v2152
      %v2194 = vadd.f32 %v2049, %v2155
      %v2195 = vadd.f32 %v2050, %v2160
      %v2196 = vadd.f32 %v2051, %v2163
      %v2197 = vadd.f32 %v2052, %v2168
      %v2198 = vadd.f32 %v2053, %v2171
      %v2199 = vadd.f32 %v2054, %v2176
      %v2200 = vadd.f32 %v2055, %v2179
      %v2201 = vadd.f32 %v2056, %v2184
      %v2202 = vrot.slane %v1737, 1
      %v2203 = vor.u32 %v1734, %v2202
      %v2204 = vrot.slane %v1742, 1
      %v2205 = vrot.slane %v1745, 2
      %v2206 = vor.u32 %v2204, %v2205
      %v2207 = vrot.slane %v1750, 2
      %v2208 = vrot.slane %v1753, 3
      %v2209 = vor.u32 %v2207, %v2208
      %v2210 = vrot.slane %v1759, 3
      %v2211 = vrot.slane %v1762, 4
      %v2212 = vor.u32 %v2210, %v2211
      %v2213 = vrot.slane %v1767, 4
      %v2214 = vrot.slane %v1770, 5
      %v2215 = vor.u32 %v2213, %v2214
      %v2216 = vrot.slane %v1775, 5
      %v2217 = vrot.slane %v1778, 6
      %v2218 = vor.u32 %v2216, %v2217
      %v2220 = vshrl.u32 %v2067, 16
      %v2222 = vrot.slane %v2220, 6
      %v2223 = vshll.u32 %v2067, 16
      %v2225 = vrot.slane %v2223, 7
      %v2226 = vor.u32 %v2222, %v2225
      %v2229 = vsel %vm1587, %v2203, %v2206
      %v2231 = vsel %vm1591, %v2206, %v2209
      %v2233 = vsel %vm1594, %v2209, %v2212
      %v2235 = vsel %vm1597, %v2212, %v2215
      %v2237 = vsel %vm1600, %v2215, %v2218
      %v2239 = vsel %vm1604, %v2218, %v2226
      %s2240 = scalar_lea.vmem %s9, 8
      %v2241 = vld [vmem:[%s2240] sm:$0x3]
      %v2242 = vsel %vm1608, %v2229, 0
      %v2244 = vsel %vm1608, %v2231, 0
      %v2246 = vsel %vm1608, %v2233, 0
      %v2248 = vsel %vm1608, %v2235, 0
      %v2250 = vsel %vm1608, %v2237, 0
      %v2252 = vsel %vm1608, %v2239, 0
      %v2254 = vsel %vm1608, %v2226, 0
      %v2257 = vsel %vm1604, %v2241, 0
      %2259 = vmatprep.subr.bf16.mxu0 0
      %2260 = vmatpush1.bf16.msra.mxu0 0
      %2261 = vmatprep.subr.bf16.mxu0 0
      %2262 = vmatpush1.bf16.msra.mxu0 0
      %2263 = vmatprep.subr.bf16.mxu0 0
      %2264 = vmatpush1.bf16.msra.mxu0 0
      %2265 = vmatprep.subr.bf16.mxu0 0
      %2266 = vmatpush1.bf16.msra.mxu0 0
      %2267 = vmatprep.subr.bf16.mxu0 0
      %2268 = vmatpush1.bf16.msra.mxu0 0
      %2269 = vmatprep.subr.bf16.mxu0 0
      %2270 = vmatpush1.bf16.msra.mxu0 0
      %2271 = vmatprep.subr.bf16.mxu0 0
      %2272 = vmatpush1.bf16.msra.mxu0 0
      %2273 = vmatprep.subr.bf16.mxu0 0
      %2274 = vmatpush1.bf16.msra.mxu0 %v2257
      %2275 = vmatprep.subr.bf16.mxu0 0
      %2276 = vmatpush2.bf16.msra.mxu0 0
      %2277 = vmatprep.subr.bf16.mxu0 0
      %2278 = vmatpush2.bf16.msra.mxu0 0
      %2279 = vmatprep.subr.bf16.mxu0 0
      %2280 = vmatpush2.bf16.msra.mxu0 0
      %2281 = vmatprep.subr.bf16.mxu0 0
      %2282 = vmatpush2.bf16.msra.mxu0 0
      %2283 = vmatprep.subr.bf16.mxu0 0
      %2284 = vmatpush2.bf16.msra.mxu0 0
      %2285 = vmatprep.subr.bf16.mxu0 0
      %2286 = vmatpush2.bf16.msra.mxu0 0
      %2287 = vmatprep.subr.bf16.mxu0 0
      %2288 = vmatpush2.bf16.msra.mxu0 0
      %2289 = vmatprep.subr.bf16.mxu0 0
      %2290 = vmatpush2.bf16.msra.mxu0 0
      %2291 = vmatprep.mubr.bf16.mxu0 0
      %2292 = vmatmul.mubr.bf16.gmra.mxu0 %v2242
      %v2293 = vpop.f32.mrf.mxu0
      %v2294 = vadd.f32 0.0, %v2293
      %v2295 = vpop.f32.mrf.mxu0
      %v2296 = vpop.f32.mrf.mxu0
      %v2297 = vadd.f32 0.0, %v2296
      %v2298 = vpop.f32.mrf.mxu0
      %2299 = vmatprep.mubr.bf16.mxu0 0
      %2300 = vmatmul.mubr.bf16.gmra.mxu0 %v2244
      %v2301 = vpop.f32.mrf.mxu0
      %v2302 = vadd.f32 0.0, %v2301
      %v2303 = vpop.f32.mrf.mxu0
      %v2304 = vpop.f32.mrf.mxu0
      %v2305 = vadd.f32 0.0, %v2304
      %v2306 = vpop.f32.mrf.mxu0
      %2307 = vmatprep.mubr.bf16.mxu0 0
      %2308 = vmatmul.mubr.bf16.gmra.mxu0 %v2246
      %v2309 = vpop.f32.mrf.mxu0
      %v2310 = vadd.f32 0.0, %v2309
      %v2311 = vpop.f32.mrf.mxu0
      %v2312 = vpop.f32.mrf.mxu0
      %v2313 = vadd.f32 0.0, %v2312
      %v2314 = vpop.f32.mrf.mxu0
      %2315 = vmatprep.mubr.bf16.mxu0 0
      %2316 = vmatmul.mubr.bf16.gmra.mxu0 %v2248
      %v2317 = vpop.f32.mrf.mxu0
      %v2318 = vadd.f32 0.0, %v2317
      %v2319 = vpop.f32.mrf.mxu0
      %v2320 = vpop.f32.mrf.mxu0
      %v2321 = vadd.f32 0.0, %v2320
      %v2322 = vpop.f32.mrf.mxu0
      %2323 = vmatprep.mubr.bf16.mxu0 0
      %2324 = vmatmul.mubr.bf16.gmra.mxu0 %v2250
      %v2325 = vpop.f32.mrf.mxu0
      %v2326 = vadd.f32 0.0, %v2325
      %v2327 = vpop.f32.mrf.mxu0
      %v2328 = vpop.f32.mrf.mxu0
      %v2329 = vadd.f32 0.0, %v2328
      %v2330 = vpop.f32.mrf.mxu0
      %2331 = vmatprep.mubr.bf16.mxu0 0
      %2332 = vmatmul.mubr.bf16.gmra.mxu0 %v2252
      %v2333 = vpop.f32.mrf.mxu0
      %v2334 = vadd.f32 0.0, %v2333
      %v2335 = vpop.f32.mrf.mxu0
      %v2336 = vpop.f32.mrf.mxu0
      %v2337 = vadd.f32 0.0, %v2336
      %v2338 = vpop.f32.mrf.mxu0
      %2339 = vmatprep.mubr.bf16.mxu0 0
      %2340 = vmatmul.mubr.bf16.gmra.mxu0 %v2254
      %v2341 = vpop.f32.mrf.mxu0
      %v2342 = vadd.f32 0.0, %v2341
      %v2343 = vpop.f32.mrf.mxu0
      %v2344 = vpop.f32.mrf.mxu0
      %v2345 = vpop.f32.mrf.mxu0
      %2346 = vdwg.mxu0
      %v2347 = vadd.f32 %v2189, %v2294
      %v2348 = vadd.f32 %v2190, %v2297
      %v2349 = vadd.f32 %v2191, %v2302
      %v2350 = vadd.f32 %v2192, %v2305
      %v2351 = vadd.f32 %v2193, %v2310
      %v2352 = vadd.f32 %v2194, %v2313
      %v2353 = vadd.f32 %v2195, %v2318
      %v2354 = vadd.f32 %v2196, %v2321
      %v2355 = vadd.f32 %v2197, %v2326
      %v2356 = vadd.f32 %v2198, %v2329
      %v2357 = vadd.f32 %v2199, %v2334
      %v2358 = vadd.f32 %v2200, %v2337
      %v2359 = vadd.f32 %v2201, %v2342
      %v2360 = vrot.slane %v2067, 7
      %v2361 = vsel %vm1587, %v1556, %v1562
      %v2362 = vsel %vm1591, %v1562, %v1568
      %v2363 = vsel %vm1594, %v1568, %v1573
      %v2364 = vsel %vm1597, %v1574, %v1580
      %v2365 = vsel %vm1600, %v1580, %v1586
      %v2367 = vsel %vm1604, %v1586, %v2360
      %s2368 = scalar_lea.vmem %s9, 10
      %v2369 = vld [vmem:[%s2368] sm:$0x3]
      %v2370 = vsel %vm1608, %v2361, 0
      %v2372 = vsel %vm1608, %v2362, 0
      %v2374 = vsel %vm1608, %v2363, 0
      %v2376 = vsel %vm1608, %v2364, 0
      %v2378 = vsel %vm1608, %v2365, 0
      %v2380 = vsel %vm1608, %v2367, 0
      %v2382 = vsel %vm1608, %v2360, 0
      %v2385 = vsel %vm1604, %v2369, 0
      %2387 = vmatprep.subr.bf16.mxu0 0
      %2388 = vmatpush1.bf16.msra.mxu0 0
      %2389 = vmatprep.subr.bf16.mxu0 0
      %2390 = vmatpush1.bf16.msra.mxu0 0
      %2391 = vmatprep.subr.bf16.mxu0 0
      %2392 = vmatpush1.bf16.msra.mxu0 0
      %2393 = vmatprep.subr.bf16.mxu0 0
      %2394 = vmatpush1.bf16.msra.mxu0 0
      %2395 = vmatprep.subr.bf16.mxu0 0
      %2396 = vmatpush1.bf16.msra.mxu0 0
      %2397 = vmatprep.subr.bf16.mxu0 0
      %2398 = vmatpush1.bf16.msra.mxu0 0
      %2399 = vmatprep.subr.bf16.mxu0 0
      %2400 = vmatpush1.bf16.msra.mxu0 0
      %2401 = vmatprep.subr.bf16.mxu0 0
      %2402 = vmatpush1.bf16.msra.mxu0 %v2385
      %2403 = vmatprep.subr.bf16.mxu0 0
      %2404 = vmatpush2.bf16.msra.mxu0 0
      %2405 = vmatprep.subr.bf16.mxu0 0
      %2406 = vmatpush2.bf16.msra.mxu0 0
      %2407 = vmatprep.subr.bf16.mxu0 0
      %2408 = vmatpush2.bf16.msra.mxu0 0
      %2409 = vmatprep.subr.bf16.mxu0 0
      %2410 = vmatpush2.bf16.msra.mxu0 0
      %2411 = vmatprep.subr.bf16.mxu0 0
      %2412 = vmatpush2.bf16.msra.mxu0 0
      %2413 = vmatprep.subr.bf16.mxu0 0
      %2414 = vmatpush2.bf16.msra.mxu0 0
      %2415 = vmatprep.subr.bf16.mxu0 0
      %2416 = vmatpush2.bf16.msra.mxu0 0
      %2417 = vmatprep.subr.bf16.mxu0 0
      %2418 = vmatpush2.bf16.msra.mxu0 0
      %2419 = vmatprep.mubr.bf16.mxu0 0
      %2420 = vmatmul.mubr.bf16.gmra.mxu0 %v2370
      %v2421 = vpop.f32.mrf.mxu0
      %v2422 = vadd.f32 0.0, %v2421
      %v2423 = vpop.f32.mrf.mxu0
      %v2424 = vpop.f32.mrf.mxu0
      %v2425 = vadd.f32 0.0, %v2424
      %v2426 = vpop.f32.mrf.mxu0
      %2427 = vmatprep.mubr.bf16.mxu0 0
      %2428 = vmatmul.mubr.bf16.gmra.mxu0 %v2372
      %v2429 = vpop.f32.mrf.mxu0
      %v2430 = vadd.f32 0.0, %v2429
      %v2431 = vpop.f32.mrf.mxu0
      %v2432 = vpop.f32.mrf.mxu0
      %v2433 = vadd.f32 0.0, %v2432
      %v2434 = vpop.f32.mrf.mxu0
      %2435 = vmatprep.mubr.bf16.mxu0 0
      %2436 = vmatmul.mubr.bf16.gmra.mxu0 %v2374
      %v2437 = vpop.f32.mrf.mxu0
      %v2438 = vadd.f32 0.0, %v2437
      %v2439 = vpop.f32.mrf.mxu0
      %v2440 = vpop.f32.mrf.mxu0
      %v2441 = vadd.f32 0.0, %v2440
      %v2442 = vpop.f32.mrf.mxu0
      %2443 = vmatprep.mubr.bf16.mxu0 0
      %2444 = vmatmul.mubr.bf16.gmra.mxu0 %v2376
      %v2445 = vpop.f32.mrf.mxu0
      %v2446 = vadd.f32 0.0, %v2445
      %v2447 = vpop.f32.mrf.mxu0
      %v2448 = vpop.f32.mrf.mxu0
      %v2449 = vadd.f32 0.0, %v2448
      %v2450 = vpop.f32.mrf.mxu0
      %2451 = vmatprep.mubr.bf16.mxu0 0
      %2452 = vmatmul.mubr.bf16.gmra.mxu0 %v2378
      %v2453 = vpop.f32.mrf.mxu0
      %v2454 = vadd.f32 0.0, %v2453
      %v2455 = vpop.f32.mrf.mxu0
      %v2456 = vpop.f32.mrf.mxu0
      %v2457 = vadd.f32 0.0, %v2456
      %v2458 = vpop.f32.mrf.mxu0
      %2459 = vmatprep.mubr.bf16.mxu0 0
      %2460 = vmatmul.mubr.bf16.gmra.mxu0 %v2380
      %v2461 = vpop.f32.mrf.mxu0
      %v2462 = vadd.f32 0.0, %v2461
      %v2463 = vpop.f32.mrf.mxu0
      %v2464 = vpop.f32.mrf.mxu0
      %v2465 = vadd.f32 0.0, %v2464
      %v2466 = vpop.f32.mrf.mxu0
      %2467 = vmatprep.mubr.bf16.mxu0 0
      %2468 = vmatmul.mubr.bf16.gmra.mxu0 %v2382
      %v2469 = vpop.f32.mrf.mxu0
      %v2470 = vadd.f32 0.0, %v2469
      %v2471 = vpop.f32.mrf.mxu0
      %v2472 = vpop.f32.mrf.mxu0
      %v2473 = vpop.f32.mrf.mxu0
      %2474 = vdwg.mxu0
      %v2475 = vadd.f32 %v2347, %v2422
      %v2476 = vadd.f32 %v2348, %v2425
      %v2477 = vadd.f32 %v2349, %v2430
      %v2478 = vadd.f32 %v2350, %v2433
      %v2479 = vadd.f32 %v2351, %v2438
      %v2480 = vadd.f32 %v2352, %v2441
      %v2481 = vadd.f32 %v2353, %v2446
      %v2482 = vadd.f32 %v2354, %v2449
      %v2483 = vadd.f32 %v2355, %v2454
      %v2484 = vadd.f32 %v2356, %v2457
      %v2485 = vadd.f32 %v2357, %v2462
      %v2486 = vadd.f32 %v2358, %v2465
      %v2487 = vadd.f32 %v2359, %v2470
      %v2488 = vrot.slane %v1567, 1
      %v2489 = vrot.slane %v1757, 2
      %v2490 = vrot.slane %v1579, 3
      %v2491 = vpack.c.b16 %v1583, %v1583
      %v2492 = vpack.c.b16 %v1584, %v1584
      %v2493 = vrot.slane %v2067, 5
      %v2496 = vunpack.c.l.b16 %v1544
      %v2497 = vunpack.c.l.b16 %v1545
      %v2498 = vpack.c.b16 %v2497, %v2496
      %v2499 = vrot.slane %v2498, 6
      %v2501 = vsel %vm1587, %v1561, %v2488
      %v2503 = vsel %vm1591, %v2488, %v2489
      %v2505 = vsel %vm1594, %v2489, %v2490
      %v2507 = vsel %vm1597, %v2490, %v2491
      %v2510 = vsel %vm1600, %v2492, %v2493
      %v2512 = vsel %vm1604, %v2493, %v2499
      %s2513 = scalar_lea.vmem %s9, 12
      %v2514 = vld [vmem:[%s2513] sm:$0x3]
      %v2515 = vsel %vm1608, %v2501, 0
      %v2517 = vsel %vm1608, %v2503, 0
      %v2519 = vsel %vm1608, %v2505, 0
      %v2521 = vsel %vm1608, %v2507, 0
      %v2523 = vsel %vm1608, %v2510, 0
      %v2525 = vsel %vm1608, %v2512, 0
      %v2527 = vsel %vm1608, %v2499, 0
      %v2530 = vsel %vm1604, %v2514, 0
      %2532 = vmatprep.subr.bf16.mxu0 0
      %2533 = vmatpush1.bf16.msra.mxu0 0
      %2534 = vmatprep.subr.bf16.mxu0 0
      %2535 = vmatpush1.bf16.msra.mxu0 0
      %2536 = vmatprep.subr.bf16.mxu0 0
      %2537 = vmatpush1.bf16.msra.mxu0 0
      %2538 = vmatprep.subr.bf16.mxu0 0
      %2539 = vmatpush1.bf16.msra.mxu0 0
      %2540 = vmatprep.subr.bf16.mxu0 0
      %2541 = vmatpush1.bf16.msra.mxu0 0
      %2542 = vmatprep.subr.bf16.mxu0 0
      %2543 = vmatpush1.bf16.msra.mxu0 0
      %2544 = vmatprep.subr.bf16.mxu0 0
      %2545 = vmatpush1.bf16.msra.mxu0 0
      %2546 = vmatprep.subr.bf16.mxu0 0
      %2547 = vmatpush1.bf16.msra.mxu0 %v2530
      %2548 = vmatprep.subr.bf16.mxu0 0
      %2549 = vmatpush2.bf16.msra.mxu0 0
      %2550 = vmatprep.subr.bf16.mxu0 0
      %2551 = vmatpush2.bf16.msra.mxu0 0
      %2552 = vmatprep.subr.bf16.mxu0 0
      %2553 = vmatpush2.bf16.msra.mxu0 0
      %2554 = vmatprep.subr.bf16.mxu0 0
      %2555 = vmatpush2.bf16.msra.mxu0 0
      %2556 = vmatprep.subr.bf16.mxu0 0
      %2557 = vmatpush2.bf16.msra.mxu0 0
      %2558 = vmatprep.subr.bf16.mxu0 0
      %2559 = vmatpush2.bf16.msra.mxu0 0
      %2560 = vmatprep.subr.bf16.mxu0 0
      %2561 = vmatpush2.bf16.msra.mxu0 0
      %2562 = vmatprep.subr.bf16.mxu0 0
      %2563 = vmatpush2.bf16.msra.mxu0 0
      %2564 = vmatprep.mubr.bf16.mxu0 0
      %2565 = vmatmul.mubr.bf16.gmra.mxu0 %v2515
      %v2566 = vpop.f32.mrf.mxu0
      %v2567 = vadd.f32 0.0, %v2566
      %v2568 = vpop.f32.mrf.mxu0
      %v2569 = vpop.f32.mrf.mxu0
      %v2570 = vadd.f32 0.0, %v2569
      %v2571 = vpop.f32.mrf.mxu0
      %2572 = vmatprep.mubr.bf16.mxu0 0
      %2573 = vmatmul.mubr.bf16.gmra.mxu0 %v2517
      %v2574 = vpop.f32.mrf.mxu0
      %v2575 = vadd.f32 0.0, %v2574
      %v2576 = vpop.f32.mrf.mxu0
      %v2577 = vpop.f32.mrf.mxu0
      %v2578 = vadd.f32 0.0, %v2577
      %v2579 = vpop.f32.mrf.mxu0
      %2580 = vmatprep.mubr.bf16.mxu0 0
      %2581 = vmatmul.mubr.bf16.gmra.mxu0 %v2519
      %v2582 = vpop.f32.mrf.mxu0
      %v2583 = vadd.f32 0.0, %v2582
      %v2584 = vpop.f32.mrf.mxu0
      %v2585 = vpop.f32.mrf.mxu0
      %v2586 = vadd.f32 0.0, %v2585
      %v2587 = vpop.f32.mrf.mxu0
      %2588 = vmatprep.mubr.bf16.mxu0 0
      %2589 = vmatmul.mubr.bf16.gmra.mxu0 %v2521
      %v2590 = vpop.f32.mrf.mxu0
      %v2591 = vadd.f32 0.0, %v2590
      %v2592 = vpop.f32.mrf.mxu0
      %v2593 = vpop.f32.mrf.mxu0
      %v2594 = vadd.f32 0.0, %v2593
      %v2595 = vpop.f32.mrf.mxu0
      %2596 = vmatprep.mubr.bf16.mxu0 0
      %2597 = vmatmul.mubr.bf16.gmra.mxu0 %v2523
      %v2598 = vpop.f32.mrf.mxu0
      %v2599 = vadd.f32 0.0, %v2598
      %v2600 = vpop.f32.mrf.mxu0
      %v2601 = vpop.f32.mrf.mxu0
      %v2602 = vadd.f32 0.0, %v2601
      %v2603 = vpop.f32.mrf.mxu0
      %2604 = vmatprep.mubr.bf16.mxu0 0
      %2605 = vmatmul.mubr.bf16.gmra.mxu0 %v2525
      %v2606 = vpop.f32.mrf.mxu0
      %v2607 = vadd.f32 0.0, %v2606
      %v2608 = vpop.f32.mrf.mxu0
      %v2609 = vpop.f32.mrf.mxu0
      %v2610 = vadd.f32 0.0, %v2609
      %v2611 = vpop.f32.mrf.mxu0
      %2612 = vmatprep.mubr.bf16.mxu0 0
      %2613 = vmatmul.mubr.bf16.gmra.mxu0 %v2527
      %v2614 = vpop.f32.mrf.mxu0
      %v2615 = vadd.f32 0.0, %v2614
      %v2616 = vpop.f32.mrf.mxu0
      %v2617 = vpop.f32.mrf.mxu0
      %v2618 = vpop.f32.mrf.mxu0
      %2619 = vdwg.mxu0
      %v2620 = vadd.f32 %v2475, %v2567
      %v2621 = vadd.f32 %v2476, %v2570
      %v2622 = vadd.f32 %v2477, %v2575
      %v2623 = vadd.f32 %v2478, %v2578
      %v2624 = vadd.f32 %v2479, %v2583
      %v2625 = vadd.f32 %v2480, %v2586
      %v2626 = vadd.f32 %v2481, %v2591
      %v2627 = vadd.f32 %v2482, %v2594
      %v2628 = vadd.f32 %v2483, %v2599
      %v2629 = vadd.f32 %v2484, %v2602
      %v2630 = vadd.f32 %v2485, %v2607
      %v2631 = vadd.f32 %v2486, %v2610
      %v2632 = vadd.f32 %v2487, %v2615
      %v2633 = vrot.slane %v1745, 1
      %v2634 = vor.u32 %v1742, %v2633
      %v2635 = vrot.slane %v1750, 1
      %v2636 = vrot.slane %v1753, 2
      %v2637 = vor.u32 %v2635, %v2636
      %v2638 = vrot.slane %v1759, 2
      %v2639 = vrot.slane %v1762, 3
      %v2640 = vor.u32 %v2638, %v2639
      %v2641 = vrot.slane %v1767, 3
      %v2642 = vrot.slane %v1770, 4
      %v2643 = vor.u32 %v2641, %v2642
      %v2644 = vrot.slane %v1775, 4
      %v2645 = vrot.slane %v1778, 5
      %v2646 = vor.u32 %v2644, %v2645
      %v2647 = vrot.slane %v2220, 5
      %v2648 = vrot.slane %v2223, 6
      %v2649 = vor.u32 %v2647, %v2648
      %v2651 = vshrl.u32 %v2498, 16
      %v2653 = vrot.slane %v2651, 6
      %v2654 = vshll.u32 %v2498, 16
      %v2656 = vrot.slane %v2654, 7
      %v2657 = vor.u32 %v2653, %v2656
      %v2660 = vsel %vm1587, %v2634, %v2637
      %v2662 = vsel %vm1591, %v2637, %v2640
      %v2664 = vsel %vm1594, %v2640, %v2643
      %v2666 = vsel %vm1597, %v2643, %v2646
      %v2668 = vsel %vm1600, %v2646, %v2649
      %v2670 = vsel %vm1604, %v2649, %v2657
      %s2671 = scalar_lea.vmem %s9, 14
      %v2672 = vld [vmem:[%s2671] sm:$0x3]
      %v2673 = vsel %vm1608, %v2660, 0
      %v2675 = vsel %vm1608, %v2662, 0
      %v2677 = vsel %vm1608, %v2664, 0
      %v2679 = vsel %vm1608, %v2666, 0
      %v2681 = vsel %vm1608, %v2668, 0
      %v2683 = vsel %vm1608, %v2670, 0
      %v2685 = vsel %vm1608, %v2657, 0
      %v2688 = vsel %vm1604, %v2672, 0
      %2690 = vmatprep.subr.bf16.mxu0 0
      %2691 = vmatpush1.bf16.msra.mxu0 0
      %2692 = vmatprep.subr.bf16.mxu0 0
      %2693 = vmatpush1.bf16.msra.mxu0 0
      %2694 = vmatprep.subr.bf16.mxu0 0
      %2695 = vmatpush1.bf16.msra.mxu0 0
      %2696 = vmatprep.subr.bf16.mxu0 0
      %2697 = vmatpush1.bf16.msra.mxu0 0
      %2698 = vmatprep.subr.bf16.mxu0 0
      %2699 = vmatpush1.bf16.msra.mxu0 0
      %2700 = vmatprep.subr.bf16.mxu0 0
      %2701 = vmatpush1.bf16.msra.mxu0 0
      %2702 = vmatprep.subr.bf16.mxu0 0
      %2703 = vmatpush1.bf16.msra.mxu0 0
      %2704 = vmatprep.subr.bf16.mxu0 0
      %2705 = vmatpush1.bf16.msra.mxu0 %v2688
      %2706 = vmatprep.subr.bf16.mxu0 0
      %2707 = vmatpush2.bf16.msra.mxu0 0
      %2708 = vmatprep.subr.bf16.mxu0 0
      %2709 = vmatpush2.bf16.msra.mxu0 0
      %2710 = vmatprep.subr.bf16.mxu0 0
      %2711 = vmatpush2.bf16.msra.mxu0 0
      %2712 = vmatprep.subr.bf16.mxu0 0
      %2713 = vmatpush2.bf16.msra.mxu0 0
      %2714 = vmatprep.subr.bf16.mxu0 0
      %2715 = vmatpush2.bf16.msra.mxu0 0
      %2716 = vmatprep.subr.bf16.mxu0 0
      %2717 = vmatpush2.bf16.msra.mxu0 0
      %2718 = vmatprep.subr.bf16.mxu0 0
      %2719 = vmatpush2.bf16.msra.mxu0 0
      %2720 = vmatprep.subr.bf16.mxu0 0
      %2721 = vmatpush2.bf16.msra.mxu0 0
      %2722 = vmatprep.mubr.bf16.mxu0 0
      %2723 = vmatmul.mubr.bf16.gmra.mxu0 %v2673
      %v2724 = vpop.f32.mrf.mxu0
      %v2725 = vadd.f32 0.0, %v2724
      %v2726 = vpop.f32.mrf.mxu0
      %v2727 = vpop.f32.mrf.mxu0
      %v2728 = vadd.f32 0.0, %v2727
      %v2729 = vpop.f32.mrf.mxu0
      %2730 = vmatprep.mubr.bf16.mxu0 0
      %2731 = vmatmul.mubr.bf16.gmra.mxu0 %v2675
      %v2732 = vpop.f32.mrf.mxu0
      %v2733 = vadd.f32 0.0, %v2732
      %v2734 = vpop.f32.mrf.mxu0
      %v2735 = vpop.f32.mrf.mxu0
      %v2736 = vadd.f32 0.0, %v2735
      %v2737 = vpop.f32.mrf.mxu0
      %2738 = vmatprep.mubr.bf16.mxu0 0
      %2739 = vmatmul.mubr.bf16.gmra.mxu0 %v2677
      %v2740 = vpop.f32.mrf.mxu0
      %v2741 = vadd.f32 0.0, %v2740
      %v2742 = vpop.f32.mrf.mxu0
      %v2743 = vpop.f32.mrf.mxu0
      %v2744 = vadd.f32 0.0, %v2743
      %v2745 = vpop.f32.mrf.mxu0
      %2746 = vmatprep.mubr.bf16.mxu0 0
      %2747 = vmatmul.mubr.bf16.gmra.mxu0 %v2679
      %v2748 = vpop.f32.mrf.mxu0
      %v2749 = vadd.f32 0.0, %v2748
      %v2750 = vpop.f32.mrf.mxu0
      %v2751 = vpop.f32.mrf.mxu0
      %v2752 = vadd.f32 0.0, %v2751
      %v2753 = vpop.f32.mrf.mxu0
      %2754 = vmatprep.mubr.bf16.mxu0 0
      %2755 = vmatmul.mubr.bf16.gmra.mxu0 %v2681
      %v2756 = vpop.f32.mrf.mxu0
      %v2757 = vadd.f32 0.0, %v2756
      %v2758 = vpop.f32.mrf.mxu0
      %v2759 = vpop.f32.mrf.mxu0
      %v2760 = vadd.f32 0.0, %v2759
      %v2761 = vpop.f32.mrf.mxu0
      %2762 = vmatprep.mubr.bf16.mxu0 0
      %2763 = vmatmul.mubr.bf16.gmra.mxu0 %v2683
      %v2764 = vpop.f32.mrf.mxu0
      %v2765 = vadd.f32 0.0, %v2764
      %v2766 = vpop.f32.mrf.mxu0
      %v2767 = vpop.f32.mrf.mxu0
      %v2768 = vadd.f32 0.0, %v2767
      %v2769 = vpop.f32.mrf.mxu0
      %2770 = vmatprep.mubr.bf16.mxu0 0
      %2771 = vmatmul.mubr.bf16.gmra.mxu0 %v2685
      %v2772 = vpop.f32.mrf.mxu0
      %v2773 = vadd.f32 0.0, %v2772
      %v2774 = vpop.f32.mrf.mxu0
      %v2775 = vpop.f32.mrf.mxu0
      %v2776 = vpop.f32.mrf.mxu0
      %2777 = vdwg.mxu0
      %v2778 = vadd.f32 %v2620, %v2725
      %v2779 = vadd.f32 %v2621, %v2728
      %v2780 = vadd.f32 %v2622, %v2733
      %v2781 = vadd.f32 %v2623, %v2736
      %v2782 = vadd.f32 %v2624, %v2741
      %v2783 = vadd.f32 %v2625, %v2744
      %v2784 = vadd.f32 %v2626, %v2749
      %v2785 = vadd.f32 %v2627, %v2752
      %v2786 = vadd.f32 %v2628, %v2757
      %v2787 = vadd.f32 %v2629, %v2760
      %v2788 = vadd.f32 %v2630, %v2765
      %v2789 = vadd.f32 %v2631, %v2768
      %v2790 = vadd.f32 %v2632, %v2773
      %v2791 = vrot.slane %v2498, 7
      %v2792 = vsel %vm1587, %v2057, %v2058
      %v2793 = vsel %vm1591, %v2058, %v2059
      %v2794 = vsel %vm1594, %v2059, %v2060
      %v2795 = vsel %vm1597, %v2061, %v2062
      %v2796 = vsel %vm1600, %v2062, %v2068
      %v2798 = vsel %vm1604, %v2068, %v2791
      %s2799 = scalar_lea.vmem %s9, 16
      %v2800 = vld [vmem:[%s2799] sm:$0x3]
      %v2801 = vsel %vm1608, %v2792, 0
      %v2803 = vsel %vm1608, %v2793, 0
      %v2805 = vsel %vm1608, %v2794, 0
      %v2807 = vsel %vm1608, %v2795, 0
      %v2809 = vsel %vm1608, %v2796, 0
      %v2811 = vsel %vm1608, %v2798, 0
      %v2813 = vsel %vm1608, %v2791, 0
      %v2816 = vsel %vm1604, %v2800, 0
      %2818 = vmatprep.subr.bf16.mxu0 0
      %2819 = vmatpush1.bf16.msra.mxu0 0
      %2820 = vmatprep.subr.bf16.mxu0 0
      %2821 = vmatpush1.bf16.msra.mxu0 0
      %2822 = vmatprep.subr.bf16.mxu0 0
      %2823 = vmatpush1.bf16.msra.mxu0 0
      %2824 = vmatprep.subr.bf16.mxu0 0
      %2825 = vmatpush1.bf16.msra.mxu0 0
      %2826 = vmatprep.subr.bf16.mxu0 0
      %2827 = vmatpush1.bf16.msra.mxu0 0
      %2828 = vmatprep.subr.bf16.mxu0 0
      %2829 = vmatpush1.bf16.msra.mxu0 0
      %2830 = vmatprep.subr.bf16.mxu0 0
      %2831 = vmatpush1.bf16.msra.mxu0 0
      %2832 = vmatprep.subr.bf16.mxu0 0
      %2833 = vmatpush1.bf16.msra.mxu0 %v2816
      %2834 = vmatprep.subr.bf16.mxu0 0
      %2835 = vmatpush2.bf16.msra.mxu0 0
      %2836 = vmatprep.subr.bf16.mxu0 0
      %2837 = vmatpush2.bf16.msra.mxu0 0
      %2838 = vmatprep.subr.bf16.mxu0 0
      %2839 = vmatpush2.bf16.msra.mxu0 0
      %2840 = vmatprep.subr.bf16.mxu0 0
      %2841 = vmatpush2.bf16.msra.mxu0 0
      %2842 = vmatprep.subr.bf16.mxu0 0
      %2843 = vmatpush2.bf16.msra.mxu0 0
      %2844 = vmatprep.subr.bf16.mxu0 0
      %2845 = vmatpush2.bf16.msra.mxu0 0
      %2846 = vmatprep.subr.bf16.mxu0 0
      %2847 = vmatpush2.bf16.msra.mxu0 0
      %2848 = vmatprep.subr.bf16.mxu0 0
      %2849 = vmatpush2.bf16.msra.mxu0 0
      %2850 = vmatprep.mubr.bf16.mxu0 0
      %2851 = vmatmul.mubr.bf16.gmra.mxu0 %v2801
      %v2852 = vpop.f32.mrf.mxu0
      %v2853 = vadd.f32 0.0, %v2852
      %v2854 = vpop.f32.mrf.mxu0
      %v2855 = vpop.f32.mrf.mxu0
      %v2856 = vadd.f32 0.0, %v2855
      %v2857 = vpop.f32.mrf.mxu0
      %2858 = vmatprep.mubr.bf16.mxu0 0
      %2859 = vmatmul.mubr.bf16.gmra.mxu0 %v2803
      %v2860 = vpop.f32.mrf.mxu0
      %v2861 = vadd.f32 0.0, %v2860
      %v2862 = vpop.f32.mrf.mxu0
      %v2863 = vpop.f32.mrf.mxu0
      %v2864 = vadd.f32 0.0, %v2863
      %v2865 = vpop.f32.mrf.mxu0
      %2866 = vmatprep.mubr.bf16.mxu0 0
      %2867 = vmatmul.mubr.bf16.gmra.mxu0 %v2805
      %v2868 = vpop.f32.mrf.mxu0
      %v2869 = vadd.f32 0.0, %v2868
      %v2870 = vpop.f32.mrf.mxu0
      %v2871 = vpop.f32.mrf.mxu0
      %v2872 = vadd.f32 0.0, %v2871
      %v2873 = vpop.f32.mrf.mxu0
      %2874 = vmatprep.mubr.bf16.mxu0 0
      %2875 = vmatmul.mubr.bf16.gmra.mxu0 %v2807
      %v2876 = vpop.f32.mrf.mxu0
      %v2877 = vadd.f32 0.0, %v2876
      %v2878 = vpop.f32.mrf.mxu0
      %v2879 = vpop.f32.mrf.mxu0
      %v2880 = vadd.f32 0.0, %v2879
      %v2881 = vpop.f32.mrf.mxu0
      %2882 = vmatprep.mubr.bf16.mxu0 0
      %2883 = vmatmul.mubr.bf16.gmra.mxu0 %v2809
      %v2884 = vpop.f32.mrf.mxu0
      %v2885 = vadd.f32 0.0, %v2884
      %v2886 = vpop.f32.mrf.mxu0
      %v2887 = vpop.f32.mrf.mxu0
      %v2888 = vadd.f32 0.0, %v2887
      %v2889 = vpop.f32.mrf.mxu0
      %2890 = vmatprep.mubr.bf16.mxu0 0
      %2891 = vmatmul.mubr.bf16.gmra.mxu0 %v2811
      %v2892 = vpop.f32.mrf.mxu0
      %v2893 = vadd.f32 0.0, %v2892
      %v2894 = vpop.f32.mrf.mxu0
      %v2895 = vpop.f32.mrf.mxu0
      %v2896 = vadd.f32 0.0, %v2895
      %v2897 = vpop.f32.mrf.mxu0
      %2898 = vmatprep.mubr.bf16.mxu0 0
      %2899 = vmatmul.mubr.bf16.gmra.mxu0 %v2813
      %v2900 = vpop.f32.mrf.mxu0
      %v2901 = vadd.f32 0.0, %v2900
      %v2902 = vpop.f32.mrf.mxu0
      %v2903 = vpop.f32.mrf.mxu0
      %v2904 = vpop.f32.mrf.mxu0
      %2905 = vdwg.mxu0
      %v2906 = vadd.f32 %v2778, %v2853
      %v2907 = vadd.f32 %v2779, %v2856
      %v2908 = vadd.f32 %v2780, %v2861
      %v2909 = vadd.f32 %v2781, %v2864
      %v2910 = vadd.f32 %v2782, %v2869
      %v2911 = vadd.f32 %v2783, %v2872
      %v2912 = vadd.f32 %v2784, %v2877
      %v2913 = vadd.f32 %v2785, %v2880
      %v2914 = vadd.f32 %v2786, %v2885
      %v2915 = vadd.f32 %v2787, %v2888
      %v2916 = vadd.f32 %v2788, %v2893
      %v2917 = vadd.f32 %v2789, %v2896
      %v2918 = vadd.f32 %v2790, %v2901
      %v2919 = vld [vmem:[%s1401] sm:$0xff]
      %v2920 = vld [vmem:[%s1401 + $0x8] sm:$0xff]
      %v2921 = vld [vmem:[%s1401 + $0x10] sm:$0xf]
      %v2922 = vpack.c.bf16 %v2920, %v2919
      %v2923 = vpack.c.bf16 %v2921, %v2921
      %v2924 = vld [vmem:[%s1414] sm:$0xff]
      %v2925 = vld [vmem:[%s1414 + $0x8] sm:$0xff]
      %v2926 = vld [vmem:[%s1414 + $0x10] sm:$0xf]
      %v2927 = vpack.c.bf16 %v2925, %v2924
      %v2928 = vpack.c.bf16 %v2926, %v2926
      %v2929 = vld [vmem:[%s1427] sm:$0xff]
      %v2930 = vld [vmem:[%s1427 + $0x8] sm:$0xff]
      %v2931 = vld [vmem:[%s1427 + $0x10] sm:$0xf]
      %v2932 = vpack.c.bf16 %v2930, %v2929
      %v2933 = vpack.c.bf16 %v2931, %v2931
      %v2934 = vld [vmem:[%s1440] sm:$0xff]
      %v2935 = vld [vmem:[%s1440 + $0x8] sm:$0xff]
      %v2936 = vld [vmem:[%s1440 + $0x10] sm:$0xf]
      %v2937 = vpack.c.bf16 %v2935, %v2934
      %v2938 = vpack.c.bf16 %v2936, %v2936
      %v2939 = vld [vmem:[%s1453] sm:$0xff]
      %v2940 = vld [vmem:[%s1453 + $0x8] sm:$0xff]
      %v2941 = vld [vmem:[%s1453 + $0x10] sm:$0xf]
      %v2942 = vpack.c.bf16 %v2940, %v2939
      %v2943 = vpack.c.bf16 %v2941, %v2941
      %v2944 = vld [vmem:[%s1466] sm:$0xff]
      %v2945 = vld [vmem:[%s1466 + $0x8] sm:$0xff]
      %v2946 = vld [vmem:[%s1466 + $0x10] sm:$0xf]
      %v2947 = vpack.c.bf16 %v2945, %v2944
      %v2948 = vpack.c.bf16 %v2946, %v2946
      %v2949 = vld [vmem:[%s1479] sm:$0xff]
      %v2950 = vld [vmem:[%s1479 + $0x8] sm:$0xff]
      %v2951 = vld [vmem:[%s1479 + $0x10] sm:$0xf]
      %v2952 = vpack.c.bf16 %v2950, %v2949
      %v2953 = vpack.c.bf16 %v2951, %v2951
      %v2954 = vld [vmem:[%s1492] sm:$0xff]
      %v2955 = vld [vmem:[%s1492 + $0x8] sm:$0xff]
      %v2956 = vld [vmem:[%s1492 + $0x10] sm:$0xf]
      %v2957 = vpack.c.bf16 %v2955, %v2954
      %v2958 = vpack.c.bf16 %v2956, %v2956
      %v2959 = vld [vmem:[%s1505] sm:$0xff]
      %v2960 = vld [vmem:[%s1505 + $0x8] sm:$0xff]
      %v2961 = vld [vmem:[%s1505 + $0x10] sm:$0xf]
      %v2962 = vpack.c.bf16 %v2960, %v2959
      %v2963 = vpack.c.bf16 %v2961, %v2961
      %v2965 = vrot.slane %v2922, 1
      %v2967 = vrot.slane %v2927, 2
      %v2969 = vrot.slane %v2932, 3
      %v2971 = vrot.slane %v2937, 4
      %v2973 = vrot.slane %v2942, 5
      %v2975 = vrot.slane %v2947, 6
      %v2977 = vrot.slane %v2952, 7
      %v2980 = vsel %vm1587, %v2965, %v2967
      %v2982 = vsel %vm1591, %v2967, %v2969
      %v2984 = vsel %vm1594, %v2969, %v2971
      %v2986 = vsel %vm1597, %v2971, %v2973
      %v2988 = vsel %vm1600, %v2973, %v2975
      %v2990 = vsel %vm1604, %v2975, %v2977
      %v2991 = vld [vmem:[%s19] sm:$0x3]
      %v2992 = vsel %vm1608, %v2980, 0
      %v2994 = vsel %vm1608, %v2982, 0
      %v2996 = vsel %vm1608, %v2984, 0
      %v2998 = vsel %vm1608, %v2986, 0
      %v3000 = vsel %vm1608, %v2988, 0
      %v3002 = vsel %vm1608, %v2990, 0
      %v3004 = vsel %vm1608, %v2977, 0
      %v3007 = vsel %vm1604, %v2991, 0
      %3009 = vmatprep.subr.bf16.mxu0 0
      %3010 = vmatpush1.bf16.msra.mxu0 0
      %3011 = vmatprep.subr.bf16.mxu0 0
      %3012 = vmatpush1.bf16.msra.mxu0 0
      %3013 = vmatprep.subr.bf16.mxu0 0
      %3014 = vmatpush1.bf16.msra.mxu0 0
      %3015 = vmatprep.subr.bf16.mxu0 0
      %3016 = vmatpush1.bf16.msra.mxu0 0
      %3017 = vmatprep.subr.bf16.mxu0 0
      %3018 = vmatpush1.bf16.msra.mxu0 0
      %3019 = vmatprep.subr.bf16.mxu0 0
      %3020 = vmatpush1.bf16.msra.mxu0 0
      %3021 = vmatprep.subr.bf16.mxu0 0
      %3022 = vmatpush1.bf16.msra.mxu0 0
      %3023 = vmatprep.subr.bf16.mxu0 0
      %3024 = vmatpush1.bf16.msra.mxu0 %v3007
      %3025 = vmatprep.subr.bf16.mxu0 0
      %3026 = vmatpush2.bf16.msra.mxu0 0
      %3027 = vmatprep.subr.bf16.mxu0 0
      %3028 = vmatpush2.bf16.msra.mxu0 0
      %3029 = vmatprep.subr.bf16.mxu0 0
      %3030 = vmatpush2.bf16.msra.mxu0 0
      %3031 = vmatprep.subr.bf16.mxu0 0
      %3032 = vmatpush2.bf16.msra.mxu0 0
      %3033 = vmatprep.subr.bf16.mxu0 0
      %3034 = vmatpush2.bf16.msra.mxu0 0
      %3035 = vmatprep.subr.bf16.mxu0 0
      %3036 = vmatpush2.bf16.msra.mxu0 0
      %3037 = vmatprep.subr.bf16.mxu0 0
      %3038 = vmatpush2.bf16.msra.mxu0 0
      %3039 = vmatprep.subr.bf16.mxu0 0
      %3040 = vmatpush2.bf16.msra.mxu0 0
      %3041 = vmatprep.mubr.bf16.mxu0 0
      %3042 = vmatmul.mubr.bf16.gmra.mxu0 %v2992
      %v3043 = vpop.f32.mrf.mxu0
      %v3044 = vadd.f32 0.0, %v3043
      %v3045 = vpop.f32.mrf.mxu0
      %v3046 = vpop.f32.mrf.mxu0
      %v3047 = vadd.f32 0.0, %v3046
      %v3048 = vpop.f32.mrf.mxu0
      %3049 = vmatprep.mubr.bf16.mxu0 0
      %3050 = vmatmul.mubr.bf16.gmra.mxu0 %v2994
      %v3051 = vpop.f32.mrf.mxu0
      %v3052 = vadd.f32 0.0, %v3051
      %v3053 = vpop.f32.mrf.mxu0
      %v3054 = vpop.f32.mrf.mxu0
      %v3055 = vadd.f32 0.0, %v3054
      %v3056 = vpop.f32.mrf.mxu0
      %3057 = vmatprep.mubr.bf16.mxu0 0
      %3058 = vmatmul.mubr.bf16.gmra.mxu0 %v2996
      %v3059 = vpop.f32.mrf.mxu0
      %v3060 = vadd.f32 0.0, %v3059
      %v3061 = vpop.f32.mrf.mxu0
      %v3062 = vpop.f32.mrf.mxu0
      %v3063 = vadd.f32 0.0, %v3062
      %v3064 = vpop.f32.mrf.mxu0
      %3065 = vmatprep.mubr.bf16.mxu0 0
      %3066 = vmatmul.mubr.bf16.gmra.mxu0 %v2998
      %v3067 = vpop.f32.mrf.mxu0
      %v3068 = vadd.f32 0.0, %v3067
      %v3069 = vpop.f32.mrf.mxu0
      %v3070 = vpop.f32.mrf.mxu0
      %v3071 = vadd.f32 0.0, %v3070
      %v3072 = vpop.f32.mrf.mxu0
      %3073 = vmatprep.mubr.bf16.mxu0 0
      %3074 = vmatmul.mubr.bf16.gmra.mxu0 %v3000
      %v3075 = vpop.f32.mrf.mxu0
      %v3076 = vadd.f32 0.0, %v3075
      %v3077 = vpop.f32.mrf.mxu0
      %v3078 = vpop.f32.mrf.mxu0
      %v3079 = vadd.f32 0.0, %v3078
      %v3080 = vpop.f32.mrf.mxu0
      %3081 = vmatprep.mubr.bf16.mxu0 0
      %3082 = vmatmul.mubr.bf16.gmra.mxu0 %v3002
      %v3083 = vpop.f32.mrf.mxu0
      %v3084 = vadd.f32 0.0, %v3083
      %v3085 = vpop.f32.mrf.mxu0
      %v3086 = vpop.f32.mrf.mxu0
      %v3087 = vadd.f32 0.0, %v3086
      %v3088 = vpop.f32.mrf.mxu0
      %3089 = vmatprep.mubr.bf16.mxu0 0
      %3090 = vmatmul.mubr.bf16.gmra.mxu0 %v3004
      %v3091 = vpop.f32.mrf.mxu0
      %v3092 = vadd.f32 0.0, %v3091
      %v3093 = vpop.f32.mrf.mxu0
      %v3094 = vpop.f32.mrf.mxu0
      %v3095 = vpop.f32.mrf.mxu0
      %3096 = vdwg.mxu0
      %v3097 = vadd.f32 %v2906, %v3044
      %v3098 = vadd.f32 %v2907, %v3047
      %v3099 = vadd.f32 %v2908, %v3052
      %v3100 = vadd.f32 %v2909, %v3055
      %v3101 = vadd.f32 %v2910, %v3060
      %v3102 = vadd.f32 %v2911, %v3063
      %v3103 = vadd.f32 %v2912, %v3068
      %v3104 = vadd.f32 %v2913, %v3071
      %v3105 = vadd.f32 %v2914, %v3076
      %v3106 = vadd.f32 %v2915, %v3079
      %v3107 = vadd.f32 %v2916, %v3084
      %v3108 = vadd.f32 %v2917, %v3087
      %v3109 = vadd.f32 %v2918, %v3092
      %vm3110 = vsmask.f32 6400
      %v3112 = vshrl.u32 %v2922, 16
      %v3114 = vrot.slane %v3112, 1
      %v3115 = vshll.u32 %v2922, 16
      %v3117 = vrot.slane %v3115, 2
      %v3118 = vor.u32 %v3114, %v3117
      %v3120 = vshll.u32 %v2923, 16
      %v3122 = vrot.slane %v3120, 2
      %v3123 = vsel %vm3110, %v3118, %v3122
      %vm3124 = vsmask.f32 5376
      %v3126 = vshrl.u32 %v2927, 16
      %v3128 = vrot.slane %v3126, 2
      %v3129 = vshll.u32 %v2927, 16
      %v3131 = vrot.slane %v3129, 3
      %v3132 = vor.u32 %v3128, %v3131
      %v3134 = vshll.u32 %v2928, 16
      %v3136 = vrot.slane %v3134, 3
      %v3137 = vsel %vm3124, %v3132, %v3136
      %vm3138 = vsmask.f32 4352
      %v3140 = vshrl.u32 %v2932, 16
      %v3142 = vrot.slane %v3140, 3
      %v3143 = vshll.u32 %v2932, 16
      %v3145 = vrot.slane %v3143, 4
      %v3146 = vor.u32 %v3142, %v3145
      %v3148 = vshll.u32 %v2933, 16
      %v3150 = vrot.slane %v3148, 4
      %v3151 = vsel %vm3138, %v3146, %v3150
      %vm3152 = vsmask.f32 3328
      %v3154 = vshrl.u32 %v2937, 16
      %v3156 = vrot.slane %v3154, 4
      %v3157 = vshll.u32 %v2937, 16
      %v3159 = vrot.slane %v3157, 5
      %v3160 = vor.u32 %v3156, %v3159
      %v3162 = vshll.u32 %v2938, 16
      %v3164 = vrot.slane %v3162, 5
      %v3165 = vsel %vm3152, %v3160, %v3164
      %vm3166 = vsmask.f32 2304
      %v3168 = vshrl.u32 %v2942, 16
      %v3170 = vrot.slane %v3168, 5
      %v3171 = vshll.u32 %v2942, 16
      %v3173 = vrot.slane %v3171, 6
      %v3174 = vor.u32 %v3170, %v3173
      %v3176 = vshll.u32 %v2943, 16
      %v3178 = vrot.slane %v3176, 6
      %v3179 = vsel %vm3166, %v3174, %v3178
      %vm3180 = vsmask.f32 1280
      %v3182 = vshrl.u32 %v2947, 16
      %v3184 = vrot.slane %v3182, 6
      %v3185 = vshll.u32 %v2947, 16
      %v3187 = vrot.slane %v3185, 7
      %v3188 = vor.u32 %v3184, %v3187
      %v3190 = vshll.u32 %v2948, 16
      %v3192 = vrot.slane %v3190, 7
      %v3193 = vsel %vm3180, %v3188, %v3192
      %vm3194 = vsmask.f32 256
      %v3196 = vshrl.u32 %v2952, 16
      %v3198 = vrot.slane %v3196, 7
      %v3199 = vshll.u32 %v2952, 16
      %v3201 = vor.u32 %v3198, %v3199
      %v3203 = vshll.u32 %v2953, 16
      %v3205 = vsel %vm3194, %v3198, %v3203
      %v3208 = vsel %vm1587, %v3123, %v3132
      %v3211 = vsel %vm1591, %v3137, %v3146
      %v3214 = vsel %vm1594, %v3151, %v3160
      %v3217 = vsel %vm1597, %v3165, %v3174
      %v3220 = vsel %vm1600, %v3179, %v3188
      %v3223 = vsel %vm1604, %v3193, %v3201
      %s3224 = scalar_lea.vmem %s19, 2
      %v3225 = vld [vmem:[%s3224] sm:$0x3]
      %v3226 = vsel %vm1608, %v3208, 0
      %v3228 = vsel %vm1608, %v3211, 0
      %v3230 = vsel %vm1608, %v3214, 0
      %v3232 = vsel %vm1608, %v3217, 0
      %v3234 = vsel %vm1608, %v3220, 0
      %v3236 = vsel %vm1608, %v3223, 0
      %v3239 = vsel %vm1608, %v3205, 0
      %v3242 = vsel %vm1604, %v3225, 0
      %3244 = vmatprep.subr.bf16.mxu0 0
      %3245 = vmatpush1.bf16.msra.mxu0 0
      %3246 = vmatprep.subr.bf16.mxu0 0
      %3247 = vmatpush1.bf16.msra.mxu0 0
      %3248 = vmatprep.subr.bf16.mxu0 0
      %3249 = vmatpush1.bf16.msra.mxu0 0
      %3250 = vmatprep.subr.bf16.mxu0 0
      %3251 = vmatpush1.bf16.msra.mxu0 0
      %3252 = vmatprep.subr.bf16.mxu0 0
      %3253 = vmatpush1.bf16.msra.mxu0 0
      %3254 = vmatprep.subr.bf16.mxu0 0
      %3255 = vmatpush1.bf16.msra.mxu0 0
      %3256 = vmatprep.subr.bf16.mxu0 0
      %3257 = vmatpush1.bf16.msra.mxu0 0
      %3258 = vmatprep.subr.bf16.mxu0 0
      %3259 = vmatpush1.bf16.msra.mxu0 %v3242
      %3260 = vmatprep.subr.bf16.mxu0 0
      %3261 = vmatpush2.bf16.msra.mxu0 0
      %3262 = vmatprep.subr.bf16.mxu0 0
      %3263 = vmatpush2.bf16.msra.mxu0 0
      %3264 = vmatprep.subr.bf16.mxu0 0
      %3265 = vmatpush2.bf16.msra.mxu0 0
      %3266 = vmatprep.subr.bf16.mxu0 0
      %3267 = vmatpush2.bf16.msra.mxu0 0
      %3268 = vmatprep.subr.bf16.mxu0 0
      %3269 = vmatpush2.bf16.msra.mxu0 0
      %3270 = vmatprep.subr.bf16.mxu0 0
      %3271 = vmatpush2.bf16.msra.mxu0 0
      %3272 = vmatprep.subr.bf16.mxu0 0
      %3273 = vmatpush2.bf16.msra.mxu0 0
      %3274 = vmatprep.subr.bf16.mxu0 0
      %3275 = vmatpush2.bf16.msra.mxu0 0
      %3276 = vmatprep.mubr.bf16.mxu0 0
      %3277 = vmatmul.mubr.bf16.gmra.mxu0 %v3226
      %v3278 = vpop.f32.mrf.mxu0
      %v3279 = vadd.f32 0.0, %v3278
      %v3280 = vpop.f32.mrf.mxu0
      %v3281 = vpop.f32.mrf.mxu0
      %v3282 = vadd.f32 0.0, %v3281
      %v3283 = vpop.f32.mrf.mxu0
      %3284 = vmatprep.mubr.bf16.mxu0 0
      %3285 = vmatmul.mubr.bf16.gmra.mxu0 %v3228
      %v3286 = vpop.f32.mrf.mxu0
      %v3287 = vadd.f32 0.0, %v3286
      %v3288 = vpop.f32.mrf.mxu0
      %v3289 = vpop.f32.mrf.mxu0
      %v3290 = vadd.f32 0.0, %v3289
      %v3291 = vpop.f32.mrf.mxu0
      %3292 = vmatprep.mubr.bf16.mxu0 0
      %3293 = vmatmul.mubr.bf16.gmra.mxu0 %v3230
      %v3294 = vpop.f32.mrf.mxu0
      %v3295 = vadd.f32 0.0, %v3294
      %v3296 = vpop.f32.mrf.mxu0
      %v3297 = vpop.f32.mrf.mxu0
      %v3298 = vadd.f32 0.0, %v3297
      %v3299 = vpop.f32.mrf.mxu0
      %3300 = vmatprep.mubr.bf16.mxu0 0
      %3301 = vmatmul.mubr.bf16.gmra.mxu0 %v3232
      %v3302 = vpop.f32.mrf.mxu0
      %v3303 = vadd.f32 0.0, %v3302
      %v3304 = vpop.f32.mrf.mxu0
      %v3305 = vpop.f32.mrf.mxu0
      %v3306 = vadd.f32 0.0, %v3305
      %v3307 = vpop.f32.mrf.mxu0
      %3308 = vmatprep.mubr.bf16.mxu0 0
      %3309 = vmatmul.mubr.bf16.gmra.mxu0 %v3234
      %v3310 = vpop.f32.mrf.mxu0
      %v3311 = vadd.f32 0.0, %v3310
      %v3312 = vpop.f32.mrf.mxu0
      %v3313 = vpop.f32.mrf.mxu0
      %v3314 = vadd.f32 0.0, %v3313
      %v3315 = vpop.f32.mrf.mxu0
      %3316 = vmatprep.mubr.bf16.mxu0 0
      %3317 = vmatmul.mubr.bf16.gmra.mxu0 %v3236
      %v3318 = vpop.f32.mrf.mxu0
      %v3319 = vadd.f32 0.0, %v3318
      %v3320 = vpop.f32.mrf.mxu0
      %v3321 = vpop.f32.mrf.mxu0
      %v3322 = vadd.f32 0.0, %v3321
      %v3323 = vpop.f32.mrf.mxu0
      %3324 = vmatprep.mubr.bf16.mxu0 0
      %3325 = vmatmul.mubr.bf16.gmra.mxu0 %v3239
      %v3326 = vpop.f32.mrf.mxu0
      %v3327 = vadd.f32 0.0, %v3326
      %v3328 = vpop.f32.mrf.mxu0
      %v3329 = vpop.f32.mrf.mxu0
      %v3330 = vpop.f32.mrf.mxu0
      %3331 = vdwg.mxu0
      %v3332 = vadd.f32 %v3097, %v3279
      %v3333 = vadd.f32 %v3098, %v3282
      %v3334 = vadd.f32 %v3099, %v3287
      %v3335 = vadd.f32 %v3100, %v3290
      %v3336 = vadd.f32 %v3101, %v3295
      %v3337 = vadd.f32 %v3102, %v3298
      %v3338 = vadd.f32 %v3103, %v3303
      %v3339 = vadd.f32 %v3104, %v3306
      %v3340 = vadd.f32 %v3105, %v3311
      %v3341 = vadd.f32 %v3106, %v3314
      %v3342 = vadd.f32 %v3107, %v3319
      %v3343 = vadd.f32 %v3108, %v3322
      %v3344 = vadd.f32 %v3109, %v3327
      %vm3346 = vcmask 1045504
      %v3347 = vrot.slane %v2922, 2
      %v3348 = vrot.slane %v2923, 2
      %v3349 = vsel %vm3346, %v3347, %v3348
      %vm3351 = vcmask 1044480
      %v3352 = vrot.slane %v2927, 3
      %v3353 = vrot.slane %v2928, 3
      %v3354 = vsel %vm3351, %v3352, %v3353
      %vm3356 = vcmask 1043456
      %v3357 = vrot.slane %v2932, 4
      %v3358 = vrot.slane %v2933, 4
      %v3359 = vsel %vm3356, %v3357, %v3358
      %vm3361 = vcmask 1042432
      %v3362 = vrot.slane %v2937, 5
      %v3363 = vrot.slane %v2938, 5
      %v3364 = vsel %vm3361, %v3362, %v3363
      %vm3366 = vcmask 1041408
      %v3367 = vrot.slane %v2942, 6
      %v3368 = vrot.slane %v2943, 6
      %v3369 = vsel %vm3366, %v3367, %v3368
      %vm3371 = vcmask 1040384
      %v3372 = vrot.slane %v2947, 7
      %v3373 = vrot.slane %v2948, 7
      %v3374 = vsel %vm3371, %v3372, %v3373
      %v3377 = vsel %vm1587, %v3349, %v3352
      %v3380 = vsel %vm1591, %v3354, %v3357
      %v3383 = vsel %vm1594, %v3359, %v3362
      %v3386 = vsel %vm1597, %v3364, %v3367
      %v3389 = vsel %vm1600, %v3369, %v3372
      %v3391 = vsel %vm1604, %v3374, %v2952
      %s3392 = scalar_lea.vmem %s19, 4
      %v3393 = vld [vmem:[%s3392] sm:$0x3]
      %v3394 = vsel %vm1608, %v3377, 0
      %v3396 = vsel %vm1608, %v3380, 0
      %v3398 = vsel %vm1608, %v3383, 0
      %v3400 = vsel %vm1608, %v3386, 0
      %v3402 = vsel %vm1608, %v3389, 0
      %v3404 = vsel %vm1608, %v3391, 0
      %v3406 = vsel %vm1608, %v2953, 0
      %v3409 = vsel %vm1604, %v3393, 0
      %3411 = vmatprep.subr.bf16.mxu0 0
      %3412 = vmatpush1.bf16.msra.mxu0 0
      %3413 = vmatprep.subr.bf16.mxu0 0
      %3414 = vmatpush1.bf16.msra.mxu0 0
      %3415 = vmatprep.subr.bf16.mxu0 0
      %3416 = vmatpush1.bf16.msra.mxu0 0
      %3417 = vmatprep.subr.bf16.mxu0 0
      %3418 = vmatpush1.bf16.msra.mxu0 0
      %3419 = vmatprep.subr.bf16.mxu0 0
      %3420 = vmatpush1.bf16.msra.mxu0 0
      %3421 = vmatprep.subr.bf16.mxu0 0
      %3422 = vmatpush1.bf16.msra.mxu0 0
      %3423 = vmatprep.subr.bf16.mxu0 0
      %3424 = vmatpush1.bf16.msra.mxu0 0
      %3425 = vmatprep.subr.bf16.mxu0 0
      %3426 = vmatpush1.bf16.msra.mxu0 %v3409
      %3427 = vmatprep.subr.bf16.mxu0 0
      %3428 = vmatpush2.bf16.msra.mxu0 0
      %3429 = vmatprep.subr.bf16.mxu0 0
      %3430 = vmatpush2.bf16.msra.mxu0 0
      %3431 = vmatprep.subr.bf16.mxu0 0
      %3432 = vmatpush2.bf16.msra.mxu0 0
      %3433 = vmatprep.subr.bf16.mxu0 0
      %3434 = vmatpush2.bf16.msra.mxu0 0
      %3435 = vmatprep.subr.bf16.mxu0 0
      %3436 = vmatpush2.bf16.msra.mxu0 0
      %3437 = vmatprep.subr.bf16.mxu0 0
      %3438 = vmatpush2.bf16.msra.mxu0 0
      %3439 = vmatprep.subr.bf16.mxu0 0
      %3440 = vmatpush2.bf16.msra.mxu0 0
      %3441 = vmatprep.subr.bf16.mxu0 0
      %3442 = vmatpush2.bf16.msra.mxu0 0
      %3443 = vmatprep.mubr.bf16.mxu0 0
      %3444 = vmatmul.mubr.bf16.gmra.mxu0 %v3394
      %v3445 = vpop.f32.mrf.mxu0
      %v3446 = vadd.f32 0.0, %v3445
      %v3447 = vpop.f32.mrf.mxu0
      %v3448 = vpop.f32.mrf.mxu0
      %v3449 = vadd.f32 0.0, %v3448
      %v3450 = vpop.f32.mrf.mxu0
      %3451 = vmatprep.mubr.bf16.mxu0 0
      %3452 = vmatmul.mubr.bf16.gmra.mxu0 %v3396
      %v3453 = vpop.f32.mrf.mxu0
      %v3454 = vadd.f32 0.0, %v3453
      %v3455 = vpop.f32.mrf.mxu0
      %v3456 = vpop.f32.mrf.mxu0
      %v3457 = vadd.f32 0.0, %v3456
      %v3458 = vpop.f32.mrf.mxu0
      %3459 = vmatprep.mubr.bf16.mxu0 0
      %3460 = vmatmul.mubr.bf16.gmra.mxu0 %v3398
      %v3461 = vpop.f32.mrf.mxu0
      %v3462 = vadd.f32 0.0, %v3461
      %v3463 = vpop.f32.mrf.mxu0
      %v3464 = vpop.f32.mrf.mxu0
      %v3465 = vadd.f32 0.0, %v3464
      %v3466 = vpop.f32.mrf.mxu0
      %3467 = vmatprep.mubr.bf16.mxu0 0
      %3468 = vmatmul.mubr.bf16.gmra.mxu0 %v3400
      %v3469 = vpop.f32.mrf.mxu0
      %v3470 = vadd.f32 0.0, %v3469
      %v3471 = vpop.f32.mrf.mxu0
      %v3472 = vpop.f32.mrf.mxu0
      %v3473 = vadd.f32 0.0, %v3472
      %v3474 = vpop.f32.mrf.mxu0
      %3475 = vmatprep.mubr.bf16.mxu0 0
      %3476 = vmatmul.mubr.bf16.gmra.mxu0 %v3402
      %v3477 = vpop.f32.mrf.mxu0
      %v3478 = vadd.f32 0.0, %v3477
      %v3479 = vpop.f32.mrf.mxu0
      %v3480 = vpop.f32.mrf.mxu0
      %v3481 = vadd.f32 0.0, %v3480
      %v3482 = vpop.f32.mrf.mxu0
      %3483 = vmatprep.mubr.bf16.mxu0 0
      %3484 = vmatmul.mubr.bf16.gmra.mxu0 %v3404
      %v3485 = vpop.f32.mrf.mxu0
      %v3486 = vadd.f32 0.0, %v3485
      %v3487 = vpop.f32.mrf.mxu0
      %v3488 = vpop.f32.mrf.mxu0
      %v3489 = vadd.f32 0.0, %v3488
      %v3490 = vpop.f32.mrf.mxu0
      %3491 = vmatprep.mubr.bf16.mxu0 0
      %3492 = vmatmul.mubr.bf16.gmra.mxu0 %v3406
      %v3493 = vpop.f32.mrf.mxu0
      %v3494 = vadd.f32 0.0, %v3493
      %v3495 = vpop.f32.mrf.mxu0
      %v3496 = vpop.f32.mrf.mxu0
      %v3497 = vpop.f32.mrf.mxu0
      %3498 = vdwg.mxu0
      %v3499 = vadd.f32 %v3332, %v3446
      %v3500 = vadd.f32 %v3333, %v3449
      %v3501 = vadd.f32 %v3334, %v3454
      %v3502 = vadd.f32 %v3335, %v3457
      %v3503 = vadd.f32 %v3336, %v3462
      %v3504 = vadd.f32 %v3337, %v3465
      %v3505 = vadd.f32 %v3338, %v3470
      %v3506 = vadd.f32 %v3339, %v3473
      %v3507 = vadd.f32 %v3340, %v3478
      %v3508 = vadd.f32 %v3341, %v3481
      %v3509 = vadd.f32 %v3342, %v3486
      %v3510 = vadd.f32 %v3343, %v3489
      %v3511 = vadd.f32 %v3344, %v3494
      %v3512 = vrot.slane %v2927, 1
      %v3513 = vrot.slane %v2932, 2
      %v3514 = vrot.slane %v2937, 3
      %v3515 = vrot.slane %v2942, 4
      %v3516 = vrot.slane %v2947, 5
      %v3517 = vrot.slane %v2952, 6
      %v3519 = vrot.slane %v2957, 7
      %v3522 = vsel %vm1587, %v3512, %v3513
      %v3524 = vsel %vm1591, %v3513, %v3514
      %v3526 = vsel %vm1594, %v3514, %v3515
      %v3528 = vsel %vm1597, %v3515, %v3516
      %v3530 = vsel %vm1600, %v3516, %v3517
      %v3532 = vsel %vm1604, %v3517, %v3519
      %s3533 = scalar_lea.vmem %s19, 6
      %v3534 = vld [vmem:[%s3533] sm:$0x3]
      %v3535 = vsel %vm1608, %v3522, 0
      %v3537 = vsel %vm1608, %v3524, 0
      %v3539 = vsel %vm1608, %v3526, 0
      %v3541 = vsel %vm1608, %v3528, 0
      %v3543 = vsel %vm1608, %v3530, 0
      %v3545 = vsel %vm1608, %v3532, 0
      %v3547 = vsel %vm1608, %v3519, 0
      %v3550 = vsel %vm1604, %v3534, 0
      %3552 = vmatprep.subr.bf16.mxu0 0
      %3553 = vmatpush1.bf16.msra.mxu0 0
      %3554 = vmatprep.subr.bf16.mxu0 0
      %3555 = vmatpush1.bf16.msra.mxu0 0
      %3556 = vmatprep.subr.bf16.mxu0 0
      %3557 = vmatpush1.bf16.msra.mxu0 0
      %3558 = vmatprep.subr.bf16.mxu0 0
      %3559 = vmatpush1.bf16.msra.mxu0 0
      %3560 = vmatprep.subr.bf16.mxu0 0
      %3561 = vmatpush1.bf16.msra.mxu0 0
      %3562 = vmatprep.subr.bf16.mxu0 0
      %3563 = vmatpush1.bf16.msra.mxu0 0
      %3564 = vmatprep.subr.bf16.mxu0 0
      %3565 = vmatpush1.bf16.msra.mxu0 0
      %3566 = vmatprep.subr.bf16.mxu0 0
      %3567 = vmatpush1.bf16.msra.mxu0 %v3550
      %3568 = vmatprep.subr.bf16.mxu0 0
      %3569 = vmatpush2.bf16.msra.mxu0 0
      %3570 = vmatprep.subr.bf16.mxu0 0
      %3571 = vmatpush2.bf16.msra.mxu0 0
      %3572 = vmatprep.subr.bf16.mxu0 0
      %3573 = vmatpush2.bf16.msra.mxu0 0
      %3574 = vmatprep.subr.bf16.mxu0 0
      %3575 = vmatpush2.bf16.msra.mxu0 0
      %3576 = vmatprep.subr.bf16.mxu0 0
      %3577 = vmatpush2.bf16.msra.mxu0 0
      %3578 = vmatprep.subr.bf16.mxu0 0
      %3579 = vmatpush2.bf16.msra.mxu0 0
      %3580 = vmatprep.subr.bf16.mxu0 0
      %3581 = vmatpush2.bf16.msra.mxu0 0
      %3582 = vmatprep.subr.bf16.mxu0 0
      %3583 = vmatpush2.bf16.msra.mxu0 0
      %3584 = vmatprep.mubr.bf16.mxu0 0
      %3585 = vmatmul.mubr.bf16.gmra.mxu0 %v3535
      %v3586 = vpop.f32.mrf.mxu0
      %v3587 = vadd.f32 0.0, %v3586
      %v3588 = vpop.f32.mrf.mxu0
      %v3589 = vpop.f32.mrf.mxu0
      %v3590 = vadd.f32 0.0, %v3589
      %v3591 = vpop.f32.mrf.mxu0
      %3592 = vmatprep.mubr.bf16.mxu0 0
      %3593 = vmatmul.mubr.bf16.gmra.mxu0 %v3537
      %v3594 = vpop.f32.mrf.mxu0
      %v3595 = vadd.f32 0.0, %v3594
      %v3596 = vpop.f32.mrf.mxu0
      %v3597 = vpop.f32.mrf.mxu0
      %v3598 = vadd.f32 0.0, %v3597
      %v3599 = vpop.f32.mrf.mxu0
      %3600 = vmatprep.mubr.bf16.mxu0 0
      %3601 = vmatmul.mubr.bf16.gmra.mxu0 %v3539
      %v3602 = vpop.f32.mrf.mxu0
      %v3603 = vadd.f32 0.0, %v3602
      %v3604 = vpop.f32.mrf.mxu0
      %v3605 = vpop.f32.mrf.mxu0
      %v3606 = vadd.f32 0.0, %v3605
      %v3607 = vpop.f32.mrf.mxu0
      %3608 = vmatprep.mubr.bf16.mxu0 0
      %3609 = vmatmul.mubr.bf16.gmra.mxu0 %v3541
      %v3610 = vpop.f32.mrf.mxu0
      %v3611 = vadd.f32 0.0, %v3610
      %v3612 = vpop.f32.mrf.mxu0
      %v3613 = vpop.f32.mrf.mxu0
      %v3614 = vadd.f32 0.0, %v3613
      %v3615 = vpop.f32.mrf.mxu0
      %3616 = vmatprep.mubr.bf16.mxu0 0
      %3617 = vmatmul.mubr.bf16.gmra.mxu0 %v3543
      %v3618 = vpop.f32.mrf.mxu0
      %v3619 = vadd.f32 0.0, %v3618
      %v3620 = vpop.f32.mrf.mxu0
      %v3621 = vpop.f32.mrf.mxu0
      %v3622 = vadd.f32 0.0, %v3621
      %v3623 = vpop.f32.mrf.mxu0
      %3624 = vmatprep.mubr.bf16.mxu0 0
      %3625 = vmatmul.mubr.bf16.gmra.mxu0 %v3545
      %v3626 = vpop.f32.mrf.mxu0
      %v3627 = vadd.f32 0.0, %v3626
      %v3628 = vpop.f32.mrf.mxu0
      %v3629 = vpop.f32.mrf.mxu0
      %v3630 = vadd.f32 0.0, %v3629
      %v3631 = vpop.f32.mrf.mxu0
      %3632 = vmatprep.mubr.bf16.mxu0 0
      %3633 = vmatmul.mubr.bf16.gmra.mxu0 %v3547
      %v3634 = vpop.f32.mrf.mxu0
      %v3635 = vadd.f32 0.0, %v3634
      %v3636 = vpop.f32.mrf.mxu0
      %v3637 = vpop.f32.mrf.mxu0
      %v3638 = vpop.f32.mrf.mxu0
      %3639 = vdwg.mxu0
      %v3640 = vadd.f32 %v3499, %v3587
      %v3641 = vadd.f32 %v3500, %v3590
      %v3642 = vadd.f32 %v3501, %v3595
      %v3643 = vadd.f32 %v3502, %v3598
      %v3644 = vadd.f32 %v3503, %v3603
      %v3645 = vadd.f32 %v3504, %v3606
      %v3646 = vadd.f32 %v3505, %v3611
      %v3647 = vadd.f32 %v3506, %v3614
      %v3648 = vadd.f32 %v3507, %v3619
      %v3649 = vadd.f32 %v3508, %v3622
      %v3650 = vadd.f32 %v3509, %v3627
      %v3651 = vadd.f32 %v3510, %v3630
      %v3652 = vadd.f32 %v3511, %v3635
      %v3653 = vrot.slane %v3126, 1
      %v3654 = vrot.slane %v3129, 2
      %v3655 = vor.u32 %v3653, %v3654
      %v3656 = vrot.slane %v3134, 2
      %v3657 = vsel %vm3110, %v3655, %v3656
      %v3658 = vrot.slane %v3140, 2
      %v3659 = vrot.slane %v3143, 3
      %v3660 = vor.u32 %v3658, %v3659
      %v3661 = vrot.slane %v3148, 3
      %v3662 = vsel %vm3124, %v3660, %v3661
      %v3663 = vrot.slane %v3154, 3
      %v3664 = vrot.slane %v3157, 4
      %v3665 = vor.u32 %v3663, %v3664
      %v3666 = vrot.slane %v3162, 4
      %v3667 = vsel %vm3138, %v3665, %v3666
      %v3668 = vrot.slane %v3168, 4
      %v3669 = vrot.slane %v3171, 5
      %v3670 = vor.u32 %v3668, %v3669
      %v3671 = vrot.slane %v3176, 5
      %v3672 = vsel %vm3152, %v3670, %v3671
      %v3673 = vrot.slane %v3182, 5
      %v3674 = vrot.slane %v3185, 6
      %v3675 = vor.u32 %v3673, %v3674
      %v3676 = vrot.slane %v3190, 6
      %v3677 = vsel %vm3166, %v3675, %v3676
      %v3678 = vrot.slane %v3196, 6
      %v3679 = vrot.slane %v3199, 7
      %v3680 = vor.u32 %v3678, %v3679
      %v3681 = vrot.slane %v3203, 7
      %v3682 = vsel %vm3180, %v3680, %v3681
      %v3684 = vshrl.u32 %v2957, 16
      %v3686 = vrot.slane %v3684, 7
      %v3687 = vshll.u32 %v2957, 16
      %v3689 = vor.u32 %v3686, %v3687
      %v3691 = vshll.u32 %v2958, 16
      %v3693 = vsel %vm3194, %v3686, %v3691
      %v3696 = vsel %vm1587, %v3657, %v3660
      %v3699 = vsel %vm1591, %v3662, %v3665
      %v3702 = vsel %vm1594, %v3667, %v3670
      %v3705 = vsel %vm1597, %v3672, %v3675
      %v3708 = vsel %vm1600, %v3677, %v3680
      %v3711 = vsel %vm1604, %v3682, %v3689
      %s3712 = scalar_lea.vmem %s19, 8
      %v3713 = vld [vmem:[%s3712] sm:$0x3]
      %v3714 = vsel %vm1608, %v3696, 0
      %v3716 = vsel %vm1608, %v3699, 0
      %v3718 = vsel %vm1608, %v3702, 0
      %v3720 = vsel %vm1608, %v3705, 0
      %v3722 = vsel %vm1608, %v3708, 0
      %v3724 = vsel %vm1608, %v3711, 0
      %v3727 = vsel %vm1608, %v3693, 0
      %v3730 = vsel %vm1604, %v3713, 0
      %3732 = vmatprep.subr.bf16.mxu0 0
      %3733 = vmatpush1.bf16.msra.mxu0 0
      %3734 = vmatprep.subr.bf16.mxu0 0
      %3735 = vmatpush1.bf16.msra.mxu0 0
      %3736 = vmatprep.subr.bf16.mxu0 0
      %3737 = vmatpush1.bf16.msra.mxu0 0
      %3738 = vmatprep.subr.bf16.mxu0 0
      %3739 = vmatpush1.bf16.msra.mxu0 0
      %3740 = vmatprep.subr.bf16.mxu0 0
      %3741 = vmatpush1.bf16.msra.mxu0 0
      %3742 = vmatprep.subr.bf16.mxu0 0
      %3743 = vmatpush1.bf16.msra.mxu0 0
      %3744 = vmatprep.subr.bf16.mxu0 0
      %3745 = vmatpush1.bf16.msra.mxu0 0
      %3746 = vmatprep.subr.bf16.mxu0 0
      %3747 = vmatpush1.bf16.msra.mxu0 %v3730
      %3748 = vmatprep.subr.bf16.mxu0 0
      %3749 = vmatpush2.bf16.msra.mxu0 0
      %3750 = vmatprep.subr.bf16.mxu0 0
      %3751 = vmatpush2.bf16.msra.mxu0 0
      %3752 = vmatprep.subr.bf16.mxu0 0
      %3753 = vmatpush2.bf16.msra.mxu0 0
      %3754 = vmatprep.subr.bf16.mxu0 0
      %3755 = vmatpush2.bf16.msra.mxu0 0
      %3756 = vmatprep.subr.bf16.mxu0 0
      %3757 = vmatpush2.bf16.msra.mxu0 0
      %3758 = vmatprep.subr.bf16.mxu0 0
      %3759 = vmatpush2.bf16.msra.mxu0 0
      %3760 = vmatprep.subr.bf16.mxu0 0
      %3761 = vmatpush2.bf16.msra.mxu0 0
      %3762 = vmatprep.subr.bf16.mxu0 0
      %3763 = vmatpush2.bf16.msra.mxu0 0
      %3764 = vmatprep.mubr.bf16.mxu0 0
      %3765 = vmatmul.mubr.bf16.gmra.mxu0 %v3714
      %v3766 = vpop.f32.mrf.mxu0
      %v3767 = vadd.f32 0.0, %v3766
      %v3768 = vpop.f32.mrf.mxu0
      %v3769 = vpop.f32.mrf.mxu0
      %v3770 = vadd.f32 0.0, %v3769
      %v3771 = vpop.f32.mrf.mxu0
      %3772 = vmatprep.mubr.bf16.mxu0 0
      %3773 = vmatmul.mubr.bf16.gmra.mxu0 %v3716
      %v3774 = vpop.f32.mrf.mxu0
      %v3775 = vadd.f32 0.0, %v3774
      %v3776 = vpop.f32.mrf.mxu0
      %v3777 = vpop.f32.mrf.mxu0
      %v3778 = vadd.f32 0.0, %v3777
      %v3779 = vpop.f32.mrf.mxu0
      %3780 = vmatprep.mubr.bf16.mxu0 0
      %3781 = vmatmul.mubr.bf16.gmra.mxu0 %v3718
      %v3782 = vpop.f32.mrf.mxu0
      %v3783 = vadd.f32 0.0, %v3782
      %v3784 = vpop.f32.mrf.mxu0
      %v3785 = vpop.f32.mrf.mxu0
      %v3786 = vadd.f32 0.0, %v3785
      %v3787 = vpop.f32.mrf.mxu0
      %3788 = vmatprep.mubr.bf16.mxu0 0
      %3789 = vmatmul.mubr.bf16.gmra.mxu0 %v3720
      %v3790 = vpop.f32.mrf.mxu0
      %v3791 = vadd.f32 0.0, %v3790
      %v3792 = vpop.f32.mrf.mxu0
      %v3793 = vpop.f32.mrf.mxu0
      %v3794 = vadd.f32 0.0, %v3793
      %v3795 = vpop.f32.mrf.mxu0
      %3796 = vmatprep.mubr.bf16.mxu0 0
      %3797 = vmatmul.mubr.bf16.gmra.mxu0 %v3722
      %v3798 = vpop.f32.mrf.mxu0
      %v3799 = vadd.f32 0.0, %v3798
      %v3800 = vpop.f32.mrf.mxu0
      %v3801 = vpop.f32.mrf.mxu0
      %v3802 = vadd.f32 0.0, %v3801
      %v3803 = vpop.f32.mrf.mxu0
      %3804 = vmatprep.mubr.bf16.mxu0 0
      %3805 = vmatmul.mubr.bf16.gmra.mxu0 %v3724
      %v3806 = vpop.f32.mrf.mxu0
      %v3807 = vadd.f32 0.0, %v3806
      %v3808 = vpop.f32.mrf.mxu0
      %v3809 = vpop.f32.mrf.mxu0
      %v3810 = vadd.f32 0.0, %v3809
      %v3811 = vpop.f32.mrf.mxu0
      %3812 = vmatprep.mubr.bf16.mxu0 0
      %3813 = vmatmul.mubr.bf16.gmra.mxu0 %v3727
      %v3814 = vpop.f32.mrf.mxu0
      %v3815 = vadd.f32 0.0, %v3814
      %v3816 = vpop.f32.mrf.mxu0
      %v3817 = vpop.f32.mrf.mxu0
      %v3818 = vpop.f32.mrf.mxu0
      %3819 = vdwg.mxu0
      %v3820 = vadd.f32 %v3640, %v3767
      %v3821 = vadd.f32 %v3641, %v3770
      %v3822 = vadd.f32 %v3642, %v3775
      %v3823 = vadd.f32 %v3643, %v3778
      %v3824 = vadd.f32 %v3644, %v3783
      %v3825 = vadd.f32 %v3645, %v3786
      %v3826 = vadd.f32 %v3646, %v3791
      %v3827 = vadd.f32 %v3647, %v3794
      %v3828 = vadd.f32 %v3648, %v3799
      %v3829 = vadd.f32 %v3649, %v3802
      %v3830 = vadd.f32 %v3650, %v3807
      %v3831 = vadd.f32 %v3651, %v3810
      %v3832 = vadd.f32 %v3652, %v3815
      %v3833 = vrot.slane %v2928, 2
      %v3834 = vsel %vm3346, %v2967, %v3833
      %v3835 = vrot.slane %v2933, 3
      %v3836 = vsel %vm3351, %v2969, %v3835
      %v3837 = vrot.slane %v2938, 4
      %v3838 = vsel %vm3356, %v2971, %v3837
      %v3839 = vrot.slane %v2943, 5
      %v3840 = vsel %vm3361, %v2973, %v3839
      %v3841 = vrot.slane %v2948, 6
      %v3842 = vsel %vm3366, %v2975, %v3841
      %v3844 = vrot.slane %v2953, 7
      %v3845 = vsel %vm3371, %v2977, %v3844
      %v3847 = vsel %vm1587, %v3834, %v2969
      %v3849 = vsel %vm1591, %v3836, %v2971
      %v3851 = vsel %vm1594, %v3838, %v2973
      %v3853 = vsel %vm1597, %v3840, %v2975
      %v3855 = vsel %vm1600, %v3842, %v2977
      %v3857 = vsel %vm1604, %v3845, %v2957
      %s3858 = scalar_lea.vmem %s19, 10
      %v3859 = vld [vmem:[%s3858] sm:$0x3]
      %v3860 = vsel %vm1608, %v3847, 0
      %v3862 = vsel %vm1608, %v3849, 0
      %v3864 = vsel %vm1608, %v3851, 0
      %v3866 = vsel %vm1608, %v3853, 0
      %v3868 = vsel %vm1608, %v3855, 0
      %v3870 = vsel %vm1608, %v3857, 0
      %v3872 = vsel %vm1608, %v2958, 0
      %v3875 = vsel %vm1604, %v3859, 0
      %3877 = vmatprep.subr.bf16.mxu0 0
      %3878 = vmatpush1.bf16.msra.mxu0 0
      %3879 = vmatprep.subr.bf16.mxu0 0
      %3880 = vmatpush1.bf16.msra.mxu0 0
      %3881 = vmatprep.subr.bf16.mxu0 0
      %3882 = vmatpush1.bf16.msra.mxu0 0
      %3883 = vmatprep.subr.bf16.mxu0 0
      %3884 = vmatpush1.bf16.msra.mxu0 0
      %3885 = vmatprep.subr.bf16.mxu0 0
      %3886 = vmatpush1.bf16.msra.mxu0 0
      %3887 = vmatprep.subr.bf16.mxu0 0
      %3888 = vmatpush1.bf16.msra.mxu0 0
      %3889 = vmatprep.subr.bf16.mxu0 0
      %3890 = vmatpush1.bf16.msra.mxu0 0
      %3891 = vmatprep.subr.bf16.mxu0 0
      %3892 = vmatpush1.bf16.msra.mxu0 %v3875
      %3893 = vmatprep.subr.bf16.mxu0 0
      %3894 = vmatpush2.bf16.msra.mxu0 0
      %3895 = vmatprep.subr.bf16.mxu0 0
      %3896 = vmatpush2.bf16.msra.mxu0 0
      %3897 = vmatprep.subr.bf16.mxu0 0
      %3898 = vmatpush2.bf16.msra.mxu0 0
      %3899 = vmatprep.subr.bf16.mxu0 0
      %3900 = vmatpush2.bf16.msra.mxu0 0
      %3901 = vmatprep.subr.bf16.mxu0 0
      %3902 = vmatpush2.bf16.msra.mxu0 0
      %3903 = vmatprep.subr.bf16.mxu0 0
      %3904 = vmatpush2.bf16.msra.mxu0 0
      %3905 = vmatprep.subr.bf16.mxu0 0
      %3906 = vmatpush2.bf16.msra.mxu0 0
      %3907 = vmatprep.subr.bf16.mxu0 0
      %3908 = vmatpush2.bf16.msra.mxu0 0
      %3909 = vmatprep.mubr.bf16.mxu0 0
      %3910 = vmatmul.mubr.bf16.gmra.mxu0 %v3860
      %v3911 = vpop.f32.mrf.mxu0
      %v3912 = vadd.f32 0.0, %v3911
      %v3913 = vpop.f32.mrf.mxu0
      %v3914 = vpop.f32.mrf.mxu0
      %v3915 = vadd.f32 0.0, %v3914
      %v3916 = vpop.f32.mrf.mxu0
      %3917 = vmatprep.mubr.bf16.mxu0 0
      %3918 = vmatmul.mubr.bf16.gmra.mxu0 %v3862
      %v3919 = vpop.f32.mrf.mxu0
      %v3920 = vadd.f32 0.0, %v3919
      %v3921 = vpop.f32.mrf.mxu0
      %v3922 = vpop.f32.mrf.mxu0
      %v3923 = vadd.f32 0.0, %v3922
      %v3924 = vpop.f32.mrf.mxu0
      %3925 = vmatprep.mubr.bf16.mxu0 0
      %3926 = vmatmul.mubr.bf16.gmra.mxu0 %v3864
      %v3927 = vpop.f32.mrf.mxu0
      %v3928 = vadd.f32 0.0, %v3927
      %v3929 = vpop.f32.mrf.mxu0
      %v3930 = vpop.f32.mrf.mxu0
      %v3931 = vadd.f32 0.0, %v3930
      %v3932 = vpop.f32.mrf.mxu0
      %3933 = vmatprep.mubr.bf16.mxu0 0
      %3934 = vmatmul.mubr.bf16.gmra.mxu0 %v3866
      %v3935 = vpop.f32.mrf.mxu0
      %v3936 = vadd.f32 0.0, %v3935
      %v3937 = vpop.f32.mrf.mxu0
      %v3938 = vpop.f32.mrf.mxu0
      %v3939 = vadd.f32 0.0, %v3938
      %v3940 = vpop.f32.mrf.mxu0
      %3941 = vmatprep.mubr.bf16.mxu0 0
      %3942 = vmatmul.mubr.bf16.gmra.mxu0 %v3868
      %v3943 = vpop.f32.mrf.mxu0
      %v3944 = vadd.f32 0.0, %v3943
      %v3945 = vpop.f32.mrf.mxu0
      %v3946 = vpop.f32.mrf.mxu0
      %v3947 = vadd.f32 0.0, %v3946
      %v3948 = vpop.f32.mrf.mxu0
      %3949 = vmatprep.mubr.bf16.mxu0 0
      %3950 = vmatmul.mubr.bf16.gmra.mxu0 %v3870
      %v3951 = vpop.f32.mrf.mxu0
      %v3952 = vadd.f32 0.0, %v3951
      %v3953 = vpop.f32.mrf.mxu0
      %v3954 = vpop.f32.mrf.mxu0
      %v3955 = vadd.f32 0.0, %v3954
      %v3956 = vpop.f32.mrf.mxu0
      %3957 = vmatprep.mubr.bf16.mxu0 0
      %3958 = vmatmul.mubr.bf16.gmra.mxu0 %v3872
      %v3959 = vpop.f32.mrf.mxu0
      %v3960 = vadd.f32 0.0, %v3959
      %v3961 = vpop.f32.mrf.mxu0
      %v3962 = vpop.f32.mrf.mxu0
      %v3963 = vpop.f32.mrf.mxu0
      %3964 = vdwg.mxu0
      %v3965 = vadd.f32 %v3820, %v3912
      %v3966 = vadd.f32 %v3821, %v3915
      %v3967 = vadd.f32 %v3822, %v3920
      %v3968 = vadd.f32 %v3823, %v3923
      %v3969 = vadd.f32 %v3824, %v3928
      %v3970 = vadd.f32 %v3825, %v3931
      %v3971 = vadd.f32 %v3826, %v3936
      %v3972 = vadd.f32 %v3827, %v3939
      %v3973 = vadd.f32 %v3828, %v3944
      %v3974 = vadd.f32 %v3829, %v3947
      %v3975 = vadd.f32 %v3830, %v3952
      %v3976 = vadd.f32 %v3831, %v3955
      %v3977 = vadd.f32 %v3832, %v3960
      %v3978 = vrot.slane %v2932, 1
      %v3979 = vrot.slane %v2937, 2
      %v3980 = vrot.slane %v2942, 3
      %v3981 = vrot.slane %v2947, 4
      %v3982 = vrot.slane %v2952, 5
      %v3983 = vrot.slane %v2957, 6
      %v3985 = vrot.slane %v2962, 7
      %v3988 = vsel %vm1587, %v3978, %v3979
      %v3990 = vsel %vm1591, %v3979, %v3980
      %v3992 = vsel %vm1594, %v3980, %v3981
      %v3994 = vsel %vm1597, %v3981, %v3982
      %v3996 = vsel %vm1600, %v3982, %v3983
      %v3998 = vsel %vm1604, %v3983, %v3985
      %s3999 = scalar_lea.vmem %s19, 12
      %v4000 = vld [vmem:[%s3999] sm:$0x3]
      %v4001 = vsel %vm1608, %v3988, 0
      %v4003 = vsel %vm1608, %v3990, 0
      %v4005 = vsel %vm1608, %v3992, 0
      %v4007 = vsel %vm1608, %v3994, 0
      %v4009 = vsel %vm1608, %v3996, 0
      %v4011 = vsel %vm1608, %v3998, 0
      %v4013 = vsel %vm1608, %v3985, 0
      %v4016 = vsel %vm1604, %v4000, 0
      %4018 = vmatprep.subr.bf16.mxu0 0
      %4019 = vmatpush1.bf16.msra.mxu0 0
      %4020 = vmatprep.subr.bf16.mxu0 0
      %4021 = vmatpush1.bf16.msra.mxu0 0
      %4022 = vmatprep.subr.bf16.mxu0 0
      %4023 = vmatpush1.bf16.msra.mxu0 0
      %4024 = vmatprep.subr.bf16.mxu0 0
      %4025 = vmatpush1.bf16.msra.mxu0 0
      %4026 = vmatprep.subr.bf16.mxu0 0
      %4027 = vmatpush1.bf16.msra.mxu0 0
      %4028 = vmatprep.subr.bf16.mxu0 0
      %4029 = vmatpush1.bf16.msra.mxu0 0
      %4030 = vmatprep.subr.bf16.mxu0 0
      %4031 = vmatpush1.bf16.msra.mxu0 0
      %4032 = vmatprep.subr.bf16.mxu0 0
      %4033 = vmatpush1.bf16.msra.mxu0 %v4016
      %4034 = vmatprep.subr.bf16.mxu0 0
      %4035 = vmatpush2.bf16.msra.mxu0 0
      %4036 = vmatprep.subr.bf16.mxu0 0
      %4037 = vmatpush2.bf16.msra.mxu0 0
      %4038 = vmatprep.subr.bf16.mxu0 0
      %4039 = vmatpush2.bf16.msra.mxu0 0
      %4040 = vmatprep.subr.bf16.mxu0 0
      %4041 = vmatpush2.bf16.msra.mxu0 0
      %4042 = vmatprep.subr.bf16.mxu0 0
      %4043 = vmatpush2.bf16.msra.mxu0 0
      %4044 = vmatprep.subr.bf16.mxu0 0
      %4045 = vmatpush2.bf16.msra.mxu0 0
      %4046 = vmatprep.subr.bf16.mxu0 0
      %4047 = vmatpush2.bf16.msra.mxu0 0
      %4048 = vmatprep.subr.bf16.mxu0 0
      %4049 = vmatpush2.bf16.msra.mxu0 0
      %4050 = vmatprep.mubr.bf16.mxu0 0
      %4051 = vmatmul.mubr.bf16.gmra.mxu0 %v4001
      %v4052 = vpop.f32.mrf.mxu0
      %v4053 = vadd.f32 0.0, %v4052
      %v4054 = vpop.f32.mrf.mxu0
      %v4055 = vpop.f32.mrf.mxu0
      %v4056 = vadd.f32 0.0, %v4055
      %v4057 = vpop.f32.mrf.mxu0
      %4058 = vmatprep.mubr.bf16.mxu0 0
      %4059 = vmatmul.mubr.bf16.gmra.mxu0 %v4003
      %v4060 = vpop.f32.mrf.mxu0
      %v4061 = vadd.f32 0.0, %v4060
      %v4062 = vpop.f32.mrf.mxu0
      %v4063 = vpop.f32.mrf.mxu0
      %v4064 = vadd.f32 0.0, %v4063
      %v4065 = vpop.f32.mrf.mxu0
      %4066 = vmatprep.mubr.bf16.mxu0 0
      %4067 = vmatmul.mubr.bf16.gmra.mxu0 %v4005
      %v4068 = vpop.f32.mrf.mxu0
      %v4069 = vadd.f32 0.0, %v4068
      %v4070 = vpop.f32.mrf.mxu0
      %v4071 = vpop.f32.mrf.mxu0
      %v4072 = vadd.f32 0.0, %v4071
      %v4073 = vpop.f32.mrf.mxu0
      %4074 = vmatprep.mubr.bf16.mxu0 0
      %4075 = vmatmul.mubr.bf16.gmra.mxu0 %v4007
      %v4076 = vpop.f32.mrf.mxu0
      %v4077 = vadd.f32 0.0, %v4076
      %v4078 = vpop.f32.mrf.mxu0
      %v4079 = vpop.f32.mrf.mxu0
      %v4080 = vadd.f32 0.0, %v4079
      %v4081 = vpop.f32.mrf.mxu0
      %4082 = vmatprep.mubr.bf16.mxu0 0
      %4083 = vmatmul.mubr.bf16.gmra.mxu0 %v4009
      %v4084 = vpop.f32.mrf.mxu0
      %v4085 = vadd.f32 0.0, %v4084
      %v4086 = vpop.f32.mrf.mxu0
      %v4087 = vpop.f32.mrf.mxu0
      %v4088 = vadd.f32 0.0, %v4087
      %v4089 = vpop.f32.mrf.mxu0
      %4090 = vmatprep.mubr.bf16.mxu0 0
      %4091 = vmatmul.mubr.bf16.gmra.mxu0 %v4011
      %v4092 = vpop.f32.mrf.mxu0
      %v4093 = vadd.f32 0.0, %v4092
      %v4094 = vpop.f32.mrf.mxu0
      %v4095 = vpop.f32.mrf.mxu0
      %v4096 = vadd.f32 0.0, %v4095
      %v4097 = vpop.f32.mrf.mxu0
      %4098 = vmatprep.mubr.bf16.mxu0 0
      %4099 = vmatmul.mubr.bf16.gmra.mxu0 %v4013
      %v4100 = vpop.f32.mrf.mxu0
      %v4101 = vadd.f32 0.0, %v4100
      %v4102 = vpop.f32.mrf.mxu0
      %v4103 = vpop.f32.mrf.mxu0
      %v4104 = vpop.f32.mrf.mxu0
      %4105 = vdwg.mxu0
      %v4106 = vadd.f32 %v3965, %v4053
      %v4107 = vadd.f32 %v3966, %v4056
      %v4108 = vadd.f32 %v3967, %v4061
      %v4109 = vadd.f32 %v3968, %v4064
      %v4110 = vadd.f32 %v3969, %v4069
      %v4111 = vadd.f32 %v3970, %v4072
      %v4112 = vadd.f32 %v3971, %v4077
      %v4113 = vadd.f32 %v3972, %v4080
      %v4114 = vadd.f32 %v3973, %v4085
      %v4115 = vadd.f32 %v3974, %v4088
      %v4116 = vadd.f32 %v3975, %v4093
      %v4117 = vadd.f32 %v3976, %v4096
      %v4118 = vadd.f32 %v3977, %v4101
      %v4119 = vrot.slane %v3140, 1
      %v4120 = vrot.slane %v3143, 2
      %v4121 = vor.u32 %v4119, %v4120
      %v4122 = vrot.slane %v3148, 2
      %v4123 = vsel %vm3110, %v4121, %v4122
      %v4124 = vrot.slane %v3154, 2
      %v4125 = vrot.slane %v3157, 3
      %v4126 = vor.u32 %v4124, %v4125
      %v4127 = vrot.slane %v3162, 3
      %v4128 = vsel %vm3124, %v4126, %v4127
      %v4129 = vrot.slane %v3168, 3
      %v4130 = vrot.slane %v3171, 4
      %v4131 = vor.u32 %v4129, %v4130
      %v4132 = vrot.slane %v3176, 4
      %v4133 = vsel %vm3138, %v4131, %v4132
      %v4134 = vrot.slane %v3182, 4
      %v4135 = vrot.slane %v3185, 5
      %v4136 = vor.u32 %v4134, %v4135
      %v4137 = vrot.slane %v3190, 5
      %v4138 = vsel %vm3152, %v4136, %v4137
      %v4139 = vrot.slane %v3196, 5
      %v4140 = vrot.slane %v3199, 6
      %v4141 = vor.u32 %v4139, %v4140
      %v4142 = vrot.slane %v3203, 6
      %v4143 = vsel %vm3166, %v4141, %v4142
      %v4144 = vrot.slane %v3684, 6
      %v4145 = vrot.slane %v3687, 7
      %v4146 = vor.u32 %v4144, %v4145
      %v4147 = vrot.slane %v3691, 7
      %v4148 = vsel %vm3180, %v4146, %v4147
      %v4150 = vshrl.u32 %v2962, 16
      %v4152 = vrot.slane %v4150, 7
      %v4153 = vshll.u32 %v2962, 16
      %v4155 = vor.u32 %v4152, %v4153
      %v4157 = vshll.u32 %v2963, 16
      %v4159 = vsel %vm3194, %v4152, %v4157
      %v4162 = vsel %vm1587, %v4123, %v4126
      %v4165 = vsel %vm1591, %v4128, %v4131
      %v4168 = vsel %vm1594, %v4133, %v4136
      %v4171 = vsel %vm1597, %v4138, %v4141
      %v4174 = vsel %vm1600, %v4143, %v4146
      %v4177 = vsel %vm1604, %v4148, %v4155
      %s4178 = scalar_lea.vmem %s19, 14
      %v4179 = vld [vmem:[%s4178] sm:$0x3]
      %v4180 = vsel %vm1608, %v4162, 0
      %v4182 = vsel %vm1608, %v4165, 0
      %v4184 = vsel %vm1608, %v4168, 0
      %v4186 = vsel %vm1608, %v4171, 0
      %v4188 = vsel %vm1608, %v4174, 0
      %v4190 = vsel %vm1608, %v4177, 0
      %v4193 = vsel %vm1608, %v4159, 0
      %v4196 = vsel %vm1604, %v4179, 0
      %4198 = vmatprep.subr.bf16.mxu0 0
      %4199 = vmatpush1.bf16.msra.mxu0 0
      %4200 = vmatprep.subr.bf16.mxu0 0
      %4201 = vmatpush1.bf16.msra.mxu0 0
      %4202 = vmatprep.subr.bf16.mxu0 0
      %4203 = vmatpush1.bf16.msra.mxu0 0
      %4204 = vmatprep.subr.bf16.mxu0 0
      %4205 = vmatpush1.bf16.msra.mxu0 0
      %4206 = vmatprep.subr.bf16.mxu0 0
      %4207 = vmatpush1.bf16.msra.mxu0 0
      %4208 = vmatprep.subr.bf16.mxu0 0
      %4209 = vmatpush1.bf16.msra.mxu0 0
      %4210 = vmatprep.subr.bf16.mxu0 0
      %4211 = vmatpush1.bf16.msra.mxu0 0
      %4212 = vmatprep.subr.bf16.mxu0 0
      %4213 = vmatpush1.bf16.msra.mxu0 %v4196
      %4214 = vmatprep.subr.bf16.mxu0 0
      %4215 = vmatpush2.bf16.msra.mxu0 0
      %4216 = vmatprep.subr.bf16.mxu0 0
      %4217 = vmatpush2.bf16.msra.mxu0 0
      %4218 = vmatprep.subr.bf16.mxu0 0
      %4219 = vmatpush2.bf16.msra.mxu0 0
      %4220 = vmatprep.subr.bf16.mxu0 0
      %4221 = vmatpush2.bf16.msra.mxu0 0
      %4222 = vmatprep.subr.bf16.mxu0 0
      %4223 = vmatpush2.bf16.msra.mxu0 0
      %4224 = vmatprep.subr.bf16.mxu0 0
      %4225 = vmatpush2.bf16.msra.mxu0 0
      %4226 = vmatprep.subr.bf16.mxu0 0
      %4227 = vmatpush2.bf16.msra.mxu0 0
      %4228 = vmatprep.subr.bf16.mxu0 0
      %4229 = vmatpush2.bf16.msra.mxu0 0
      %4230 = vmatprep.mubr.bf16.mxu0 0
      %4231 = vmatmul.mubr.bf16.gmra.mxu0 %v4180
      %v4232 = vpop.f32.mrf.mxu0
      %v4233 = vadd.f32 0.0, %v4232
      %v4234 = vpop.f32.mrf.mxu0
      %v4235 = vpop.f32.mrf.mxu0
      %v4236 = vadd.f32 0.0, %v4235
      %v4237 = vpop.f32.mrf.mxu0
      %4238 = vmatprep.mubr.bf16.mxu0 0
      %4239 = vmatmul.mubr.bf16.gmra.mxu0 %v4182
      %v4240 = vpop.f32.mrf.mxu0
      %v4241 = vadd.f32 0.0, %v4240
      %v4242 = vpop.f32.mrf.mxu0
      %v4243 = vpop.f32.mrf.mxu0
      %v4244 = vadd.f32 0.0, %v4243
      %v4245 = vpop.f32.mrf.mxu0
      %4246 = vmatprep.mubr.bf16.mxu0 0
      %4247 = vmatmul.mubr.bf16.gmra.mxu0 %v4184
      %v4248 = vpop.f32.mrf.mxu0
      %v4249 = vadd.f32 0.0, %v4248
      %v4250 = vpop.f32.mrf.mxu0
      %v4251 = vpop.f32.mrf.mxu0
      %v4252 = vadd.f32 0.0, %v4251
      %v4253 = vpop.f32.mrf.mxu0
      %4254 = vmatprep.mubr.bf16.mxu0 0
      %4255 = vmatmul.mubr.bf16.gmra.mxu0 %v4186
      %v4256 = vpop.f32.mrf.mxu0
      %v4257 = vadd.f32 0.0, %v4256
      %v4258 = vpop.f32.mrf.mxu0
      %v4259 = vpop.f32.mrf.mxu0
      %v4260 = vadd.f32 0.0, %v4259
      %v4261 = vpop.f32.mrf.mxu0
      %4262 = vmatprep.mubr.bf16.mxu0 0
      %4263 = vmatmul.mubr.bf16.gmra.mxu0 %v4188
      %v4264 = vpop.f32.mrf.mxu0
      %v4265 = vadd.f32 0.0, %v4264
      %v4266 = vpop.f32.mrf.mxu0
      %v4267 = vpop.f32.mrf.mxu0
      %v4268 = vadd.f32 0.0, %v4267
      %v4269 = vpop.f32.mrf.mxu0
      %4270 = vmatprep.mubr.bf16.mxu0 0
      %4271 = vmatmul.mubr.bf16.gmra.mxu0 %v4190
      %v4272 = vpop.f32.mrf.mxu0
      %v4273 = vadd.f32 0.0, %v4272
      %v4274 = vpop.f32.mrf.mxu0
      %v4275 = vpop.f32.mrf.mxu0
      %v4276 = vadd.f32 0.0, %v4275
      %v4277 = vpop.f32.mrf.mxu0
      %4278 = vmatprep.mubr.bf16.mxu0 0
      %4279 = vmatmul.mubr.bf16.gmra.mxu0 %v4193
      %v4280 = vpop.f32.mrf.mxu0
      %v4281 = vadd.f32 0.0, %v4280
      %v4282 = vpop.f32.mrf.mxu0
      %v4283 = vpop.f32.mrf.mxu0
      %v4284 = vpop.f32.mrf.mxu0
      %4285 = vdwg.mxu0
      %v4286 = vadd.f32 %v4106, %v4233
      %v4287 = vadd.f32 %v4107, %v4236
      %v4288 = vadd.f32 %v4108, %v4241
      %v4289 = vadd.f32 %v4109, %v4244
      %v4290 = vadd.f32 %v4110, %v4249
      %v4291 = vadd.f32 %v4111, %v4252
      %v4292 = vadd.f32 %v4112, %v4257
      %v4293 = vadd.f32 %v4113, %v4260
      %v4294 = vadd.f32 %v4114, %v4265
      %v4295 = vadd.f32 %v4115, %v4268
      %v4296 = vadd.f32 %v4116, %v4273
      %v4297 = vadd.f32 %v4117, %v4276
      %v4298 = vadd.f32 %v4118, %v4281
      %v4299 = vrot.slane %v2933, 2
      %v4300 = vsel %vm3346, %v3513, %v4299
      %v4301 = vrot.slane %v2938, 3
      %v4302 = vsel %vm3351, %v3514, %v4301
      %v4303 = vrot.slane %v2943, 4
      %v4304 = vsel %vm3356, %v3515, %v4303
      %v4305 = vrot.slane %v2948, 5
      %v4306 = vsel %vm3361, %v3516, %v4305
      %v4307 = vrot.slane %v2953, 6
      %v4308 = vsel %vm3366, %v3517, %v4307
      %v4310 = vrot.slane %v2958, 7
      %v4311 = vsel %vm3371, %v3519, %v4310
      %v4313 = vsel %vm1587, %v4300, %v3514
      %v4315 = vsel %vm1591, %v4302, %v3515
      %v4317 = vsel %vm1594, %v4304, %v3516
      %v4319 = vsel %vm1597, %v4306, %v3517
      %v4321 = vsel %vm1600, %v4308, %v3519
      %v4323 = vsel %vm1604, %v4311, %v2962
      %s4324 = scalar_lea.vmem %s19, 16
      %v4325 = vld [vmem:[%s4324] sm:$0x3]
      %v4326 = vsel %vm1608, %v4313, 0
      %v4328 = vsel %vm1608, %v4315, 0
      %v4330 = vsel %vm1608, %v4317, 0
      %v4332 = vsel %vm1608, %v4319, 0
      %v4334 = vsel %vm1608, %v4321, 0
      %v4336 = vsel %vm1608, %v4323, 0
      %v4338 = vsel %vm1608, %v2963, 0
      %v4341 = vsel %vm1604, %v4325, 0
      %4343 = vmatprep.subr.bf16.mxu0 0
      %4344 = vmatpush1.bf16.msra.mxu0 0
      %4345 = vmatprep.subr.bf16.mxu0 0
      %4346 = vmatpush1.bf16.msra.mxu0 0
      %4347 = vmatprep.subr.bf16.mxu0 0
      %4348 = vmatpush1.bf16.msra.mxu0 0
      %4349 = vmatprep.subr.bf16.mxu0 0
      %4350 = vmatpush1.bf16.msra.mxu0 0
      %4351 = vmatprep.subr.bf16.mxu0 0
      %4352 = vmatpush1.bf16.msra.mxu0 0
      %4353 = vmatprep.subr.bf16.mxu0 0
      %4354 = vmatpush1.bf16.msra.mxu0 0
      %4355 = vmatprep.subr.bf16.mxu0 0
      %4356 = vmatpush1.bf16.msra.mxu0 0
      %4357 = vmatprep.subr.bf16.mxu0 0
      %4358 = vmatpush1.bf16.msra.mxu0 %v4341
      %4359 = vmatprep.subr.bf16.mxu0 0
      %4360 = vmatpush2.bf16.msra.mxu0 0
      %4361 = vmatprep.subr.bf16.mxu0 0
      %4362 = vmatpush2.bf16.msra.mxu0 0
      %4363 = vmatprep.subr.bf16.mxu0 0
      %4364 = vmatpush2.bf16.msra.mxu0 0
      %4365 = vmatprep.subr.bf16.mxu0 0
      %4366 = vmatpush2.bf16.msra.mxu0 0
      %4367 = vmatprep.subr.bf16.mxu0 0
      %4368 = vmatpush2.bf16.msra.mxu0 0
      %4369 = vmatprep.subr.bf16.mxu0 0
      %4370 = vmatpush2.bf16.msra.mxu0 0
      %4371 = vmatprep.subr.bf16.mxu0 0
      %4372 = vmatpush2.bf16.msra.mxu0 0
      %4373 = vmatprep.subr.bf16.mxu0 0
      %4374 = vmatpush2.bf16.msra.mxu0 0
      %4375 = vmatprep.mubr.bf16.mxu0 0
      %4376 = vmatmul.mubr.bf16.gmra.mxu0 %v4326
      %v4377 = vpop.f32.mrf.mxu0
      %v4378 = vadd.f32 0.0, %v4377
      %v4379 = vpop.f32.mrf.mxu0
      %v4380 = vpop.f32.mrf.mxu0
      %v4381 = vadd.f32 0.0, %v4380
      %v4382 = vpop.f32.mrf.mxu0
      %4383 = vmatprep.mubr.bf16.mxu0 0
      %4384 = vmatmul.mubr.bf16.gmra.mxu0 %v4328
      %v4385 = vpop.f32.mrf.mxu0
      %v4386 = vadd.f32 0.0, %v4385
      %v4387 = vpop.f32.mrf.mxu0
      %v4388 = vpop.f32.mrf.mxu0
      %v4389 = vadd.f32 0.0, %v4388
      %v4390 = vpop.f32.mrf.mxu0
      %4391 = vmatprep.mubr.bf16.mxu0 0
      %4392 = vmatmul.mubr.bf16.gmra.mxu0 %v4330
      %v4393 = vpop.f32.mrf.mxu0
      %v4394 = vadd.f32 0.0, %v4393
      %v4395 = vpop.f32.mrf.mxu0
      %v4396 = vpop.f32.mrf.mxu0
      %v4397 = vadd.f32 0.0, %v4396
      %v4398 = vpop.f32.mrf.mxu0
      %4399 = vmatprep.mubr.bf16.mxu0 0
      %4400 = vmatmul.mubr.bf16.gmra.mxu0 %v4332
      %v4401 = vpop.f32.mrf.mxu0
      %v4402 = vadd.f32 0.0, %v4401
      %v4403 = vpop.f32.mrf.mxu0
      %v4404 = vpop.f32.mrf.mxu0
      %v4405 = vadd.f32 0.0, %v4404
      %v4406 = vpop.f32.mrf.mxu0
      %4407 = vmatprep.mubr.bf16.mxu0 0
      %4408 = vmatmul.mubr.bf16.gmra.mxu0 %v4334
      %v4409 = vpop.f32.mrf.mxu0
      %v4410 = vadd.f32 0.0, %v4409
      %v4411 = vpop.f32.mrf.mxu0
      %v4412 = vpop.f32.mrf.mxu0
      %v4413 = vadd.f32 0.0, %v4412
      %v4414 = vpop.f32.mrf.mxu0
      %4415 = vmatprep.mubr.bf16.mxu0 0
      %4416 = vmatmul.mubr.bf16.gmra.mxu0 %v4336
      %v4417 = vpop.f32.mrf.mxu0
      %v4418 = vadd.f32 0.0, %v4417
      %v4419 = vpop.f32.mrf.mxu0
      %v4420 = vpop.f32.mrf.mxu0
      %v4421 = vadd.f32 0.0, %v4420
      %v4422 = vpop.f32.mrf.mxu0
      %4423 = vmatprep.mubr.bf16.mxu0 0
      %4424 = vmatmul.mubr.bf16.gmra.mxu0 %v4338
      %v4425 = vpop.f32.mrf.mxu0
      %v4426 = vadd.f32 0.0, %v4425
      %v4427 = vpop.f32.mrf.mxu0
      %v4428 = vpop.f32.mrf.mxu0
      %v4429 = vpop.f32.mrf.mxu0
      %4430 = vdwg.mxu0
      %v4431 = vadd.f32 %v4286, %v4378
      %v4432 = vadd.f32 %v4287, %v4381
      %v4433 = vadd.f32 %v4288, %v4386
      %v4434 = vadd.f32 %v4289, %v4389
      %v4435 = vadd.f32 %v4290, %v4394
      %v4436 = vadd.f32 %v4291, %v4397
      %v4437 = vadd.f32 %v4292, %v4402
      %v4438 = vadd.f32 %v4293, %v4405
      %v4439 = vadd.f32 %v4294, %v4410
      %v4440 = vadd.f32 %v4295, %v4413
      %v4441 = vadd.f32 %v4296, %v4418
      %v4442 = vadd.f32 %v4297, %v4421
      %v4443 = vadd.f32 %v4298, %v4426
      %v4444 = vmax.f32 %v4431, 0.0
      %v4445 = vmax.f32 %v4432, 0.0
      %v4446 = vpack.c.bf16 %v4445, %v4444
      %v4448 = vunpack.c.l.b16 %v4446
      %v4449 = vunpack.c.h.b16 %v4446
      %v4450 = vpack.c.b16 %v4448, %v4448
      %v4451 = vpack.c.b16 %v4449, %v4449
      %4454 = vst [vmem:[%s1517] sm:$0xf] %v4450
      %4455 = vst [vmem:[%s1517 + $0x4] sm:$0x7] %v4451
      %v4456 = vmax.f32 %v4433, 0.0
      %v4457 = vmax.f32 %v4434, 0.0
      %v4458 = vpack.c.bf16 %v4456, %v4445
      %v4459 = vpack.c.bf16 %v4457, %v4457
      %v4462 = vunpack.c.l.b16 %v4458
      %v4463 = vunpack.c.h.b16 %v4458
      %v4464 = vunpack.c.l.b16 %v4459
      %v4465 = vpack.c.b16 %v4462, %v4462
      %v4466 = vpack.c.b16 %v4463, %v4463
      %v4467 = vpack.c.b16 %v4464, %v4464
      %vm4468 = vcmask 1044484
      %vm4469 = vmor %vm3371, %vm4468
      %v4470 = vrot.slane %v4465, 7
      %v4471 = vrot.slane %v4470, 4
      %v4472 = vrot.slane %v4466, 7
      %v4473 = vsel %vm4469, %v4471, %v4472
      %v4474 = vrot.slane %v4472, 4
      %v4475 = vrot.slane %v4467, 7
      %v4476 = vsel %vm4469, %v4474, %v4475
      %s4479 = scalar_lea.vmem %s1517, 8
      %4480 = vst [vmem:[%s4479] sm:$0xf] %v4473
      %4481 = vst [vmem:[%s4479 + $0x4] sm:$0x7] %v4476
      %v4482 = vmax.f32 %v4435, 0.0
      %v4483 = vmax.f32 %v4436, 0.0
      %v4484 = vpack.c.bf16 %v4482, %v4457
      %v4485 = vpack.c.bf16 %v4483, %v4483
      %v4488 = vunpack.c.l.b16 %v4484
      %v4489 = vunpack.c.h.b16 %v4484
      %v4490 = vunpack.c.l.b16 %v4485
      %v4491 = vpack.c.b16 %v4488, %v4488
      %v4492 = vpack.c.b16 %v4489, %v4489
      %v4493 = vpack.c.b16 %v4490, %v4490
      %vm4494 = vcmask 1045508
      %vm4495 = vmor %vm3366, %vm4494
      %v4496 = vrot.slane %v4491, 6
      %v4497 = vrot.slane %v4496, 4
      %v4498 = vrot.slane %v4492, 6
      %v4499 = vsel %vm4495, %v4497, %v4498
      %v4500 = vrot.slane %v4498, 4
      %v4501 = vrot.slane %v4493, 6
      %v4502 = vsel %vm4495, %v4500, %v4501
      %s4505 = scalar_lea.vmem %s1517, 16
      %4506 = vst [vmem:[%s4505] sm:$0xf] %v4499
      %4507 = vst [vmem:[%s4505 + $0x4] sm:$0x7] %v4502
      %v4508 = vmax.f32 %v4437, 0.0
      %v4509 = vpack.c.bf16 %v4508, %v4483
      %v4511 = vunpack.c.l.b16 %v4509
      %v4512 = vunpack.c.h.b16 %v4509
      %v4513 = vpack.c.b16 %v4511, %v4511
      %v4514 = vpack.c.b16 %v4512, %v4512
      %vm4515 = vcmask 1046532
      %vm4516 = vmor %vm3361, %vm4515
      %v4517 = vrot.slane %v4513, 5
      %v4518 = vrot.slane %v4517, 4
      %v4519 = vrot.slane %v4514, 5
      %v4520 = vsel %vm4516, %v4518, %v4519
      %v4521 = vrot.slane %v4519, 4
      %s4524 = scalar_lea.vmem %s1517, 24
      %4525 = vst [vmem:[%s4524] sm:$0xf] %v4520
      %4526 = vst [vmem:[%s4524 + $0x4] sm:$0x7] %v4521
      %v4527 = vmax.f32 %v4438, 0.0
      %v4528 = vmax.f32 %v4439, 0.0
      %v4529 = vpack.c.bf16 %v4528, %v4527
      %v4531 = vunpack.c.l.b16 %v4529
      %v4532 = vunpack.c.h.b16 %v4529
      %v4533 = vpack.c.b16 %v4531, %v4531
      %v4534 = vpack.c.b16 %v4532, %v4532
      %s4537 = scalar_lea.vmem %s1517, 32
      %4538 = vst [vmem:[%s4537] sm:$0xf] %v4533
      %4539 = vst [vmem:[%s4537 + $0x4] sm:$0x7] %v4534
      %v4540 = vmax.f32 %v4440, 0.0
      %v4541 = vmax.f32 %v4441, 0.0
      %v4542 = vpack.c.bf16 %v4540, %v4528
      %v4543 = vpack.c.bf16 %v4541, %v4541
      %v4546 = vunpack.c.l.b16 %v4542
      %v4547 = vunpack.c.h.b16 %v4542
      %v4548 = vunpack.c.l.b16 %v4543
      %v4549 = vpack.c.b16 %v4546, %v4546
      %v4550 = vpack.c.b16 %v4547, %v4547
      %v4551 = vpack.c.b16 %v4548, %v4548
      %v4552 = vrot.slane %v4549, 7
      %v4553 = vrot.slane %v4552, 4
      %v4554 = vrot.slane %v4550, 7
      %v4555 = vsel %vm4469, %v4553, %v4554
      %v4556 = vrot.slane %v4554, 4
      %v4557 = vrot.slane %v4551, 7
      %v4558 = vsel %vm4469, %v4556, %v4557
      %s4561 = scalar_lea.vmem %s1517, 40
      %4562 = vst [vmem:[%s4561] sm:$0xf] %v4555
      %4563 = vst [vmem:[%s4561 + $0x4] sm:$0x7] %v4558
      %v4564 = vmax.f32 %v4442, 0.0
      %v4565 = vmax.f32 %v4443, 0.0
      %v4566 = vpack.c.bf16 %v4564, %v4541
      %v4567 = vpack.c.bf16 %v4565, %v4565
      %v4570 = vunpack.c.l.b16 %v4566
      %v4571 = vunpack.c.h.b16 %v4566
      %v4572 = vunpack.c.l.b16 %v4567
      %v4573 = vpack.c.b16 %v4570, %v4570
      %v4574 = vpack.c.b16 %v4571, %v4571
      %v4575 = vpack.c.b16 %v4572, %v4572
      %v4576 = vrot.slane %v4573, 6
      %v4577 = vrot.slane %v4576, 4
      %v4578 = vrot.slane %v4574, 6
      %v4579 = vsel %vm4495, %v4577, %v4578
      %v4580 = vrot.slane %v4578, 4
      %v4581 = vrot.slane %v4575, 6
      %v4582 = vsel %vm4495, %v4580, %v4581
      %s4585 = scalar_lea.vmem %s1517, 48
      %4586 = vst [vmem:[%s4585] sm:$0xf] %v4579
      %4587 = vst [vmem:[%s4585 + $0x4] sm:$0x7] %v4582
      %s4588 = smul.u32 7, %s37
      %p4589 = scmp.lt.s32.totalorder %s36, 1
      %s4590 = scalar_select %p4589, %s36, 1
      %p4591 = scmp.lt.s32.totalorder %s4588, 13
      %s4592 = scalar_select %p4591, %s4588, 13
      %s4593 = smul.addr %s4592, 2
      %s4594 = smul.addr %s4590, 28
      %s4595 = sadd.s32 %s4593, %s4594
      %s4596 = smul.addr %s4595, 4
      %s4597 = scalar_lea.vmem %s21, %s4596
      // Predicated region
      $region105: #{unet_up_conv_block.4} parent=103 // pred_check
        %p4598 = pneg %p701
      $region106: #{unet_up_conv_block.4} parent=103 // pred_check_branch
        %4600 = sbr.rel (%p4598) target = $region108
      $region107: #{unet_up_conv_block.4} parent=103 // pred_region
        %s4601 = smul.u32 7, %s37
      $region108: #{unet_up_conv_block.4} parent=103 // pred_fallthru
        _
    $region104: #{unet_up_conv_block.4} parent=5 // pred_fallthru
      _
    %p4602 = scmp.le.s32.totalorder 2, %s27
    // Predicated region
    $region109: #{unet_up_conv_block.4} parent=5 // pred_check
      %p4603 = pneg %p4602
    $region110: #{unet_up_conv_block.4} parent=5 // pred_check_branch
      %4605 = sbr.rel (%p4603) target = $region112
    $region111: #{unet_up_conv_block.4} parent=5 // pred_region
      %s4606 = ssub.s32 %s27, 2
      // Predicated region
      $region113: #{unet_up_conv_block.4} parent=111 // pred_check
        %p4607 = pneg %p707
      $region114: #{unet_up_conv_block.4} parent=111 // pred_check_branch
        %4609 = sbr.rel (%p4607) target = $region116
      $region115: #{unet_up_conv_block.4} parent=111 // pred_region
        %s4610 = smul.u32 7, %s39
        %p4611 = scmp.lt.s32.totalorder %s38, 1
        %s4612 = scalar_select %p4611, %s38, 1
        %p4613 = scmp.lt.s32.totalorder %s4610, 13
        %s4614 = scalar_select %p4613, %s4610, 13
        %s4615 = smul.addr %s4614, 2
        %s4616 = smul.addr %s4612, 28
        %s4617 = sadd.s32 %s4615, %s4616
        %s4618 = smul.addr %s4617, 4
        %s4619 = scalar_lea.vmem %s21, %s4618
      $region116: #{unet_up_conv_block.4} parent=111 // pred_fallthru
        _
    $region112: #{unet_up_conv_block.4} parent=5 // pred_fallthru
      _
  $region6: #{unet_up_conv_block.4} parent=0 // loop_footer
    %s31 = sadd.s32 1, %s27
  $region7: #{unet_up_conv_block.4} parent=0 // loop_footer_branch
    %26 = sbr.rel target = $region3
  $region8: #{unet_up_conv_block.4} parent=0 // loop_exit
    _

</llo_original>
